<compile_context>
chip_gen: v7x
topology: tpu7x:2x2x1
jax: 0.10.0
libtpu: 0.0.40
codegen_flags: <defaults>
</compile_context>

<pallas_src>
import functools

import jax
import jax.numpy as jnp
import numpy as np
from jax.experimental import pallas as pl
from jax.experimental.pallas import tpu as pltpu

HEAD_PAD = 128  # lane-dense padded width for the fused V/A head output


# ----------------------------------------------------------------------------
# In-kernel helpers (all shapes/indices static)
# ----------------------------------------------------------------------------
def _shift_rows(x, delta):
    """out[r] = x[(r + delta) % M]; rows are (b, h, w) row-major."""
    if delta == 0:
        return x
    m = x.shape[0]
    return pltpu.roll(x, (-delta) % m, axis=0)


def _build_im2col(x, masks_ref, im_ref, W):
    """Lane-grouped im2col for a 3x3 same-padding conv.

    x:         (M, Cin)    activation rows in (b, h, w) order.
    masks_ref: (M, 9)      per-tap zero-padding masks (column t).
    im_ref:    (M, 9*Cin)  VMEM scratch; lane block t <- tap-t shifted+masked x
               so the conv becomes ONE matmul with the stacked (9*Cin, Cout)
               weights.
    """
    cin = x.shape[1]
    t = 0
    for oy in (-1, 0, 1):
        for ox in (-1, 0, 1):
            delta = oy * W + ox
            slab = _shift_rows(x, delta)
            if not (oy == 0 and ox == 0):
                slab = slab * masks_ref[:, t:t + 1]   # zero padding (bcast mul)
            im_ref[:, t * cin:(t + 1) * cin] = slab
            t += 1


def _pool_combine(acc, pw_ref, W):
    """pw[r] = max(acc[r], acc[r+1], acc[r+W], acc[r+W+1]).

    Only rows with (h, w) even are consumed downstream; for those all four
    contributing rows lie inside the same image (H, W even), so the circular
    wrap of the rolls never leaks across images for consumed rows.
    """
    pw_ref[...] = jnp.maximum(
        jnp.maximum(acc, _shift_rows(acc, 1)),
        jnp.maximum(_shift_rows(acc, W), _shift_rows(acc, W + 1)))


def _compact_pool(pw_ref, dst_ref, B, H, W):
    """Strided 2x2-pool compaction: dst[(b, ho, wo)] = pw[(b, 2*ho, 2*wo)]."""
    Ho, Wo = H // 2, W // 2
    for b in range(B):
        for ho in range(Ho):
            src = b * H * W + 2 * ho * W
            dst = (b * Ho + ho) * Wo
            dst_ref[pl.ds(dst, Wo), :] = pw_ref[pl.ds(src, Wo, stride=2), :]


# ----------------------------------------------------------------------------
# Fused forward kernel
# ----------------------------------------------------------------------------
def fused_dqn_kernel(x_ref, m1_ref, m2_ref, m3_ref,
                     w1_ref, b1_ref, w2_ref, b2_ref, w3_ref, b3t_ref,
                     wfc1_ref, bfc1_ref, wh_ref, bh_ref,
                     o_ref,
                     im1, pw1, a1c, im2, pw2, a2c, im3, pw3, fcin,
                     *, B, H, W):
    H2, W2 = H // 2, W // 2
    H3, W3 = H2 // 2, W2 // 2
    Hf, Wf = H3 // 2, W3 // 2
    cout3 = pw3.shape[1]

    # ---- conv1 (single K=9*Cin matmul) + 2x2 pool; bias+ReLU hoisted after pool
    _build_im2col(x_ref[...], m1_ref, im1, W)
    acc = jnp.dot(im1[...], w1_ref[...], preferred_element_type=jnp.float32)
    _pool_combine(acc, pw1, W)
    _compact_pool(pw1, a1c, B, H, W)
    a1 = jnp.maximum(a1c[...] + b1_ref[...], 0.0)            # (B*H2*W2, 32)

    # ---- conv2
    _build_im2col(a1, m2_ref, im2, W2)
    acc = jnp.dot(im2[...], w2_ref[...], preferred_element_type=jnp.float32)
    _pool_combine(acc, pw2, W2)
    _compact_pool(pw2, a2c, B, H2, W2)
    a2 = jnp.maximum(a2c[...] + b2_ref[...], 0.0)            # (B*H3*W3, 64)

    # ---- conv3; the NCHW flatten is fused into the fc1 operand assembly
    _build_im2col(a2, m3_ref, im3, W3)
    acc = jnp.dot(im3[...], w3_ref[...], preferred_element_type=jnp.float32)
    _pool_combine(acc, pw3, W3)

    # fc1 operand (B, n_pos*64): lane block p holds the pooled conv3 output of
    # final spatial position p = hf*Wf + wf for every batch row (strided read).
    for hf in range(Hf):
        for wf in range(Wf):
            p = hf * Wf + wf
            fcin[:, p * cout3:(p + 1) * cout3] = (
                pw3[pl.ds(2 * hf * W3 + 2 * wf, B, stride=H3 * W3), :])
    z = jnp.maximum(fcin[...] + b3t_ref[...], 0.0)           # conv3 bias + ReLU

    # ---- fc1 as ONE K = n_pos*64 matmul, then ReLU
    h1 = jnp.maximum(
        jnp.dot(z, wfc1_ref[...], preferred_element_type=jnp.float32)
        + bfc1_ref[...], 0.0)                                # (B, 256)

    # ---- fused dueling V/A head, lane-dense padded output (unmasked stores)
    o_ref[...] = jnp.dot(h1, wh_ref[...],
                         preferred_element_type=jnp.float32) + bh_ref[...]


# ----------------------------------------------------------------------------
# Compile-time constants: per-tap zero-padding masks
# ----------------------------------------------------------------------------
def _boundary_masks(B, H, W):
    M = B * H * W
    r = np.arange(M)
    h = (r // W) % H
    w = r % W
    cols = []
    for oy in (-1, 0, 1):
        for ox in (-1, 0, 1):
            cols.append(((h + oy >= 0) & (h + oy < H) &
                         (w + ox >= 0) & (w + ox < W)).astype(np.float32))
    return np.stack(cols, axis=1)            # (M, 9)


# ----------------------------------------------------------------------------
# Parameters (PyTorch-like uniform fan-in init) and forward wrapper
# ----------------------------------------------------------------------------
def init_params(key, in_channels, n_actions, spatial):
    def unif(k, shape, fan_in):
        lim = 1.0 / np.sqrt(fan_in)
        return jax.random.uniform(k, shape, jnp.float32, -lim, lim)

    ks = jax.random.split(key, 12)
    p = {}
    p["w_conv1"] = unif(ks[0], (3, 3, in_channels, 32), 9 * in_channels)  # HWIO
    p["b_conv1"] = unif(ks[1], (32,), 9 * in_channels)
    p["w_conv2"] = unif(ks[2], (3, 3, 32, 64), 9 * 32)
    p["b_conv2"] = unif(ks[3], (64,), 9 * 32)
    p["w_conv3"] = unif(ks[4], (3, 3, 64, 64), 9 * 64)
    p["b_conv3"] = unif(ks[5], (64,), 9 * 64)

    fc_in = 64 * (spatial // 8) * (spatial // 8)   # three 2x2 pools
    # w_fc1 rows follow PyTorch's NCHW flatten order: c*(Hf*Wf) + hf*Wf + wf
    p["w_fc1"] = unif(ks[6], (fc_in, 256), fc_in)
    p["b_fc1"] = unif(ks[7], (256,), fc_in)
    p["w_V"] = unif(ks[8], (256, 1), 256)
    p["b_V"] = unif(ks[9], (1,), 256)
    p["w_A"] = unif(ks[10], (256, n_actions), 256)
    p["b_A"] = unif(ks[11], (n_actions,), 256)
    return p


@jax.jit
def dueling_dqn_forward(params, state_nchw):
    """Input: (B, C, H, W) float32 (PyTorch NCHW).  Returns (V, A)."""
    B, C, H, W = state_nchw.shape
    assert H % 8 == 0 and W % 8 == 0, "three 2x2 pools need H, W % 8 == 0"
    H2, W2, H3, W3 = H // 2, W // 2, H // 4, W // 4
    Hf, Wf = H // 8, W // 8
    n_pos = Hf * Wf
    M1, M2, M3 = B * H * W, B * H2 * W2, B * H3 * W3

    # flattened NHWC rows (b, h, w) with channels on lanes
    x = jnp.transpose(state_nchw, (0, 2, 3, 1)).reshape(M1, C)

    # per-layer per-tap boundary masks (compile-time constants)
    m1 = _boundary_masks(B, H, W)
    m2 = _boundary_masks(B, H2, W2)
    m3 = _boundary_masks(B, H3, W3)

    # weight repacking (tiny; done once outside the kernel)
    w1s = params["w_conv1"].reshape(9 * C, 32)       # tap-major, channel-minor
    w2s = params["w_conv2"].reshape(9 * 32, 64)
    w3s = params["w_conv3"].reshape(9 * 64, 64)
    b1 = params["b_conv1"].reshape(1, 32)
    b2 = params["b_conv2"].reshape(1, 64)
    b3t = jnp.tile(params["b_conv3"], n_pos).reshape(1, n_pos * 64)

    fc_out = params["w_fc1"].shape[1]
    # fc1 rows follow NCHW flatten order c*n_pos + p; regroup to p*64 + c
    wfc1r = jnp.transpose(params["w_fc1"].reshape(64, n_pos, fc_out),
                          (1, 0, 2)).reshape(n_pos * 64, fc_out)
    bfc1 = params["b_fc1"].reshape(1, fc_out)

    n_actions = params["w_A"].shape[1]
    assert 1 + n_actions <= HEAD_PAD
    wh = jnp.zeros((fc_out, HEAD_PAD), jnp.float32)
    wh = wh.at[:, 0:1].set(params["w_V"]).at[:, 1:1 + n_actions].set(params["w_A"])
    bh = jnp.zeros((1, HEAD_PAD), jnp.float32)
    bh = bh.at[0, 0:1].set(params["b_V"]).at[0, 1:1 + n_actions].set(params["b_A"])

    def full(shape):
        return pl.BlockSpec(tuple(shape), lambda i, _n=len(shape): (0,) * _n)

    inputs = (x, m1, m2, m3, w1s, b1, w2s, b2, w3s, b3t, wfc1r, bfc1, wh, bh)
    out = pl.pallas_call(
        functools.partial(fused_dqn_kernel, B=B, H=H, W=W),
        out_shape=jax.ShapeDtypeStruct((B, HEAD_PAD), jnp.float32),
        grid=(1,),
        in_specs=[full(a.shape) for a in inputs],
        out_specs=full((B, HEAD_PAD)),
        scratch_shapes=[
            pltpu.VMEM((M1, 9 * C), jnp.float32),      # im2col, conv1
            pltpu.VMEM((M1, 32), jnp.float32),         # pooled acc, conv1
            pltpu.VMEM((M2, 32), jnp.float32),         # compacted conv1
            pltpu.VMEM((M2, 9 * 32), jnp.float32),     # im2col, conv2
            pltpu.VMEM((M2, 64), jnp.float32),         # pooled acc, conv2
            pltpu.VMEM((M3, 64), jnp.float32),         # compacted conv2
            pltpu.VMEM((M3, 9 * 64), jnp.float32),     # im2col, conv3
            pltpu.VMEM((M3, 64), jnp.float32),         # pooled acc, conv3
            pltpu.VMEM((B, n_pos * 64), jnp.float32),  # fc1 operand slab
        ],
        compiler_params=pltpu.CompilerParams(
            dimension_semantics=("arbitrary",),
            vmem_limit_bytes=32 * 1024 * 1024),
    )(*inputs)

    return out[:, :1], out[:, 1:1 + n_actions]


# ----------------------------------------------------------------------------
# Pure-JAX reference (sanity check only)
# ----------------------------------------------------------------------------
def ref_forward(params, state_nchw):
    x = jnp.transpose(state_nchw, (0, 2, 3, 1))
    for w, b in ((params["w_conv1"], params["b_conv1"]),
                 (params["w_conv2"], params["b_conv2"]),
                 (params["w_conv3"], params["b_conv3"])):
        y = jax.lax.conv_general_dilated(
            x, w, (1, 1), "SAME",
            dimension_numbers=("NHWC", "HWIO", "NHWC")) + b
        y = jnp.maximum(y, 0.0)
        B, H, W, C = y.shape
        x = y.reshape(B, H // 2, 2, W // 2, 2, C).max(axis=(2, 4))
    B = x.shape[0]
    flat = jnp.transpose(x, (0, 3, 1, 2)).reshape(B, -1)   # NCHW flatten
    h = jnp.maximum(flat @ params["w_fc1"] + params["b_fc1"], 0.0)
    return h @ params["w_V"] + params["b_V"], h @ params["w_A"] + params["b_A"]


# ----------------------------------------------------------------------------
if __name__ == "__main__":
    key = jax.random.PRNGKey(0)
    k_param, k_x = jax.random.split(key)

    B, C, H, W = 2, 4, 16, 16     # input_dims = (4, 16, 16)
    n_actions = 5

    params = init_params(k_param, in_channels=C, n_actions=n_actions, spatial=H)
    state = jax.random.normal(k_x, (B, C, H, W), jnp.float32)   # NCHW input

    V, A = dueling_dqn_forward(params, state)
    jax.block_until_ready((V, A))

    # sanity check against a pure-JAX reference
    V_ref, A_ref = ref_forward(params, state)
    np.testing.assert_allclose(np.asarray(V), np.asarray(V_ref), atol=5e-4, rtol=1e-4)
    np.testing.assert_allclose(np.asarray(A), np.asarray(A_ref), atol=5e-4, rtol=1e-4)
    assert V.shape == (B, 1) and A.shape == (B, n_actions)

    print("KERNEL_OK")
</pallas_src>

<mosaic_0001>
module attributes {stable_mosaic.version = 11 : i64} {
  func.func @fused_dqn_kernel(%arg0: i32, %arg1: memref<512x4xf32, #tpu.memory_space<vmem>>, %arg2: memref<512x9xf32, #tpu.memory_space<vmem>>, %arg3: memref<128x9xf32, #tpu.memory_space<vmem>>, %arg4: memref<32x9xf32, #tpu.memory_space<vmem>>, %arg5: memref<36x32xf32, #tpu.memory_space<vmem>>, %arg6: memref<1x32xf32, #tpu.memory_space<vmem>>, %arg7: memref<288x64xf32, #tpu.memory_space<vmem>>, %arg8: memref<1x64xf32, #tpu.memory_space<vmem>>, %arg9: memref<576x64xf32, #tpu.memory_space<vmem>>, %arg10: memref<1x256xf32, #tpu.memory_space<vmem>>, %arg11: memref<256x256xf32, #tpu.memory_space<vmem>>, %arg12: memref<1x256xf32, #tpu.memory_space<vmem>>, %arg13: memref<256x128xf32, #tpu.memory_space<vmem>>, %arg14: memref<1x128xf32, #tpu.memory_space<vmem>>, %arg15: memref<2x128xf32, #tpu.memory_space<vmem>>, %arg16: memref<512x36xf32, #tpu.memory_space<vmem>>, %arg17: memref<512x32xf32, #tpu.memory_space<vmem>>, %arg18: memref<128x32xf32, #tpu.memory_space<vmem>>, %arg19: memref<128x288xf32, #tpu.memory_space<vmem>>, %arg20: memref<128x64xf32, #tpu.memory_space<vmem>>, %arg21: memref<32x64xf32, #tpu.memory_space<vmem>>, %arg22: memref<32x576xf32, #tpu.memory_space<vmem>>, %arg23: memref<32x64xf32, #tpu.memory_space<vmem>>, %arg24: memref<2x256xf32, #tpu.memory_space<vmem>>) attributes {dimension_semantics = [#tpu.dimension_semantics<arbitrary>], iteration_bounds = array<i64: 1>, scalar_prefetch = 0 : i64, scratch_operands = 9 : i64, tpu.core_type = #tpu.core_type<tc>, window_params = [{pipeline_mode = #tpu.pipeline_mode<synchronous>, transform_indices = @transform_0, window_bounds = array<i64: 512, 4>}, {pipeline_mode = #tpu.pipeline_mode<synchronous>, transform_indices = @transform_1, window_bounds = array<i64: 512, 9>}, {pipeline_mode = #tpu.pipeline_mode<synchronous>, transform_indices = @transform_2, window_bounds = array<i64: 128, 9>}, {pipeline_mode = #tpu.pipeline_mode<synchronous>, transform_indices = @transform_3, window_bounds = array<i64: 32, 9>}, {pipeline_mode = #tpu.pipeline_mode<synchronous>, transform_indices = @transform_4, window_bounds = array<i64: 36, 32>}, {pipeline_mode = #tpu.pipeline_mode<synchronous>, transform_indices = @transform_5, window_bounds = array<i64: 1, 32>}, {pipeline_mode = #tpu.pipeline_mode<synchronous>, transform_indices = @transform_6, window_bounds = array<i64: 288, 64>}, {pipeline_mode = #tpu.pipeline_mode<synchronous>, transform_indices = @transform_7, window_bounds = array<i64: 1, 64>}, {pipeline_mode = #tpu.pipeline_mode<synchronous>, transform_indices = @transform_8, window_bounds = array<i64: 576, 64>}, {pipeline_mode = #tpu.pipeline_mode<synchronous>, transform_indices = @transform_9, window_bounds = array<i64: 1, 256>}, {pipeline_mode = #tpu.pipeline_mode<synchronous>, transform_indices = @transform_10, window_bounds = array<i64: 256, 256>}, {pipeline_mode = #tpu.pipeline_mode<synchronous>, transform_indices = @transform_11, window_bounds = array<i64: 1, 256>}, {pipeline_mode = #tpu.pipeline_mode<synchronous>, transform_indices = @transform_12, window_bounds = array<i64: 256, 128>}, {pipeline_mode = #tpu.pipeline_mode<synchronous>, transform_indices = @transform_13, window_bounds = array<i64: 1, 128>}, {pipeline_mode = #tpu.pipeline_mode<synchronous>, transform_indices = @transform_14, window_bounds = array<i64: 2, 128>}]} {
    %c0 = arith.constant 0 : index
    %c0_0 = arith.constant 0 : index
    %0 = vector.load %arg1[%c0, %c0_0] : memref<512x4xf32, #tpu.memory_space<vmem>>, vector<512x4xf32>
    %c17_i32 = arith.constant 17 : i32
    %1 = tpu.dynamic_rotate %0 by %c17_i32 dim 0 : vector<512x4xf32>, i32 -> vector<512x4xf32>
    %c0_1 = arith.constant 0 : index
    %c0_2 = arith.constant 0 : index
    %2 = vector.load %arg2[%c0_1, %c0_2] : memref<512x9xf32, #tpu.memory_space<vmem>>, vector<512x1xf32>
    %3 = vector.broadcast %2 : vector<512x1xf32> to vector<512x4xf32>
    %4 = arith.mulf %1, %3 : vector<512x4xf32>
    %c0_3 = arith.constant 0 : index
    %c0_4 = arith.constant 0 : index
    %5 = vector.load %arg16[%c0_3, %c0_4] : memref<512x36xf32, #tpu.memory_space<vmem>>, vector<512x4xf32>
    tpu.vector_store %arg16[%c0_3, %c0_4], %4 {strides = array<i32>} : memref<512x36xf32, #tpu.memory_space<vmem>>, vector<512x4xf32>,
    %c16_i32 = arith.constant 16 : i32
    %6 = tpu.dynamic_rotate %0 by %c16_i32 dim 0 : vector<512x4xf32>, i32 -> vector<512x4xf32>
    %c0_5 = arith.constant 0 : index
    %c1 = arith.constant 1 : index
    %7 = vector.load %arg2[%c0_5, %c1] : memref<512x9xf32, #tpu.memory_space<vmem>>, vector<512x1xf32>
    %8 = vector.broadcast %7 : vector<512x1xf32> to vector<512x4xf32>
    %9 = arith.mulf %6, %8 : vector<512x4xf32>
    %c0_6 = arith.constant 0 : index
    %c4 = arith.constant 4 : index
    %10 = vector.load %arg16[%c0_6, %c4] : memref<512x36xf32, #tpu.memory_space<vmem>>, vector<512x4xf32>
    tpu.vector_store %arg16[%c0_6, %c4], %9 {strides = array<i32>} : memref<512x36xf32, #tpu.memory_space<vmem>>, vector<512x4xf32>,
    %c15_i32 = arith.constant 15 : i32
    %11 = tpu.dynamic_rotate %0 by %c15_i32 dim 0 : vector<512x4xf32>, i32 -> vector<512x4xf32>
    %c0_7 = arith.constant 0 : index
    %c2 = arith.constant 2 : index
    %12 = vector.load %arg2[%c0_7, %c2] : memref<512x9xf32, #tpu.memory_space<vmem>>, vector<512x1xf32>
    %13 = vector.broadcast %12 : vector<512x1xf32> to vector<512x4xf32>
    %14 = arith.mulf %11, %13 : vector<512x4xf32>
    %c0_8 = arith.constant 0 : index
    %c8 = arith.constant 8 : index
    %15 = vector.load %arg16[%c0_8, %c8] : memref<512x36xf32, #tpu.memory_space<vmem>>, vector<512x4xf32>
    tpu.vector_store %arg16[%c0_8, %c8], %14 {strides = array<i32>} : memref<512x36xf32, #tpu.memory_space<vmem>>, vector<512x4xf32>,
    %c1_i32 = arith.constant 1 : i32
    %16 = tpu.dynamic_rotate %0 by %c1_i32 dim 0 : vector<512x4xf32>, i32 -> vector<512x4xf32>
    %c0_9 = arith.constant 0 : index
    %c3 = arith.constant 3 : index
    %17 = vector.load %arg2[%c0_9, %c3] : memref<512x9xf32, #tpu.memory_space<vmem>>, vector<512x1xf32>
    %18 = vector.broadcast %17 : vector<512x1xf32> to vector<512x4xf32>
    %19 = arith.mulf %16, %18 : vector<512x4xf32>
    %c0_10 = arith.constant 0 : index
    %c12 = arith.constant 12 : index
    %20 = vector.load %arg16[%c0_10, %c12] : memref<512x36xf32, #tpu.memory_space<vmem>>, vector<512x4xf32>
    tpu.vector_store %arg16[%c0_10, %c12], %19 {strides = array<i32>} : memref<512x36xf32, #tpu.memory_space<vmem>>, vector<512x4xf32>,
    %c0_11 = arith.constant 0 : index
    %c16 = arith.constant 16 : index
    %21 = vector.load %arg16[%c0_11, %c16] : memref<512x36xf32, #tpu.memory_space<vmem>>, vector<512x4xf32>
    tpu.vector_store %arg16[%c0_11, %c16], %0 {strides = array<i32>} : memref<512x36xf32, #tpu.memory_space<vmem>>, vector<512x4xf32>,
    %c511_i32 = arith.constant 511 : i32
    %22 = tpu.dynamic_rotate %0 by %c511_i32 dim 0 : vector<512x4xf32>, i32 -> vector<512x4xf32>
    %c0_12 = arith.constant 0 : index
    %c5 = arith.constant 5 : index
    %23 = vector.load %arg2[%c0_12, %c5] : memref<512x9xf32, #tpu.memory_space<vmem>>, vector<512x1xf32>
    %24 = vector.broadcast %23 : vector<512x1xf32> to vector<512x4xf32>
    %25 = arith.mulf %22, %24 : vector<512x4xf32>
    %c0_13 = arith.constant 0 : index
    %c20 = arith.constant 20 : index
    %26 = vector.load %arg16[%c0_13, %c20] : memref<512x36xf32, #tpu.memory_space<vmem>>, vector<512x4xf32>
    tpu.vector_store %arg16[%c0_13, %c20], %25 {strides = array<i32>} : memref<512x36xf32, #tpu.memory_space<vmem>>, vector<512x4xf32>,
    %c497_i32 = arith.constant 497 : i32
    %27 = tpu.dynamic_rotate %0 by %c497_i32 dim 0 : vector<512x4xf32>, i32 -> vector<512x4xf32>
    %c0_14 = arith.constant 0 : index
    %c6 = arith.constant 6 : index
    %28 = vector.load %arg2[%c0_14, %c6] : memref<512x9xf32, #tpu.memory_space<vmem>>, vector<512x1xf32>
    %29 = vector.broadcast %28 : vector<512x1xf32> to vector<512x4xf32>
    %30 = arith.mulf %27, %29 : vector<512x4xf32>
    %c0_15 = arith.constant 0 : index
    %c24 = arith.constant 24 : index
    %31 = vector.load %arg16[%c0_15, %c24] : memref<512x36xf32, #tpu.memory_space<vmem>>, vector<512x4xf32>
    tpu.vector_store %arg16[%c0_15, %c24], %30 {strides = array<i32>} : memref<512x36xf32, #tpu.memory_space<vmem>>, vector<512x4xf32>,
    %c496_i32 = arith.constant 496 : i32
    %32 = tpu.dynamic_rotate %0 by %c496_i32 dim 0 : vector<512x4xf32>, i32 -> vector<512x4xf32>
    %c0_16 = arith.constant 0 : index
    %c7 = arith.constant 7 : index
    %33 = vector.load %arg2[%c0_16, %c7] : memref<512x9xf32, #tpu.memory_space<vmem>>, vector<512x1xf32>
    %34 = vector.broadcast %33 : vector<512x1xf32> to vector<512x4xf32>
    %35 = arith.mulf %32, %34 : vector<512x4xf32>
    %c0_17 = arith.constant 0 : index
    %c28 = arith.constant 28 : index
    %36 = vector.load %arg16[%c0_17, %c28] : memref<512x36xf32, #tpu.memory_space<vmem>>, vector<512x4xf32>
    tpu.vector_store %arg16[%c0_17, %c28], %35 {strides = array<i32>} : memref<512x36xf32, #tpu.memory_space<vmem>>, vector<512x4xf32>,
    %c495_i32 = arith.constant 495 : i32
    %37 = tpu.dynamic_rotate %0 by %c495_i32 dim 0 : vector<512x4xf32>, i32 -> vector<512x4xf32>
    %c0_18 = arith.constant 0 : index
    %c8_19 = arith.constant 8 : index
    %38 = vector.load %arg2[%c0_18, %c8_19] : memref<512x9xf32, #tpu.memory_space<vmem>>, vector<512x1xf32>
    %39 = vector.broadcast %38 : vector<512x1xf32> to vector<512x4xf32>
    %40 = arith.mulf %37, %39 : vector<512x4xf32>
    %c0_20 = arith.constant 0 : index
    %c32 = arith.constant 32 : index
    %41 = vector.load %arg16[%c0_20, %c32] : memref<512x36xf32, #tpu.memory_space<vmem>>, vector<512x4xf32>
    tpu.vector_store %arg16[%c0_20, %c32], %40 {strides = array<i32>} : memref<512x36xf32, #tpu.memory_space<vmem>>, vector<512x4xf32>,
    %c0_21 = arith.constant 0 : index
    %c0_22 = arith.constant 0 : index
    %42 = vector.load %arg16[%c0_21, %c0_22] : memref<512x36xf32, #tpu.memory_space<vmem>>, vector<512x36xf32>
    %c0_23 = arith.constant 0 : index
    %c0_24 = arith.constant 0 : index
    %43 = vector.load %arg5[%c0_23, %c0_24] : memref<36x32xf32, #tpu.memory_space<vmem>>, vector<36x32xf32>
    %cst = arith.constant dense<0.000000e+00> : vector<512x32xf32>
    %44 = tpu.matmul %42, %43, %cst {dimension_numbers = #tpu.dot_dimension_numbers<[1], [0], [0], [1], [0, 0, 1, 1], [], []>} : vector<512x36xf32>, vector<36x32xf32>, vector<512x32xf32> -> vector<512x32xf32>
    %c511_i32_25 = arith.constant 511 : i32
    %45 = tpu.dynamic_rotate %44 by %c511_i32_25 dim 0 : vector<512x32xf32>, i32 -> vector<512x32xf32>
    %46 = arith.maximumf %44, %45 : vector<512x32xf32>
    %c496_i32_26 = arith.constant 496 : i32
    %47 = tpu.dynamic_rotate %44 by %c496_i32_26 dim 0 : vector<512x32xf32>, i32 -> vector<512x32xf32>
    %c495_i32_27 = arith.constant 495 : i32
    %48 = tpu.dynamic_rotate %44 by %c495_i32_27 dim 0 : vector<512x32xf32>, i32 -> vector<512x32xf32>
    %49 = arith.maximumf %47, %48 : vector<512x32xf32>
    %50 = arith.maximumf %46, %49 : vector<512x32xf32>
    %c0_28 = arith.constant 0 : index
    %c0_29 = arith.constant 0 : index
    %51 = vector.load %arg17[%c0_28, %c0_29] : memref<512x32xf32, #tpu.memory_space<vmem>>, vector<512x32xf32>
    tpu.vector_store %arg17[%c0_28, %c0_29], %50 {strides = array<i32>} : memref<512x32xf32, #tpu.memory_space<vmem>>, vector<512x32xf32>,
    %c0_30 = arith.constant 0 : index
    %c0_31 = arith.constant 0 : index
    %52 = tpu.strided_load %arg17[%c0_30, %c0_31] {strides = array<i32: 2, 1>} : memref<512x32xf32, #tpu.memory_space<vmem>>, vector<8x32xf32>
    %c0_32 = arith.constant 0 : index
    %c0_33 = arith.constant 0 : index
    %53 = vector.load %arg18[%c0_32, %c0_33] : memref<128x32xf32, #tpu.memory_space<vmem>>, vector<8x32xf32>
    tpu.vector_store %arg18[%c0_32, %c0_33], %52 {strides = array<i32>} : memref<128x32xf32, #tpu.memory_space<vmem>>, vector<8x32xf32>,
    %c32_34 = arith.constant 32 : index
    %c0_35 = arith.constant 0 : index
    %54 = tpu.strided_load %arg17[%c32_34, %c0_35] {strides = array<i32: 2, 1>} : memref<512x32xf32, #tpu.memory_space<vmem>>, vector<8x32xf32>
    %c8_36 = arith.constant 8 : index
    %c0_37 = arith.constant 0 : index
    %55 = vector.load %arg18[%c8_36, %c0_37] : memref<128x32xf32, #tpu.memory_space<vmem>>, vector<8x32xf32>
    tpu.vector_store %arg18[%c8_36, %c0_37], %54 {strides = array<i32>} : memref<128x32xf32, #tpu.memory_space<vmem>>, vector<8x32xf32>,
    %c64 = arith.constant 64 : index
    %c0_38 = arith.constant 0 : index
    %56 = tpu.strided_load %arg17[%c64, %c0_38] {strides = array<i32: 2, 1>} : memref<512x32xf32, #tpu.memory_space<vmem>>, vector<8x32xf32>
    %c16_39 = arith.constant 16 : index
    %c0_40 = arith.constant 0 : index
    %57 = vector.load %arg18[%c16_39, %c0_40] : memref<128x32xf32, #tpu.memory_space<vmem>>, vector<8x32xf32>
    tpu.vector_store %arg18[%c16_39, %c0_40], %56 {strides = array<i32>} : memref<128x32xf32, #tpu.memory_space<vmem>>, vector<8x32xf32>,
    %c96 = arith.constant 96 : index
    %c0_41 = arith.constant 0 : index
    %58 = tpu.strided_load %arg17[%c96, %c0_41] {strides = array<i32: 2, 1>} : memref<512x32xf32, #tpu.memory_space<vmem>>, vector<8x32xf32>
    %c24_42 = arith.constant 24 : index
    %c0_43 = arith.constant 0 : index
    %59 = vector.load %arg18[%c24_42, %c0_43] : memref<128x32xf32, #tpu.memory_space<vmem>>, vector<8x32xf32>
    tpu.vector_store %arg18[%c24_42, %c0_43], %58 {strides = array<i32>} : memref<128x32xf32, #tpu.memory_space<vmem>>, vector<8x32xf32>,
    %c128 = arith.constant 128 : index
    %c0_44 = arith.constant 0 : index
    %60 = tpu.strided_load %arg17[%c128, %c0_44] {strides = array<i32: 2, 1>} : memref<512x32xf32, #tpu.memory_space<vmem>>, vector<8x32xf32>
    %c32_45 = arith.constant 32 : index
    %c0_46 = arith.constant 0 : index
    %61 = vector.load %arg18[%c32_45, %c0_46] : memref<128x32xf32, #tpu.memory_space<vmem>>, vector<8x32xf32>
    tpu.vector_store %arg18[%c32_45, %c0_46], %60 {strides = array<i32>} : memref<128x32xf32, #tpu.memory_space<vmem>>, vector<8x32xf32>,
    %c160 = arith.constant 160 : index
    %c0_47 = arith.constant 0 : index
    %62 = tpu.strided_load %arg17[%c160, %c0_47] {strides = array<i32: 2, 1>} : memref<512x32xf32, #tpu.memory_space<vmem>>, vector<8x32xf32>
    %c40 = arith.constant 40 : index
    %c0_48 = arith.constant 0 : index
    %63 = vector.load %arg18[%c40, %c0_48] : memref<128x32xf32, #tpu.memory_space<vmem>>, vector<8x32xf32>
    tpu.vector_store %arg18[%c40, %c0_48], %62 {strides = array<i32>} : memref<128x32xf32, #tpu.memory_space<vmem>>, vector<8x32xf32>,
    %c192 = arith.constant 192 : index
    %c0_49 = arith.constant 0 : index
    %64 = tpu.strided_load %arg17[%c192, %c0_49] {strides = array<i32: 2, 1>} : memref<512x32xf32, #tpu.memory_space<vmem>>, vector<8x32xf32>
    %c48 = arith.constant 48 : index
    %c0_50 = arith.constant 0 : index
    %65 = vector.load %arg18[%c48, %c0_50] : memref<128x32xf32, #tpu.memory_space<vmem>>, vector<8x32xf32>
    tpu.vector_store %arg18[%c48, %c0_50], %64 {strides = array<i32>} : memref<128x32xf32, #tpu.memory_space<vmem>>, vector<8x32xf32>,
    %c224 = arith.constant 224 : index
    %c0_51 = arith.constant 0 : index
    %66 = tpu.strided_load %arg17[%c224, %c0_51] {strides = array<i32: 2, 1>} : memref<512x32xf32, #tpu.memory_space<vmem>>, vector<8x32xf32>
    %c56 = arith.constant 56 : index
    %c0_52 = arith.constant 0 : index
    %67 = vector.load %arg18[%c56, %c0_52] : memref<128x32xf32, #tpu.memory_space<vmem>>, vector<8x32xf32>
    tpu.vector_store %arg18[%c56, %c0_52], %66 {strides = array<i32>} : memref<128x32xf32, #tpu.memory_space<vmem>>, vector<8x32xf32>,
    %c256 = arith.constant 256 : index
    %c0_53 = arith.constant 0 : index
    %68 = tpu.strided_load %arg17[%c256, %c0_53] {strides = array<i32: 2, 1>} : memref<512x32xf32, #tpu.memory_space<vmem>>, vector<8x32xf32>
    %c64_54 = arith.constant 64 : index
    %c0_55 = arith.constant 0 : index
    %69 = vector.load %arg18[%c64_54, %c0_55] : memref<128x32xf32, #tpu.memory_space<vmem>>, vector<8x32xf32>
    tpu.vector_store %arg18[%c64_54, %c0_55], %68 {strides = array<i32>} : memref<128x32xf32, #tpu.memory_space<vmem>>, vector<8x32xf32>,
    %c288 = arith.constant 288 : index
    %c0_56 = arith.constant 0 : index
    %70 = tpu.strided_load %arg17[%c288, %c0_56] {strides = array<i32: 2, 1>} : memref<512x32xf32, #tpu.memory_space<vmem>>, vector<8x32xf32>
    %c72 = arith.constant 72 : index
    %c0_57 = arith.constant 0 : index
    %71 = vector.load %arg18[%c72, %c0_57] : memref<128x32xf32, #tpu.memory_space<vmem>>, vector<8x32xf32>
    tpu.vector_store %arg18[%c72, %c0_57], %70 {strides = array<i32>} : memref<128x32xf32, #tpu.memory_space<vmem>>, vector<8x32xf32>,
    %c320 = arith.constant 320 : index
    %c0_58 = arith.constant 0 : index
    %72 = tpu.strided_load %arg17[%c320, %c0_58] {strides = array<i32: 2, 1>} : memref<512x32xf32, #tpu.memory_space<vmem>>, vector<8x32xf32>
    %c80 = arith.constant 80 : index
    %c0_59 = arith.constant 0 : index
    %73 = vector.load %arg18[%c80, %c0_59] : memref<128x32xf32, #tpu.memory_space<vmem>>, vector<8x32xf32>
    tpu.vector_store %arg18[%c80, %c0_59], %72 {strides = array<i32>} : memref<128x32xf32, #tpu.memory_space<vmem>>, vector<8x32xf32>,
    %c352 = arith.constant 352 : index
    %c0_60 = arith.constant 0 : index
    %74 = tpu.strided_load %arg17[%c352, %c0_60] {strides = array<i32: 2, 1>} : memref<512x32xf32, #tpu.memory_space<vmem>>, vector<8x32xf32>
    %c88 = arith.constant 88 : index
    %c0_61 = arith.constant 0 : index
    %75 = vector.load %arg18[%c88, %c0_61] : memref<128x32xf32, #tpu.memory_space<vmem>>, vector<8x32xf32>
    tpu.vector_store %arg18[%c88, %c0_61], %74 {strides = array<i32>} : memref<128x32xf32, #tpu.memory_space<vmem>>, vector<8x32xf32>,
    %c384 = arith.constant 384 : index
    %c0_62 = arith.constant 0 : index
    %76 = tpu.strided_load %arg17[%c384, %c0_62] {strides = array<i32: 2, 1>} : memref<512x32xf32, #tpu.memory_space<vmem>>, vector<8x32xf32>
    %c96_63 = arith.constant 96 : index
    %c0_64 = arith.constant 0 : index
    %77 = vector.load %arg18[%c96_63, %c0_64] : memref<128x32xf32, #tpu.memory_space<vmem>>, vector<8x32xf32>
    tpu.vector_store %arg18[%c96_63, %c0_64], %76 {strides = array<i32>} : memref<128x32xf32, #tpu.memory_space<vmem>>, vector<8x32xf32>,
    %c416 = arith.constant 416 : index
    %c0_65 = arith.constant 0 : index
    %78 = tpu.strided_load %arg17[%c416, %c0_65] {strides = array<i32: 2, 1>} : memref<512x32xf32, #tpu.memory_space<vmem>>, vector<8x32xf32>
    %c104 = arith.constant 104 : index
    %c0_66 = arith.constant 0 : index
    %79 = vector.load %arg18[%c104, %c0_66] : memref<128x32xf32, #tpu.memory_space<vmem>>, vector<8x32xf32>
    tpu.vector_store %arg18[%c104, %c0_66], %78 {strides = array<i32>} : memref<128x32xf32, #tpu.memory_space<vmem>>, vector<8x32xf32>,
    %c448 = arith.constant 448 : index
    %c0_67 = arith.constant 0 : index
    %80 = tpu.strided_load %arg17[%c448, %c0_67] {strides = array<i32: 2, 1>} : memref<512x32xf32, #tpu.memory_space<vmem>>, vector<8x32xf32>
    %c112 = arith.constant 112 : index
    %c0_68 = arith.constant 0 : index
    %81 = vector.load %arg18[%c112, %c0_68] : memref<128x32xf32, #tpu.memory_space<vmem>>, vector<8x32xf32>
    tpu.vector_store %arg18[%c112, %c0_68], %80 {strides = array<i32>} : memref<128x32xf32, #tpu.memory_space<vmem>>, vector<8x32xf32>,
    %c480 = arith.constant 480 : index
    %c0_69 = arith.constant 0 : index
    %82 = tpu.strided_load %arg17[%c480, %c0_69] {strides = array<i32: 2, 1>} : memref<512x32xf32, #tpu.memory_space<vmem>>, vector<8x32xf32>
    %c120 = arith.constant 120 : index
    %c0_70 = arith.constant 0 : index
    %83 = vector.load %arg18[%c120, %c0_70] : memref<128x32xf32, #tpu.memory_space<vmem>>, vector<8x32xf32>
    tpu.vector_store %arg18[%c120, %c0_70], %82 {strides = array<i32>} : memref<128x32xf32, #tpu.memory_space<vmem>>, vector<8x32xf32>,
    %c0_71 = arith.constant 0 : index
    %c0_72 = arith.constant 0 : index
    %84 = vector.load %arg18[%c0_71, %c0_72] : memref<128x32xf32, #tpu.memory_space<vmem>>, vector<128x32xf32>
    %c0_73 = arith.constant 0 : index
    %c0_74 = arith.constant 0 : index
    %85 = vector.load %arg6[%c0_73, %c0_74] : memref<1x32xf32, #tpu.memory_space<vmem>>, vector<1x32xf32>
    %86 = vector.broadcast %85 : vector<1x32xf32> to vector<128x32xf32>
    %87 = arith.addf %84, %86 : vector<128x32xf32>
    %cst_75 = arith.constant 0.000000e+00 : f32
    %88 = vector.broadcast %cst_75 : f32 to vector<128x32xf32>
    %89 = arith.maximumf %87, %88 : vector<128x32xf32>
    %c9_i32 = arith.constant 9 : i32
    %90 = tpu.dynamic_rotate %89 by %c9_i32 dim 0 : vector<128x32xf32>, i32 -> vector<128x32xf32>
    %c0_76 = arith.constant 0 : index
    %c0_77 = arith.constant 0 : index
    %91 = vector.load %arg3[%c0_76, %c0_77] : memref<128x9xf32, #tpu.memory_space<vmem>>, vector<128x1xf32>
    %92 = vector.broadcast %91 : vector<128x1xf32> to vector<128x32xf32>
    %93 = arith.mulf %90, %92 : vector<128x32xf32>
    %c0_78 = arith.constant 0 : index
    %c0_79 = arith.constant 0 : index
    %94 = vector.load %arg19[%c0_78, %c0_79] : memref<128x288xf32, #tpu.memory_space<vmem>>, vector<128x32xf32>
    tpu.vector_store %arg19[%c0_78, %c0_79], %93 {strides = array<i32>} : memref<128x288xf32, #tpu.memory_space<vmem>>, vector<128x32xf32>,
    %c8_i32 = arith.constant 8 : i32
    %95 = tpu.dynamic_rotate %89 by %c8_i32 dim 0 : vector<128x32xf32>, i32 -> vector<128x32xf32>
    %c0_80 = arith.constant 0 : index
    %c1_81 = arith.constant 1 : index
    %96 = vector.load %arg3[%c0_80, %c1_81] : memref<128x9xf32, #tpu.memory_space<vmem>>, vector<128x1xf32>
    %97 = vector.broadcast %96 : vector<128x1xf32> to vector<128x32xf32>
    %98 = arith.mulf %95, %97 : vector<128x32xf32>
    %c0_82 = arith.constant 0 : index
    %c32_83 = arith.constant 32 : index
    %99 = vector.load %arg19[%c0_82, %c32_83] : memref<128x288xf32, #tpu.memory_space<vmem>>, vector<128x32xf32>
    tpu.vector_store %arg19[%c0_82, %c32_83], %98 {strides = array<i32>} : memref<128x288xf32, #tpu.memory_space<vmem>>, vector<128x32xf32>,
    %c7_i32 = arith.constant 7 : i32
    %100 = tpu.dynamic_rotate %89 by %c7_i32 dim 0 : vector<128x32xf32>, i32 -> vector<128x32xf32>
    %c0_84 = arith.constant 0 : index
    %c2_85 = arith.constant 2 : index
    %101 = vector.load %arg3[%c0_84, %c2_85] : memref<128x9xf32, #tpu.memory_space<vmem>>, vector<128x1xf32>
    %102 = vector.broadcast %101 : vector<128x1xf32> to vector<128x32xf32>
    %103 = arith.mulf %100, %102 : vector<128x32xf32>
    %c0_86 = arith.constant 0 : index
    %c64_87 = arith.constant 64 : index
    %104 = vector.load %arg19[%c0_86, %c64_87] : memref<128x288xf32, #tpu.memory_space<vmem>>, vector<128x32xf32>
    tpu.vector_store %arg19[%c0_86, %c64_87], %103 {strides = array<i32>} : memref<128x288xf32, #tpu.memory_space<vmem>>, vector<128x32xf32>,
    %c1_i32_88 = arith.constant 1 : i32
    %105 = tpu.dynamic_rotate %89 by %c1_i32_88 dim 0 : vector<128x32xf32>, i32 -> vector<128x32xf32>
    %c0_89 = arith.constant 0 : index
    %c3_90 = arith.constant 3 : index
    %106 = vector.load %arg3[%c0_89, %c3_90] : memref<128x9xf32, #tpu.memory_space<vmem>>, vector<128x1xf32>
    %107 = vector.broadcast %106 : vector<128x1xf32> to vector<128x32xf32>
    %108 = arith.mulf %105, %107 : vector<128x32xf32>
    %c0_91 = arith.constant 0 : index
    %c96_92 = arith.constant 96 : index
    %109 = vector.load %arg19[%c0_91, %c96_92] : memref<128x288xf32, #tpu.memory_space<vmem>>, vector<128x32xf32>
    tpu.vector_store %arg19[%c0_91, %c96_92], %108 {strides = array<i32>} : memref<128x288xf32, #tpu.memory_space<vmem>>, vector<128x32xf32>,
    %c0_93 = arith.constant 0 : index
    %c128_94 = arith.constant 128 : index
    %110 = vector.load %arg19[%c0_93, %c128_94] : memref<128x288xf32, #tpu.memory_space<vmem>>, vector<128x32xf32>
    tpu.vector_store %arg19[%c0_93, %c128_94], %89 {strides = array<i32>} : memref<128x288xf32, #tpu.memory_space<vmem>>, vector<128x32xf32>,
    %c127_i32 = arith.constant 127 : i32
    %111 = tpu.dynamic_rotate %89 by %c127_i32 dim 0 : vector<128x32xf32>, i32 -> vector<128x32xf32>
    %c0_95 = arith.constant 0 : index
    %c5_96 = arith.constant 5 : index
    %112 = vector.load %arg3[%c0_95, %c5_96] : memref<128x9xf32, #tpu.memory_space<vmem>>, vector<128x1xf32>
    %113 = vector.broadcast %112 : vector<128x1xf32> to vector<128x32xf32>
    %114 = arith.mulf %111, %113 : vector<128x32xf32>
    %c0_97 = arith.constant 0 : index
    %c160_98 = arith.constant 160 : index
    %115 = vector.load %arg19[%c0_97, %c160_98] : memref<128x288xf32, #tpu.memory_space<vmem>>, vector<128x32xf32>
    tpu.vector_store %arg19[%c0_97, %c160_98], %114 {strides = array<i32>} : memref<128x288xf32, #tpu.memory_space<vmem>>, vector<128x32xf32>,
    %c121_i32 = arith.constant 121 : i32
    %116 = tpu.dynamic_rotate %89 by %c121_i32 dim 0 : vector<128x32xf32>, i32 -> vector<128x32xf32>
    %c0_99 = arith.constant 0 : index
    %c6_100 = arith.constant 6 : index
    %117 = vector.load %arg3[%c0_99, %c6_100] : memref<128x9xf32, #tpu.memory_space<vmem>>, vector<128x1xf32>
    %118 = vector.broadcast %117 : vector<128x1xf32> to vector<128x32xf32>
    %119 = arith.mulf %116, %118 : vector<128x32xf32>
    %c0_101 = arith.constant 0 : index
    %c192_102 = arith.constant 192 : index
    %120 = vector.load %arg19[%c0_101, %c192_102] : memref<128x288xf32, #tpu.memory_space<vmem>>, vector<128x32xf32>
    tpu.vector_store %arg19[%c0_101, %c192_102], %119 {strides = array<i32>} : memref<128x288xf32, #tpu.memory_space<vmem>>, vector<128x32xf32>,
    %c120_i32 = arith.constant 120 : i32
    %121 = tpu.dynamic_rotate %89 by %c120_i32 dim 0 : vector<128x32xf32>, i32 -> vector<128x32xf32>
    %c0_103 = arith.constant 0 : index
    %c7_104 = arith.constant 7 : index
    %122 = vector.load %arg3[%c0_103, %c7_104] : memref<128x9xf32, #tpu.memory_space<vmem>>, vector<128x1xf32>
    %123 = vector.broadcast %122 : vector<128x1xf32> to vector<128x32xf32>
    %124 = arith.mulf %121, %123 : vector<128x32xf32>
    %c0_105 = arith.constant 0 : index
    %c224_106 = arith.constant 224 : index
    %125 = vector.load %arg19[%c0_105, %c224_106] : memref<128x288xf32, #tpu.memory_space<vmem>>, vector<128x32xf32>
    tpu.vector_store %arg19[%c0_105, %c224_106], %124 {strides = array<i32>} : memref<128x288xf32, #tpu.memory_space<vmem>>, vector<128x32xf32>,
    %c119_i32 = arith.constant 119 : i32
    %126 = tpu.dynamic_rotate %89 by %c119_i32 dim 0 : vector<128x32xf32>, i32 -> vector<128x32xf32>
    %c0_107 = arith.constant 0 : index
    %c8_108 = arith.constant 8 : index
    %127 = vector.load %arg3[%c0_107, %c8_108] : memref<128x9xf32, #tpu.memory_space<vmem>>, vector<128x1xf32>
    %128 = vector.broadcast %127 : vector<128x1xf32> to vector<128x32xf32>
    %129 = arith.mulf %126, %128 : vector<128x32xf32>
    %c0_109 = arith.constant 0 : index
    %c256_110 = arith.constant 256 : index
    %130 = vector.load %arg19[%c0_109, %c256_110] : memref<128x288xf32, #tpu.memory_space<vmem>>, vector<128x32xf32>
    tpu.vector_store %arg19[%c0_109, %c256_110], %129 {strides = array<i32>} : memref<128x288xf32, #tpu.memory_space<vmem>>, vector<128x32xf32>,
    %c0_111 = arith.constant 0 : index
    %c0_112 = arith.constant 0 : index
    %131 = vector.load %arg19[%c0_111, %c0_112] : memref<128x288xf32, #tpu.memory_space<vmem>>, vector<128x288xf32>
    %c0_113 = arith.constant 0 : index
    %c0_114 = arith.constant 0 : index
    %132 = vector.load %arg7[%c0_113, %c0_114] : memref<288x64xf32, #tpu.memory_space<vmem>>, vector<288x64xf32>
    %cst_115 = arith.constant dense<0.000000e+00> : vector<128x64xf32>
    %133 = tpu.matmul %131, %132, %cst_115 {dimension_numbers = #tpu.dot_dimension_numbers<[1], [0], [0], [1], [0, 0, 1, 1], [], []>} : vector<128x288xf32>, vector<288x64xf32>, vector<128x64xf32> -> vector<128x64xf32>
    %c127_i32_116 = arith.constant 127 : i32
    %134 = tpu.dynamic_rotate %133 by %c127_i32_116 dim 0 : vector<128x64xf32>, i32 -> vector<128x64xf32>
    %135 = arith.maximumf %133, %134 : vector<128x64xf32>
    %c120_i32_117 = arith.constant 120 : i32
    %136 = tpu.dynamic_rotate %133 by %c120_i32_117 dim 0 : vector<128x64xf32>, i32 -> vector<128x64xf32>
    %c119_i32_118 = arith.constant 119 : i32
    %137 = tpu.dynamic_rotate %133 by %c119_i32_118 dim 0 : vector<128x64xf32>, i32 -> vector<128x64xf32>
    %138 = arith.maximumf %136, %137 : vector<128x64xf32>
    %139 = arith.maximumf %135, %138 : vector<128x64xf32>
    %c0_119 = arith.constant 0 : index
    %c0_120 = arith.constant 0 : index
    %140 = vector.load %arg20[%c0_119, %c0_120] : memref<128x64xf32, #tpu.memory_space<vmem>>, vector<128x64xf32>
    tpu.vector_store %arg20[%c0_119, %c0_120], %139 {strides = array<i32>} : memref<128x64xf32, #tpu.memory_space<vmem>>, vector<128x64xf32>,
    %c0_121 = arith.constant 0 : index
    %c0_122 = arith.constant 0 : index
    %141 = tpu.strided_load %arg20[%c0_121, %c0_122] {strides = array<i32: 2, 1>} : memref<128x64xf32, #tpu.memory_space<vmem>>, vector<4x64xf32>
    %c0_123 = arith.constant 0 : index
    %c0_124 = arith.constant 0 : index
    %142 = vector.load %arg21[%c0_123, %c0_124] : memref<32x64xf32, #tpu.memory_space<vmem>>, vector<4x64xf32>
    tpu.vector_store %arg21[%c0_123, %c0_124], %141 {strides = array<i32>} : memref<32x64xf32, #tpu.memory_space<vmem>>, vector<4x64xf32>,
    %c16_125 = arith.constant 16 : index
    %c0_126 = arith.constant 0 : index
    %143 = tpu.strided_load %arg20[%c16_125, %c0_126] {strides = array<i32: 2, 1>} : memref<128x64xf32, #tpu.memory_space<vmem>>, vector<4x64xf32>
    %c4_127 = arith.constant 4 : index
    %c0_128 = arith.constant 0 : index
    %144 = vector.load %arg21[%c4_127, %c0_128] : memref<32x64xf32, #tpu.memory_space<vmem>>, vector<4x64xf32>
    tpu.vector_store %arg21[%c4_127, %c0_128], %143 {strides = array<i32>} : memref<32x64xf32, #tpu.memory_space<vmem>>, vector<4x64xf32>,
    %c32_129 = arith.constant 32 : index
    %c0_130 = arith.constant 0 : index
    %145 = tpu.strided_load %arg20[%c32_129, %c0_130] {strides = array<i32: 2, 1>} : memref<128x64xf32, #tpu.memory_space<vmem>>, vector<4x64xf32>
    %c8_131 = arith.constant 8 : index
    %c0_132 = arith.constant 0 : index
    %146 = vector.load %arg21[%c8_131, %c0_132] : memref<32x64xf32, #tpu.memory_space<vmem>>, vector<4x64xf32>
    tpu.vector_store %arg21[%c8_131, %c0_132], %145 {strides = array<i32>} : memref<32x64xf32, #tpu.memory_space<vmem>>, vector<4x64xf32>,
    %c48_133 = arith.constant 48 : index
    %c0_134 = arith.constant 0 : index
    %147 = tpu.strided_load %arg20[%c48_133, %c0_134] {strides = array<i32: 2, 1>} : memref<128x64xf32, #tpu.memory_space<vmem>>, vector<4x64xf32>
    %c12_135 = arith.constant 12 : index
    %c0_136 = arith.constant 0 : index
    %148 = vector.load %arg21[%c12_135, %c0_136] : memref<32x64xf32, #tpu.memory_space<vmem>>, vector<4x64xf32>
    tpu.vector_store %arg21[%c12_135, %c0_136], %147 {strides = array<i32>} : memref<32x64xf32, #tpu.memory_space<vmem>>, vector<4x64xf32>,
    %c64_137 = arith.constant 64 : index
    %c0_138 = arith.constant 0 : index
    %149 = tpu.strided_load %arg20[%c64_137, %c0_138] {strides = array<i32: 2, 1>} : memref<128x64xf32, #tpu.memory_space<vmem>>, vector<4x64xf32>
    %c16_139 = arith.constant 16 : index
    %c0_140 = arith.constant 0 : index
    %150 = vector.load %arg21[%c16_139, %c0_140] : memref<32x64xf32, #tpu.memory_space<vmem>>, vector<4x64xf32>
    tpu.vector_store %arg21[%c16_139, %c0_140], %149 {strides = array<i32>} : memref<32x64xf32, #tpu.memory_space<vmem>>, vector<4x64xf32>,
    %c80_141 = arith.constant 80 : index
    %c0_142 = arith.constant 0 : index
    %151 = tpu.strided_load %arg20[%c80_141, %c0_142] {strides = array<i32: 2, 1>} : memref<128x64xf32, #tpu.memory_space<vmem>>, vector<4x64xf32>
    %c20_143 = arith.constant 20 : index
    %c0_144 = arith.constant 0 : index
    %152 = vector.load %arg21[%c20_143, %c0_144] : memref<32x64xf32, #tpu.memory_space<vmem>>, vector<4x64xf32>
    tpu.vector_store %arg21[%c20_143, %c0_144], %151 {strides = array<i32>} : memref<32x64xf32, #tpu.memory_space<vmem>>, vector<4x64xf32>,
    %c96_145 = arith.constant 96 : index
    %c0_146 = arith.constant 0 : index
    %153 = tpu.strided_load %arg20[%c96_145, %c0_146] {strides = array<i32: 2, 1>} : memref<128x64xf32, #tpu.memory_space<vmem>>, vector<4x64xf32>
    %c24_147 = arith.constant 24 : index
    %c0_148 = arith.constant 0 : index
    %154 = vector.load %arg21[%c24_147, %c0_148] : memref<32x64xf32, #tpu.memory_space<vmem>>, vector<4x64xf32>
    tpu.vector_store %arg21[%c24_147, %c0_148], %153 {strides = array<i32>} : memref<32x64xf32, #tpu.memory_space<vmem>>, vector<4x64xf32>,
    %c112_149 = arith.constant 112 : index
    %c0_150 = arith.constant 0 : index
    %155 = tpu.strided_load %arg20[%c112_149, %c0_150] {strides = array<i32: 2, 1>} : memref<128x64xf32, #tpu.memory_space<vmem>>, vector<4x64xf32>
    %c28_151 = arith.constant 28 : index
    %c0_152 = arith.constant 0 : index
    %156 = vector.load %arg21[%c28_151, %c0_152] : memref<32x64xf32, #tpu.memory_space<vmem>>, vector<4x64xf32>
    tpu.vector_store %arg21[%c28_151, %c0_152], %155 {strides = array<i32>} : memref<32x64xf32, #tpu.memory_space<vmem>>, vector<4x64xf32>,
    %c0_153 = arith.constant 0 : index
    %c0_154 = arith.constant 0 : index
    %157 = vector.load %arg21[%c0_153, %c0_154] : memref<32x64xf32, #tpu.memory_space<vmem>>, vector<32x64xf32>
    %c0_155 = arith.constant 0 : index
    %c0_156 = arith.constant 0 : index
    %158 = vector.load %arg8[%c0_155, %c0_156] : memref<1x64xf32, #tpu.memory_space<vmem>>, vector<1x64xf32>
    %159 = vector.broadcast %158 : vector<1x64xf32> to vector<32x64xf32>
    %160 = arith.addf %157, %159 : vector<32x64xf32>
    %cst_157 = arith.constant 0.000000e+00 : f32
    %161 = vector.broadcast %cst_157 : f32 to vector<32x64xf32>
    %162 = arith.maximumf %160, %161 : vector<32x64xf32>
    %c5_i32 = arith.constant 5 : i32
    %163 = tpu.dynamic_rotate %162 by %c5_i32 dim 0 : vector<32x64xf32>, i32 -> vector<32x64xf32>
    %c0_158 = arith.constant 0 : index
    %c0_159 = arith.constant 0 : index
    %164 = vector.load %arg4[%c0_158, %c0_159] : memref<32x9xf32, #tpu.memory_space<vmem>>, vector<32x1xf32>
    %165 = vector.broadcast %164 : vector<32x1xf32> to vector<32x64xf32>
    %166 = arith.mulf %163, %165 : vector<32x64xf32>
    %c0_160 = arith.constant 0 : index
    %c0_161 = arith.constant 0 : index
    %167 = vector.load %arg22[%c0_160, %c0_161] : memref<32x576xf32, #tpu.memory_space<vmem>>, vector<32x64xf32>
    tpu.vector_store %arg22[%c0_160, %c0_161], %166 {strides = array<i32>} : memref<32x576xf32, #tpu.memory_space<vmem>>, vector<32x64xf32>,
    %c4_i32 = arith.constant 4 : i32
    %168 = tpu.dynamic_rotate %162 by %c4_i32 dim 0 : vector<32x64xf32>, i32 -> vector<32x64xf32>
    %c0_162 = arith.constant 0 : index
    %c1_163 = arith.constant 1 : index
    %169 = vector.load %arg4[%c0_162, %c1_163] : memref<32x9xf32, #tpu.memory_space<vmem>>, vector<32x1xf32>
    %170 = vector.broadcast %169 : vector<32x1xf32> to vector<32x64xf32>
    %171 = arith.mulf %168, %170 : vector<32x64xf32>
    %c0_164 = arith.constant 0 : index
    %c64_165 = arith.constant 64 : index
    %172 = vector.load %arg22[%c0_164, %c64_165] : memref<32x576xf32, #tpu.memory_space<vmem>>, vector<32x64xf32>
    tpu.vector_store %arg22[%c0_164, %c64_165], %171 {strides = array<i32>} : memref<32x576xf32, #tpu.memory_space<vmem>>, vector<32x64xf32>,
    %c3_i32 = arith.constant 3 : i32
    %173 = tpu.dynamic_rotate %162 by %c3_i32 dim 0 : vector<32x64xf32>, i32 -> vector<32x64xf32>
    %c0_166 = arith.constant 0 : index
    %c2_167 = arith.constant 2 : index
    %174 = vector.load %arg4[%c0_166, %c2_167] : memref<32x9xf32, #tpu.memory_space<vmem>>, vector<32x1xf32>
    %175 = vector.broadcast %174 : vector<32x1xf32> to vector<32x64xf32>
    %176 = arith.mulf %173, %175 : vector<32x64xf32>
    %c0_168 = arith.constant 0 : index
    %c128_169 = arith.constant 128 : index
    %177 = vector.load %arg22[%c0_168, %c128_169] : memref<32x576xf32, #tpu.memory_space<vmem>>, vector<32x64xf32>
    tpu.vector_store %arg22[%c0_168, %c128_169], %176 {strides = array<i32>} : memref<32x576xf32, #tpu.memory_space<vmem>>, vector<32x64xf32>,
    %c1_i32_170 = arith.constant 1 : i32
    %178 = tpu.dynamic_rotate %162 by %c1_i32_170 dim 0 : vector<32x64xf32>, i32 -> vector<32x64xf32>
    %c0_171 = arith.constant 0 : index
    %c3_172 = arith.constant 3 : index
    %179 = vector.load %arg4[%c0_171, %c3_172] : memref<32x9xf32, #tpu.memory_space<vmem>>, vector<32x1xf32>
    %180 = vector.broadcast %179 : vector<32x1xf32> to vector<32x64xf32>
    %181 = arith.mulf %178, %180 : vector<32x64xf32>
    %c0_173 = arith.constant 0 : index
    %c192_174 = arith.constant 192 : index
    %182 = vector.load %arg22[%c0_173, %c192_174] : memref<32x576xf32, #tpu.memory_space<vmem>>, vector<32x64xf32>
    tpu.vector_store %arg22[%c0_173, %c192_174], %181 {strides = array<i32>} : memref<32x576xf32, #tpu.memory_space<vmem>>, vector<32x64xf32>,
    %c0_175 = arith.constant 0 : index
    %c256_176 = arith.constant 256 : index
    %183 = vector.load %arg22[%c0_175, %c256_176] : memref<32x576xf32, #tpu.memory_space<vmem>>, vector<32x64xf32>
    tpu.vector_store %arg22[%c0_175, %c256_176], %162 {strides = array<i32>} : memref<32x576xf32, #tpu.memory_space<vmem>>, vector<32x64xf32>,
    %c31_i32 = arith.constant 31 : i32
    %184 = tpu.dynamic_rotate %162 by %c31_i32 dim 0 : vector<32x64xf32>, i32 -> vector<32x64xf32>
    %c0_177 = arith.constant 0 : index
    %c5_178 = arith.constant 5 : index
    %185 = vector.load %arg4[%c0_177, %c5_178] : memref<32x9xf32, #tpu.memory_space<vmem>>, vector<32x1xf32>
    %186 = vector.broadcast %185 : vector<32x1xf32> to vector<32x64xf32>
    %187 = arith.mulf %184, %186 : vector<32x64xf32>
    %c0_179 = arith.constant 0 : index
    %c320_180 = arith.constant 320 : index
    %188 = vector.load %arg22[%c0_179, %c320_180] : memref<32x576xf32, #tpu.memory_space<vmem>>, vector<32x64xf32>
    tpu.vector_store %arg22[%c0_179, %c320_180], %187 {strides = array<i32>} : memref<32x576xf32, #tpu.memory_space<vmem>>, vector<32x64xf32>,
    %c29_i32 = arith.constant 29 : i32
    %189 = tpu.dynamic_rotate %162 by %c29_i32 dim 0 : vector<32x64xf32>, i32 -> vector<32x64xf32>
    %c0_181 = arith.constant 0 : index
    %c6_182 = arith.constant 6 : index
    %190 = vector.load %arg4[%c0_181, %c6_182] : memref<32x9xf32, #tpu.memory_space<vmem>>, vector<32x1xf32>
    %191 = vector.broadcast %190 : vector<32x1xf32> to vector<32x64xf32>
    %192 = arith.mulf %189, %191 : vector<32x64xf32>
    %c0_183 = arith.constant 0 : index
    %c384_184 = arith.constant 384 : index
    %193 = vector.load %arg22[%c0_183, %c384_184] : memref<32x576xf32, #tpu.memory_space<vmem>>, vector<32x64xf32>
    tpu.vector_store %arg22[%c0_183, %c384_184], %192 {strides = array<i32>} : memref<32x576xf32, #tpu.memory_space<vmem>>, vector<32x64xf32>,
    %c28_i32 = arith.constant 28 : i32
    %194 = tpu.dynamic_rotate %162 by %c28_i32 dim 0 : vector<32x64xf32>, i32 -> vector<32x64xf32>
    %c0_185 = arith.constant 0 : index
    %c7_186 = arith.constant 7 : index
    %195 = vector.load %arg4[%c0_185, %c7_186] : memref<32x9xf32, #tpu.memory_space<vmem>>, vector<32x1xf32>
    %196 = vector.broadcast %195 : vector<32x1xf32> to vector<32x64xf32>
    %197 = arith.mulf %194, %196 : vector<32x64xf32>
    %c0_187 = arith.constant 0 : index
    %c448_188 = arith.constant 448 : index
    %198 = vector.load %arg22[%c0_187, %c448_188] : memref<32x576xf32, #tpu.memory_space<vmem>>, vector<32x64xf32>
    tpu.vector_store %arg22[%c0_187, %c448_188], %197 {strides = array<i32>} : memref<32x576xf32, #tpu.memory_space<vmem>>, vector<32x64xf32>,
    %c27_i32 = arith.constant 27 : i32
    %199 = tpu.dynamic_rotate %162 by %c27_i32 dim 0 : vector<32x64xf32>, i32 -> vector<32x64xf32>
    %c0_189 = arith.constant 0 : index
    %c8_190 = arith.constant 8 : index
    %200 = vector.load %arg4[%c0_189, %c8_190] : memref<32x9xf32, #tpu.memory_space<vmem>>, vector<32x1xf32>
    %201 = vector.broadcast %200 : vector<32x1xf32> to vector<32x64xf32>
    %202 = arith.mulf %199, %201 : vector<32x64xf32>
    %c0_191 = arith.constant 0 : index
    %c512 = arith.constant 512 : index
    %203 = vector.load %arg22[%c0_191, %c512] : memref<32x576xf32, #tpu.memory_space<vmem>>, vector<32x64xf32>
    tpu.vector_store %arg22[%c0_191, %c512], %202 {strides = array<i32>} : memref<32x576xf32, #tpu.memory_space<vmem>>, vector<32x64xf32>,
    %c0_192 = arith.constant 0 : index
    %c0_193 = arith.constant 0 : index
    %204 = vector.load %arg22[%c0_192, %c0_193] : memref<32x576xf32, #tpu.memory_space<vmem>>, vector<32x576xf32>
    %c0_194 = arith.constant 0 : index
    %c0_195 = arith.constant 0 : index
    %205 = vector.load %arg9[%c0_194, %c0_195] : memref<576x64xf32, #tpu.memory_space<vmem>>, vector<576x64xf32>
    %cst_196 = arith.constant dense<0.000000e+00> : vector<32x64xf32>
    %206 = tpu.matmul %204, %205, %cst_196 {dimension_numbers = #tpu.dot_dimension_numbers<[1], [0], [0], [1], [0, 0, 1, 1], [], []>} : vector<32x576xf32>, vector<576x64xf32>, vector<32x64xf32> -> vector<32x64xf32>
    %c31_i32_197 = arith.constant 31 : i32
    %207 = tpu.dynamic_rotate %206 by %c31_i32_197 dim 0 : vector<32x64xf32>, i32 -> vector<32x64xf32>
    %208 = arith.maximumf %206, %207 : vector<32x64xf32>
    %c28_i32_198 = arith.constant 28 : i32
    %209 = tpu.dynamic_rotate %206 by %c28_i32_198 dim 0 : vector<32x64xf32>, i32 -> vector<32x64xf32>
    %c27_i32_199 = arith.constant 27 : i32
    %210 = tpu.dynamic_rotate %206 by %c27_i32_199 dim 0 : vector<32x64xf32>, i32 -> vector<32x64xf32>
    %211 = arith.maximumf %209, %210 : vector<32x64xf32>
    %212 = arith.maximumf %208, %211 : vector<32x64xf32>
    %c0_200 = arith.constant 0 : index
    %c0_201 = arith.constant 0 : index
    %213 = vector.load %arg23[%c0_200, %c0_201] : memref<32x64xf32, #tpu.memory_space<vmem>>, vector<32x64xf32>
    tpu.vector_store %arg23[%c0_200, %c0_201], %212 {strides = array<i32>} : memref<32x64xf32, #tpu.memory_space<vmem>>, vector<32x64xf32>,
    %c0_202 = arith.constant 0 : index
    %c0_203 = arith.constant 0 : index
    %214 = tpu.strided_load %arg23[%c0_202, %c0_203] {strides = array<i32: 16, 1>} : memref<32x64xf32, #tpu.memory_space<vmem>>, vector<2x64xf32>
    %c0_204 = arith.constant 0 : index
    %c0_205 = arith.constant 0 : index
    %215 = vector.load %arg24[%c0_204, %c0_205] : memref<2x256xf32, #tpu.memory_space<vmem>>, vector<2x64xf32>
    tpu.vector_store %arg24[%c0_204, %c0_205], %214 {strides = array<i32>} : memref<2x256xf32, #tpu.memory_space<vmem>>, vector<2x64xf32>,
    %c2_206 = arith.constant 2 : index
    %c0_207 = arith.constant 0 : index
    %216 = tpu.strided_load %arg23[%c2_206, %c0_207] {strides = array<i32: 16, 1>} : memref<32x64xf32, #tpu.memory_space<vmem>>, vector<2x64xf32>
    %c0_208 = arith.constant 0 : index
    %c64_209 = arith.constant 64 : index
    %217 = vector.load %arg24[%c0_208, %c64_209] : memref<2x256xf32, #tpu.memory_space<vmem>>, vector<2x64xf32>
    tpu.vector_store %arg24[%c0_208, %c64_209], %216 {strides = array<i32>} : memref<2x256xf32, #tpu.memory_space<vmem>>, vector<2x64xf32>,
    %c8_210 = arith.constant 8 : index
    %c0_211 = arith.constant 0 : index
    %218 = tpu.strided_load %arg23[%c8_210, %c0_211] {strides = array<i32: 16, 1>} : memref<32x64xf32, #tpu.memory_space<vmem>>, vector<2x64xf32>
    %c0_212 = arith.constant 0 : index
    %c128_213 = arith.constant 128 : index
    %219 = vector.load %arg24[%c0_212, %c128_213] : memref<2x256xf32, #tpu.memory_space<vmem>>, vector<2x64xf32>
    tpu.vector_store %arg24[%c0_212, %c128_213], %218 {strides = array<i32>} : memref<2x256xf32, #tpu.memory_space<vmem>>, vector<2x64xf32>,
    %c10 = arith.constant 10 : index
    %c0_214 = arith.constant 0 : index
    %220 = tpu.strided_load %arg23[%c10, %c0_214] {strides = array<i32: 16, 1>} : memref<32x64xf32, #tpu.memory_space<vmem>>, vector<2x64xf32>
    %c0_215 = arith.constant 0 : index
    %c192_216 = arith.constant 192 : index
    %221 = vector.load %arg24[%c0_215, %c192_216] : memref<2x256xf32, #tpu.memory_space<vmem>>, vector<2x64xf32>
    tpu.vector_store %arg24[%c0_215, %c192_216], %220 {strides = array<i32>} : memref<2x256xf32, #tpu.memory_space<vmem>>, vector<2x64xf32>,
    %c0_217 = arith.constant 0 : index
    %c0_218 = arith.constant 0 : index
    %222 = vector.load %arg24[%c0_217, %c0_218] : memref<2x256xf32, #tpu.memory_space<vmem>>, vector<2x256xf32>
    %c0_219 = arith.constant 0 : index
    %c0_220 = arith.constant 0 : index
    %223 = vector.load %arg10[%c0_219, %c0_220] : memref<1x256xf32, #tpu.memory_space<vmem>>, vector<1x256xf32>
    %224 = vector.broadcast %223 : vector<1x256xf32> to vector<2x256xf32>
    %225 = arith.addf %222, %224 : vector<2x256xf32>
    %cst_221 = arith.constant 0.000000e+00 : f32
    %226 = vector.broadcast %cst_221 : f32 to vector<2x256xf32>
    %227 = arith.maximumf %225, %226 : vector<2x256xf32>
    %c0_222 = arith.constant 0 : index
    %c0_223 = arith.constant 0 : index
    %228 = vector.load %arg11[%c0_222, %c0_223] : memref<256x256xf32, #tpu.memory_space<vmem>>, vector<256x256xf32>
    %cst_224 = arith.constant dense<0.000000e+00> : vector<2x256xf32>
    %229 = tpu.matmul %227, %228, %cst_224 {dimension_numbers = #tpu.dot_dimension_numbers<[1], [0], [0], [1], [0, 0, 1, 1], [], []>} : vector<2x256xf32>, vector<256x256xf32>, vector<2x256xf32> -> vector<2x256xf32>
    %c0_225 = arith.constant 0 : index
    %c0_226 = arith.constant 0 : index
    %230 = vector.load %arg12[%c0_225, %c0_226] : memref<1x256xf32, #tpu.memory_space<vmem>>, vector<1x256xf32>
    %231 = vector.broadcast %230 : vector<1x256xf32> to vector<2x256xf32>
    %232 = arith.addf %229, %231 : vector<2x256xf32>
    %cst_227 = arith.constant 0.000000e+00 : f32
    %233 = vector.broadcast %cst_227 : f32 to vector<2x256xf32>
    %234 = arith.maximumf %232, %233 : vector<2x256xf32>
    %c0_228 = arith.constant 0 : index
    %c0_229 = arith.constant 0 : index
    %235 = vector.load %arg13[%c0_228, %c0_229] : memref<256x128xf32, #tpu.memory_space<vmem>>, vector<256x128xf32>
    %cst_230 = arith.constant dense<0.000000e+00> : vector<2x128xf32>
    %236 = tpu.matmul %234, %235, %cst_230 {dimension_numbers = #tpu.dot_dimension_numbers<[1], [0], [0], [1], [0, 0, 1, 1], [], []>} : vector<2x256xf32>, vector<256x128xf32>, vector<2x128xf32> -> vector<2x128xf32>
    %c0_231 = arith.constant 0 : index
    %c0_232 = arith.constant 0 : index
    %237 = vector.load %arg14[%c0_231, %c0_232] : memref<1x128xf32, #tpu.memory_space<vmem>>, vector<1x128xf32>
    %238 = vector.broadcast %237 : vector<1x128xf32> to vector<2x128xf32>
    %239 = arith.addf %236, %238 : vector<2x128xf32>
    %c0_233 = arith.constant 0 : index
    %c0_234 = arith.constant 0 : index
    %240 = vector.load %arg15[%c0_233, %c0_234] : memref<2x128xf32, #tpu.memory_space<vmem>>, vector<2x128xf32>
    tpu.vector_store %arg15[%c0_233, %c0_234], %239 {strides = array<i32>} : memref<2x128xf32, #tpu.memory_space<vmem>>, vector<2x128xf32>,
    return
  }
  func.func @transform_0(%arg0: i32) -> (i32, i32) {
    %c0_i32 = arith.constant 0 : i32
    %c0_i32_0 = arith.constant 0 : i32
    %c0_i32_1 = arith.constant 0 : i32
    return %c0_i32, %c0_i32_0 : i32, i32
  }
  func.func @transform_1(%arg0: i32) -> (i32, i32) {
    %c0_i32 = arith.constant 0 : i32
    %c0_i32_0 = arith.constant 0 : i32
    %c0_i32_1 = arith.constant 0 : i32
    return %c0_i32, %c0_i32_0 : i32, i32
  }
  func.func @transform_2(%arg0: i32) -> (i32, i32) {
    %c0_i32 = arith.constant 0 : i32
    %c0_i32_0 = arith.constant 0 : i32
    %c0_i32_1 = arith.constant 0 : i32
    return %c0_i32, %c0_i32_0 : i32, i32
  }
  func.func @transform_3(%arg0: i32) -> (i32, i32) {
    %c0_i32 = arith.constant 0 : i32
    %c0_i32_0 = arith.constant 0 : i32
    %c0_i32_1 = arith.constant 0 : i32
    return %c0_i32, %c0_i32_0 : i32, i32
  }
  func.func @transform_4(%arg0: i32) -> (i32, i32) {
    %c0_i32 = arith.constant 0 : i32
    %c0_i32_0 = arith.constant 0 : i32
    %c0_i32_1 = arith.constant 0 : i32
    return %c0_i32, %c0_i32_0 : i32, i32
  }
  func.func @transform_5(%arg0: i32) -> (i32, i32) {
    %c0_i32 = arith.constant 0 : i32
    %c0_i32_0 = arith.constant 0 : i32
    %c0_i32_1 = arith.constant 0 : i32
    return %c0_i32, %c0_i32_0 : i32, i32
  }
  func.func @transform_6(%arg0: i32) -> (i32, i32) {
    %c0_i32 = arith.constant 0 : i32
    %c0_i32_0 = arith.constant 0 : i32
    %c0_i32_1 = arith.constant 0 : i32
    return %c0_i32, %c0_i32_0 : i32, i32
  }
  func.func @transform_7(%arg0: i32) -> (i32, i32) {
    %c0_i32 = arith.constant 0 : i32
    %c0_i32_0 = arith.constant 0 : i32
    %c0_i32_1 = arith.constant 0 : i32
    return %c0_i32, %c0_i32_0 : i32, i32
  }
  func.func @transform_8(%arg0: i32) -> (i32, i32) {
    %c0_i32 = arith.constant 0 : i32
    %c0_i32_0 = arith.constant 0 : i32
    %c0_i32_1 = arith.constant 0 : i32
    return %c0_i32, %c0_i32_0 : i32, i32
  }
  func.func @transform_9(%arg0: i32) -> (i32, i32) {
    %c0_i32 = arith.constant 0 : i32
    %c0_i32_0 = arith.constant 0 : i32
    %c0_i32_1 = arith.constant 0 : i32
    return %c0_i32, %c0_i32_0 : i32, i32
  }
  func.func @transform_10(%arg0: i32) -> (i32, i32) {
    %c0_i32 = arith.constant 0 : i32
    %c0_i32_0 = arith.constant 0 : i32
    %c0_i32_1 = arith.constant 0 : i32
    return %c0_i32, %c0_i32_0 : i32, i32
  }
  func.func @transform_11(%arg0: i32) -> (i32, i32) {
    %c0_i32 = arith.constant 0 : i32
    %c0_i32_0 = arith.constant 0 : i32
    %c0_i32_1 = arith.constant 0 : i32
    return %c0_i32, %c0_i32_0 : i32, i32
  }
  func.func @transform_12(%arg0: i32) -> (i32, i32) {
    %c0_i32 = arith.constant 0 : i32
    %c0_i32_0 = arith.constant 0 : i32
    %c0_i32_1 = arith.constant 0 : i32
    return %c0_i32, %c0_i32_0 : i32, i32
  }
  func.func @transform_13(%arg0: i32) -> (i32, i32) {
    %c0_i32 = arith.constant 0 : i32
    %c0_i32_0 = arith.constant 0 : i32
    %c0_i32_1 = arith.constant 0 : i32
    return %c0_i32, %c0_i32_0 : i32, i32
  }
  func.func @transform_14(%arg0: i32) -> (i32, i32) {
    %c0_i32 = arith.constant 0 : i32
    %c0_i32_0 = arith.constant 0 : i32
    %c0_i32_1 = arith.constant 0 : i32
    return %c0_i32, %c0_i32_0 : i32, i32
  }
}

</mosaic_0001>

<llo_original>
// kernel: tile.8
$region0: #{tile.8}
  #allocation0 [shape = 's32[1]{0}', space=sflag, size = 0x4, scoped, tag = 'scoped memory for tile.8']
  %s0 = inlined_call_operand.vmem [shape: f32[64], index: 0, kind: input, shape index: {}]
  %s1 = inlined_call_operand.vmem [shape: f32[4,64], index: 1, kind: output, shape index: {}]
  // Predicated region
  $region2: #{tile.8} parent=0 // pred_check
    _
  $region3: #{tile.8} parent=0 // pred_check_branch
    %3 = sbr.rel (0) target = $region5
  $region4: #{tile.8} parent=0 // pred_region
    _
  $region5: #{tile.8} parent=0 // pred_fallthru
    _
  %v4 = vld [vmem:[%s0] ss:$0 sm:$0xff]
  %5 = vst [vmem:[%s1] sm:$0xf] %v4

// kernel: tile.9
$region0: #{tile.9}
  %s0 = inlined_call_operand.vmem [shape: f32[4,64], index: 0, kind: input, shape index: {}]
  %s1 = inlined_call_operand.vmem [shape: f32[1,256], index: 1, kind: output, shape index: {}]
  $region1: #{tile.9} parent=0
    #allocation0 [shape = 'u8[8192]{0}', space=vmem, size = 0x2000, scoped, tag = 'scoped mem for output reshape']
    #allocation1 [shape = 'u8[4096]{0}', space=vmem, size = 0x1000, scoped, tag = 'scoped mem for input reshape']
    %s3 = sshllo.u32 0, 4
    %v4 = vld [vmem:[%s0] sm:%s3]
    %5 = vst [vmem:[#allocation1] sm:%s3] %v4
    %s6 = smov 3
    %v7 = vld [vmem:[#allocation1] ss:$2 sm:%s6]
    %vm8 = vcmask 523264
    %9 = vst.msk [vmem:[#allocation0] ss:$8 sm:$0x3] %vm8, %v7
    %s10 = scalar_lea.vmem [#allocation1], 1
    %s11 = smov 3
    %v12 = vld [vmem:[%s10] ss:$2 sm:%s11]
    %13 = vrot.lane.b32.xlu0 %v12, 64
    %v14 = vpop.permute.xlu0 %13
    %vm15 = vcmask 1048064
    %16 = vst.msk [vmem:[#allocation0] ss:$8 sm:$0x3] %vm15, %v14
    %s18 = sshllo.u32 0, 1
    %v20 = vld [vmem:[#allocation0] sm:%s18]
    %s21 = sshllo.u32 0, 1
    %22 = vst [vmem:[%s1] sm:%s21] %v20
    %s23 = scalar_lea.vmem [#allocation0], 8
    %v24 = vld [vmem:[%s23] sm:%s18]
    %s25 = sshllo.u32 0, 1
    %s26 = scalar_lea.vmem %s1, 1
    %27 = vst [vmem:[%s26] sm:%s25] %v24

// kernel: dueling_dqn_forward.1
$region0: #{dueling_dqn_forward.1}
  #allocation0 [shape = 'u32[]', space=smem, size = 0x4, offset = 0x4, fixed_abs, tag = 'smem constant byte address 0x4 - core index']
  #allocation1 [shape = 'u32[144,128]{1,0:T(1,128)}', space=vmem, size = 0x12000, scoped, tag = 'internal scratch']
  #allocation2 [shape = 'f32[512,36]{1,0:T(8,128)}', space=vmem, size = 0x40000, scoped, tag = 'scratch operand']
  #allocation3 [shape = 'f32[512,32]{1,0:T(8,128)}', space=vmem, size = 0x40000, scoped, tag = 'scratch operand']
  #allocation4 [shape = 'f32[128,32]{1,0:T(8,128)}', space=vmem, size = 0x10000, scoped, tag = 'scratch operand']
  #allocation5 [shape = 'f32[128,288]{1,0:T(8,128)}', space=vmem, size = 0x30000, scoped, tag = 'scratch operand']
  #allocation6 [shape = 'f32[128,64]{1,0:T(8,128)}', space=vmem, size = 0x10000, scoped, tag = 'scratch operand']
  #allocation7 [shape = 'f32[32,64]{1,0:T(8,128)}', space=vmem, size = 0x4000, scoped, tag = 'scratch operand']
  #allocation8 [shape = 'f32[32,576]{1,0:T(8,128)}', space=vmem, size = 0x14000, scoped, tag = 'scratch operand']
  #allocation9 [shape = 'f32[32,64]{1,0:T(8,128)}', space=vmem, size = 0x4000, scoped, tag = 'scratch operand']
  #allocation10 [shape = 'f32[2,256]{1,0:T(2,128)}', space=vmem, size = 0x800, scoped, tag = 'scratch operand']
  %s0 = inlined_call_operand.vmem [shape: f32[512,4], index: 0, kind: input, shape index: {}]
  %s1 = inlined_call_operand.vmem [shape: f32[512,9], index: 1, kind: input, shape index: {}]
  %s2 = inlined_call_operand.vmem [shape: f32[128,9], index: 2, kind: input, shape index: {}]
  %s3 = inlined_call_operand.vmem [shape: f32[32,9], index: 3, kind: input, shape index: {}]
  %s4 = inlined_call_operand.vmem [shape: f32[36,32], index: 4, kind: input, shape index: {}]
  %s5 = inlined_call_operand.vmem [shape: f32[1,32], index: 5, kind: input, shape index: {}]
  %s6 = inlined_call_operand.vmem [shape: f32[288,64], index: 6, kind: input, shape index: {}]
  %s7 = inlined_call_operand.vmem [shape: f32[1,64], index: 7, kind: input, shape index: {}]
  %s8 = inlined_call_operand.vmem [shape: f32[576,64], index: 8, kind: input, shape index: {}]
  %s9 = inlined_call_operand.vmem [shape: f32[1,256], index: 9, kind: input, shape index: {}]
  %s10 = inlined_call_operand.vmem [shape: f32[256,256], index: 10, kind: input, shape index: {}]
  %s11 = inlined_call_operand.vmem [shape: f32[1,256], index: 11, kind: input, shape index: {}]
  %s12 = inlined_call_operand.vmem [shape: f32[256,128], index: 12, kind: input, shape index: {}]
  %s13 = inlined_call_operand.vmem [shape: f32[1,128], index: 13, kind: input, shape index: {}]
  %s14 = inlined_call_operand.vmem [shape: f32[2,128], index: 14, kind: output, shape index: {}]
  %s15 = sld [smem:[#allocation0]]
  $region66: #{dueling_dqn_forward.1} parent=0
    _
  %s17 = ssub.s32 1, %s15
  %s18 = scalar_select 0, %s17, %s15
  // Predicated region
  $region2: #{dueling_dqn_forward.1} parent=0 // pred_check
    _
  $region3: #{dueling_dqn_forward.1} parent=0 // pred_check_branch
    %20 = sbr.rel (0) target = $region5
  $region4: #{dueling_dqn_forward.1} parent=0 // pred_region
    _
  $region5: #{dueling_dqn_forward.1} parent=0 // pred_fallthru
    _
  // Predicated region
  $region6: #{dueling_dqn_forward.1} parent=0 // pred_check
    _
  $region7: #{dueling_dqn_forward.1} parent=0 // pred_check_branch
    %22 = sbr.rel (0) target = $region9
  $region8: #{dueling_dqn_forward.1} parent=0 // pred_region
    _
  $region9: #{dueling_dqn_forward.1} parent=0 // pred_fallthru
    _
  // Predicated region
  $region10: #{dueling_dqn_forward.1} parent=0 // pred_check
    _
  $region11: #{dueling_dqn_forward.1} parent=0 // pred_check_branch
    %24 = sbr.rel (0) target = $region13
  $region12: #{dueling_dqn_forward.1} parent=0 // pred_region
    _
  $region13: #{dueling_dqn_forward.1} parent=0 // pred_fallthru
    _
  // Predicated region
  $region14: #{dueling_dqn_forward.1} parent=0 // pred_check
    _
  $region15: #{dueling_dqn_forward.1} parent=0 // pred_check_branch
    %26 = sbr.rel (0) target = $region17
  $region16: #{dueling_dqn_forward.1} parent=0 // pred_region
    _
  $region17: #{dueling_dqn_forward.1} parent=0 // pred_fallthru
    _
  // Predicated region
  $region18: #{dueling_dqn_forward.1} parent=0 // pred_check
    _
  $region19: #{dueling_dqn_forward.1} parent=0 // pred_check_branch
    %28 = sbr.rel (0) target = $region21
  $region20: #{dueling_dqn_forward.1} parent=0 // pred_region
    _
  $region21: #{dueling_dqn_forward.1} parent=0 // pred_fallthru
    _
  // Predicated region
  $region22: #{dueling_dqn_forward.1} parent=0 // pred_check
    _
  $region23: #{dueling_dqn_forward.1} parent=0 // pred_check_branch
    %30 = sbr.rel (0) target = $region25
  $region24: #{dueling_dqn_forward.1} parent=0 // pred_region
    _
  $region25: #{dueling_dqn_forward.1} parent=0 // pred_fallthru
    _
  // Predicated region
  $region26: #{dueling_dqn_forward.1} parent=0 // pred_check
    _
  $region27: #{dueling_dqn_forward.1} parent=0 // pred_check_branch
    %32 = sbr.rel (0) target = $region29
  $region28: #{dueling_dqn_forward.1} parent=0 // pred_region
    _
  $region29: #{dueling_dqn_forward.1} parent=0 // pred_fallthru
    _
  // Predicated region
  $region30: #{dueling_dqn_forward.1} parent=0 // pred_check
    _
  $region31: #{dueling_dqn_forward.1} parent=0 // pred_check_branch
    %34 = sbr.rel (0) target = $region33
  $region32: #{dueling_dqn_forward.1} parent=0 // pred_region
    _
  $region33: #{dueling_dqn_forward.1} parent=0 // pred_fallthru
    _
  // Predicated region
  $region34: #{dueling_dqn_forward.1} parent=0 // pred_check
    _
  $region35: #{dueling_dqn_forward.1} parent=0 // pred_check_branch
    %36 = sbr.rel (0) target = $region37
  $region36: #{dueling_dqn_forward.1} parent=0 // pred_region
    _
  $region37: #{dueling_dqn_forward.1} parent=0 // pred_fallthru
    _
  // Predicated region
  $region38: #{dueling_dqn_forward.1} parent=0 // pred_check
    _
  $region39: #{dueling_dqn_forward.1} parent=0 // pred_check_branch
    %38 = sbr.rel (0) target = $region41
  $region40: #{dueling_dqn_forward.1} parent=0 // pred_region
    _
  $region41: #{dueling_dqn_forward.1} parent=0 // pred_fallthru
    _
  // Predicated region
  $region42: #{dueling_dqn_forward.1} parent=0 // pred_check
    _
  $region43: #{dueling_dqn_forward.1} parent=0 // pred_check_branch
    %40 = sbr.rel (0) target = $region45
  $region44: #{dueling_dqn_forward.1} parent=0 // pred_region
    _
  $region45: #{dueling_dqn_forward.1} parent=0 // pred_fallthru
    _
  // Predicated region
  $region46: #{dueling_dqn_forward.1} parent=0 // pred_check
    _
  $region47: #{dueling_dqn_forward.1} parent=0 // pred_check_branch
    %42 = sbr.rel (0) target = $region49
  $region48: #{dueling_dqn_forward.1} parent=0 // pred_region
    _
  $region49: #{dueling_dqn_forward.1} parent=0 // pred_fallthru
    _
  // Predicated region
  $region50: #{dueling_dqn_forward.1} parent=0 // pred_check
    _
  $region51: #{dueling_dqn_forward.1} parent=0 // pred_check_branch
    %44 = sbr.rel (0) target = $region53
  $region52: #{dueling_dqn_forward.1} parent=0 // pred_region
    _
  $region53: #{dueling_dqn_forward.1} parent=0 // pred_fallthru
    _
  // Predicated region
  $region54: #{dueling_dqn_forward.1} parent=0 // pred_check
    _
  $region55: #{dueling_dqn_forward.1} parent=0 // pred_check_branch
    %46 = sbr.rel (0) target = $region57
  $region56: #{dueling_dqn_forward.1} parent=0 // pred_region
    _
  $region57: #{dueling_dqn_forward.1} parent=0 // pred_fallthru
    _
  %v47 = vld [vmem:[%s0] sm:$0xff]
  %v48 = vld [vmem:[%s0 + $0x8] sm:$0xff]
  %v49 = vld [vmem:[%s0 + $0x10] sm:$0xff]
  %v50 = vld [vmem:[%s0 + $0x18] sm:$0xff]
  %v51 = vld [vmem:[%s0 + $0x20] sm:$0xff]
  %v52 = vld [vmem:[%s0 + $0x28] sm:$0xff]
  %v53 = vld [vmem:[%s0 + $0x30] sm:$0xff]
  %v54 = vld [vmem:[%s0 + $0x38] sm:$0xff]
  %v55 = vld [vmem:[%s0 + $0x40] sm:$0xff]
  %v56 = vld [vmem:[%s0 + $0x48] sm:$0xff]
  %v57 = vld [vmem:[%s0 + $0x50] sm:$0xff]
  %v58 = vld [vmem:[%s0 + $0x58] sm:$0xff]
  %v59 = vld [vmem:[%s0 + $0x60] sm:$0xff]
  %v60 = vld [vmem:[%s0 + $0x68] sm:$0xff]
  %v61 = vld [vmem:[%s0 + $0x70] sm:$0xff]
  %v62 = vld [vmem:[%s0 + $0x78] sm:$0xff]
  %v63 = vld [vmem:[%s0 + $0x80] sm:$0xff]
  %v64 = vld [vmem:[%s0 + $0x88] sm:$0xff]
  %v65 = vld [vmem:[%s0 + $0x90] sm:$0xff]
  %v66 = vld [vmem:[%s0 + $0x98] sm:$0xff]
  %v67 = vld [vmem:[%s0 + $0xa0] sm:$0xff]
  %v68 = vld [vmem:[%s0 + $0xa8] sm:$0xff]
  %v69 = vld [vmem:[%s0 + $0xb0] sm:$0xff]
  %v70 = vld [vmem:[%s0 + $0xb8] sm:$0xff]
  %v71 = vld [vmem:[%s0 + $0xc0] sm:$0xff]
  %v72 = vld [vmem:[%s0 + $0xc8] sm:$0xff]
  %v73 = vld [vmem:[%s0 + $0xd0] sm:$0xff]
  %v74 = vld [vmem:[%s0 + $0xd8] sm:$0xff]
  %v75 = vld [vmem:[%s0 + $0xe0] sm:$0xff]
  %v76 = vld [vmem:[%s0 + $0xe8] sm:$0xff]
  %v77 = vld [vmem:[%s0 + $0xf0] sm:$0xff]
  %v78 = vld [vmem:[%s0 + $0xf8] sm:$0xff]
  %v79 = vld [vmem:[%s0 + $0x100] sm:$0xff]
  %v80 = vld [vmem:[%s0 + $0x108] sm:$0xff]
  %v81 = vld [vmem:[%s0 + $0x110] sm:$0xff]
  %v82 = vld [vmem:[%s0 + $0x118] sm:$0xff]
  %v83 = vld [vmem:[%s0 + $0x120] sm:$0xff]
  %v84 = vld [vmem:[%s0 + $0x128] sm:$0xff]
  %v85 = vld [vmem:[%s0 + $0x130] sm:$0xff]
  %v86 = vld [vmem:[%s0 + $0x138] sm:$0xff]
  %v87 = vld [vmem:[%s0 + $0x140] sm:$0xff]
  %v88 = vld [vmem:[%s0 + $0x148] sm:$0xff]
  %v89 = vld [vmem:[%s0 + $0x150] sm:$0xff]
  %v90 = vld [vmem:[%s0 + $0x158] sm:$0xff]
  %v91 = vld [vmem:[%s0 + $0x160] sm:$0xff]
  %v92 = vld [vmem:[%s0 + $0x168] sm:$0xff]
  %v93 = vld [vmem:[%s0 + $0x170] sm:$0xff]
  %v94 = vld [vmem:[%s0 + $0x178] sm:$0xff]
  %v95 = vld [vmem:[%s0 + $0x180] sm:$0xff]
  %v96 = vld [vmem:[%s0 + $0x188] sm:$0xff]
  %v97 = vld [vmem:[%s0 + $0x190] sm:$0xff]
  %v98 = vld [vmem:[%s0 + $0x198] sm:$0xff]
  %v99 = vld [vmem:[%s0 + $0x1a0] sm:$0xff]
  %v100 = vld [vmem:[%s0 + $0x1a8] sm:$0xff]
  %v101 = vld [vmem:[%s0 + $0x1b0] sm:$0xff]
  %v102 = vld [vmem:[%s0 + $0x1b8] sm:$0xff]
  %v103 = vld [vmem:[%s0 + $0x1c0] sm:$0xff]
  %v104 = vld [vmem:[%s0 + $0x1c8] sm:$0xff]
  %v105 = vld [vmem:[%s0 + $0x1d0] sm:$0xff]
  %v106 = vld [vmem:[%s0 + $0x1d8] sm:$0xff]
  %v107 = vld [vmem:[%s0 + $0x1e0] sm:$0xff]
  %v108 = vld [vmem:[%s0 + $0x1e8] sm:$0xff]
  %v109 = vld [vmem:[%s0 + $0x1f0] sm:$0xff]
  %v110 = vld [vmem:[%s0 + $0x1f8] sm:$0xff]
  %v111 = vrot.slane %v47, 7
  %v112 = vrot.slane %v48, 7
  %v113 = vrot.slane %v49, 7
  %v114 = vrot.slane %v50, 7
  %v115 = vrot.slane %v51, 7
  %v116 = vrot.slane %v52, 7
  %v117 = vrot.slane %v53, 7
  %v118 = vrot.slane %v54, 7
  %v119 = vrot.slane %v55, 7
  %v120 = vrot.slane %v56, 7
  %v121 = vrot.slane %v57, 7
  %v122 = vrot.slane %v58, 7
  %v123 = vrot.slane %v59, 7
  %v124 = vrot.slane %v60, 7
  %v125 = vrot.slane %v61, 7
  %v126 = vrot.slane %v62, 7
  %v127 = vrot.slane %v63, 7
  %v128 = vrot.slane %v64, 7
  %v129 = vrot.slane %v65, 7
  %v130 = vrot.slane %v66, 7
  %v131 = vrot.slane %v67, 7
  %v132 = vrot.slane %v68, 7
  %v133 = vrot.slane %v69, 7
  %v134 = vrot.slane %v70, 7
  %v135 = vrot.slane %v71, 7
  %v136 = vrot.slane %v72, 7
  %v137 = vrot.slane %v73, 7
  %v138 = vrot.slane %v74, 7
  %v139 = vrot.slane %v75, 7
  %v140 = vrot.slane %v76, 7
  %v141 = vrot.slane %v77, 7
  %v142 = vrot.slane %v78, 7
  %v143 = vrot.slane %v79, 7
  %v144 = vrot.slane %v80, 7
  %v145 = vrot.slane %v81, 7
  %v146 = vrot.slane %v82, 7
  %v147 = vrot.slane %v83, 7
  %v148 = vrot.slane %v84, 7
  %v149 = vrot.slane %v85, 7
  %v150 = vrot.slane %v86, 7
  %v151 = vrot.slane %v87, 7
  %v152 = vrot.slane %v88, 7
  %v153 = vrot.slane %v89, 7
  %v154 = vrot.slane %v90, 7
  %v155 = vrot.slane %v91, 7
  %v156 = vrot.slane %v92, 7
  %v157 = vrot.slane %v93, 7
  %v158 = vrot.slane %v94, 7
  %v159 = vrot.slane %v95, 7
  %v160 = vrot.slane %v96, 7
  %v161 = vrot.slane %v97, 7
  %v162 = vrot.slane %v98, 7
  %v163 = vrot.slane %v99, 7
  %v164 = vrot.slane %v100, 7
  %v165 = vrot.slane %v101, 7
  %v166 = vrot.slane %v102, 7
  %v167 = vrot.slane %v103, 7
  %v168 = vrot.slane %v104, 7
  %v169 = vrot.slane %v105, 7
  %v170 = vrot.slane %v106, 7
  %v171 = vrot.slane %v107, 7
  %v172 = vrot.slane %v108, 7
  %v173 = vrot.slane %v109, 7
  %v174 = vrot.slane %v110, 7
  %v175 = vlaneseq
  %v176 = vshrl.u32 %v175, 7
  %vm177 = vcmp.lt.s32.totalorder %v176, 1
  %v178 = vsel %vm177, %v173, %v174
  %v179 = vsel %vm177, %v172, %v173
  %v180 = vsel %vm177, %v171, %v172
  %v181 = vsel %vm177, %v170, %v171
  %v182 = vsel %vm177, %v169, %v170
  %v183 = vsel %vm177, %v168, %v169
  %v184 = vsel %vm177, %v167, %v168
  %v185 = vsel %vm177, %v166, %v167
  %v186 = vsel %vm177, %v165, %v166
  %v187 = vsel %vm177, %v164, %v165
  %v188 = vsel %vm177, %v163, %v164
  %v189 = vsel %vm177, %v162, %v163
  %v190 = vsel %vm177, %v161, %v162
  %v191 = vsel %vm177, %v160, %v161
  %v192 = vsel %vm177, %v159, %v160
  %v193 = vsel %vm177, %v158, %v159
  %v194 = vsel %vm177, %v157, %v158
  %v195 = vsel %vm177, %v156, %v157
  %v196 = vsel %vm177, %v155, %v156
  %v197 = vsel %vm177, %v154, %v155
  %v198 = vsel %vm177, %v153, %v154
  %v199 = vsel %vm177, %v152, %v153
  %v200 = vsel %vm177, %v151, %v152
  %v201 = vsel %vm177, %v150, %v151
  %v202 = vsel %vm177, %v149, %v150
  %v203 = vsel %vm177, %v148, %v149
  %v204 = vsel %vm177, %v147, %v148
  %v205 = vsel %vm177, %v146, %v147
  %v206 = vsel %vm177, %v145, %v146
  %v207 = vsel %vm177, %v144, %v145
  %v208 = vsel %vm177, %v143, %v144
  %v209 = vsel %vm177, %v142, %v143
  %v210 = vsel %vm177, %v141, %v142
  %v211 = vsel %vm177, %v140, %v141
  %v212 = vsel %vm177, %v139, %v140
  %v213 = vsel %vm177, %v138, %v139
  %v214 = vsel %vm177, %v137, %v138
  %v215 = vsel %vm177, %v136, %v137
  %v216 = vsel %vm177, %v135, %v136
  %v217 = vsel %vm177, %v134, %v135
  %v218 = vsel %vm177, %v133, %v134
  %v219 = vsel %vm177, %v132, %v133
  %v220 = vsel %vm177, %v131, %v132
  %v221 = vsel %vm177, %v130, %v131
  %v222 = vsel %vm177, %v129, %v130
  %v223 = vsel %vm177, %v128, %v129
  %v224 = vsel %vm177, %v127, %v128
  %v225 = vsel %vm177, %v126, %v127
  %v226 = vsel %vm177, %v125, %v126
  %v227 = vsel %vm177, %v124, %v125
  %v228 = vsel %vm177, %v123, %v124
  %v229 = vsel %vm177, %v122, %v123
  %v230 = vsel %vm177, %v121, %v122
  %v231 = vsel %vm177, %v120, %v121
  %v232 = vsel %vm177, %v119, %v120
  %v233 = vsel %vm177, %v118, %v119
  %v234 = vsel %vm177, %v117, %v118
  %v235 = vsel %vm177, %v116, %v117
  %v236 = vsel %vm177, %v115, %v116
  %v237 = vsel %vm177, %v114, %v115
  %v238 = vsel %vm177, %v113, %v114
  %v239 = vsel %vm177, %v112, %v113
  %v240 = vsel %vm177, %v111, %v112
  %v241 = vsel %vm177, %v174, %v111
  %v242 = vld [vmem:[%s1] sm:$0xff]
  %v243 = vld [vmem:[%s1 + $0x8] sm:$0xff]
  %v244 = vld [vmem:[%s1 + $0x10] sm:$0xff]
  %v245 = vld [vmem:[%s1 + $0x18] sm:$0xff]
  %v246 = vld [vmem:[%s1 + $0x20] sm:$0xff]
  %v247 = vld [vmem:[%s1 + $0x28] sm:$0xff]
  %v248 = vld [vmem:[%s1 + $0x30] sm:$0xff]
  %v249 = vld [vmem:[%s1 + $0x38] sm:$0xff]
  %v250 = vld [vmem:[%s1 + $0x40] sm:$0xff]
  %v251 = vld [vmem:[%s1 + $0x48] sm:$0xff]
  %v252 = vld [vmem:[%s1 + $0x50] sm:$0xff]
  %v253 = vld [vmem:[%s1 + $0x58] sm:$0xff]
  %v254 = vld [vmem:[%s1 + $0x60] sm:$0xff]
  %v255 = vld [vmem:[%s1 + $0x68] sm:$0xff]
  %v256 = vld [vmem:[%s1 + $0x70] sm:$0xff]
  %v257 = vld [vmem:[%s1 + $0x78] sm:$0xff]
  %v258 = vld [vmem:[%s1 + $0x80] sm:$0xff]
  %v259 = vld [vmem:[%s1 + $0x88] sm:$0xff]
  %v260 = vld [vmem:[%s1 + $0x90] sm:$0xff]
  %v261 = vld [vmem:[%s1 + $0x98] sm:$0xff]
  %v262 = vld [vmem:[%s1 + $0xa0] sm:$0xff]
  %v263 = vld [vmem:[%s1 + $0xa8] sm:$0xff]
  %v264 = vld [vmem:[%s1 + $0xb0] sm:$0xff]
  %v265 = vld [vmem:[%s1 + $0xb8] sm:$0xff]
  %v266 = vld [vmem:[%s1 + $0xc0] sm:$0xff]
  %v267 = vld [vmem:[%s1 + $0xc8] sm:$0xff]
  %v268 = vld [vmem:[%s1 + $0xd0] sm:$0xff]
  %v269 = vld [vmem:[%s1 + $0xd8] sm:$0xff]
  %v270 = vld [vmem:[%s1 + $0xe0] sm:$0xff]
  %v271 = vld [vmem:[%s1 + $0xe8] sm:$0xff]
  %v272 = vld [vmem:[%s1 + $0xf0] sm:$0xff]
  %v273 = vld [vmem:[%s1 + $0xf8] sm:$0xff]
  %v274 = vld [vmem:[%s1 + $0x100] sm:$0xff]
  %v275 = vld [vmem:[%s1 + $0x108] sm:$0xff]
  %v276 = vld [vmem:[%s1 + $0x110] sm:$0xff]
  %v277 = vld [vmem:[%s1 + $0x118] sm:$0xff]
  %v278 = vld [vmem:[%s1 + $0x120] sm:$0xff]
  %v279 = vld [vmem:[%s1 + $0x128] sm:$0xff]
  %v280 = vld [vmem:[%s1 + $0x130] sm:$0xff]
  %v281 = vld [vmem:[%s1 + $0x138] sm:$0xff]
  %v282 = vld [vmem:[%s1 + $0x140] sm:$0xff]
  %v283 = vld [vmem:[%s1 + $0x148] sm:$0xff]
  %v284 = vld [vmem:[%s1 + $0x150] sm:$0xff]
  %v285 = vld [vmem:[%s1 + $0x158] sm:$0xff]
  %v286 = vld [vmem:[%s1 + $0x160] sm:$0xff]
  %v287 = vld [vmem:[%s1 + $0x168] sm:$0xff]
  %v288 = vld [vmem:[%s1 + $0x170] sm:$0xff]
  %v289 = vld [vmem:[%s1 + $0x178] sm:$0xff]
  %v290 = vld [vmem:[%s1 + $0x180] sm:$0xff]
  %v291 = vld [vmem:[%s1 + $0x188] sm:$0xff]
  %v292 = vld [vmem:[%s1 + $0x190] sm:$0xff]
  %v293 = vld [vmem:[%s1 + $0x198] sm:$0xff]
  %v294 = vld [vmem:[%s1 + $0x1a0] sm:$0xff]
  %v295 = vld [vmem:[%s1 + $0x1a8] sm:$0xff]
  %v296 = vld [vmem:[%s1 + $0x1b0] sm:$0xff]
  %v297 = vld [vmem:[%s1 + $0x1b8] sm:$0xff]
  %v298 = vld [vmem:[%s1 + $0x1c0] sm:$0xff]
  %v299 = vld [vmem:[%s1 + $0x1c8] sm:$0xff]
  %v300 = vld [vmem:[%s1 + $0x1d0] sm:$0xff]
  %v301 = vld [vmem:[%s1 + $0x1d8] sm:$0xff]
  %v302 = vld [vmem:[%s1 + $0x1e0] sm:$0xff]
  %v303 = vld [vmem:[%s1 + $0x1e8] sm:$0xff]
  %v304 = vld [vmem:[%s1 + $0x1f0] sm:$0xff]
  %v305 = vld [vmem:[%s1 + $0x1f8] sm:$0xff]
  %307 = vset.pattern.permute.xlu0 0
  %308 = vperm.xlu0 %307, %v242
  %v309 = vpop.permute.xlu0 %308
  %312 = vset.pattern.permute.xlu0 0
  %313 = vperm.xlu0 %312, %v243
  %v314 = vpop.permute.xlu0 %313
  %317 = vset.pattern.permute.xlu0 0
  %318 = vperm.xlu0 %317, %v244
  %v319 = vpop.permute.xlu0 %318
  %322 = vset.pattern.permute.xlu0 0
  %323 = vperm.xlu0 %322, %v245
  %v324 = vpop.permute.xlu0 %323
  %327 = vset.pattern.permute.xlu0 0
  %328 = vperm.xlu0 %327, %v246
  %v329 = vpop.permute.xlu0 %328
  %332 = vset.pattern.permute.xlu0 0
  %333 = vperm.xlu0 %332, %v247
  %v334 = vpop.permute.xlu0 %333
  %337 = vset.pattern.permute.xlu0 0
  %338 = vperm.xlu0 %337, %v248
  %v339 = vpop.permute.xlu0 %338
  %342 = vset.pattern.permute.xlu0 0
  %343 = vperm.xlu0 %342, %v249
  %v344 = vpop.permute.xlu0 %343
  %347 = vset.pattern.permute.xlu0 0
  %348 = vperm.xlu0 %347, %v250
  %v349 = vpop.permute.xlu0 %348
  %352 = vset.pattern.permute.xlu0 0
  %353 = vperm.xlu0 %352, %v251
  %v354 = vpop.permute.xlu0 %353
  %357 = vset.pattern.permute.xlu0 0
  %358 = vperm.xlu0 %357, %v252
  %v359 = vpop.permute.xlu0 %358
  %362 = vset.pattern.permute.xlu0 0
  %363 = vperm.xlu0 %362, %v253
  %v364 = vpop.permute.xlu0 %363
  %367 = vset.pattern.permute.xlu0 0
  %368 = vperm.xlu0 %367, %v254
  %v369 = vpop.permute.xlu0 %368
  %372 = vset.pattern.permute.xlu0 0
  %373 = vperm.xlu0 %372, %v255
  %v374 = vpop.permute.xlu0 %373
  %377 = vset.pattern.permute.xlu0 0
  %378 = vperm.xlu0 %377, %v256
  %v379 = vpop.permute.xlu0 %378
  %382 = vset.pattern.permute.xlu0 0
  %383 = vperm.xlu0 %382, %v257
  %v384 = vpop.permute.xlu0 %383
  %387 = vset.pattern.permute.xlu0 0
  %388 = vperm.xlu0 %387, %v258
  %v389 = vpop.permute.xlu0 %388
  %392 = vset.pattern.permute.xlu0 0
  %393 = vperm.xlu0 %392, %v259
  %v394 = vpop.permute.xlu0 %393
  %397 = vset.pattern.permute.xlu0 0
  %398 = vperm.xlu0 %397, %v260
  %v399 = vpop.permute.xlu0 %398
  %402 = vset.pattern.permute.xlu0 0
  %403 = vperm.xlu0 %402, %v261
  %v404 = vpop.permute.xlu0 %403
  %407 = vset.pattern.permute.xlu0 0
  %408 = vperm.xlu0 %407, %v262
  %v409 = vpop.permute.xlu0 %408
  %412 = vset.pattern.permute.xlu0 0
  %413 = vperm.xlu0 %412, %v263
  %v414 = vpop.permute.xlu0 %413
  %417 = vset.pattern.permute.xlu0 0
  %418 = vperm.xlu0 %417, %v264
  %v419 = vpop.permute.xlu0 %418
  %422 = vset.pattern.permute.xlu0 0
  %423 = vperm.xlu0 %422, %v265
  %v424 = vpop.permute.xlu0 %423
  %427 = vset.pattern.permute.xlu0 0
  %428 = vperm.xlu0 %427, %v266
  %v429 = vpop.permute.xlu0 %428
  %432 = vset.pattern.permute.xlu0 0
  %433 = vperm.xlu0 %432, %v267
  %v434 = vpop.permute.xlu0 %433
  %437 = vset.pattern.permute.xlu0 0
  %438 = vperm.xlu0 %437, %v268
  %v439 = vpop.permute.xlu0 %438
  %442 = vset.pattern.permute.xlu0 0
  %443 = vperm.xlu0 %442, %v269
  %v444 = vpop.permute.xlu0 %443
  %447 = vset.pattern.permute.xlu0 0
  %448 = vperm.xlu0 %447, %v270
  %v449 = vpop.permute.xlu0 %448
  %452 = vset.pattern.permute.xlu0 0
  %453 = vperm.xlu0 %452, %v271
  %v454 = vpop.permute.xlu0 %453
  %457 = vset.pattern.permute.xlu0 0
  %458 = vperm.xlu0 %457, %v272
  %v459 = vpop.permute.xlu0 %458
  %462 = vset.pattern.permute.xlu0 0
  %463 = vperm.xlu0 %462, %v273
  %v464 = vpop.permute.xlu0 %463
  %467 = vset.pattern.permute.xlu0 0
  %468 = vperm.xlu0 %467, %v274
  %v469 = vpop.permute.xlu0 %468
  %472 = vset.pattern.permute.xlu0 0
  %473 = vperm.xlu0 %472, %v275
  %v474 = vpop.permute.xlu0 %473
  %477 = vset.pattern.permute.xlu0 0
  %478 = vperm.xlu0 %477, %v276
  %v479 = vpop.permute.xlu0 %478
  %482 = vset.pattern.permute.xlu0 0
  %483 = vperm.xlu0 %482, %v277
  %v484 = vpop.permute.xlu0 %483
  %487 = vset.pattern.permute.xlu0 0
  %488 = vperm.xlu0 %487, %v278
  %v489 = vpop.permute.xlu0 %488
  %492 = vset.pattern.permute.xlu0 0
  %493 = vperm.xlu0 %492, %v279
  %v494 = vpop.permute.xlu0 %493
  %497 = vset.pattern.permute.xlu0 0
  %498 = vperm.xlu0 %497, %v280
  %v499 = vpop.permute.xlu0 %498
  %502 = vset.pattern.permute.xlu0 0
  %503 = vperm.xlu0 %502, %v281
  %v504 = vpop.permute.xlu0 %503
  %507 = vset.pattern.permute.xlu0 0
  %508 = vperm.xlu0 %507, %v282
  %v509 = vpop.permute.xlu0 %508
  %512 = vset.pattern.permute.xlu0 0
  %513 = vperm.xlu0 %512, %v283
  %v514 = vpop.permute.xlu0 %513
  %517 = vset.pattern.permute.xlu0 0
  %518 = vperm.xlu0 %517, %v284
  %v519 = vpop.permute.xlu0 %518
  %522 = vset.pattern.permute.xlu0 0
  %523 = vperm.xlu0 %522, %v285
  %v524 = vpop.permute.xlu0 %523
  %527 = vset.pattern.permute.xlu0 0
  %528 = vperm.xlu0 %527, %v286
  %v529 = vpop.permute.xlu0 %528
  %532 = vset.pattern.permute.xlu0 0
  %533 = vperm.xlu0 %532, %v287
  %v534 = vpop.permute.xlu0 %533
  %537 = vset.pattern.permute.xlu0 0
  %538 = vperm.xlu0 %537, %v288
  %v539 = vpop.permute.xlu0 %538
  %542 = vset.pattern.permute.xlu0 0
  %543 = vperm.xlu0 %542, %v289
  %v544 = vpop.permute.xlu0 %543
  %547 = vset.pattern.permute.xlu0 0
  %548 = vperm.xlu0 %547, %v290
  %v549 = vpop.permute.xlu0 %548
  %552 = vset.pattern.permute.xlu0 0
  %553 = vperm.xlu0 %552, %v291
  %v554 = vpop.permute.xlu0 %553
  %557 = vset.pattern.permute.xlu0 0
  %558 = vperm.xlu0 %557, %v292
  %v559 = vpop.permute.xlu0 %558
  %562 = vset.pattern.permute.xlu0 0
  %563 = vperm.xlu0 %562, %v293
  %v564 = vpop.permute.xlu0 %563
  %567 = vset.pattern.permute.xlu0 0
  %568 = vperm.xlu0 %567, %v294
  %v569 = vpop.permute.xlu0 %568
  %572 = vset.pattern.permute.xlu0 0
  %573 = vperm.xlu0 %572, %v295
  %v574 = vpop.permute.xlu0 %573
  %577 = vset.pattern.permute.xlu0 0
  %578 = vperm.xlu0 %577, %v296
  %v579 = vpop.permute.xlu0 %578
  %582 = vset.pattern.permute.xlu0 0
  %583 = vperm.xlu0 %582, %v297
  %v584 = vpop.permute.xlu0 %583
  %587 = vset.pattern.permute.xlu0 0
  %588 = vperm.xlu0 %587, %v298
  %v589 = vpop.permute.xlu0 %588
  %592 = vset.pattern.permute.xlu0 0
  %593 = vperm.xlu0 %592, %v299
  %v594 = vpop.permute.xlu0 %593
  %597 = vset.pattern.permute.xlu0 0
  %598 = vperm.xlu0 %597, %v300
  %v599 = vpop.permute.xlu0 %598
  %602 = vset.pattern.permute.xlu0 0
  %603 = vperm.xlu0 %602, %v301
  %v604 = vpop.permute.xlu0 %603
  %607 = vset.pattern.permute.xlu0 0
  %608 = vperm.xlu0 %607, %v302
  %v609 = vpop.permute.xlu0 %608
  %612 = vset.pattern.permute.xlu0 0
  %613 = vperm.xlu0 %612, %v303
  %v614 = vpop.permute.xlu0 %613
  %617 = vset.pattern.permute.xlu0 0
  %618 = vperm.xlu0 %617, %v304
  %v619 = vpop.permute.xlu0 %618
  %622 = vset.pattern.permute.xlu0 0
  %623 = vperm.xlu0 %622, %v305
  %v624 = vpop.permute.xlu0 %623
  %v626 = vmul.f32 %v179, %v309
  %v627 = vmul.f32 %v178, %v314
  %v628 = vmul.f32 %v241, %v319
  %v629 = vmul.f32 %v240, %v324
  %v630 = vmul.f32 %v239, %v329
  %v631 = vmul.f32 %v238, %v334
  %v632 = vmul.f32 %v237, %v339
  %v633 = vmul.f32 %v236, %v344
  %v634 = vmul.f32 %v235, %v349
  %v635 = vmul.f32 %v234, %v354
  %v636 = vmul.f32 %v233, %v359
  %v637 = vmul.f32 %v232, %v364
  %v638 = vmul.f32 %v231, %v369
  %v639 = vmul.f32 %v230, %v374
  %v640 = vmul.f32 %v229, %v379
  %v641 = vmul.f32 %v228, %v384
  %v642 = vmul.f32 %v227, %v389
  %v643 = vmul.f32 %v226, %v394
  %v644 = vmul.f32 %v225, %v399
  %v645 = vmul.f32 %v224, %v404
  %v646 = vmul.f32 %v223, %v409
  %v647 = vmul.f32 %v222, %v414
  %v648 = vmul.f32 %v221, %v419
  %v649 = vmul.f32 %v220, %v424
  %v650 = vmul.f32 %v219, %v429
  %v651 = vmul.f32 %v218, %v434
  %v652 = vmul.f32 %v217, %v439
  %v653 = vmul.f32 %v216, %v444
  %v654 = vmul.f32 %v215, %v449
  %v655 = vmul.f32 %v214, %v454
  %v656 = vmul.f32 %v213, %v459
  %v657 = vmul.f32 %v212, %v464
  %v658 = vmul.f32 %v211, %v469
  %v659 = vmul.f32 %v210, %v474
  %v660 = vmul.f32 %v209, %v479
  %v661 = vmul.f32 %v208, %v484
  %v662 = vmul.f32 %v207, %v489
  %v663 = vmul.f32 %v206, %v494
  %v664 = vmul.f32 %v205, %v499
  %v665 = vmul.f32 %v204, %v504
  %v666 = vmul.f32 %v203, %v509
  %v667 = vmul.f32 %v202, %v514
  %v668 = vmul.f32 %v201, %v519
  %v669 = vmul.f32 %v200, %v524
  %v670 = vmul.f32 %v199, %v529
  %v671 = vmul.f32 %v198, %v534
  %v672 = vmul.f32 %v197, %v539
  %v673 = vmul.f32 %v196, %v544
  %v674 = vmul.f32 %v195, %v549
  %v675 = vmul.f32 %v194, %v554
  %v676 = vmul.f32 %v193, %v559
  %v677 = vmul.f32 %v192, %v564
  %v678 = vmul.f32 %v191, %v569
  %v679 = vmul.f32 %v190, %v574
  %v680 = vmul.f32 %v189, %v579
  %v681 = vmul.f32 %v188, %v584
  %v682 = vmul.f32 %v187, %v589
  %v683 = vmul.f32 %v186, %v594
  %v684 = vmul.f32 %v185, %v599
  %v685 = vmul.f32 %v184, %v604
  %v686 = vmul.f32 %v183, %v609
  %v687 = vmul.f32 %v182, %v614
  %v688 = vmul.f32 %v181, %v619
  %v689 = vmul.f32 %v180, %v624
  %vm690 = vcmask 31744
  %691 = vst.msk [vmem:[#allocation2] sm:$0xff] %vm690, %v626
  %692 = vst.msk [vmem:[#allocation2 + $0x8] sm:$0xff] %vm690, %v627
  %693 = vst.msk [vmem:[#allocation2 + $0x10] sm:$0xff] %vm690, %v628
  %694 = vst.msk [vmem:[#allocation2 + $0x18] sm:$0xff] %vm690, %v629
  %695 = vst.msk [vmem:[#allocation2 + $0x20] sm:$0xff] %vm690, %v630
  %696 = vst.msk [vmem:[#allocation2 + $0x28] sm:$0xff] %vm690, %v631
  %697 = vst.msk [vmem:[#allocation2 + $0x30] sm:$0xff] %vm690, %v632
  %698 = vst.msk [vmem:[#allocation2 + $0x38] sm:$0xff] %vm690, %v633
  %699 = vst.msk [vmem:[#allocation2 + $0x40] sm:$0xff] %vm690, %v634
  %700 = vst.msk [vmem:[#allocation2 + $0x48] sm:$0xff] %vm690, %v635
  %701 = vst.msk [vmem:[#allocation2 + $0x50] sm:$0xff] %vm690, %v636
  %702 = vst.msk [vmem:[#allocation2 + $0x58] sm:$0xff] %vm690, %v637
  %703 = vst.msk [vmem:[#allocation2 + $0x60] sm:$0xff] %vm690, %v638
  %704 = vst.msk [vmem:[#allocation2 + $0x68] sm:$0xff] %vm690, %v639
  %705 = vst.msk [vmem:[#allocation2 + $0x70] sm:$0xff] %vm690, %v640
  %706 = vst.msk [vmem:[#allocation2 + $0x78] sm:$0xff] %vm690, %v641
  %707 = vst.msk [vmem:[#allocation2 + $0x80] sm:$0xff] %vm690, %v642
  %708 = vst.msk [vmem:[#allocation2 + $0x88] sm:$0xff] %vm690, %v643
  %709 = vst.msk [vmem:[#allocation2 + $0x90] sm:$0xff] %vm690, %v644
  %710 = vst.msk [vmem:[#allocation2 + $0x98] sm:$0xff] %vm690, %v645
  %711 = vst.msk [vmem:[#allocation2 + $0xa0] sm:$0xff] %vm690, %v646
  %712 = vst.msk [vmem:[#allocation2 + $0xa8] sm:$0xff] %vm690, %v647
  %713 = vst.msk [vmem:[#allocation2 + $0xb0] sm:$0xff] %vm690, %v648
  %714 = vst.msk [vmem:[#allocation2 + $0xb8] sm:$0xff] %vm690, %v649
  %715 = vst.msk [vmem:[#allocation2 + $0xc0] sm:$0xff] %vm690, %v650
  %716 = vst.msk [vmem:[#allocation2 + $0xc8] sm:$0xff] %vm690, %v651
  %717 = vst.msk [vmem:[#allocation2 + $0xd0] sm:$0xff] %vm690, %v652
  %718 = vst.msk [vmem:[#allocation2 + $0xd8] sm:$0xff] %vm690, %v653
  %719 = vst.msk [vmem:[#allocation2 + $0xe0] sm:$0xff] %vm690, %v654
  %720 = vst.msk [vmem:[#allocation2 + $0xe8] sm:$0xff] %vm690, %v655
  %721 = vst.msk [vmem:[#allocation2 + $0xf0] sm:$0xff] %vm690, %v656
  %722 = vst.msk [vmem:[#allocation2 + $0xf8] sm:$0xff] %vm690, %v657
  %723 = vst.msk [vmem:[#allocation2 + $0x100] sm:$0xff] %vm690, %v658
  %724 = vst.msk [vmem:[#allocation2 + $0x108] sm:$0xff] %vm690, %v659
  %725 = vst.msk [vmem:[#allocation2 + $0x110] sm:$0xff] %vm690, %v660
  %726 = vst.msk [vmem:[#allocation2 + $0x118] sm:$0xff] %vm690, %v661
  %727 = vst.msk [vmem:[#allocation2 + $0x120] sm:$0xff] %vm690, %v662
  %728 = vst.msk [vmem:[#allocation2 + $0x128] sm:$0xff] %vm690, %v663
  %729 = vst.msk [vmem:[#allocation2 + $0x130] sm:$0xff] %vm690, %v664
  %730 = vst.msk [vmem:[#allocation2 + $0x138] sm:$0xff] %vm690, %v665
  %731 = vst.msk [vmem:[#allocation2 + $0x140] sm:$0xff] %vm690, %v666
  %732 = vst.msk [vmem:[#allocation2 + $0x148] sm:$0xff] %vm690, %v667
  %733 = vst.msk [vmem:[#allocation2 + $0x150] sm:$0xff] %vm690, %v668
  %734 = vst.msk [vmem:[#allocation2 + $0x158] sm:$0xff] %vm690, %v669
  %735 = vst.msk [vmem:[#allocation2 + $0x160] sm:$0xff] %vm690, %v670
  %736 = vst.msk [vmem:[#allocation2 + $0x168] sm:$0xff] %vm690, %v671
  %737 = vst.msk [vmem:[#allocation2 + $0x170] sm:$0xff] %vm690, %v672
  %738 = vst.msk [vmem:[#allocation2 + $0x178] sm:$0xff] %vm690, %v673
  %739 = vst.msk [vmem:[#allocation2 + $0x180] sm:$0xff] %vm690, %v674
  %740 = vst.msk [vmem:[#allocation2 + $0x188] sm:$0xff] %vm690, %v675
  %741 = vst.msk [vmem:[#allocation2 + $0x190] sm:$0xff] %vm690, %v676
  %742 = vst.msk [vmem:[#allocation2 + $0x198] sm:$0xff] %vm690, %v677
  %743 = vst.msk [vmem:[#allocation2 + $0x1a0] sm:$0xff] %vm690, %v678
  %744 = vst.msk [vmem:[#allocation2 + $0x1a8] sm:$0xff] %vm690, %v679
  %745 = vst.msk [vmem:[#allocation2 + $0x1b0] sm:$0xff] %vm690, %v680
  %746 = vst.msk [vmem:[#allocation2 + $0x1b8] sm:$0xff] %vm690, %v681
  %747 = vst.msk [vmem:[#allocation2 + $0x1c0] sm:$0xff] %vm690, %v682
  %748 = vst.msk [vmem:[#allocation2 + $0x1c8] sm:$0xff] %vm690, %v683
  %749 = vst.msk [vmem:[#allocation2 + $0x1d0] sm:$0xff] %vm690, %v684
  %750 = vst.msk [vmem:[#allocation2 + $0x1d8] sm:$0xff] %vm690, %v685
  %751 = vst.msk [vmem:[#allocation2 + $0x1e0] sm:$0xff] %vm690, %v686
  %752 = vst.msk [vmem:[#allocation2 + $0x1e8] sm:$0xff] %vm690, %v687
  %753 = vst.msk [vmem:[#allocation2 + $0x1f0] sm:$0xff] %vm690, %v688
  %754 = vst.msk [vmem:[#allocation2 + $0x1f8] sm:$0xff] %vm690, %v689
  %v755 = vld [vmem:[%s1] sm:$0xff]
  %v756 = vld [vmem:[%s1 + $0x8] sm:$0xff]
  %v757 = vld [vmem:[%s1 + $0x10] sm:$0xff]
  %v758 = vld [vmem:[%s1 + $0x18] sm:$0xff]
  %v759 = vld [vmem:[%s1 + $0x20] sm:$0xff]
  %v760 = vld [vmem:[%s1 + $0x28] sm:$0xff]
  %v761 = vld [vmem:[%s1 + $0x30] sm:$0xff]
  %v762 = vld [vmem:[%s1 + $0x38] sm:$0xff]
  %v763 = vld [vmem:[%s1 + $0x40] sm:$0xff]
  %v764 = vld [vmem:[%s1 + $0x48] sm:$0xff]
  %v765 = vld [vmem:[%s1 + $0x50] sm:$0xff]
  %v766 = vld [vmem:[%s1 + $0x58] sm:$0xff]
  %v767 = vld [vmem:[%s1 + $0x60] sm:$0xff]
  %v768 = vld [vmem:[%s1 + $0x68] sm:$0xff]
  %v769 = vld [vmem:[%s1 + $0x70] sm:$0xff]
  %v770 = vld [vmem:[%s1 + $0x78] sm:$0xff]
  %v771 = vld [vmem:[%s1 + $0x80] sm:$0xff]
  %v772 = vld [vmem:[%s1 + $0x88] sm:$0xff]
  %v773 = vld [vmem:[%s1 + $0x90] sm:$0xff]
  %v774 = vld [vmem:[%s1 + $0x98] sm:$0xff]
  %v775 = vld [vmem:[%s1 + $0xa0] sm:$0xff]
  %v776 = vld [vmem:[%s1 + $0xa8] sm:$0xff]
  %v777 = vld [vmem:[%s1 + $0xb0] sm:$0xff]
  %v778 = vld [vmem:[%s1 + $0xb8] sm:$0xff]
  %v779 = vld [vmem:[%s1 + $0xc0] sm:$0xff]
  %v780 = vld [vmem:[%s1 + $0xc8] sm:$0xff]
  %v781 = vld [vmem:[%s1 + $0xd0] sm:$0xff]
  %v782 = vld [vmem:[%s1 + $0xd8] sm:$0xff]
  %v783 = vld [vmem:[%s1 + $0xe0] sm:$0xff]
  %v784 = vld [vmem:[%s1 + $0xe8] sm:$0xff]
  %v785 = vld [vmem:[%s1 + $0xf0] sm:$0xff]
  %v786 = vld [vmem:[%s1 + $0xf8] sm:$0xff]
  %v787 = vld [vmem:[%s1 + $0x100] sm:$0xff]
  %v788 = vld [vmem:[%s1 + $0x108] sm:$0xff]
  %v789 = vld [vmem:[%s1 + $0x110] sm:$0xff]
  %v790 = vld [vmem:[%s1 + $0x118] sm:$0xff]
  %v791 = vld [vmem:[%s1 + $0x120] sm:$0xff]
  %v792 = vld [vmem:[%s1 + $0x128] sm:$0xff]
  %v793 = vld [vmem:[%s1 + $0x130] sm:$0xff]
  %v794 = vld [vmem:[%s1 + $0x138] sm:$0xff]
  %v795 = vld [vmem:[%s1 + $0x140] sm:$0xff]
  %v796 = vld [vmem:[%s1 + $0x148] sm:$0xff]
  %v797 = vld [vmem:[%s1 + $0x150] sm:$0xff]
  %v798 = vld [vmem:[%s1 + $0x158] sm:$0xff]
  %v799 = vld [vmem:[%s1 + $0x160] sm:$0xff]
  %v800 = vld [vmem:[%s1 + $0x168] sm:$0xff]
  %v801 = vld [vmem:[%s1 + $0x170] sm:$0xff]
  %v802 = vld [vmem:[%s1 + $0x178] sm:$0xff]
  %v803 = vld [vmem:[%s1 + $0x180] sm:$0xff]
  %v804 = vld [vmem:[%s1 + $0x188] sm:$0xff]
  %v805 = vld [vmem:[%s1 + $0x190] sm:$0xff]
  %v806 = vld [vmem:[%s1 + $0x198] sm:$0xff]
  %v807 = vld [vmem:[%s1 + $0x1a0] sm:$0xff]
  %v808 = vld [vmem:[%s1 + $0x1a8] sm:$0xff]
  %v809 = vld [vmem:[%s1 + $0x1b0] sm:$0xff]
  %v810 = vld [vmem:[%s1 + $0x1b8] sm:$0xff]
  %v811 = vld [vmem:[%s1 + $0x1c0] sm:$0xff]
  %v812 = vld [vmem:[%s1 + $0x1c8] sm:$0xff]
  %v813 = vld [vmem:[%s1 + $0x1d0] sm:$0xff]
  %v814 = vld [vmem:[%s1 + $0x1d8] sm:$0xff]
  %v815 = vld [vmem:[%s1 + $0x1e0] sm:$0xff]
  %v816 = vld [vmem:[%s1 + $0x1e8] sm:$0xff]
  %v817 = vld [vmem:[%s1 + $0x1f0] sm:$0xff]
  %v818 = vld [vmem:[%s1 + $0x1f8] sm:$0xff]
  %820 = vset.pattern.permute.xlu0 1
  %821 = vperm.xlu0 %820, %v755
  %v822 = vpop.permute.xlu0 %821
  %825 = vset.pattern.permute.xlu0 1
  %826 = vperm.xlu0 %825, %v756
  %v827 = vpop.permute.xlu0 %826
  %830 = vset.pattern.permute.xlu0 1
  %831 = vperm.xlu0 %830, %v757
  %v832 = vpop.permute.xlu0 %831
  %835 = vset.pattern.permute.xlu0 1
  %836 = vperm.xlu0 %835, %v758
  %v837 = vpop.permute.xlu0 %836
  %840 = vset.pattern.permute.xlu0 1
  %841 = vperm.xlu0 %840, %v759
  %v842 = vpop.permute.xlu0 %841
  %845 = vset.pattern.permute.xlu0 1
  %846 = vperm.xlu0 %845, %v760
  %v847 = vpop.permute.xlu0 %846
  %850 = vset.pattern.permute.xlu0 1
  %851 = vperm.xlu0 %850, %v761
  %v852 = vpop.permute.xlu0 %851
  %855 = vset.pattern.permute.xlu0 1
  %856 = vperm.xlu0 %855, %v762
  %v857 = vpop.permute.xlu0 %856
  %860 = vset.pattern.permute.xlu0 1
  %861 = vperm.xlu0 %860, %v763
  %v862 = vpop.permute.xlu0 %861
  %865 = vset.pattern.permute.xlu0 1
  %866 = vperm.xlu0 %865, %v764
  %v867 = vpop.permute.xlu0 %866
  %870 = vset.pattern.permute.xlu0 1
  %871 = vperm.xlu0 %870, %v765
  %v872 = vpop.permute.xlu0 %871
  %875 = vset.pattern.permute.xlu0 1
  %876 = vperm.xlu0 %875, %v766
  %v877 = vpop.permute.xlu0 %876
  %880 = vset.pattern.permute.xlu0 1
  %881 = vperm.xlu0 %880, %v767
  %v882 = vpop.permute.xlu0 %881
  %885 = vset.pattern.permute.xlu0 1
  %886 = vperm.xlu0 %885, %v768
  %v887 = vpop.permute.xlu0 %886
  %890 = vset.pattern.permute.xlu0 1
  %891 = vperm.xlu0 %890, %v769
  %v892 = vpop.permute.xlu0 %891
  %895 = vset.pattern.permute.xlu0 1
  %896 = vperm.xlu0 %895, %v770
  %v897 = vpop.permute.xlu0 %896
  %900 = vset.pattern.permute.xlu0 1
  %901 = vperm.xlu0 %900, %v771
  %v902 = vpop.permute.xlu0 %901
  %905 = vset.pattern.permute.xlu0 1
  %906 = vperm.xlu0 %905, %v772
  %v907 = vpop.permute.xlu0 %906
  %910 = vset.pattern.permute.xlu0 1
  %911 = vperm.xlu0 %910, %v773
  %v912 = vpop.permute.xlu0 %911
  %915 = vset.pattern.permute.xlu0 1
  %916 = vperm.xlu0 %915, %v774
  %v917 = vpop.permute.xlu0 %916
  %920 = vset.pattern.permute.xlu0 1
  %921 = vperm.xlu0 %920, %v775
  %v922 = vpop.permute.xlu0 %921
  %925 = vset.pattern.permute.xlu0 1
  %926 = vperm.xlu0 %925, %v776
  %v927 = vpop.permute.xlu0 %926
  %930 = vset.pattern.permute.xlu0 1
  %931 = vperm.xlu0 %930, %v777
  %v932 = vpop.permute.xlu0 %931
  %935 = vset.pattern.permute.xlu0 1
  %936 = vperm.xlu0 %935, %v778
  %v937 = vpop.permute.xlu0 %936
  %940 = vset.pattern.permute.xlu0 1
  %941 = vperm.xlu0 %940, %v779
  %v942 = vpop.permute.xlu0 %941
  %945 = vset.pattern.permute.xlu0 1
  %946 = vperm.xlu0 %945, %v780
  %v947 = vpop.permute.xlu0 %946
  %950 = vset.pattern.permute.xlu0 1
  %951 = vperm.xlu0 %950, %v781
  %v952 = vpop.permute.xlu0 %951
  %955 = vset.pattern.permute.xlu0 1
  %956 = vperm.xlu0 %955, %v782
  %v957 = vpop.permute.xlu0 %956
  %960 = vset.pattern.permute.xlu0 1
  %961 = vperm.xlu0 %960, %v783
  %v962 = vpop.permute.xlu0 %961
  %965 = vset.pattern.permute.xlu0 1
  %966 = vperm.xlu0 %965, %v784
  %v967 = vpop.permute.xlu0 %966
  %970 = vset.pattern.permute.xlu0 1
  %971 = vperm.xlu0 %970, %v785
  %v972 = vpop.permute.xlu0 %971
  %975 = vset.pattern.permute.xlu0 1
  %976 = vperm.xlu0 %975, %v786
  %v977 = vpop.permute.xlu0 %976
  %980 = vset.pattern.permute.xlu0 1
  %981 = vperm.xlu0 %980, %v787
  %v982 = vpop.permute.xlu0 %981
  %985 = vset.pattern.permute.xlu0 1
  %986 = vperm.xlu0 %985, %v788
  %v987 = vpop.permute.xlu0 %986
  %990 = vset.pattern.permute.xlu0 1
  %991 = vperm.xlu0 %990, %v789
  %v992 = vpop.permute.xlu0 %991
  %995 = vset.pattern.permute.xlu0 1
  %996 = vperm.xlu0 %995, %v790
  %v997 = vpop.permute.xlu0 %996
  %1000 = vset.pattern.permute.xlu0 1
  %1001 = vperm.xlu0 %1000, %v791
  %v1002 = vpop.permute.xlu0 %1001
  %1005 = vset.pattern.permute.xlu0 1
  %1006 = vperm.xlu0 %1005, %v792
  %v1007 = vpop.permute.xlu0 %1006
  %1010 = vset.pattern.permute.xlu0 1
  %1011 = vperm.xlu0 %1010, %v793
  %v1012 = vpop.permute.xlu0 %1011
  %1015 = vset.pattern.permute.xlu0 1
  %1016 = vperm.xlu0 %1015, %v794
  %v1017 = vpop.permute.xlu0 %1016
  %1020 = vset.pattern.permute.xlu0 1
  %1021 = vperm.xlu0 %1020, %v795
  %v1022 = vpop.permute.xlu0 %1021
  %1025 = vset.pattern.permute.xlu0 1
  %1026 = vperm.xlu0 %1025, %v796
  %v1027 = vpop.permute.xlu0 %1026
  %1030 = vset.pattern.permute.xlu0 1
  %1031 = vperm.xlu0 %1030, %v797
  %v1032 = vpop.permute.xlu0 %1031
  %1035 = vset.pattern.permute.xlu0 1
  %1036 = vperm.xlu0 %1035, %v798
  %v1037 = vpop.permute.xlu0 %1036
  %1040 = vset.pattern.permute.xlu0 1
  %1041 = vperm.xlu0 %1040, %v799
  %v1042 = vpop.permute.xlu0 %1041
  %1045 = vset.pattern.permute.xlu0 1
  %1046 = vperm.xlu0 %1045, %v800
  %v1047 = vpop.permute.xlu0 %1046
  %1050 = vset.pattern.permute.xlu0 1
  %1051 = vperm.xlu0 %1050, %v801
  %v1052 = vpop.permute.xlu0 %1051
  %1055 = vset.pattern.permute.xlu0 1
  %1056 = vperm.xlu0 %1055, %v802
  %v1057 = vpop.permute.xlu0 %1056
  %1060 = vset.pattern.permute.xlu0 1
  %1061 = vperm.xlu0 %1060, %v803
  %v1062 = vpop.permute.xlu0 %1061
  %1065 = vset.pattern.permute.xlu0 1
  %1066 = vperm.xlu0 %1065, %v804
  %v1067 = vpop.permute.xlu0 %1066
  %1070 = vset.pattern.permute.xlu0 1
  %1071 = vperm.xlu0 %1070, %v805
  %v1072 = vpop.permute.xlu0 %1071
  %1075 = vset.pattern.permute.xlu0 1
  %1076 = vperm.xlu0 %1075, %v806
  %v1077 = vpop.permute.xlu0 %1076
  %1080 = vset.pattern.permute.xlu0 1
  %1081 = vperm.xlu0 %1080, %v807
  %v1082 = vpop.permute.xlu0 %1081
  %1085 = vset.pattern.permute.xlu0 1
  %1086 = vperm.xlu0 %1085, %v808
  %v1087 = vpop.permute.xlu0 %1086
  %1090 = vset.pattern.permute.xlu0 1
  %1091 = vperm.xlu0 %1090, %v809
  %v1092 = vpop.permute.xlu0 %1091
  %1095 = vset.pattern.permute.xlu0 1
  %1096 = vperm.xlu0 %1095, %v810
  %v1097 = vpop.permute.xlu0 %1096
  %1100 = vset.pattern.permute.xlu0 1
  %1101 = vperm.xlu0 %1100, %v811
  %v1102 = vpop.permute.xlu0 %1101
  %1105 = vset.pattern.permute.xlu0 1
  %1106 = vperm.xlu0 %1105, %v812
  %v1107 = vpop.permute.xlu0 %1106
  %1110 = vset.pattern.permute.xlu0 1
  %1111 = vperm.xlu0 %1110, %v813
  %v1112 = vpop.permute.xlu0 %1111
  %1115 = vset.pattern.permute.xlu0 1
  %1116 = vperm.xlu0 %1115, %v814
  %v1117 = vpop.permute.xlu0 %1116
  %1120 = vset.pattern.permute.xlu0 1
  %1121 = vperm.xlu0 %1120, %v815
  %v1122 = vpop.permute.xlu0 %1121
  %1125 = vset.pattern.permute.xlu0 1
  %1126 = vperm.xlu0 %1125, %v816
  %v1127 = vpop.permute.xlu0 %1126
  %1130 = vset.pattern.permute.xlu0 1
  %1131 = vperm.xlu0 %1130, %v817
  %v1132 = vpop.permute.xlu0 %1131
  %1135 = vset.pattern.permute.xlu0 1
  %1136 = vperm.xlu0 %1135, %v818
  %v1137 = vpop.permute.xlu0 %1136
  %v1139 = vmul.f32 %v109, %v822
  %v1140 = vmul.f32 %v110, %v827
  %v1141 = vmul.f32 %v47, %v832
  %v1142 = vmul.f32 %v48, %v837
  %v1143 = vmul.f32 %v49, %v842
  %v1144 = vmul.f32 %v50, %v847
  %v1145 = vmul.f32 %v51, %v852
  %v1146 = vmul.f32 %v52, %v857
  %v1147 = vmul.f32 %v53, %v862
  %v1148 = vmul.f32 %v54, %v867
  %v1149 = vmul.f32 %v55, %v872
  %v1150 = vmul.f32 %v56, %v877
  %v1151 = vmul.f32 %v57, %v882
  %v1152 = vmul.f32 %v58, %v887
  %v1153 = vmul.f32 %v59, %v892
  %v1154 = vmul.f32 %v60, %v897
  %v1155 = vmul.f32 %v61, %v902
  %v1156 = vmul.f32 %v62, %v907
  %v1157 = vmul.f32 %v63, %v912
  %v1158 = vmul.f32 %v64, %v917
  %v1159 = vmul.f32 %v65, %v922
  %v1160 = vmul.f32 %v66, %v927
  %v1161 = vmul.f32 %v67, %v932
  %v1162 = vmul.f32 %v68, %v937
  %v1163 = vmul.f32 %v69, %v942
  %v1164 = vmul.f32 %v70, %v947
  %v1165 = vmul.f32 %v71, %v952
  %v1166 = vmul.f32 %v72, %v957
  %v1167 = vmul.f32 %v73, %v962
  %v1168 = vmul.f32 %v74, %v967
  %v1169 = vmul.f32 %v75, %v972
  %v1170 = vmul.f32 %v76, %v977
  %v1171 = vmul.f32 %v77, %v982
  %v1172 = vmul.f32 %v78, %v987
  %v1173 = vmul.f32 %v79, %v992
  %v1174 = vmul.f32 %v80, %v997
  %v1175 = vmul.f32 %v81, %v1002
  %v1176 = vmul.f32 %v82, %v1007
  %v1177 = vmul.f32 %v83, %v1012
  %v1178 = vmul.f32 %v84, %v1017
  %v1179 = vmul.f32 %v85, %v1022
  %v1180 = vmul.f32 %v86, %v1027
  %v1181 = vmul.f32 %v87, %v1032
  %v1182 = vmul.f32 %v88, %v1037
  %v1183 = vmul.f32 %v89, %v1042
  %v1184 = vmul.f32 %v90, %v1047
  %v1185 = vmul.f32 %v91, %v1052
  %v1186 = vmul.f32 %v92, %v1057
  %v1187 = vmul.f32 %v93, %v1062
  %v1188 = vmul.f32 %v94, %v1067
  %v1189 = vmul.f32 %v95, %v1072
  %v1190 = vmul.f32 %v96, %v1077
  %v1191 = vmul.f32 %v97, %v1082
  %v1192 = vmul.f32 %v98, %v1087
  %v1193 = vmul.f32 %v99, %v1092
  %v1194 = vmul.f32 %v100, %v1097
  %v1195 = vmul.f32 %v101, %v1102
  %v1196 = vmul.f32 %v102, %v1107
  %v1197 = vmul.f32 %v103, %v1112
  %v1198 = vmul.f32 %v104, %v1117
  %v1199 = vmul.f32 %v105, %v1122
  %v1200 = vmul.f32 %v106, %v1127
  %v1201 = vmul.f32 %v107, %v1132
  %v1202 = vmul.f32 %v108, %v1137
  %1267 = vrot.lane.b32.xlu0 %v1139, 4
  %v1268 = vpop.permute.xlu0 %1267
  %1269 = vrot.lane.b32.xlu0 %v1140, 4
  %v1270 = vpop.permute.xlu0 %1269
  %1271 = vrot.lane.b32.xlu0 %v1141, 4
  %v1272 = vpop.permute.xlu0 %1271
  %1273 = vrot.lane.b32.xlu0 %v1142, 4
  %v1274 = vpop.permute.xlu0 %1273
  %1275 = vrot.lane.b32.xlu0 %v1143, 4
  %v1276 = vpop.permute.xlu0 %1275
  %1277 = vrot.lane.b32.xlu0 %v1144, 4
  %v1278 = vpop.permute.xlu0 %1277
  %1279 = vrot.lane.b32.xlu0 %v1145, 4
  %v1280 = vpop.permute.xlu0 %1279
  %1281 = vrot.lane.b32.xlu0 %v1146, 4
  %v1282 = vpop.permute.xlu0 %1281
  %1283 = vrot.lane.b32.xlu0 %v1147, 4
  %v1284 = vpop.permute.xlu0 %1283
  %1285 = vrot.lane.b32.xlu0 %v1148, 4
  %v1286 = vpop.permute.xlu0 %1285
  %1287 = vrot.lane.b32.xlu0 %v1149, 4
  %v1288 = vpop.permute.xlu0 %1287
  %1289 = vrot.lane.b32.xlu0 %v1150, 4
  %v1290 = vpop.permute.xlu0 %1289
  %1291 = vrot.lane.b32.xlu0 %v1151, 4
  %v1292 = vpop.permute.xlu0 %1291
  %1293 = vrot.lane.b32.xlu0 %v1152, 4
  %v1294 = vpop.permute.xlu0 %1293
  %1295 = vrot.lane.b32.xlu0 %v1153, 4
  %v1296 = vpop.permute.xlu0 %1295
  %1297 = vrot.lane.b32.xlu0 %v1154, 4
  %v1298 = vpop.permute.xlu0 %1297
  %1299 = vrot.lane.b32.xlu0 %v1155, 4
  %v1300 = vpop.permute.xlu0 %1299
  %1301 = vrot.lane.b32.xlu0 %v1156, 4
  %v1302 = vpop.permute.xlu0 %1301
  %1303 = vrot.lane.b32.xlu0 %v1157, 4
  %v1304 = vpop.permute.xlu0 %1303
  %1305 = vrot.lane.b32.xlu0 %v1158, 4
  %v1306 = vpop.permute.xlu0 %1305
  %1307 = vrot.lane.b32.xlu0 %v1159, 4
  %v1308 = vpop.permute.xlu0 %1307
  %1309 = vrot.lane.b32.xlu0 %v1160, 4
  %v1310 = vpop.permute.xlu0 %1309
  %1311 = vrot.lane.b32.xlu0 %v1161, 4
  %v1312 = vpop.permute.xlu0 %1311
  %1313 = vrot.lane.b32.xlu0 %v1162, 4
  %v1314 = vpop.permute.xlu0 %1313
  %1315 = vrot.lane.b32.xlu0 %v1163, 4
  %v1316 = vpop.permute.xlu0 %1315
  %1317 = vrot.lane.b32.xlu0 %v1164, 4
  %v1318 = vpop.permute.xlu0 %1317
  %1319 = vrot.lane.b32.xlu0 %v1165, 4
  %v1320 = vpop.permute.xlu0 %1319
  %1321 = vrot.lane.b32.xlu0 %v1166, 4
  %v1322 = vpop.permute.xlu0 %1321
  %1323 = vrot.lane.b32.xlu0 %v1167, 4
  %v1324 = vpop.permute.xlu0 %1323
  %1325 = vrot.lane.b32.xlu0 %v1168, 4
  %v1326 = vpop.permute.xlu0 %1325
  %1327 = vrot.lane.b32.xlu0 %v1169, 4
  %v1328 = vpop.permute.xlu0 %1327
  %1329 = vrot.lane.b32.xlu0 %v1170, 4
  %v1330 = vpop.permute.xlu0 %1329
  %1331 = vrot.lane.b32.xlu0 %v1171, 4
  %v1332 = vpop.permute.xlu0 %1331
  %1333 = vrot.lane.b32.xlu0 %v1172, 4
  %v1334 = vpop.permute.xlu0 %1333
  %1335 = vrot.lane.b32.xlu0 %v1173, 4
  %v1336 = vpop.permute.xlu0 %1335
  %1337 = vrot.lane.b32.xlu0 %v1174, 4
  %v1338 = vpop.permute.xlu0 %1337
  %1339 = vrot.lane.b32.xlu0 %v1175, 4
  %v1340 = vpop.permute.xlu0 %1339
  %1341 = vrot.lane.b32.xlu0 %v1176, 4
  %v1342 = vpop.permute.xlu0 %1341
  %1343 = vrot.lane.b32.xlu0 %v1177, 4
  %v1344 = vpop.permute.xlu0 %1343
  %1345 = vrot.lane.b32.xlu0 %v1178, 4
  %v1346 = vpop.permute.xlu0 %1345
  %1347 = vrot.lane.b32.xlu0 %v1179, 4
  %v1348 = vpop.permute.xlu0 %1347
  %1349 = vrot.lane.b32.xlu0 %v1180, 4
  %v1350 = vpop.permute.xlu0 %1349
  %1351 = vrot.lane.b32.xlu0 %v1181, 4
  %v1352 = vpop.permute.xlu0 %1351
  %1353 = vrot.lane.b32.xlu0 %v1182, 4
  %v1354 = vpop.permute.xlu0 %1353
  %1355 = vrot.lane.b32.xlu0 %v1183, 4
  %v1356 = vpop.permute.xlu0 %1355
  %1357 = vrot.lane.b32.xlu0 %v1184, 4
  %v1358 = vpop.permute.xlu0 %1357
  %1359 = vrot.lane.b32.xlu0 %v1185, 4
  %v1360 = vpop.permute.xlu0 %1359
  %1361 = vrot.lane.b32.xlu0 %v1186, 4
  %v1362 = vpop.permute.xlu0 %1361
  %1363 = vrot.lane.b32.xlu0 %v1187, 4
  %v1364 = vpop.permute.xlu0 %1363
  %1365 = vrot.lane.b32.xlu0 %v1188, 4
  %v1366 = vpop.permute.xlu0 %1365
  %1367 = vrot.lane.b32.xlu0 %v1189, 4
  %v1368 = vpop.permute.xlu0 %1367
  %1369 = vrot.lane.b32.xlu0 %v1190, 4
  %v1370 = vpop.permute.xlu0 %1369
  %1371 = vrot.lane.b32.xlu0 %v1191, 4
  %v1372 = vpop.permute.xlu0 %1371
  %1373 = vrot.lane.b32.xlu0 %v1192, 4
  %v1374 = vpop.permute.xlu0 %1373
  %1375 = vrot.lane.b32.xlu0 %v1193, 4
  %v1376 = vpop.permute.xlu0 %1375
  %1377 = vrot.lane.b32.xlu0 %v1194, 4
  %v1378 = vpop.permute.xlu0 %1377
  %1379 = vrot.lane.b32.xlu0 %v1195, 4
  %v1380 = vpop.permute.xlu0 %1379
  %1381 = vrot.lane.b32.xlu0 %v1196, 4
  %v1382 = vpop.permute.xlu0 %1381
  %1383 = vrot.lane.b32.xlu0 %v1197, 4
  %v1384 = vpop.permute.xlu0 %1383
  %1385 = vrot.lane.b32.xlu0 %v1198, 4
  %v1386 = vpop.permute.xlu0 %1385
  %1387 = vrot.lane.b32.xlu0 %v1199, 4
  %v1388 = vpop.permute.xlu0 %1387
  %1389 = vrot.lane.b32.xlu0 %v1200, 4
  %v1390 = vpop.permute.xlu0 %1389
  %1391 = vrot.lane.b32.xlu0 %v1201, 4
  %v1392 = vpop.permute.xlu0 %1391
  %1393 = vrot.lane.b32.xlu0 %v1202, 4
  %v1394 = vpop.permute.xlu0 %1393
  %vm1459 = vcmask 64544
  %1460 = vst.msk [vmem:[#allocation2] sm:$0xff] %vm1459, %v1268
  %1461 = vst.msk [vmem:[#allocation2 + $0x8] sm:$0xff] %vm1459, %v1270
  %1462 = vst.msk [vmem:[#allocation2 + $0x10] sm:$0xff] %vm1459, %v1272
  %1463 = vst.msk [vmem:[#allocation2 + $0x18] sm:$0xff] %vm1459, %v1274
  %1464 = vst.msk [vmem:[#allocation2 + $0x20] sm:$0xff] %vm1459, %v1276
  %1465 = vst.msk [vmem:[#allocation2 + $0x28] sm:$0xff] %vm1459, %v1278
  %1466 = vst.msk [vmem:[#allocation2 + $0x30] sm:$0xff] %vm1459, %v1280
  %1467 = vst.msk [vmem:[#allocation2 + $0x38] sm:$0xff] %vm1459, %v1282
  %1468 = vst.msk [vmem:[#allocation2 + $0x40] sm:$0xff] %vm1459, %v1284
  %1469 = vst.msk [vmem:[#allocation2 + $0x48] sm:$0xff] %vm1459, %v1286
  %1470 = vst.msk [vmem:[#allocation2 + $0x50] sm:$0xff] %vm1459, %v1288
  %1471 = vst.msk [vmem:[#allocation2 + $0x58] sm:$0xff] %vm1459, %v1290
  %1472 = vst.msk [vmem:[#allocation2 + $0x60] sm:$0xff] %vm1459, %v1292
  %1473 = vst.msk [vmem:[#allocation2 + $0x68] sm:$0xff] %vm1459, %v1294
  %1474 = vst.msk [vmem:[#allocation2 + $0x70] sm:$0xff] %vm1459, %v1296
  %1475 = vst.msk [vmem:[#allocation2 + $0x78] sm:$0xff] %vm1459, %v1298
  %1476 = vst.msk [vmem:[#allocation2 + $0x80] sm:$0xff] %vm1459, %v1300
  %1477 = vst.msk [vmem:[#allocation2 + $0x88] sm:$0xff] %vm1459, %v1302
  %1478 = vst.msk [vmem:[#allocation2 + $0x90] sm:$0xff] %vm1459, %v1304
  %1479 = vst.msk [vmem:[#allocation2 + $0x98] sm:$0xff] %vm1459, %v1306
  %1480 = vst.msk [vmem:[#allocation2 + $0xa0] sm:$0xff] %vm1459, %v1308
  %1481 = vst.msk [vmem:[#allocation2 + $0xa8] sm:$0xff] %vm1459, %v1310
  %1482 = vst.msk [vmem:[#allocation2 + $0xb0] sm:$0xff] %vm1459, %v1312
  %1483 = vst.msk [vmem:[#allocation2 + $0xb8] sm:$0xff] %vm1459, %v1314
  %1484 = vst.msk [vmem:[#allocation2 + $0xc0] sm:$0xff] %vm1459, %v1316
  %1485 = vst.msk [vmem:[#allocation2 + $0xc8] sm:$0xff] %vm1459, %v1318
  %1486 = vst.msk [vmem:[#allocation2 + $0xd0] sm:$0xff] %vm1459, %v1320
  %1487 = vst.msk [vmem:[#allocation2 + $0xd8] sm:$0xff] %vm1459, %v1322
  %1488 = vst.msk [vmem:[#allocation2 + $0xe0] sm:$0xff] %vm1459, %v1324
  %1489 = vst.msk [vmem:[#allocation2 + $0xe8] sm:$0xff] %vm1459, %v1326
  %1490 = vst.msk [vmem:[#allocation2 + $0xf0] sm:$0xff] %vm1459, %v1328
  %1491 = vst.msk [vmem:[#allocation2 + $0xf8] sm:$0xff] %vm1459, %v1330
  %1492 = vst.msk [vmem:[#allocation2 + $0x100] sm:$0xff] %vm1459, %v1332
  %1493 = vst.msk [vmem:[#allocation2 + $0x108] sm:$0xff] %vm1459, %v1334
  %1494 = vst.msk [vmem:[#allocation2 + $0x110] sm:$0xff] %vm1459, %v1336
  %1495 = vst.msk [vmem:[#allocation2 + $0x118] sm:$0xff] %vm1459, %v1338
  %1496 = vst.msk [vmem:[#allocation2 + $0x120] sm:$0xff] %vm1459, %v1340
  %1497 = vst.msk [vmem:[#allocation2 + $0x128] sm:$0xff] %vm1459, %v1342
  %1498 = vst.msk [vmem:[#allocation2 + $0x130] sm:$0xff] %vm1459, %v1344
  %1499 = vst.msk [vmem:[#allocation2 + $0x138] sm:$0xff] %vm1459, %v1346
  %1500 = vst.msk [vmem:[#allocation2 + $0x140] sm:$0xff] %vm1459, %v1348
  %1501 = vst.msk [vmem:[#allocation2 + $0x148] sm:$0xff] %vm1459, %v1350
  %1502 = vst.msk [vmem:[#allocation2 + $0x150] sm:$0xff] %vm1459, %v1352
  %1503 = vst.msk [vmem:[#allocation2 + $0x158] sm:$0xff] %vm1459, %v1354
  %1504 = vst.msk [vmem:[#allocation2 + $0x160] sm:$0xff] %vm1459, %v1356
  %1505 = vst.msk [vmem:[#allocation2 + $0x168] sm:$0xff] %vm1459, %v1358
  %1506 = vst.msk [vmem:[#allocation2 + $0x170] sm:$0xff] %vm1459, %v1360
  %1507 = vst.msk [vmem:[#allocation2 + $0x178] sm:$0xff] %vm1459, %v1362
  %1508 = vst.msk [vmem:[#allocation2 + $0x180] sm:$0xff] %vm1459, %v1364
  %1509 = vst.msk [vmem:[#allocation2 + $0x188] sm:$0xff] %vm1459, %v1366
  %1510 = vst.msk [vmem:[#allocation2 + $0x190] sm:$0xff] %vm1459, %v1368
  %1511 = vst.msk [vmem:[#allocation2 + $0x198] sm:$0xff] %vm1459, %v1370
  %1512 = vst.msk [vmem:[#allocation2 + $0x1a0] sm:$0xff] %vm1459, %v1372
  %1513 = vst.msk [vmem:[#allocation2 + $0x1a8] sm:$0xff] %vm1459, %v1374
  %1514 = vst.msk [vmem:[#allocation2 + $0x1b0] sm:$0xff] %vm1459, %v1376
  %1515 = vst.msk [vmem:[#allocation2 + $0x1b8] sm:$0xff] %vm1459, %v1378
  %1516 = vst.msk [vmem:[#allocation2 + $0x1c0] sm:$0xff] %vm1459, %v1380
  %1517 = vst.msk [vmem:[#allocation2 + $0x1c8] sm:$0xff] %vm1459, %v1382
  %1518 = vst.msk [vmem:[#allocation2 + $0x1d0] sm:$0xff] %vm1459, %v1384
  %1519 = vst.msk [vmem:[#allocation2 + $0x1d8] sm:$0xff] %vm1459, %v1386
  %1520 = vst.msk [vmem:[#allocation2 + $0x1e0] sm:$0xff] %vm1459, %v1388
  %1521 = vst.msk [vmem:[#allocation2 + $0x1e8] sm:$0xff] %vm1459, %v1390
  %1522 = vst.msk [vmem:[#allocation2 + $0x1f0] sm:$0xff] %vm1459, %v1392
  %1523 = vst.msk [vmem:[#allocation2 + $0x1f8] sm:$0xff] %vm1459, %v1394
  %v1524 = vrot.slane %v47, 1
  %v1525 = vrot.slane %v48, 1
  %v1526 = vrot.slane %v49, 1
  %v1527 = vrot.slane %v50, 1
  %v1528 = vrot.slane %v51, 1
  %v1529 = vrot.slane %v52, 1
  %v1530 = vrot.slane %v53, 1
  %v1531 = vrot.slane %v54, 1
  %v1532 = vrot.slane %v55, 1
  %v1533 = vrot.slane %v56, 1
  %v1534 = vrot.slane %v57, 1
  %v1535 = vrot.slane %v58, 1
  %v1536 = vrot.slane %v59, 1
  %v1537 = vrot.slane %v60, 1
  %v1538 = vrot.slane %v61, 1
  %v1539 = vrot.slane %v62, 1
  %v1540 = vrot.slane %v63, 1
  %v1541 = vrot.slane %v64, 1
  %v1542 = vrot.slane %v65, 1
  %v1543 = vrot.slane %v66, 1
  %v1544 = vrot.slane %v67, 1
  %v1545 = vrot.slane %v68, 1
  %v1546 = vrot.slane %v69, 1
  %v1547 = vrot.slane %v70, 1
  %v1548 = vrot.slane %v71, 1
  %v1549 = vrot.slane %v72, 1
  %v1550 = vrot.slane %v73, 1
  %v1551 = vrot.slane %v74, 1
  %v1552 = vrot.slane %v75, 1
  %v1553 = vrot.slane %v76, 1
  %v1554 = vrot.slane %v77, 1
  %v1555 = vrot.slane %v78, 1
  %v1556 = vrot.slane %v79, 1
  %v1557 = vrot.slane %v80, 1
  %v1558 = vrot.slane %v81, 1
  %v1559 = vrot.slane %v82, 1
  %v1560 = vrot.slane %v83, 1
  %v1561 = vrot.slane %v84, 1
  %v1562 = vrot.slane %v85, 1
  %v1563 = vrot.slane %v86, 1
  %v1564 = vrot.slane %v87, 1
  %v1565 = vrot.slane %v88, 1
  %v1566 = vrot.slane %v89, 1
  %v1567 = vrot.slane %v90, 1
  %v1568 = vrot.slane %v91, 1
  %v1569 = vrot.slane %v92, 1
  %v1570 = vrot.slane %v93, 1
  %v1571 = vrot.slane %v94, 1
  %v1572 = vrot.slane %v95, 1
  %v1573 = vrot.slane %v96, 1
  %v1574 = vrot.slane %v97, 1
  %v1575 = vrot.slane %v98, 1
  %v1576 = vrot.slane %v99, 1
  %v1577 = vrot.slane %v100, 1
  %v1578 = vrot.slane %v101, 1
  %v1579 = vrot.slane %v102, 1
  %v1580 = vrot.slane %v103, 1
  %v1581 = vrot.slane %v104, 1
  %v1582 = vrot.slane %v105, 1
  %v1583 = vrot.slane %v106, 1
  %v1584 = vrot.slane %v107, 1
  %v1585 = vrot.slane %v108, 1
  %v1586 = vrot.slane %v109, 1
  %v1587 = vrot.slane %v110, 1
  %vm1588 = vcmp.lt.s32.totalorder %v176, 7
  %v1589 = vsel %vm1588, %v1586, %v1587
  %v1590 = vsel %vm1588, %v1585, %v1586
  %v1591 = vsel %vm1588, %v1584, %v1585
  %v1592 = vsel %vm1588, %v1583, %v1584
  %v1593 = vsel %vm1588, %v1582, %v1583
  %v1594 = vsel %vm1588, %v1581, %v1582
  %v1595 = vsel %vm1588, %v1580, %v1581
  %v1596 = vsel %vm1588, %v1579, %v1580
  %v1597 = vsel %vm1588, %v1578, %v1579
  %v1598 = vsel %vm1588, %v1577, %v1578
  %v1599 = vsel %vm1588, %v1576, %v1577
  %v1600 = vsel %vm1588, %v1575, %v1576
  %v1601 = vsel %vm1588, %v1574, %v1575
  %v1602 = vsel %vm1588, %v1573, %v1574
  %v1603 = vsel %vm1588, %v1572, %v1573
  %v1604 = vsel %vm1588, %v1571, %v1572
  %v1605 = vsel %vm1588, %v1570, %v1571
  %v1606 = vsel %vm1588, %v1569, %v1570
  %v1607 = vsel %vm1588, %v1568, %v1569
  %v1608 = vsel %vm1588, %v1567, %v1568
  %v1609 = vsel %vm1588, %v1566, %v1567
  %v1610 = vsel %vm1588, %v1565, %v1566
  %v1611 = vsel %vm1588, %v1564, %v1565
  %v1612 = vsel %vm1588, %v1563, %v1564
  %v1613 = vsel %vm1588, %v1562, %v1563
  %v1614 = vsel %vm1588, %v1561, %v1562
  %v1615 = vsel %vm1588, %v1560, %v1561
  %v1616 = vsel %vm1588, %v1559, %v1560
  %v1617 = vsel %vm1588, %v1558, %v1559
  %v1618 = vsel %vm1588, %v1557, %v1558
  %v1619 = vsel %vm1588, %v1556, %v1557
  %v1620 = vsel %vm1588, %v1555, %v1556
  %v1621 = vsel %vm1588, %v1554, %v1555
  %v1622 = vsel %vm1588, %v1553, %v1554
  %v1623 = vsel %vm1588, %v1552, %v1553
  %v1624 = vsel %vm1588, %v1551, %v1552
  %v1625 = vsel %vm1588, %v1550, %v1551
  %v1626 = vsel %vm1588, %v1549, %v1550
  %v1627 = vsel %vm1588, %v1548, %v1549
  %v1628 = vsel %vm1588, %v1547, %v1548
  %v1629 = vsel %vm1588, %v1546, %v1547
  %v1630 = vsel %vm1588, %v1545, %v1546
  %v1631 = vsel %vm1588, %v1544, %v1545
  %v1632 = vsel %vm1588, %v1543, %v1544
  %v1633 = vsel %vm1588, %v1542, %v1543
  %v1634 = vsel %vm1588, %v1541, %v1542
  %v1635 = vsel %vm1588, %v1540, %v1541
  %v1636 = vsel %vm1588, %v1539, %v1540
  %v1637 = vsel %vm1588, %v1538, %v1539
  %v1638 = vsel %vm1588, %v1537, %v1538
  %v1639 = vsel %vm1588, %v1536, %v1537
  %v1640 = vsel %vm1588, %v1535, %v1536
  %v1641 = vsel %vm1588, %v1534, %v1535
  %v1642 = vsel %vm1588, %v1533, %v1534
  %v1643 = vsel %vm1588, %v1532, %v1533
  %v1644 = vsel %vm1588, %v1531, %v1532
  %v1645 = vsel %vm1588, %v1530, %v1531
  %v1646 = vsel %vm1588, %v1529, %v1530
  %v1647 = vsel %vm1588, %v1528, %v1529
  %v1648 = vsel %vm1588, %v1527, %v1528
  %v1649 = vsel %vm1588, %v1526, %v1527
  %v1650 = vsel %vm1588, %v1525, %v1526
  %v1651 = vsel %vm1588, %v1524, %v1525
  %v1652 = vsel %vm1588, %v1587, %v1524
  %v1653 = vld [vmem:[%s1] sm:$0xff]
  %v1654 = vld [vmem:[%s1 + $0x8] sm:$0xff]
  %v1655 = vld [vmem:[%s1 + $0x10] sm:$0xff]
  %v1656 = vld [vmem:[%s1 + $0x18] sm:$0xff]
  %v1657 = vld [vmem:[%s1 + $0x20] sm:$0xff]
  %v1658 = vld [vmem:[%s1 + $0x28] sm:$0xff]
  %v1659 = vld [vmem:[%s1 + $0x30] sm:$0xff]
  %v1660 = vld [vmem:[%s1 + $0x38] sm:$0xff]
  %v1661 = vld [vmem:[%s1 + $0x40] sm:$0xff]
  %v1662 = vld [vmem:[%s1 + $0x48] sm:$0xff]
  %v1663 = vld [vmem:[%s1 + $0x50] sm:$0xff]
  %v1664 = vld [vmem:[%s1 + $0x58] sm:$0xff]
  %v1665 = vld [vmem:[%s1 + $0x60] sm:$0xff]
  %v1666 = vld [vmem:[%s1 + $0x68] sm:$0xff]
  %v1667 = vld [vmem:[%s1 + $0x70] sm:$0xff]
  %v1668 = vld [vmem:[%s1 + $0x78] sm:$0xff]
  %v1669 = vld [vmem:[%s1 + $0x80] sm:$0xff]
  %v1670 = vld [vmem:[%s1 + $0x88] sm:$0xff]
  %v1671 = vld [vmem:[%s1 + $0x90] sm:$0xff]
  %v1672 = vld [vmem:[%s1 + $0x98] sm:$0xff]
  %v1673 = vld [vmem:[%s1 + $0xa0] sm:$0xff]
  %v1674 = vld [vmem:[%s1 + $0xa8] sm:$0xff]
  %v1675 = vld [vmem:[%s1 + $0xb0] sm:$0xff]
  %v1676 = vld [vmem:[%s1 + $0xb8] sm:$0xff]
  %v1677 = vld [vmem:[%s1 + $0xc0] sm:$0xff]
  %v1678 = vld [vmem:[%s1 + $0xc8] sm:$0xff]
  %v1679 = vld [vmem:[%s1 + $0xd0] sm:$0xff]
  %v1680 = vld [vmem:[%s1 + $0xd8] sm:$0xff]
  %v1681 = vld [vmem:[%s1 + $0xe0] sm:$0xff]
  %v1682 = vld [vmem:[%s1 + $0xe8] sm:$0xff]
  %v1683 = vld [vmem:[%s1 + $0xf0] sm:$0xff]
  %v1684 = vld [vmem:[%s1 + $0xf8] sm:$0xff]
  %v1685 = vld [vmem:[%s1 + $0x100] sm:$0xff]
  %v1686 = vld [vmem:[%s1 + $0x108] sm:$0xff]
  %v1687 = vld [vmem:[%s1 + $0x110] sm:$0xff]
  %v1688 = vld [vmem:[%s1 + $0x118] sm:$0xff]
  %v1689 = vld [vmem:[%s1 + $0x120] sm:$0xff]
  %v1690 = vld [vmem:[%s1 + $0x128] sm:$0xff]
  %v1691 = vld [vmem:[%s1 + $0x130] sm:$0xff]
  %v1692 = vld [vmem:[%s1 + $0x138] sm:$0xff]
  %v1693 = vld [vmem:[%s1 + $0x140] sm:$0xff]
  %v1694 = vld [vmem:[%s1 + $0x148] sm:$0xff]
  %v1695 = vld [vmem:[%s1 + $0x150] sm:$0xff]
  %v1696 = vld [vmem:[%s1 + $0x158] sm:$0xff]
  %v1697 = vld [vmem:[%s1 + $0x160] sm:$0xff]
  %v1698 = vld [vmem:[%s1 + $0x168] sm:$0xff]
  %v1699 = vld [vmem:[%s1 + $0x170] sm:$0xff]
  %v1700 = vld [vmem:[%s1 + $0x178] sm:$0xff]
  %v1701 = vld [vmem:[%s1 + $0x180] sm:$0xff]
  %v1702 = vld [vmem:[%s1 + $0x188] sm:$0xff]
  %v1703 = vld [vmem:[%s1 + $0x190] sm:$0xff]
  %v1704 = vld [vmem:[%s1 + $0x198] sm:$0xff]
  %v1705 = vld [vmem:[%s1 + $0x1a0] sm:$0xff]
  %v1706 = vld [vmem:[%s1 + $0x1a8] sm:$0xff]
  %v1707 = vld [vmem:[%s1 + $0x1b0] sm:$0xff]
  %v1708 = vld [vmem:[%s1 + $0x1b8] sm:$0xff]
  %v1709 = vld [vmem:[%s1 + $0x1c0] sm:$0xff]
  %v1710 = vld [vmem:[%s1 + $0x1c8] sm:$0xff]
  %v1711 = vld [vmem:[%s1 + $0x1d0] sm:$0xff]
  %v1712 = vld [vmem:[%s1 + $0x1d8] sm:$0xff]
  %v1713 = vld [vmem:[%s1 + $0x1e0] sm:$0xff]
  %v1714 = vld [vmem:[%s1 + $0x1e8] sm:$0xff]
  %v1715 = vld [vmem:[%s1 + $0x1f0] sm:$0xff]
  %v1716 = vld [vmem:[%s1 + $0x1f8] sm:$0xff]
  %1718 = vset.pattern.permute.xlu0 2
  %1719 = vperm.xlu0 %1718, %v1653
  %v1720 = vpop.permute.xlu0 %1719
  %1723 = vset.pattern.permute.xlu0 2
  %1724 = vperm.xlu0 %1723, %v1654
  %v1725 = vpop.permute.xlu0 %1724
  %1728 = vset.pattern.permute.xlu0 2
  %1729 = vperm.xlu0 %1728, %v1655
  %v1730 = vpop.permute.xlu0 %1729
  %1733 = vset.pattern.permute.xlu0 2
  %1734 = vperm.xlu0 %1733, %v1656
  %v1735 = vpop.permute.xlu0 %1734
  %1738 = vset.pattern.permute.xlu0 2
  %1739 = vperm.xlu0 %1738, %v1657
  %v1740 = vpop.permute.xlu0 %1739
  %1743 = vset.pattern.permute.xlu0 2
  %1744 = vperm.xlu0 %1743, %v1658
  %v1745 = vpop.permute.xlu0 %1744
  %1748 = vset.pattern.permute.xlu0 2
  %1749 = vperm.xlu0 %1748, %v1659
  %v1750 = vpop.permute.xlu0 %1749
  %1753 = vset.pattern.permute.xlu0 2
  %1754 = vperm.xlu0 %1753, %v1660
  %v1755 = vpop.permute.xlu0 %1754
  %1758 = vset.pattern.permute.xlu0 2
  %1759 = vperm.xlu0 %1758, %v1661
  %v1760 = vpop.permute.xlu0 %1759
  %1763 = vset.pattern.permute.xlu0 2
  %1764 = vperm.xlu0 %1763, %v1662
  %v1765 = vpop.permute.xlu0 %1764
  %1768 = vset.pattern.permute.xlu0 2
  %1769 = vperm.xlu0 %1768, %v1663
  %v1770 = vpop.permute.xlu0 %1769
  %1773 = vset.pattern.permute.xlu0 2
  %1774 = vperm.xlu0 %1773, %v1664
  %v1775 = vpop.permute.xlu0 %1774
  %1778 = vset.pattern.permute.xlu0 2
  %1779 = vperm.xlu0 %1778, %v1665
  %v1780 = vpop.permute.xlu0 %1779
  %1783 = vset.pattern.permute.xlu0 2
  %1784 = vperm.xlu0 %1783, %v1666
  %v1785 = vpop.permute.xlu0 %1784
  %1788 = vset.pattern.permute.xlu0 2
  %1789 = vperm.xlu0 %1788, %v1667
  %v1790 = vpop.permute.xlu0 %1789
  %1793 = vset.pattern.permute.xlu0 2
  %1794 = vperm.xlu0 %1793, %v1668
  %v1795 = vpop.permute.xlu0 %1794
  %1798 = vset.pattern.permute.xlu0 2
  %1799 = vperm.xlu0 %1798, %v1669
  %v1800 = vpop.permute.xlu0 %1799
  %1803 = vset.pattern.permute.xlu0 2
  %1804 = vperm.xlu0 %1803, %v1670
  %v1805 = vpop.permute.xlu0 %1804
  %1808 = vset.pattern.permute.xlu0 2
  %1809 = vperm.xlu0 %1808, %v1671
  %v1810 = vpop.permute.xlu0 %1809
  %1813 = vset.pattern.permute.xlu0 2
  %1814 = vperm.xlu0 %1813, %v1672
  %v1815 = vpop.permute.xlu0 %1814
  %1818 = vset.pattern.permute.xlu0 2
  %1819 = vperm.xlu0 %1818, %v1673
  %v1820 = vpop.permute.xlu0 %1819
  %1823 = vset.pattern.permute.xlu0 2
  %1824 = vperm.xlu0 %1823, %v1674
  %v1825 = vpop.permute.xlu0 %1824
  %1828 = vset.pattern.permute.xlu0 2
  %1829 = vperm.xlu0 %1828, %v1675
  %v1830 = vpop.permute.xlu0 %1829
  %1833 = vset.pattern.permute.xlu0 2
  %1834 = vperm.xlu0 %1833, %v1676
  %v1835 = vpop.permute.xlu0 %1834
  %1838 = vset.pattern.permute.xlu0 2
  %1839 = vperm.xlu0 %1838, %v1677
  %v1840 = vpop.permute.xlu0 %1839
  %1843 = vset.pattern.permute.xlu0 2
  %1844 = vperm.xlu0 %1843, %v1678
  %v1845 = vpop.permute.xlu0 %1844
  %1848 = vset.pattern.permute.xlu0 2
  %1849 = vperm.xlu0 %1848, %v1679
  %v1850 = vpop.permute.xlu0 %1849
  %1853 = vset.pattern.permute.xlu0 2
  %1854 = vperm.xlu0 %1853, %v1680
  %v1855 = vpop.permute.xlu0 %1854
  %1858 = vset.pattern.permute.xlu0 2
  %1859 = vperm.xlu0 %1858, %v1681
  %v1860 = vpop.permute.xlu0 %1859
  %1863 = vset.pattern.permute.xlu0 2
  %1864 = vperm.xlu0 %1863, %v1682
  %v1865 = vpop.permute.xlu0 %1864
  %1868 = vset.pattern.permute.xlu0 2
  %1869 = vperm.xlu0 %1868, %v1683
  %v1870 = vpop.permute.xlu0 %1869
  %1873 = vset.pattern.permute.xlu0 2
  %1874 = vperm.xlu0 %1873, %v1684
  %v1875 = vpop.permute.xlu0 %1874
  %1878 = vset.pattern.permute.xlu0 2
  %1879 = vperm.xlu0 %1878, %v1685
  %v1880 = vpop.permute.xlu0 %1879
  %1883 = vset.pattern.permute.xlu0 2
  %1884 = vperm.xlu0 %1883, %v1686
  %v1885 = vpop.permute.xlu0 %1884
  %1888 = vset.pattern.permute.xlu0 2
  %1889 = vperm.xlu0 %1888, %v1687
  %v1890 = vpop.permute.xlu0 %1889
  %1893 = vset.pattern.permute.xlu0 2
  %1894 = vperm.xlu0 %1893, %v1688
  %v1895 = vpop.permute.xlu0 %1894
  %1898 = vset.pattern.permute.xlu0 2
  %1899 = vperm.xlu0 %1898, %v1689
  %v1900 = vpop.permute.xlu0 %1899
  %1903 = vset.pattern.permute.xlu0 2
  %1904 = vperm.xlu0 %1903, %v1690
  %v1905 = vpop.permute.xlu0 %1904
  %1908 = vset.pattern.permute.xlu0 2
  %1909 = vperm.xlu0 %1908, %v1691
  %v1910 = vpop.permute.xlu0 %1909
  %1913 = vset.pattern.permute.xlu0 2
  %1914 = vperm.xlu0 %1913, %v1692
  %v1915 = vpop.permute.xlu0 %1914
  %1918 = vset.pattern.permute.xlu0 2
  %1919 = vperm.xlu0 %1918, %v1693
  %v1920 = vpop.permute.xlu0 %1919
  %1923 = vset.pattern.permute.xlu0 2
  %1924 = vperm.xlu0 %1923, %v1694
  %v1925 = vpop.permute.xlu0 %1924
  %1928 = vset.pattern.permute.xlu0 2
  %1929 = vperm.xlu0 %1928, %v1695
  %v1930 = vpop.permute.xlu0 %1929
  %1933 = vset.pattern.permute.xlu0 2
  %1934 = vperm.xlu0 %1933, %v1696
  %v1935 = vpop.permute.xlu0 %1934
  %1938 = vset.pattern.permute.xlu0 2
  %1939 = vperm.xlu0 %1938, %v1697
  %v1940 = vpop.permute.xlu0 %1939
  %1943 = vset.pattern.permute.xlu0 2
  %1944 = vperm.xlu0 %1943, %v1698
  %v1945 = vpop.permute.xlu0 %1944
  %1948 = vset.pattern.permute.xlu0 2
  %1949 = vperm.xlu0 %1948, %v1699
  %v1950 = vpop.permute.xlu0 %1949
  %1953 = vset.pattern.permute.xlu0 2
  %1954 = vperm.xlu0 %1953, %v1700
  %v1955 = vpop.permute.xlu0 %1954
  %1958 = vset.pattern.permute.xlu0 2
  %1959 = vperm.xlu0 %1958, %v1701
  %v1960 = vpop.permute.xlu0 %1959
  %1963 = vset.pattern.permute.xlu0 2
  %1964 = vperm.xlu0 %1963, %v1702
  %v1965 = vpop.permute.xlu0 %1964
  %1968 = vset.pattern.permute.xlu0 2
  %1969 = vperm.xlu0 %1968, %v1703
  %v1970 = vpop.permute.xlu0 %1969
  %1973 = vset.pattern.permute.xlu0 2
  %1974 = vperm.xlu0 %1973, %v1704
  %v1975 = vpop.permute.xlu0 %1974
  %1978 = vset.pattern.permute.xlu0 2
  %1979 = vperm.xlu0 %1978, %v1705
  %v1980 = vpop.permute.xlu0 %1979
  %1983 = vset.pattern.permute.xlu0 2
  %1984 = vperm.xlu0 %1983, %v1706
  %v1985 = vpop.permute.xlu0 %1984
  %1988 = vset.pattern.permute.xlu0 2
  %1989 = vperm.xlu0 %1988, %v1707
  %v1990 = vpop.permute.xlu0 %1989
  %1993 = vset.pattern.permute.xlu0 2
  %1994 = vperm.xlu0 %1993, %v1708
  %v1995 = vpop.permute.xlu0 %1994
  %1998 = vset.pattern.permute.xlu0 2
  %1999 = vperm.xlu0 %1998, %v1709
  %v2000 = vpop.permute.xlu0 %1999
  %2003 = vset.pattern.permute.xlu0 2
  %2004 = vperm.xlu0 %2003, %v1710
  %v2005 = vpop.permute.xlu0 %2004
  %2008 = vset.pattern.permute.xlu0 2
  %2009 = vperm.xlu0 %2008, %v1711
  %v2010 = vpop.permute.xlu0 %2009
  %2013 = vset.pattern.permute.xlu0 2
  %2014 = vperm.xlu0 %2013, %v1712
  %v2015 = vpop.permute.xlu0 %2014
  %2018 = vset.pattern.permute.xlu0 2
  %2019 = vperm.xlu0 %2018, %v1713
  %v2020 = vpop.permute.xlu0 %2019
  %2023 = vset.pattern.permute.xlu0 2
  %2024 = vperm.xlu0 %2023, %v1714
  %v2025 = vpop.permute.xlu0 %2024
  %2028 = vset.pattern.permute.xlu0 2
  %2029 = vperm.xlu0 %2028, %v1715
  %v2030 = vpop.permute.xlu0 %2029
  %2033 = vset.pattern.permute.xlu0 2
  %2034 = vperm.xlu0 %2033, %v1716
  %v2035 = vpop.permute.xlu0 %2034
  %v2037 = vmul.f32 %v1589, %v1720
  %v2038 = vmul.f32 %v1652, %v1725
  %v2039 = vmul.f32 %v1651, %v1730
  %v2040 = vmul.f32 %v1650, %v1735
  %v2041 = vmul.f32 %v1649, %v1740
  %v2042 = vmul.f32 %v1648, %v1745
  %v2043 = vmul.f32 %v1647, %v1750
  %v2044 = vmul.f32 %v1646, %v1755
  %v2045 = vmul.f32 %v1645, %v1760
  %v2046 = vmul.f32 %v1644, %v1765
  %v2047 = vmul.f32 %v1643, %v1770
  %v2048 = vmul.f32 %v1642, %v1775
  %v2049 = vmul.f32 %v1641, %v1780
  %v2050 = vmul.f32 %v1640, %v1785
  %v2051 = vmul.f32 %v1639, %v1790
  %v2052 = vmul.f32 %v1638, %v1795
  %v2053 = vmul.f32 %v1637, %v1800
  %v2054 = vmul.f32 %v1636, %v1805
  %v2055 = vmul.f32 %v1635, %v1810
  %v2056 = vmul.f32 %v1634, %v1815
  %v2057 = vmul.f32 %v1633, %v1820
  %v2058 = vmul.f32 %v1632, %v1825
  %v2059 = vmul.f32 %v1631, %v1830
  %v2060 = vmul.f32 %v1630, %v1835
  %v2061 = vmul.f32 %v1629, %v1840
  %v2062 = vmul.f32 %v1628, %v1845
  %v2063 = vmul.f32 %v1627, %v1850
  %v2064 = vmul.f32 %v1626, %v1855
  %v2065 = vmul.f32 %v1625, %v1860
  %v2066 = vmul.f32 %v1624, %v1865
  %v2067 = vmul.f32 %v1623, %v1870
  %v2068 = vmul.f32 %v1622, %v1875
  %v2069 = vmul.f32 %v1621, %v1880
  %v2070 = vmul.f32 %v1620, %v1885
  %v2071 = vmul.f32 %v1619, %v1890
  %v2072 = vmul.f32 %v1618, %v1895
  %v2073 = vmul.f32 %v1617, %v1900
  %v2074 = vmul.f32 %v1616, %v1905
  %v2075 = vmul.f32 %v1615, %v1910
  %v2076 = vmul.f32 %v1614, %v1915
  %v2077 = vmul.f32 %v1613, %v1920
  %v2078 = vmul.f32 %v1612, %v1925
  %v2079 = vmul.f32 %v1611, %v1930
  %v2080 = vmul.f32 %v1610, %v1935
  %v2081 = vmul.f32 %v1609, %v1940
  %v2082 = vmul.f32 %v1608, %v1945
  %v2083 = vmul.f32 %v1607, %v1950
  %v2084 = vmul.f32 %v1606, %v1955
  %v2085 = vmul.f32 %v1605, %v1960
  %v2086 = vmul.f32 %v1604, %v1965
  %v2087 = vmul.f32 %v1603, %v1970
  %v2088 = vmul.f32 %v1602, %v1975
  %v2089 = vmul.f32 %v1601, %v1980
  %v2090 = vmul.f32 %v1600, %v1985
  %v2091 = vmul.f32 %v1599, %v1990
  %v2092 = vmul.f32 %v1598, %v1995
  %v2093 = vmul.f32 %v1597, %v2000
  %v2094 = vmul.f32 %v1596, %v2005
  %v2095 = vmul.f32 %v1595, %v2010
  %v2096 = vmul.f32 %v1594, %v2015
  %v2097 = vmul.f32 %v1593, %v2020
  %v2098 = vmul.f32 %v1592, %v2025
  %v2099 = vmul.f32 %v1591, %v2030
  %v2100 = vmul.f32 %v1590, %v2035
  %2165 = vrot.lane.b32.xlu0 %v2037, 8
  %v2166 = vpop.permute.xlu0 %2165
  %2167 = vrot.lane.b32.xlu0 %v2038, 8
  %v2168 = vpop.permute.xlu0 %2167
  %2169 = vrot.lane.b32.xlu0 %v2039, 8
  %v2170 = vpop.permute.xlu0 %2169
  %2171 = vrot.lane.b32.xlu0 %v2040, 8
  %v2172 = vpop.permute.xlu0 %2171
  %2173 = vrot.lane.b32.xlu0 %v2041, 8
  %v2174 = vpop.permute.xlu0 %2173
  %2175 = vrot.lane.b32.xlu0 %v2042, 8
  %v2176 = vpop.permute.xlu0 %2175
  %2177 = vrot.lane.b32.xlu0 %v2043, 8
  %v2178 = vpop.permute.xlu0 %2177
  %2179 = vrot.lane.b32.xlu0 %v2044, 8
  %v2180 = vpop.permute.xlu0 %2179
  %2181 = vrot.lane.b32.xlu0 %v2045, 8
  %v2182 = vpop.permute.xlu0 %2181
  %2183 = vrot.lane.b32.xlu0 %v2046, 8
  %v2184 = vpop.permute.xlu0 %2183
  %2185 = vrot.lane.b32.xlu0 %v2047, 8
  %v2186 = vpop.permute.xlu0 %2185
  %2187 = vrot.lane.b32.xlu0 %v2048, 8
  %v2188 = vpop.permute.xlu0 %2187
  %2189 = vrot.lane.b32.xlu0 %v2049, 8
  %v2190 = vpop.permute.xlu0 %2189
  %2191 = vrot.lane.b32.xlu0 %v2050, 8
  %v2192 = vpop.permute.xlu0 %2191
  %2193 = vrot.lane.b32.xlu0 %v2051, 8
  %v2194 = vpop.permute.xlu0 %2193
  %2195 = vrot.lane.b32.xlu0 %v2052, 8
  %v2196 = vpop.permute.xlu0 %2195
  %2197 = vrot.lane.b32.xlu0 %v2053, 8
  %v2198 = vpop.permute.xlu0 %2197
  %2199 = vrot.lane.b32.xlu0 %v2054, 8
  %v2200 = vpop.permute.xlu0 %2199
  %2201 = vrot.lane.b32.xlu0 %v2055, 8
  %v2202 = vpop.permute.xlu0 %2201
  %2203 = vrot.lane.b32.xlu0 %v2056, 8
  %v2204 = vpop.permute.xlu0 %2203
  %2205 = vrot.lane.b32.xlu0 %v2057, 8
  %v2206 = vpop.permute.xlu0 %2205
  %2207 = vrot.lane.b32.xlu0 %v2058, 8
  %v2208 = vpop.permute.xlu0 %2207
  %2209 = vrot.lane.b32.xlu0 %v2059, 8
  %v2210 = vpop.permute.xlu0 %2209
  %2211 = vrot.lane.b32.xlu0 %v2060, 8
  %v2212 = vpop.permute.xlu0 %2211
  %2213 = vrot.lane.b32.xlu0 %v2061, 8
  %v2214 = vpop.permute.xlu0 %2213
  %2215 = vrot.lane.b32.xlu0 %v2062, 8
  %v2216 = vpop.permute.xlu0 %2215
  %2217 = vrot.lane.b32.xlu0 %v2063, 8
  %v2218 = vpop.permute.xlu0 %2217
  %2219 = vrot.lane.b32.xlu0 %v2064, 8
  %v2220 = vpop.permute.xlu0 %2219
  %2221 = vrot.lane.b32.xlu0 %v2065, 8
  %v2222 = vpop.permute.xlu0 %2221
  %2223 = vrot.lane.b32.xlu0 %v2066, 8
  %v2224 = vpop.permute.xlu0 %2223
  %2225 = vrot.lane.b32.xlu0 %v2067, 8
  %v2226 = vpop.permute.xlu0 %2225
  %2227 = vrot.lane.b32.xlu0 %v2068, 8
  %v2228 = vpop.permute.xlu0 %2227
  %2229 = vrot.lane.b32.xlu0 %v2069, 8
  %v2230 = vpop.permute.xlu0 %2229
  %2231 = vrot.lane.b32.xlu0 %v2070, 8
  %v2232 = vpop.permute.xlu0 %2231
  %2233 = vrot.lane.b32.xlu0 %v2071, 8
  %v2234 = vpop.permute.xlu0 %2233
  %2235 = vrot.lane.b32.xlu0 %v2072, 8
  %v2236 = vpop.permute.xlu0 %2235
  %2237 = vrot.lane.b32.xlu0 %v2073, 8
  %v2238 = vpop.permute.xlu0 %2237
  %2239 = vrot.lane.b32.xlu0 %v2074, 8
  %v2240 = vpop.permute.xlu0 %2239
  %2241 = vrot.lane.b32.xlu0 %v2075, 8
  %v2242 = vpop.permute.xlu0 %2241
  %2243 = vrot.lane.b32.xlu0 %v2076, 8
  %v2244 = vpop.permute.xlu0 %2243
  %2245 = vrot.lane.b32.xlu0 %v2077, 8
  %v2246 = vpop.permute.xlu0 %2245
  %2247 = vrot.lane.b32.xlu0 %v2078, 8
  %v2248 = vpop.permute.xlu0 %2247
  %2249 = vrot.lane.b32.xlu0 %v2079, 8
  %v2250 = vpop.permute.xlu0 %2249
  %2251 = vrot.lane.b32.xlu0 %v2080, 8
  %v2252 = vpop.permute.xlu0 %2251
  %2253 = vrot.lane.b32.xlu0 %v2081, 8
  %v2254 = vpop.permute.xlu0 %2253
  %2255 = vrot.lane.b32.xlu0 %v2082, 8
  %v2256 = vpop.permute.xlu0 %2255
  %2257 = vrot.lane.b32.xlu0 %v2083, 8
  %v2258 = vpop.permute.xlu0 %2257
  %2259 = vrot.lane.b32.xlu0 %v2084, 8
  %v2260 = vpop.permute.xlu0 %2259
  %2261 = vrot.lane.b32.xlu0 %v2085, 8
  %v2262 = vpop.permute.xlu0 %2261
  %2263 = vrot.lane.b32.xlu0 %v2086, 8
  %v2264 = vpop.permute.xlu0 %2263
  %2265 = vrot.lane.b32.xlu0 %v2087, 8
  %v2266 = vpop.permute.xlu0 %2265
  %2267 = vrot.lane.b32.xlu0 %v2088, 8
  %v2268 = vpop.permute.xlu0 %2267
  %2269 = vrot.lane.b32.xlu0 %v2089, 8
  %v2270 = vpop.permute.xlu0 %2269
  %2271 = vrot.lane.b32.xlu0 %v2090, 8
  %v2272 = vpop.permute.xlu0 %2271
  %2273 = vrot.lane.b32.xlu0 %v2091, 8
  %v2274 = vpop.permute.xlu0 %2273
  %2275 = vrot.lane.b32.xlu0 %v2092, 8
  %v2276 = vpop.permute.xlu0 %2275
  %2277 = vrot.lane.b32.xlu0 %v2093, 8
  %v2278 = vpop.permute.xlu0 %2277
  %2279 = vrot.lane.b32.xlu0 %v2094, 8
  %v2280 = vpop.permute.xlu0 %2279
  %2281 = vrot.lane.b32.xlu0 %v2095, 8
  %v2282 = vpop.permute.xlu0 %2281
  %2283 = vrot.lane.b32.xlu0 %v2096, 8
  %v2284 = vpop.permute.xlu0 %2283
  %2285 = vrot.lane.b32.xlu0 %v2097, 8
  %v2286 = vpop.permute.xlu0 %2285
  %2287 = vrot.lane.b32.xlu0 %v2098, 8
  %v2288 = vpop.permute.xlu0 %2287
  %2289 = vrot.lane.b32.xlu0 %v2099, 8
  %v2290 = vpop.permute.xlu0 %2289
  %2291 = vrot.lane.b32.xlu0 %v2100, 8
  %v2292 = vpop.permute.xlu0 %2291
  %vm2357 = vcmask 97344
  %2358 = vst.msk [vmem:[#allocation2] sm:$0xff] %vm2357, %v2166
  %2359 = vst.msk [vmem:[#allocation2 + $0x8] sm:$0xff] %vm2357, %v2168
  %2360 = vst.msk [vmem:[#allocation2 + $0x10] sm:$0xff] %vm2357, %v2170
  %2361 = vst.msk [vmem:[#allocation2 + $0x18] sm:$0xff] %vm2357, %v2172
  %2362 = vst.msk [vmem:[#allocation2 + $0x20] sm:$0xff] %vm2357, %v2174
  %2363 = vst.msk [vmem:[#allocation2 + $0x28] sm:$0xff] %vm2357, %v2176
  %2364 = vst.msk [vmem:[#allocation2 + $0x30] sm:$0xff] %vm2357, %v2178
  %2365 = vst.msk [vmem:[#allocation2 + $0x38] sm:$0xff] %vm2357, %v2180
  %2366 = vst.msk [vmem:[#allocation2 + $0x40] sm:$0xff] %vm2357, %v2182
  %2367 = vst.msk [vmem:[#allocation2 + $0x48] sm:$0xff] %vm2357, %v2184
  %2368 = vst.msk [vmem:[#allocation2 + $0x50] sm:$0xff] %vm2357, %v2186
  %2369 = vst.msk [vmem:[#allocation2 + $0x58] sm:$0xff] %vm2357, %v2188
  %2370 = vst.msk [vmem:[#allocation2 + $0x60] sm:$0xff] %vm2357, %v2190
  %2371 = vst.msk [vmem:[#allocation2 + $0x68] sm:$0xff] %vm2357, %v2192
  %2372 = vst.msk [vmem:[#allocation2 + $0x70] sm:$0xff] %vm2357, %v2194
  %2373 = vst.msk [vmem:[#allocation2 + $0x78] sm:$0xff] %vm2357, %v2196
  %2374 = vst.msk [vmem:[#allocation2 + $0x80] sm:$0xff] %vm2357, %v2198
  %2375 = vst.msk [vmem:[#allocation2 + $0x88] sm:$0xff] %vm2357, %v2200
  %2376 = vst.msk [vmem:[#allocation2 + $0x90] sm:$0xff] %vm2357, %v2202
  %2377 = vst.msk [vmem:[#allocation2 + $0x98] sm:$0xff] %vm2357, %v2204
  %2378 = vst.msk [vmem:[#allocation2 + $0xa0] sm:$0xff] %vm2357, %v2206
  %2379 = vst.msk [vmem:[#allocation2 + $0xa8] sm:$0xff] %vm2357, %v2208
  %2380 = vst.msk [vmem:[#allocation2 + $0xb0] sm:$0xff] %vm2357, %v2210
  %2381 = vst.msk [vmem:[#allocation2 + $0xb8] sm:$0xff] %vm2357, %v2212
  %2382 = vst.msk [vmem:[#allocation2 + $0xc0] sm:$0xff] %vm2357, %v2214
  %2383 = vst.msk [vmem:[#allocation2 + $0xc8] sm:$0xff] %vm2357, %v2216
  %2384 = vst.msk [vmem:[#allocation2 + $0xd0] sm:$0xff] %vm2357, %v2218
  %2385 = vst.msk [vmem:[#allocation2 + $0xd8] sm:$0xff] %vm2357, %v2220
  %2386 = vst.msk [vmem:[#allocation2 + $0xe0] sm:$0xff] %vm2357, %v2222
  %2387 = vst.msk [vmem:[#allocation2 + $0xe8] sm:$0xff] %vm2357, %v2224
  %2388 = vst.msk [vmem:[#allocation2 + $0xf0] sm:$0xff] %vm2357, %v2226
  %2389 = vst.msk [vmem:[#allocation2 + $0xf8] sm:$0xff] %vm2357, %v2228
  %2390 = vst.msk [vmem:[#allocation2 + $0x100] sm:$0xff] %vm2357, %v2230
  %2391 = vst.msk [vmem:[#allocation2 + $0x108] sm:$0xff] %vm2357, %v2232
  %2392 = vst.msk [vmem:[#allocation2 + $0x110] sm:$0xff] %vm2357, %v2234
  %2393 = vst.msk [vmem:[#allocation2 + $0x118] sm:$0xff] %vm2357, %v2236
  %2394 = vst.msk [vmem:[#allocation2 + $0x120] sm:$0xff] %vm2357, %v2238
  %2395 = vst.msk [vmem:[#allocation2 + $0x128] sm:$0xff] %vm2357, %v2240
  %2396 = vst.msk [vmem:[#allocation2 + $0x130] sm:$0xff] %vm2357, %v2242
  %2397 = vst.msk [vmem:[#allocation2 + $0x138] sm:$0xff] %vm2357, %v2244
  %2398 = vst.msk [vmem:[#allocation2 + $0x140] sm:$0xff] %vm2357, %v2246
  %2399 = vst.msk [vmem:[#allocation2 + $0x148] sm:$0xff] %vm2357, %v2248
  %2400 = vst.msk [vmem:[#allocation2 + $0x150] sm:$0xff] %vm2357, %v2250
  %2401 = vst.msk [vmem:[#allocation2 + $0x158] sm:$0xff] %vm2357, %v2252
  %2402 = vst.msk [vmem:[#allocation2 + $0x160] sm:$0xff] %vm2357, %v2254
  %2403 = vst.msk [vmem:[#allocation2 + $0x168] sm:$0xff] %vm2357, %v2256
  %2404 = vst.msk [vmem:[#allocation2 + $0x170] sm:$0xff] %vm2357, %v2258
  %2405 = vst.msk [vmem:[#allocation2 + $0x178] sm:$0xff] %vm2357, %v2260
  %2406 = vst.msk [vmem:[#allocation2 + $0x180] sm:$0xff] %vm2357, %v2262
  %2407 = vst.msk [vmem:[#allocation2 + $0x188] sm:$0xff] %vm2357, %v2264
  %2408 = vst.msk [vmem:[#allocation2 + $0x190] sm:$0xff] %vm2357, %v2266
  %2409 = vst.msk [vmem:[#allocation2 + $0x198] sm:$0xff] %vm2357, %v2268
  %2410 = vst.msk [vmem:[#allocation2 + $0x1a0] sm:$0xff] %vm2357, %v2270
  %2411 = vst.msk [vmem:[#allocation2 + $0x1a8] sm:$0xff] %vm2357, %v2272
  %2412 = vst.msk [vmem:[#allocation2 + $0x1b0] sm:$0xff] %vm2357, %v2274
  %2413 = vst.msk [vmem:[#allocation2 + $0x1b8] sm:$0xff] %vm2357, %v2276
  %2414 = vst.msk [vmem:[#allocation2 + $0x1c0] sm:$0xff] %vm2357, %v2278
  %2415 = vst.msk [vmem:[#allocation2 + $0x1c8] sm:$0xff] %vm2357, %v2280
  %2416 = vst.msk [vmem:[#allocation2 + $0x1d0] sm:$0xff] %vm2357, %v2282
  %2417 = vst.msk [vmem:[#allocation2 + $0x1d8] sm:$0xff] %vm2357, %v2284
  %2418 = vst.msk [vmem:[#allocation2 + $0x1e0] sm:$0xff] %vm2357, %v2286
  %2419 = vst.msk [vmem:[#allocation2 + $0x1e8] sm:$0xff] %vm2357, %v2288
  %2420 = vst.msk [vmem:[#allocation2 + $0x1f0] sm:$0xff] %vm2357, %v2290
  %2421 = vst.msk [vmem:[#allocation2 + $0x1f8] sm:$0xff] %vm2357, %v2292
  %v2422 = vld [vmem:[%s1] sm:$0xff]
  %v2423 = vld [vmem:[%s1 + $0x8] sm:$0xff]
  %v2424 = vld [vmem:[%s1 + $0x10] sm:$0xff]
  %v2425 = vld [vmem:[%s1 + $0x18] sm:$0xff]
  %v2426 = vld [vmem:[%s1 + $0x20] sm:$0xff]
  %v2427 = vld [vmem:[%s1 + $0x28] sm:$0xff]
  %v2428 = vld [vmem:[%s1 + $0x30] sm:$0xff]
  %v2429 = vld [vmem:[%s1 + $0x38] sm:$0xff]
  %v2430 = vld [vmem:[%s1 + $0x40] sm:$0xff]
  %v2431 = vld [vmem:[%s1 + $0x48] sm:$0xff]
  %v2432 = vld [vmem:[%s1 + $0x50] sm:$0xff]
  %v2433 = vld [vmem:[%s1 + $0x58] sm:$0xff]
  %v2434 = vld [vmem:[%s1 + $0x60] sm:$0xff]
  %v2435 = vld [vmem:[%s1 + $0x68] sm:$0xff]
  %v2436 = vld [vmem:[%s1 + $0x70] sm:$0xff]
  %v2437 = vld [vmem:[%s1 + $0x78] sm:$0xff]
  %v2438 = vld [vmem:[%s1 + $0x80] sm:$0xff]
  %v2439 = vld [vmem:[%s1 + $0x88] sm:$0xff]
  %v2440 = vld [vmem:[%s1 + $0x90] sm:$0xff]
  %v2441 = vld [vmem:[%s1 + $0x98] sm:$0xff]
  %v2442 = vld [vmem:[%s1 + $0xa0] sm:$0xff]
  %v2443 = vld [vmem:[%s1 + $0xa8] sm:$0xff]
  %v2444 = vld [vmem:[%s1 + $0xb0] sm:$0xff]
  %v2445 = vld [vmem:[%s1 + $0xb8] sm:$0xff]
  %v2446 = vld [vmem:[%s1 + $0xc0] sm:$0xff]
  %v2447 = vld [vmem:[%s1 + $0xc8] sm:$0xff]
  %v2448 = vld [vmem:[%s1 + $0xd0] sm:$0xff]
  %v2449 = vld [vmem:[%s1 + $0xd8] sm:$0xff]
  %v2450 = vld [vmem:[%s1 + $0xe0] sm:$0xff]
  %v2451 = vld [vmem:[%s1 + $0xe8] sm:$0xff]
  %v2452 = vld [vmem:[%s1 + $0xf0] sm:$0xff]
  %v2453 = vld [vmem:[%s1 + $0xf8] sm:$0xff]
  %v2454 = vld [vmem:[%s1 + $0x100] sm:$0xff]
  %v2455 = vld [vmem:[%s1 + $0x108] sm:$0xff]
  %v2456 = vld [vmem:[%s1 + $0x110] sm:$0xff]
  %v2457 = vld [vmem:[%s1 + $0x118] sm:$0xff]
  %v2458 = vld [vmem:[%s1 + $0x120] sm:$0xff]
  %v2459 = vld [vmem:[%s1 + $0x128] sm:$0xff]
  %v2460 = vld [vmem:[%s1 + $0x130] sm:$0xff]
  %v2461 = vld [vmem:[%s1 + $0x138] sm:$0xff]
  %v2462 = vld [vmem:[%s1 + $0x140] sm:$0xff]
  %v2463 = vld [vmem:[%s1 + $0x148] sm:$0xff]
  %v2464 = vld [vmem:[%s1 + $0x150] sm:$0xff]
  %v2465 = vld [vmem:[%s1 + $0x158] sm:$0xff]
  %v2466 = vld [vmem:[%s1 + $0x160] sm:$0xff]
  %v2467 = vld [vmem:[%s1 + $0x168] sm:$0xff]
  %v2468 = vld [vmem:[%s1 + $0x170] sm:$0xff]
  %v2469 = vld [vmem:[%s1 + $0x178] sm:$0xff]
  %v2470 = vld [vmem:[%s1 + $0x180] sm:$0xff]
  %v2471 = vld [vmem:[%s1 + $0x188] sm:$0xff]
  %v2472 = vld [vmem:[%s1 + $0x190] sm:$0xff]
  %v2473 = vld [vmem:[%s1 + $0x198] sm:$0xff]
  %v2474 = vld [vmem:[%s1 + $0x1a0] sm:$0xff]
  %v2475 = vld [vmem:[%s1 + $0x1a8] sm:$0xff]
  %v2476 = vld [vmem:[%s1 + $0x1b0] sm:$0xff]
  %v2477 = vld [vmem:[%s1 + $0x1b8] sm:$0xff]
  %v2478 = vld [vmem:[%s1 + $0x1c0] sm:$0xff]
  %v2479 = vld [vmem:[%s1 + $0x1c8] sm:$0xff]
  %v2480 = vld [vmem:[%s1 + $0x1d0] sm:$0xff]
  %v2481 = vld [vmem:[%s1 + $0x1d8] sm:$0xff]
  %v2482 = vld [vmem:[%s1 + $0x1e0] sm:$0xff]
  %v2483 = vld [vmem:[%s1 + $0x1e8] sm:$0xff]
  %v2484 = vld [vmem:[%s1 + $0x1f0] sm:$0xff]
  %v2485 = vld [vmem:[%s1 + $0x1f8] sm:$0xff]
  %2487 = vset.pattern.permute.xlu0 3
  %2488 = vperm.xlu0 %2487, %v2422
  %v2489 = vpop.permute.xlu0 %2488
  %2492 = vset.pattern.permute.xlu0 3
  %2493 = vperm.xlu0 %2492, %v2423
  %v2494 = vpop.permute.xlu0 %2493
  %2497 = vset.pattern.permute.xlu0 3
  %2498 = vperm.xlu0 %2497, %v2424
  %v2499 = vpop.permute.xlu0 %2498
  %2502 = vset.pattern.permute.xlu0 3
  %2503 = vperm.xlu0 %2502, %v2425
  %v2504 = vpop.permute.xlu0 %2503
  %2507 = vset.pattern.permute.xlu0 3
  %2508 = vperm.xlu0 %2507, %v2426
  %v2509 = vpop.permute.xlu0 %2508
  %2512 = vset.pattern.permute.xlu0 3
  %2513 = vperm.xlu0 %2512, %v2427
  %v2514 = vpop.permute.xlu0 %2513
  %2517 = vset.pattern.permute.xlu0 3
  %2518 = vperm.xlu0 %2517, %v2428
  %v2519 = vpop.permute.xlu0 %2518
  %2522 = vset.pattern.permute.xlu0 3
  %2523 = vperm.xlu0 %2522, %v2429
  %v2524 = vpop.permute.xlu0 %2523
  %2527 = vset.pattern.permute.xlu0 3
  %2528 = vperm.xlu0 %2527, %v2430
  %v2529 = vpop.permute.xlu0 %2528
  %2532 = vset.pattern.permute.xlu0 3
  %2533 = vperm.xlu0 %2532, %v2431
  %v2534 = vpop.permute.xlu0 %2533
  %2537 = vset.pattern.permute.xlu0 3
  %2538 = vperm.xlu0 %2537, %v2432
  %v2539 = vpop.permute.xlu0 %2538
  %2542 = vset.pattern.permute.xlu0 3
  %2543 = vperm.xlu0 %2542, %v2433
  %v2544 = vpop.permute.xlu0 %2543
  %2547 = vset.pattern.permute.xlu0 3
  %2548 = vperm.xlu0 %2547, %v2434
  %v2549 = vpop.permute.xlu0 %2548
  %2552 = vset.pattern.permute.xlu0 3
  %2553 = vperm.xlu0 %2552, %v2435
  %v2554 = vpop.permute.xlu0 %2553
  %2557 = vset.pattern.permute.xlu0 3
  %2558 = vperm.xlu0 %2557, %v2436
  %v2559 = vpop.permute.xlu0 %2558
  %2562 = vset.pattern.permute.xlu0 3
  %2563 = vperm.xlu0 %2562, %v2437
  %v2564 = vpop.permute.xlu0 %2563
  %2567 = vset.pattern.permute.xlu0 3
  %2568 = vperm.xlu0 %2567, %v2438
  %v2569 = vpop.permute.xlu0 %2568
  %2572 = vset.pattern.permute.xlu0 3
  %2573 = vperm.xlu0 %2572, %v2439
  %v2574 = vpop.permute.xlu0 %2573
  %2577 = vset.pattern.permute.xlu0 3
  %2578 = vperm.xlu0 %2577, %v2440
  %v2579 = vpop.permute.xlu0 %2578
  %2582 = vset.pattern.permute.xlu0 3
  %2583 = vperm.xlu0 %2582, %v2441
  %v2584 = vpop.permute.xlu0 %2583
  %2587 = vset.pattern.permute.xlu0 3
  %2588 = vperm.xlu0 %2587, %v2442
  %v2589 = vpop.permute.xlu0 %2588
  %2592 = vset.pattern.permute.xlu0 3
  %2593 = vperm.xlu0 %2592, %v2443
  %v2594 = vpop.permute.xlu0 %2593
  %2597 = vset.pattern.permute.xlu0 3
  %2598 = vperm.xlu0 %2597, %v2444
  %v2599 = vpop.permute.xlu0 %2598
  %2602 = vset.pattern.permute.xlu0 3
  %2603 = vperm.xlu0 %2602, %v2445
  %v2604 = vpop.permute.xlu0 %2603
  %2607 = vset.pattern.permute.xlu0 3
  %2608 = vperm.xlu0 %2607, %v2446
  %v2609 = vpop.permute.xlu0 %2608
  %2612 = vset.pattern.permute.xlu0 3
  %2613 = vperm.xlu0 %2612, %v2447
  %v2614 = vpop.permute.xlu0 %2613
  %2617 = vset.pattern.permute.xlu0 3
  %2618 = vperm.xlu0 %2617, %v2448
  %v2619 = vpop.permute.xlu0 %2618
  %2622 = vset.pattern.permute.xlu0 3
  %2623 = vperm.xlu0 %2622, %v2449
  %v2624 = vpop.permute.xlu0 %2623
  %2627 = vset.pattern.permute.xlu0 3
  %2628 = vperm.xlu0 %2627, %v2450
  %v2629 = vpop.permute.xlu0 %2628
  %2632 = vset.pattern.permute.xlu0 3
  %2633 = vperm.xlu0 %2632, %v2451
  %v2634 = vpop.permute.xlu0 %2633
  %2637 = vset.pattern.permute.xlu0 3
  %2638 = vperm.xlu0 %2637, %v2452
  %v2639 = vpop.permute.xlu0 %2638
  %2642 = vset.pattern.permute.xlu0 3
  %2643 = vperm.xlu0 %2642, %v2453
  %v2644 = vpop.permute.xlu0 %2643
  %2647 = vset.pattern.permute.xlu0 3
  %2648 = vperm.xlu0 %2647, %v2454
  %v2649 = vpop.permute.xlu0 %2648
  %2652 = vset.pattern.permute.xlu0 3
  %2653 = vperm.xlu0 %2652, %v2455
  %v2654 = vpop.permute.xlu0 %2653
  %2657 = vset.pattern.permute.xlu0 3
  %2658 = vperm.xlu0 %2657, %v2456
  %v2659 = vpop.permute.xlu0 %2658
  %2662 = vset.pattern.permute.xlu0 3
  %2663 = vperm.xlu0 %2662, %v2457
  %v2664 = vpop.permute.xlu0 %2663
  %2667 = vset.pattern.permute.xlu0 3
  %2668 = vperm.xlu0 %2667, %v2458
  %v2669 = vpop.permute.xlu0 %2668
  %2672 = vset.pattern.permute.xlu0 3
  %2673 = vperm.xlu0 %2672, %v2459
  %v2674 = vpop.permute.xlu0 %2673
  %2677 = vset.pattern.permute.xlu0 3
  %2678 = vperm.xlu0 %2677, %v2460
  %v2679 = vpop.permute.xlu0 %2678
  %2682 = vset.pattern.permute.xlu0 3
  %2683 = vperm.xlu0 %2682, %v2461
  %v2684 = vpop.permute.xlu0 %2683
  %2687 = vset.pattern.permute.xlu0 3
  %2688 = vperm.xlu0 %2687, %v2462
  %v2689 = vpop.permute.xlu0 %2688
  %2692 = vset.pattern.permute.xlu0 3
  %2693 = vperm.xlu0 %2692, %v2463
  %v2694 = vpop.permute.xlu0 %2693
  %2697 = vset.pattern.permute.xlu0 3
  %2698 = vperm.xlu0 %2697, %v2464
  %v2699 = vpop.permute.xlu0 %2698
  %2702 = vset.pattern.permute.xlu0 3
  %2703 = vperm.xlu0 %2702, %v2465
  %v2704 = vpop.permute.xlu0 %2703
  %2707 = vset.pattern.permute.xlu0 3
  %2708 = vperm.xlu0 %2707, %v2466
  %v2709 = vpop.permute.xlu0 %2708
  %2712 = vset.pattern.permute.xlu0 3
  %2713 = vperm.xlu0 %2712, %v2467
  %v2714 = vpop.permute.xlu0 %2713
  %2717 = vset.pattern.permute.xlu0 3
  %2718 = vperm.xlu0 %2717, %v2468
  %v2719 = vpop.permute.xlu0 %2718
  %2722 = vset.pattern.permute.xlu0 3
  %2723 = vperm.xlu0 %2722, %v2469
  %v2724 = vpop.permute.xlu0 %2723
  %2727 = vset.pattern.permute.xlu0 3
  %2728 = vperm.xlu0 %2727, %v2470
  %v2729 = vpop.permute.xlu0 %2728
  %2732 = vset.pattern.permute.xlu0 3
  %2733 = vperm.xlu0 %2732, %v2471
  %v2734 = vpop.permute.xlu0 %2733
  %2737 = vset.pattern.permute.xlu0 3
  %2738 = vperm.xlu0 %2737, %v2472
  %v2739 = vpop.permute.xlu0 %2738
  %2742 = vset.pattern.permute.xlu0 3
  %2743 = vperm.xlu0 %2742, %v2473
  %v2744 = vpop.permute.xlu0 %2743
  %2747 = vset.pattern.permute.xlu0 3
  %2748 = vperm.xlu0 %2747, %v2474
  %v2749 = vpop.permute.xlu0 %2748
  %2752 = vset.pattern.permute.xlu0 3
  %2753 = vperm.xlu0 %2752, %v2475
  %v2754 = vpop.permute.xlu0 %2753
  %2757 = vset.pattern.permute.xlu0 3
  %2758 = vperm.xlu0 %2757, %v2476
  %v2759 = vpop.permute.xlu0 %2758
  %2762 = vset.pattern.permute.xlu0 3
  %2763 = vperm.xlu0 %2762, %v2477
  %v2764 = vpop.permute.xlu0 %2763
  %2767 = vset.pattern.permute.xlu0 3
  %2768 = vperm.xlu0 %2767, %v2478
  %v2769 = vpop.permute.xlu0 %2768
  %2772 = vset.pattern.permute.xlu0 3
  %2773 = vperm.xlu0 %2772, %v2479
  %v2774 = vpop.permute.xlu0 %2773
  %2777 = vset.pattern.permute.xlu0 3
  %2778 = vperm.xlu0 %2777, %v2480
  %v2779 = vpop.permute.xlu0 %2778
  %2782 = vset.pattern.permute.xlu0 3
  %2783 = vperm.xlu0 %2782, %v2481
  %v2784 = vpop.permute.xlu0 %2783
  %2787 = vset.pattern.permute.xlu0 3
  %2788 = vperm.xlu0 %2787, %v2482
  %v2789 = vpop.permute.xlu0 %2788
  %2792 = vset.pattern.permute.xlu0 3
  %2793 = vperm.xlu0 %2792, %v2483
  %v2794 = vpop.permute.xlu0 %2793
  %2797 = vset.pattern.permute.xlu0 3
  %2798 = vperm.xlu0 %2797, %v2484
  %v2799 = vpop.permute.xlu0 %2798
  %2802 = vset.pattern.permute.xlu0 3
  %2803 = vperm.xlu0 %2802, %v2485
  %v2804 = vpop.permute.xlu0 %2803
  %v2806 = vmul.f32 %v241, %v2489
  %v2807 = vmul.f32 %v240, %v2494
  %v2808 = vmul.f32 %v239, %v2499
  %v2809 = vmul.f32 %v238, %v2504
  %v2810 = vmul.f32 %v237, %v2509
  %v2811 = vmul.f32 %v236, %v2514
  %v2812 = vmul.f32 %v235, %v2519
  %v2813 = vmul.f32 %v234, %v2524
  %v2814 = vmul.f32 %v233, %v2529
  %v2815 = vmul.f32 %v232, %v2534
  %v2816 = vmul.f32 %v231, %v2539
  %v2817 = vmul.f32 %v230, %v2544
  %v2818 = vmul.f32 %v229, %v2549
  %v2819 = vmul.f32 %v228, %v2554
  %v2820 = vmul.f32 %v227, %v2559
  %v2821 = vmul.f32 %v226, %v2564
  %v2822 = vmul.f32 %v225, %v2569
  %v2823 = vmul.f32 %v224, %v2574
  %v2824 = vmul.f32 %v223, %v2579
  %v2825 = vmul.f32 %v222, %v2584
  %v2826 = vmul.f32 %v221, %v2589
  %v2827 = vmul.f32 %v220, %v2594
  %v2828 = vmul.f32 %v219, %v2599
  %v2829 = vmul.f32 %v218, %v2604
  %v2830 = vmul.f32 %v217, %v2609
  %v2831 = vmul.f32 %v216, %v2614
  %v2832 = vmul.f32 %v215, %v2619
  %v2833 = vmul.f32 %v214, %v2624
  %v2834 = vmul.f32 %v213, %v2629
  %v2835 = vmul.f32 %v212, %v2634
  %v2836 = vmul.f32 %v211, %v2639
  %v2837 = vmul.f32 %v210, %v2644
  %v2838 = vmul.f32 %v209, %v2649
  %v2839 = vmul.f32 %v208, %v2654
  %v2840 = vmul.f32 %v207, %v2659
  %v2841 = vmul.f32 %v206, %v2664
  %v2842 = vmul.f32 %v205, %v2669
  %v2843 = vmul.f32 %v204, %v2674
  %v2844 = vmul.f32 %v203, %v2679
  %v2845 = vmul.f32 %v202, %v2684
  %v2846 = vmul.f32 %v201, %v2689
  %v2847 = vmul.f32 %v200, %v2694
  %v2848 = vmul.f32 %v199, %v2699
  %v2849 = vmul.f32 %v198, %v2704
  %v2850 = vmul.f32 %v197, %v2709
  %v2851 = vmul.f32 %v196, %v2714
  %v2852 = vmul.f32 %v195, %v2719
  %v2853 = vmul.f32 %v194, %v2724
  %v2854 = vmul.f32 %v193, %v2729
  %v2855 = vmul.f32 %v192, %v2734
  %v2856 = vmul.f32 %v191, %v2739
  %v2857 = vmul.f32 %v190, %v2744
  %v2858 = vmul.f32 %v189, %v2749
  %v2859 = vmul.f32 %v188, %v2754
  %v2860 = vmul.f32 %v187, %v2759
  %v2861 = vmul.f32 %v186, %v2764
  %v2862 = vmul.f32 %v185, %v2769
  %v2863 = vmul.f32 %v184, %v2774
  %v2864 = vmul.f32 %v183, %v2779
  %v2865 = vmul.f32 %v182, %v2784
  %v2866 = vmul.f32 %v181, %v2789
  %v2867 = vmul.f32 %v180, %v2794
  %v2868 = vmul.f32 %v179, %v2799
  %v2869 = vmul.f32 %v178, %v2804
  %2934 = vrot.lane.b32.xlu0 %v2806, 12
  %v2935 = vpop.permute.xlu0 %2934
  %2936 = vrot.lane.b32.xlu0 %v2807, 12
  %v2937 = vpop.permute.xlu0 %2936
  %2938 = vrot.lane.b32.xlu0 %v2808, 12
  %v2939 = vpop.permute.xlu0 %2938
  %2940 = vrot.lane.b32.xlu0 %v2809, 12
  %v2941 = vpop.permute.xlu0 %2940
  %2942 = vrot.lane.b32.xlu0 %v2810, 12
  %v2943 = vpop.permute.xlu0 %2942
  %2944 = vrot.lane.b32.xlu0 %v2811, 12
  %v2945 = vpop.permute.xlu0 %2944
  %2946 = vrot.lane.b32.xlu0 %v2812, 12
  %v2947 = vpop.permute.xlu0 %2946
  %2948 = vrot.lane.b32.xlu0 %v2813, 12
  %v2949 = vpop.permute.xlu0 %2948
  %2950 = vrot.lane.b32.xlu0 %v2814, 12
  %v2951 = vpop.permute.xlu0 %2950
  %2952 = vrot.lane.b32.xlu0 %v2815, 12
  %v2953 = vpop.permute.xlu0 %2952
  %2954 = vrot.lane.b32.xlu0 %v2816, 12
  %v2955 = vpop.permute.xlu0 %2954
  %2956 = vrot.lane.b32.xlu0 %v2817, 12
  %v2957 = vpop.permute.xlu0 %2956
  %2958 = vrot.lane.b32.xlu0 %v2818, 12
  %v2959 = vpop.permute.xlu0 %2958
  %2960 = vrot.lane.b32.xlu0 %v2819, 12
  %v2961 = vpop.permute.xlu0 %2960
  %2962 = vrot.lane.b32.xlu0 %v2820, 12
  %v2963 = vpop.permute.xlu0 %2962
  %2964 = vrot.lane.b32.xlu0 %v2821, 12
  %v2965 = vpop.permute.xlu0 %2964
  %2966 = vrot.lane.b32.xlu0 %v2822, 12
  %v2967 = vpop.permute.xlu0 %2966
  %2968 = vrot.lane.b32.xlu0 %v2823, 12
  %v2969 = vpop.permute.xlu0 %2968
  %2970 = vrot.lane.b32.xlu0 %v2824, 12
  %v2971 = vpop.permute.xlu0 %2970
  %2972 = vrot.lane.b32.xlu0 %v2825, 12
  %v2973 = vpop.permute.xlu0 %2972
  %2974 = vrot.lane.b32.xlu0 %v2826, 12
  %v2975 = vpop.permute.xlu0 %2974
  %2976 = vrot.lane.b32.xlu0 %v2827, 12
  %v2977 = vpop.permute.xlu0 %2976
  %2978 = vrot.lane.b32.xlu0 %v2828, 12
  %v2979 = vpop.permute.xlu0 %2978
  %2980 = vrot.lane.b32.xlu0 %v2829, 12
  %v2981 = vpop.permute.xlu0 %2980
  %2982 = vrot.lane.b32.xlu0 %v2830, 12
  %v2983 = vpop.permute.xlu0 %2982
  %2984 = vrot.lane.b32.xlu0 %v2831, 12
  %v2985 = vpop.permute.xlu0 %2984
  %2986 = vrot.lane.b32.xlu0 %v2832, 12
  %v2987 = vpop.permute.xlu0 %2986
  %2988 = vrot.lane.b32.xlu0 %v2833, 12
  %v2989 = vpop.permute.xlu0 %2988
  %2990 = vrot.lane.b32.xlu0 %v2834, 12
  %v2991 = vpop.permute.xlu0 %2990
  %2992 = vrot.lane.b32.xlu0 %v2835, 12
  %v2993 = vpop.permute.xlu0 %2992
  %2994 = vrot.lane.b32.xlu0 %v2836, 12
  %v2995 = vpop.permute.xlu0 %2994
  %2996 = vrot.lane.b32.xlu0 %v2837, 12
  %v2997 = vpop.permute.xlu0 %2996
  %2998 = vrot.lane.b32.xlu0 %v2838, 12
  %v2999 = vpop.permute.xlu0 %2998
  %3000 = vrot.lane.b32.xlu0 %v2839, 12
  %v3001 = vpop.permute.xlu0 %3000
  %3002 = vrot.lane.b32.xlu0 %v2840, 12
  %v3003 = vpop.permute.xlu0 %3002
  %3004 = vrot.lane.b32.xlu0 %v2841, 12
  %v3005 = vpop.permute.xlu0 %3004
  %3006 = vrot.lane.b32.xlu0 %v2842, 12
  %v3007 = vpop.permute.xlu0 %3006
  %3008 = vrot.lane.b32.xlu0 %v2843, 12
  %v3009 = vpop.permute.xlu0 %3008
  %3010 = vrot.lane.b32.xlu0 %v2844, 12
  %v3011 = vpop.permute.xlu0 %3010
  %3012 = vrot.lane.b32.xlu0 %v2845, 12
  %v3013 = vpop.permute.xlu0 %3012
  %3014 = vrot.lane.b32.xlu0 %v2846, 12
  %v3015 = vpop.permute.xlu0 %3014
  %3016 = vrot.lane.b32.xlu0 %v2847, 12
  %v3017 = vpop.permute.xlu0 %3016
  %3018 = vrot.lane.b32.xlu0 %v2848, 12
  %v3019 = vpop.permute.xlu0 %3018
  %3020 = vrot.lane.b32.xlu0 %v2849, 12
  %v3021 = vpop.permute.xlu0 %3020
  %3022 = vrot.lane.b32.xlu0 %v2850, 12
  %v3023 = vpop.permute.xlu0 %3022
  %3024 = vrot.lane.b32.xlu0 %v2851, 12
  %v3025 = vpop.permute.xlu0 %3024
  %3026 = vrot.lane.b32.xlu0 %v2852, 12
  %v3027 = vpop.permute.xlu0 %3026
  %3028 = vrot.lane.b32.xlu0 %v2853, 12
  %v3029 = vpop.permute.xlu0 %3028
  %3030 = vrot.lane.b32.xlu0 %v2854, 12
  %v3031 = vpop.permute.xlu0 %3030
  %3032 = vrot.lane.b32.xlu0 %v2855, 12
  %v3033 = vpop.permute.xlu0 %3032
  %3034 = vrot.lane.b32.xlu0 %v2856, 12
  %v3035 = vpop.permute.xlu0 %3034
  %3036 = vrot.lane.b32.xlu0 %v2857, 12
  %v3037 = vpop.permute.xlu0 %3036
  %3038 = vrot.lane.b32.xlu0 %v2858, 12
  %v3039 = vpop.permute.xlu0 %3038
  %3040 = vrot.lane.b32.xlu0 %v2859, 12
  %v3041 = vpop.permute.xlu0 %3040
  %3042 = vrot.lane.b32.xlu0 %v2860, 12
  %v3043 = vpop.permute.xlu0 %3042
  %3044 = vrot.lane.b32.xlu0 %v2861, 12
  %v3045 = vpop.permute.xlu0 %3044
  %3046 = vrot.lane.b32.xlu0 %v2862, 12
  %v3047 = vpop.permute.xlu0 %3046
  %3048 = vrot.lane.b32.xlu0 %v2863, 12
  %v3049 = vpop.permute.xlu0 %3048
  %3050 = vrot.lane.b32.xlu0 %v2864, 12
  %v3051 = vpop.permute.xlu0 %3050
  %3052 = vrot.lane.b32.xlu0 %v2865, 12
  %v3053 = vpop.permute.xlu0 %3052
  %3054 = vrot.lane.b32.xlu0 %v2866, 12
  %v3055 = vpop.permute.xlu0 %3054
  %3056 = vrot.lane.b32.xlu0 %v2867, 12
  %v3057 = vpop.permute.xlu0 %3056
  %3058 = vrot.lane.b32.xlu0 %v2868, 12
  %v3059 = vpop.permute.xlu0 %3058
  %3060 = vrot.lane.b32.xlu0 %v2869, 12
  %v3061 = vpop.permute.xlu0 %3060
  %vm3126 = vcmask 130144
  %3127 = vst.msk [vmem:[#allocation2] sm:$0xff] %vm3126, %v2935
  %3128 = vst.msk [vmem:[#allocation2 + $0x8] sm:$0xff] %vm3126, %v2937
  %3129 = vst.msk [vmem:[#allocation2 + $0x10] sm:$0xff] %vm3126, %v2939
  %3130 = vst.msk [vmem:[#allocation2 + $0x18] sm:$0xff] %vm3126, %v2941
  %3131 = vst.msk [vmem:[#allocation2 + $0x20] sm:$0xff] %vm3126, %v2943
  %3132 = vst.msk [vmem:[#allocation2 + $0x28] sm:$0xff] %vm3126, %v2945
  %3133 = vst.msk [vmem:[#allocation2 + $0x30] sm:$0xff] %vm3126, %v2947
  %3134 = vst.msk [vmem:[#allocation2 + $0x38] sm:$0xff] %vm3126, %v2949
  %3135 = vst.msk [vmem:[#allocation2 + $0x40] sm:$0xff] %vm3126, %v2951
  %3136 = vst.msk [vmem:[#allocation2 + $0x48] sm:$0xff] %vm3126, %v2953
  %3137 = vst.msk [vmem:[#allocation2 + $0x50] sm:$0xff] %vm3126, %v2955
  %3138 = vst.msk [vmem:[#allocation2 + $0x58] sm:$0xff] %vm3126, %v2957
  %3139 = vst.msk [vmem:[#allocation2 + $0x60] sm:$0xff] %vm3126, %v2959
  %3140 = vst.msk [vmem:[#allocation2 + $0x68] sm:$0xff] %vm3126, %v2961
  %3141 = vst.msk [vmem:[#allocation2 + $0x70] sm:$0xff] %vm3126, %v2963
  %3142 = vst.msk [vmem:[#allocation2 + $0x78] sm:$0xff] %vm3126, %v2965
  %3143 = vst.msk [vmem:[#allocation2 + $0x80] sm:$0xff] %vm3126, %v2967
  %3144 = vst.msk [vmem:[#allocation2 + $0x88] sm:$0xff] %vm3126, %v2969
  %3145 = vst.msk [vmem:[#allocation2 + $0x90] sm:$0xff] %vm3126, %v2971
  %3146 = vst.msk [vmem:[#allocation2 + $0x98] sm:$0xff] %vm3126, %v2973
  %3147 = vst.msk [vmem:[#allocation2 + $0xa0] sm:$0xff] %vm3126, %v2975
  %3148 = vst.msk [vmem:[#allocation2 + $0xa8] sm:$0xff] %vm3126, %v2977
  %3149 = vst.msk [vmem:[#allocation2 + $0xb0] sm:$0xff] %vm3126, %v2979
  %3150 = vst.msk [vmem:[#allocation2 + $0xb8] sm:$0xff] %vm3126, %v2981
  %3151 = vst.msk [vmem:[#allocation2 + $0xc0] sm:$0xff] %vm3126, %v2983
  %3152 = vst.msk [vmem:[#allocation2 + $0xc8] sm:$0xff] %vm3126, %v2985
  %3153 = vst.msk [vmem:[#allocation2 + $0xd0] sm:$0xff] %vm3126, %v2987
  %3154 = vst.msk [vmem:[#allocation2 + $0xd8] sm:$0xff] %vm3126, %v2989
  %3155 = vst.msk [vmem:[#allocation2 + $0xe0] sm:$0xff] %vm3126, %v2991
  %3156 = vst.msk [vmem:[#allocation2 + $0xe8] sm:$0xff] %vm3126, %v2993
  %3157 = vst.msk [vmem:[#allocation2 + $0xf0] sm:$0xff] %vm3126, %v2995
  %3158 = vst.msk [vmem:[#allocation2 + $0xf8] sm:$0xff] %vm3126, %v2997
  %3159 = vst.msk [vmem:[#allocation2 + $0x100] sm:$0xff] %vm3126, %v2999
  %3160 = vst.msk [vmem:[#allocation2 + $0x108] sm:$0xff] %vm3126, %v3001
  %3161 = vst.msk [vmem:[#allocation2 + $0x110] sm:$0xff] %vm3126, %v3003
  %3162 = vst.msk [vmem:[#allocation2 + $0x118] sm:$0xff] %vm3126, %v3005
  %3163 = vst.msk [vmem:[#allocation2 + $0x120] sm:$0xff] %vm3126, %v3007
  %3164 = vst.msk [vmem:[#allocation2 + $0x128] sm:$0xff] %vm3126, %v3009
  %3165 = vst.msk [vmem:[#allocation2 + $0x130] sm:$0xff] %vm3126, %v3011
  %3166 = vst.msk [vmem:[#allocation2 + $0x138] sm:$0xff] %vm3126, %v3013
  %3167 = vst.msk [vmem:[#allocation2 + $0x140] sm:$0xff] %vm3126, %v3015
  %3168 = vst.msk [vmem:[#allocation2 + $0x148] sm:$0xff] %vm3126, %v3017
  %3169 = vst.msk [vmem:[#allocation2 + $0x150] sm:$0xff] %vm3126, %v3019
  %3170 = vst.msk [vmem:[#allocation2 + $0x158] sm:$0xff] %vm3126, %v3021
  %3171 = vst.msk [vmem:[#allocation2 + $0x160] sm:$0xff] %vm3126, %v3023
  %3172 = vst.msk [vmem:[#allocation2 + $0x168] sm:$0xff] %vm3126, %v3025
  %3173 = vst.msk [vmem:[#allocation2 + $0x170] sm:$0xff] %vm3126, %v3027
  %3174 = vst.msk [vmem:[#allocation2 + $0x178] sm:$0xff] %vm3126, %v3029
  %3175 = vst.msk [vmem:[#allocation2 + $0x180] sm:$0xff] %vm3126, %v3031
  %3176 = vst.msk [vmem:[#allocation2 + $0x188] sm:$0xff] %vm3126, %v3033
  %3177 = vst.msk [vmem:[#allocation2 + $0x190] sm:$0xff] %vm3126, %v3035
  %3178 = vst.msk [vmem:[#allocation2 + $0x198] sm:$0xff] %vm3126, %v3037
  %3179 = vst.msk [vmem:[#allocation2 + $0x1a0] sm:$0xff] %vm3126, %v3039
  %3180 = vst.msk [vmem:[#allocation2 + $0x1a8] sm:$0xff] %vm3126, %v3041
  %3181 = vst.msk [vmem:[#allocation2 + $0x1b0] sm:$0xff] %vm3126, %v3043
  %3182 = vst.msk [vmem:[#allocation2 + $0x1b8] sm:$0xff] %vm3126, %v3045
  %3183 = vst.msk [vmem:[#allocation2 + $0x1c0] sm:$0xff] %vm3126, %v3047
  %3184 = vst.msk [vmem:[#allocation2 + $0x1c8] sm:$0xff] %vm3126, %v3049
  %3185 = vst.msk [vmem:[#allocation2 + $0x1d0] sm:$0xff] %vm3126, %v3051
  %3186 = vst.msk [vmem:[#allocation2 + $0x1d8] sm:$0xff] %vm3126, %v3053
  %3187 = vst.msk [vmem:[#allocation2 + $0x1e0] sm:$0xff] %vm3126, %v3055
  %3188 = vst.msk [vmem:[#allocation2 + $0x1e8] sm:$0xff] %vm3126, %v3057
  %3189 = vst.msk [vmem:[#allocation2 + $0x1f0] sm:$0xff] %vm3126, %v3059
  %3190 = vst.msk [vmem:[#allocation2 + $0x1f8] sm:$0xff] %vm3126, %v3061
  %3255 = vrot.lane.b32.xlu0 %v47, 16
  %v3256 = vpop.permute.xlu0 %3255
  %3257 = vrot.lane.b32.xlu0 %v48, 16
  %v3258 = vpop.permute.xlu0 %3257
  %3259 = vrot.lane.b32.xlu0 %v49, 16
  %v3260 = vpop.permute.xlu0 %3259
  %3261 = vrot.lane.b32.xlu0 %v50, 16
  %v3262 = vpop.permute.xlu0 %3261
  %3263 = vrot.lane.b32.xlu0 %v51, 16
  %v3264 = vpop.permute.xlu0 %3263
  %3265 = vrot.lane.b32.xlu0 %v52, 16
  %v3266 = vpop.permute.xlu0 %3265
  %3267 = vrot.lane.b32.xlu0 %v53, 16
  %v3268 = vpop.permute.xlu0 %3267
  %3269 = vrot.lane.b32.xlu0 %v54, 16
  %v3270 = vpop.permute.xlu0 %3269
  %3271 = vrot.lane.b32.xlu0 %v55, 16
  %v3272 = vpop.permute.xlu0 %3271
  %3273 = vrot.lane.b32.xlu0 %v56, 16
  %v3274 = vpop.permute.xlu0 %3273
  %3275 = vrot.lane.b32.xlu0 %v57, 16
  %v3276 = vpop.permute.xlu0 %3275
  %3277 = vrot.lane.b32.xlu0 %v58, 16
  %v3278 = vpop.permute.xlu0 %3277
  %3279 = vrot.lane.b32.xlu0 %v59, 16
  %v3280 = vpop.permute.xlu0 %3279
  %3281 = vrot.lane.b32.xlu0 %v60, 16
  %v3282 = vpop.permute.xlu0 %3281
  %3283 = vrot.lane.b32.xlu0 %v61, 16
  %v3284 = vpop.permute.xlu0 %3283
  %3285 = vrot.lane.b32.xlu0 %v62, 16
  %v3286 = vpop.permute.xlu0 %3285
  %3287 = vrot.lane.b32.xlu0 %v63, 16
  %v3288 = vpop.permute.xlu0 %3287
  %3289 = vrot.lane.b32.xlu0 %v64, 16
  %v3290 = vpop.permute.xlu0 %3289
  %3291 = vrot.lane.b32.xlu0 %v65, 16
  %v3292 = vpop.permute.xlu0 %3291
  %3293 = vrot.lane.b32.xlu0 %v66, 16
  %v3294 = vpop.permute.xlu0 %3293
  %3295 = vrot.lane.b32.xlu0 %v67, 16
  %v3296 = vpop.permute.xlu0 %3295
  %3297 = vrot.lane.b32.xlu0 %v68, 16
  %v3298 = vpop.permute.xlu0 %3297
  %3299 = vrot.lane.b32.xlu0 %v69, 16
  %v3300 = vpop.permute.xlu0 %3299
  %3301 = vrot.lane.b32.xlu0 %v70, 16
  %v3302 = vpop.permute.xlu0 %3301
  %3303 = vrot.lane.b32.xlu0 %v71, 16
  %v3304 = vpop.permute.xlu0 %3303
  %3305 = vrot.lane.b32.xlu0 %v72, 16
  %v3306 = vpop.permute.xlu0 %3305
  %3307 = vrot.lane.b32.xlu0 %v73, 16
  %v3308 = vpop.permute.xlu0 %3307
  %3309 = vrot.lane.b32.xlu0 %v74, 16
  %v3310 = vpop.permute.xlu0 %3309
  %3311 = vrot.lane.b32.xlu0 %v75, 16
  %v3312 = vpop.permute.xlu0 %3311
  %3313 = vrot.lane.b32.xlu0 %v76, 16
  %v3314 = vpop.permute.xlu0 %3313
  %3315 = vrot.lane.b32.xlu0 %v77, 16
  %v3316 = vpop.permute.xlu0 %3315
  %3317 = vrot.lane.b32.xlu0 %v78, 16
  %v3318 = vpop.permute.xlu0 %3317
  %3319 = vrot.lane.b32.xlu0 %v79, 16
  %v3320 = vpop.permute.xlu0 %3319
  %3321 = vrot.lane.b32.xlu0 %v80, 16
  %v3322 = vpop.permute.xlu0 %3321
  %3323 = vrot.lane.b32.xlu0 %v81, 16
  %v3324 = vpop.permute.xlu0 %3323
  %3325 = vrot.lane.b32.xlu0 %v82, 16
  %v3326 = vpop.permute.xlu0 %3325
  %3327 = vrot.lane.b32.xlu0 %v83, 16
  %v3328 = vpop.permute.xlu0 %3327
  %3329 = vrot.lane.b32.xlu0 %v84, 16
  %v3330 = vpop.permute.xlu0 %3329
  %3331 = vrot.lane.b32.xlu0 %v85, 16
  %v3332 = vpop.permute.xlu0 %3331
  %3333 = vrot.lane.b32.xlu0 %v86, 16
  %v3334 = vpop.permute.xlu0 %3333
  %3335 = vrot.lane.b32.xlu0 %v87, 16
  %v3336 = vpop.permute.xlu0 %3335
  %3337 = vrot.lane.b32.xlu0 %v88, 16
  %v3338 = vpop.permute.xlu0 %3337
  %3339 = vrot.lane.b32.xlu0 %v89, 16
  %v3340 = vpop.permute.xlu0 %3339
  %3341 = vrot.lane.b32.xlu0 %v90, 16
  %v3342 = vpop.permute.xlu0 %3341
  %3343 = vrot.lane.b32.xlu0 %v91, 16
  %v3344 = vpop.permute.xlu0 %3343
  %3345 = vrot.lane.b32.xlu0 %v92, 16
  %v3346 = vpop.permute.xlu0 %3345
  %3347 = vrot.lane.b32.xlu0 %v93, 16
  %v3348 = vpop.permute.xlu0 %3347
  %3349 = vrot.lane.b32.xlu0 %v94, 16
  %v3350 = vpop.permute.xlu0 %3349
  %3351 = vrot.lane.b32.xlu0 %v95, 16
  %v3352 = vpop.permute.xlu0 %3351
  %3353 = vrot.lane.b32.xlu0 %v96, 16
  %v3354 = vpop.permute.xlu0 %3353
  %3355 = vrot.lane.b32.xlu0 %v97, 16
  %v3356 = vpop.permute.xlu0 %3355
  %3357 = vrot.lane.b32.xlu0 %v98, 16
  %v3358 = vpop.permute.xlu0 %3357
  %3359 = vrot.lane.b32.xlu0 %v99, 16
  %v3360 = vpop.permute.xlu0 %3359
  %3361 = vrot.lane.b32.xlu0 %v100, 16
  %v3362 = vpop.permute.xlu0 %3361
  %3363 = vrot.lane.b32.xlu0 %v101, 16
  %v3364 = vpop.permute.xlu0 %3363
  %3365 = vrot.lane.b32.xlu0 %v102, 16
  %v3366 = vpop.permute.xlu0 %3365
  %3367 = vrot.lane.b32.xlu0 %v103, 16
  %v3368 = vpop.permute.xlu0 %3367
  %3369 = vrot.lane.b32.xlu0 %v104, 16
  %v3370 = vpop.permute.xlu0 %3369
  %3371 = vrot.lane.b32.xlu0 %v105, 16
  %v3372 = vpop.permute.xlu0 %3371
  %3373 = vrot.lane.b32.xlu0 %v106, 16
  %v3374 = vpop.permute.xlu0 %3373
  %3375 = vrot.lane.b32.xlu0 %v107, 16
  %v3376 = vpop.permute.xlu0 %3375
  %3377 = vrot.lane.b32.xlu0 %v108, 16
  %v3378 = vpop.permute.xlu0 %3377
  %3379 = vrot.lane.b32.xlu0 %v109, 16
  %v3380 = vpop.permute.xlu0 %3379
  %3381 = vrot.lane.b32.xlu0 %v110, 16
  %v3382 = vpop.permute.xlu0 %3381
  %vm3447 = vcmask 162944
  %3448 = vst.msk [vmem:[#allocation2] sm:$0xff] %vm3447, %v3256
  %3449 = vst.msk [vmem:[#allocation2 + $0x8] sm:$0xff] %vm3447, %v3258
  %3450 = vst.msk [vmem:[#allocation2 + $0x10] sm:$0xff] %vm3447, %v3260
  %3451 = vst.msk [vmem:[#allocation2 + $0x18] sm:$0xff] %vm3447, %v3262
  %3452 = vst.msk [vmem:[#allocation2 + $0x20] sm:$0xff] %vm3447, %v3264
  %3453 = vst.msk [vmem:[#allocation2 + $0x28] sm:$0xff] %vm3447, %v3266
  %3454 = vst.msk [vmem:[#allocation2 + $0x30] sm:$0xff] %vm3447, %v3268
  %3455 = vst.msk [vmem:[#allocation2 + $0x38] sm:$0xff] %vm3447, %v3270
  %3456 = vst.msk [vmem:[#allocation2 + $0x40] sm:$0xff] %vm3447, %v3272
  %3457 = vst.msk [vmem:[#allocation2 + $0x48] sm:$0xff] %vm3447, %v3274
  %3458 = vst.msk [vmem:[#allocation2 + $0x50] sm:$0xff] %vm3447, %v3276
  %3459 = vst.msk [vmem:[#allocation2 + $0x58] sm:$0xff] %vm3447, %v3278
  %3460 = vst.msk [vmem:[#allocation2 + $0x60] sm:$0xff] %vm3447, %v3280
  %3461 = vst.msk [vmem:[#allocation2 + $0x68] sm:$0xff] %vm3447, %v3282
  %3462 = vst.msk [vmem:[#allocation2 + $0x70] sm:$0xff] %vm3447, %v3284
  %3463 = vst.msk [vmem:[#allocation2 + $0x78] sm:$0xff] %vm3447, %v3286
  %3464 = vst.msk [vmem:[#allocation2 + $0x80] sm:$0xff] %vm3447, %v3288
  %3465 = vst.msk [vmem:[#allocation2 + $0x88] sm:$0xff] %vm3447, %v3290
  %3466 = vst.msk [vmem:[#allocation2 + $0x90] sm:$0xff] %vm3447, %v3292
  %3467 = vst.msk [vmem:[#allocation2 + $0x98] sm:$0xff] %vm3447, %v3294
  %3468 = vst.msk [vmem:[#allocation2 + $0xa0] sm:$0xff] %vm3447, %v3296
  %3469 = vst.msk [vmem:[#allocation2 + $0xa8] sm:$0xff] %vm3447, %v3298
  %3470 = vst.msk [vmem:[#allocation2 + $0xb0] sm:$0xff] %vm3447, %v3300
  %3471 = vst.msk [vmem:[#allocation2 + $0xb8] sm:$0xff] %vm3447, %v3302
  %3472 = vst.msk [vmem:[#allocation2 + $0xc0] sm:$0xff] %vm3447, %v3304
  %3473 = vst.msk [vmem:[#allocation2 + $0xc8] sm:$0xff] %vm3447, %v3306
  %3474 = vst.msk [vmem:[#allocation2 + $0xd0] sm:$0xff] %vm3447, %v3308
  %3475 = vst.msk [vmem:[#allocation2 + $0xd8] sm:$0xff] %vm3447, %v3310
  %3476 = vst.msk [vmem:[#allocation2 + $0xe0] sm:$0xff] %vm3447, %v3312
  %3477 = vst.msk [vmem:[#allocation2 + $0xe8] sm:$0xff] %vm3447, %v3314
  %3478 = vst.msk [vmem:[#allocation2 + $0xf0] sm:$0xff] %vm3447, %v3316
  %3479 = vst.msk [vmem:[#allocation2 + $0xf8] sm:$0xff] %vm3447, %v3318
  %3480 = vst.msk [vmem:[#allocation2 + $0x100] sm:$0xff] %vm3447, %v3320
  %3481 = vst.msk [vmem:[#allocation2 + $0x108] sm:$0xff] %vm3447, %v3322
  %3482 = vst.msk [vmem:[#allocation2 + $0x110] sm:$0xff] %vm3447, %v3324
  %3483 = vst.msk [vmem:[#allocation2 + $0x118] sm:$0xff] %vm3447, %v3326
  %3484 = vst.msk [vmem:[#allocation2 + $0x120] sm:$0xff] %vm3447, %v3328
  %3485 = vst.msk [vmem:[#allocation2 + $0x128] sm:$0xff] %vm3447, %v3330
  %3486 = vst.msk [vmem:[#allocation2 + $0x130] sm:$0xff] %vm3447, %v3332
  %3487 = vst.msk [vmem:[#allocation2 + $0x138] sm:$0xff] %vm3447, %v3334
  %3488 = vst.msk [vmem:[#allocation2 + $0x140] sm:$0xff] %vm3447, %v3336
  %3489 = vst.msk [vmem:[#allocation2 + $0x148] sm:$0xff] %vm3447, %v3338
  %3490 = vst.msk [vmem:[#allocation2 + $0x150] sm:$0xff] %vm3447, %v3340
  %3491 = vst.msk [vmem:[#allocation2 + $0x158] sm:$0xff] %vm3447, %v3342
  %3492 = vst.msk [vmem:[#allocation2 + $0x160] sm:$0xff] %vm3447, %v3344
  %3493 = vst.msk [vmem:[#allocation2 + $0x168] sm:$0xff] %vm3447, %v3346
  %3494 = vst.msk [vmem:[#allocation2 + $0x170] sm:$0xff] %vm3447, %v3348
  %3495 = vst.msk [vmem:[#allocation2 + $0x178] sm:$0xff] %vm3447, %v3350
  %3496 = vst.msk [vmem:[#allocation2 + $0x180] sm:$0xff] %vm3447, %v3352
  %3497 = vst.msk [vmem:[#allocation2 + $0x188] sm:$0xff] %vm3447, %v3354
  %3498 = vst.msk [vmem:[#allocation2 + $0x190] sm:$0xff] %vm3447, %v3356
  %3499 = vst.msk [vmem:[#allocation2 + $0x198] sm:$0xff] %vm3447, %v3358
  %3500 = vst.msk [vmem:[#allocation2 + $0x1a0] sm:$0xff] %vm3447, %v3360
  %3501 = vst.msk [vmem:[#allocation2 + $0x1a8] sm:$0xff] %vm3447, %v3362
  %3502 = vst.msk [vmem:[#allocation2 + $0x1b0] sm:$0xff] %vm3447, %v3364
  %3503 = vst.msk [vmem:[#allocation2 + $0x1b8] sm:$0xff] %vm3447, %v3366
  %3504 = vst.msk [vmem:[#allocation2 + $0x1c0] sm:$0xff] %vm3447, %v3368
  %3505 = vst.msk [vmem:[#allocation2 + $0x1c8] sm:$0xff] %vm3447, %v3370
  %3506 = vst.msk [vmem:[#allocation2 + $0x1d0] sm:$0xff] %vm3447, %v3372
  %3507 = vst.msk [vmem:[#allocation2 + $0x1d8] sm:$0xff] %vm3447, %v3374
  %3508 = vst.msk [vmem:[#allocation2 + $0x1e0] sm:$0xff] %vm3447, %v3376
  %3509 = vst.msk [vmem:[#allocation2 + $0x1e8] sm:$0xff] %vm3447, %v3378
  %3510 = vst.msk [vmem:[#allocation2 + $0x1f0] sm:$0xff] %vm3447, %v3380
  %3511 = vst.msk [vmem:[#allocation2 + $0x1f8] sm:$0xff] %vm3447, %v3382
  %v3512 = vld [vmem:[%s1] sm:$0xff]
  %v3513 = vld [vmem:[%s1 + $0x8] sm:$0xff]
  %v3514 = vld [vmem:[%s1 + $0x10] sm:$0xff]
  %v3515 = vld [vmem:[%s1 + $0x18] sm:$0xff]
  %v3516 = vld [vmem:[%s1 + $0x20] sm:$0xff]
  %v3517 = vld [vmem:[%s1 + $0x28] sm:$0xff]
  %v3518 = vld [vmem:[%s1 + $0x30] sm:$0xff]
  %v3519 = vld [vmem:[%s1 + $0x38] sm:$0xff]
  %v3520 = vld [vmem:[%s1 + $0x40] sm:$0xff]
  %v3521 = vld [vmem:[%s1 + $0x48] sm:$0xff]
  %v3522 = vld [vmem:[%s1 + $0x50] sm:$0xff]
  %v3523 = vld [vmem:[%s1 + $0x58] sm:$0xff]
  %v3524 = vld [vmem:[%s1 + $0x60] sm:$0xff]
  %v3525 = vld [vmem:[%s1 + $0x68] sm:$0xff]
  %v3526 = vld [vmem:[%s1 + $0x70] sm:$0xff]
  %v3527 = vld [vmem:[%s1 + $0x78] sm:$0xff]
  %v3528 = vld [vmem:[%s1 + $0x80] sm:$0xff]
  %v3529 = vld [vmem:[%s1 + $0x88] sm:$0xff]
  %v3530 = vld [vmem:[%s1 + $0x90] sm:$0xff]
  %v3531 = vld [vmem:[%s1 + $0x98] sm:$0xff]
  %v3532 = vld [vmem:[%s1 + $0xa0] sm:$0xff]
  %v3533 = vld [vmem:[%s1 + $0xa8] sm:$0xff]
  %v3534 = vld [vmem:[%s1 + $0xb0] sm:$0xff]
  %v3535 = vld [vmem:[%s1 + $0xb8] sm:$0xff]
  %v3536 = vld [vmem:[%s1 + $0xc0] sm:$0xff]
  %v3537 = vld [vmem:[%s1 + $0xc8] sm:$0xff]
  %v3538 = vld [vmem:[%s1 + $0xd0] sm:$0xff]
  %v3539 = vld [vmem:[%s1 + $0xd8] sm:$0xff]
  %v3540 = vld [vmem:[%s1 + $0xe0] sm:$0xff]
  %v3541 = vld [vmem:[%s1 + $0xe8] sm:$0xff]
  %v3542 = vld [vmem:[%s1 + $0xf0] sm:$0xff]
  %v3543 = vld [vmem:[%s1 + $0xf8] sm:$0xff]
  %v3544 = vld [vmem:[%s1 + $0x100] sm:$0xff]
  %v3545 = vld [vmem:[%s1 + $0x108] sm:$0xff]
  %v3546 = vld [vmem:[%s1 + $0x110] sm:$0xff]
  %v3547 = vld [vmem:[%s1 + $0x118] sm:$0xff]
  %v3548 = vld [vmem:[%s1 + $0x120] sm:$0xff]
  %v3549 = vld [vmem:[%s1 + $0x128] sm:$0xff]
  %v3550 = vld [vmem:[%s1 + $0x130] sm:$0xff]
  %v3551 = vld [vmem:[%s1 + $0x138] sm:$0xff]
  %v3552 = vld [vmem:[%s1 + $0x140] sm:$0xff]
  %v3553 = vld [vmem:[%s1 + $0x148] sm:$0xff]
  %v3554 = vld [vmem:[%s1 + $0x150] sm:$0xff]
  %v3555 = vld [vmem:[%s1 + $0x158] sm:$0xff]
  %v3556 = vld [vmem:[%s1 + $0x160] sm:$0xff]
  %v3557 = vld [vmem:[%s1 + $0x168] sm:$0xff]
  %v3558 = vld [vmem:[%s1 + $0x170] sm:$0xff]
  %v3559 = vld [vmem:[%s1 + $0x178] sm:$0xff]
  %v3560 = vld [vmem:[%s1 + $0x180] sm:$0xff]
  %v3561 = vld [vmem:[%s1 + $0x188] sm:$0xff]
  %v3562 = vld [vmem:[%s1 + $0x190] sm:$0xff]
  %v3563 = vld [vmem:[%s1 + $0x198] sm:$0xff]
  %v3564 = vld [vmem:[%s1 + $0x1a0] sm:$0xff]
  %v3565 = vld [vmem:[%s1 + $0x1a8] sm:$0xff]
  %v3566 = vld [vmem:[%s1 + $0x1b0] sm:$0xff]
  %v3567 = vld [vmem:[%s1 + $0x1b8] sm:$0xff]
  %v3568 = vld [vmem:[%s1 + $0x1c0] sm:$0xff]
  %v3569 = vld [vmem:[%s1 + $0x1c8] sm:$0xff]
  %v3570 = vld [vmem:[%s1 + $0x1d0] sm:$0xff]
  %v3571 = vld [vmem:[%s1 + $0x1d8] sm:$0xff]
  %v3572 = vld [vmem:[%s1 + $0x1e0] sm:$0xff]
  %v3573 = vld [vmem:[%s1 + $0x1e8] sm:$0xff]
  %v3574 = vld [vmem:[%s1 + $0x1f0] sm:$0xff]
  %v3575 = vld [vmem:[%s1 + $0x1f8] sm:$0xff]
  %3577 = vset.pattern.permute.xlu0 5
  %3578 = vperm.xlu0 %3577, %v3512
  %v3579 = vpop.permute.xlu0 %3578
  %3582 = vset.pattern.permute.xlu0 5
  %3583 = vperm.xlu0 %3582, %v3513
  %v3584 = vpop.permute.xlu0 %3583
  %3587 = vset.pattern.permute.xlu0 5
  %3588 = vperm.xlu0 %3587, %v3514
  %v3589 = vpop.permute.xlu0 %3588
  %3592 = vset.pattern.permute.xlu0 5
  %3593 = vperm.xlu0 %3592, %v3515
  %v3594 = vpop.permute.xlu0 %3593
  %3597 = vset.pattern.permute.xlu0 5
  %3598 = vperm.xlu0 %3597, %v3516
  %v3599 = vpop.permute.xlu0 %3598
  %3602 = vset.pattern.permute.xlu0 5
  %3603 = vperm.xlu0 %3602, %v3517
  %v3604 = vpop.permute.xlu0 %3603
  %3607 = vset.pattern.permute.xlu0 5
  %3608 = vperm.xlu0 %3607, %v3518
  %v3609 = vpop.permute.xlu0 %3608
  %3612 = vset.pattern.permute.xlu0 5
  %3613 = vperm.xlu0 %3612, %v3519
  %v3614 = vpop.permute.xlu0 %3613
  %3617 = vset.pattern.permute.xlu0 5
  %3618 = vperm.xlu0 %3617, %v3520
  %v3619 = vpop.permute.xlu0 %3618
  %3622 = vset.pattern.permute.xlu0 5
  %3623 = vperm.xlu0 %3622, %v3521
  %v3624 = vpop.permute.xlu0 %3623
  %3627 = vset.pattern.permute.xlu0 5
  %3628 = vperm.xlu0 %3627, %v3522
  %v3629 = vpop.permute.xlu0 %3628
  %3632 = vset.pattern.permute.xlu0 5
  %3633 = vperm.xlu0 %3632, %v3523
  %v3634 = vpop.permute.xlu0 %3633
  %3637 = vset.pattern.permute.xlu0 5
  %3638 = vperm.xlu0 %3637, %v3524
  %v3639 = vpop.permute.xlu0 %3638
  %3642 = vset.pattern.permute.xlu0 5
  %3643 = vperm.xlu0 %3642, %v3525
  %v3644 = vpop.permute.xlu0 %3643
  %3647 = vset.pattern.permute.xlu0 5
  %3648 = vperm.xlu0 %3647, %v3526
  %v3649 = vpop.permute.xlu0 %3648
  %3652 = vset.pattern.permute.xlu0 5
  %3653 = vperm.xlu0 %3652, %v3527
  %v3654 = vpop.permute.xlu0 %3653
  %3657 = vset.pattern.permute.xlu0 5
  %3658 = vperm.xlu0 %3657, %v3528
  %v3659 = vpop.permute.xlu0 %3658
  %3662 = vset.pattern.permute.xlu0 5
  %3663 = vperm.xlu0 %3662, %v3529
  %v3664 = vpop.permute.xlu0 %3663
  %3667 = vset.pattern.permute.xlu0 5
  %3668 = vperm.xlu0 %3667, %v3530
  %v3669 = vpop.permute.xlu0 %3668
  %3672 = vset.pattern.permute.xlu0 5
  %3673 = vperm.xlu0 %3672, %v3531
  %v3674 = vpop.permute.xlu0 %3673
  %3677 = vset.pattern.permute.xlu0 5
  %3678 = vperm.xlu0 %3677, %v3532
  %v3679 = vpop.permute.xlu0 %3678
  %3682 = vset.pattern.permute.xlu0 5
  %3683 = vperm.xlu0 %3682, %v3533
  %v3684 = vpop.permute.xlu0 %3683
  %3687 = vset.pattern.permute.xlu0 5
  %3688 = vperm.xlu0 %3687, %v3534
  %v3689 = vpop.permute.xlu0 %3688
  %3692 = vset.pattern.permute.xlu0 5
  %3693 = vperm.xlu0 %3692, %v3535
  %v3694 = vpop.permute.xlu0 %3693
  %3697 = vset.pattern.permute.xlu0 5
  %3698 = vperm.xlu0 %3697, %v3536
  %v3699 = vpop.permute.xlu0 %3698
  %3702 = vset.pattern.permute.xlu0 5
  %3703 = vperm.xlu0 %3702, %v3537
  %v3704 = vpop.permute.xlu0 %3703
  %3707 = vset.pattern.permute.xlu0 5
  %3708 = vperm.xlu0 %3707, %v3538
  %v3709 = vpop.permute.xlu0 %3708
  %3712 = vset.pattern.permute.xlu0 5
  %3713 = vperm.xlu0 %3712, %v3539
  %v3714 = vpop.permute.xlu0 %3713
  %3717 = vset.pattern.permute.xlu0 5
  %3718 = vperm.xlu0 %3717, %v3540
  %v3719 = vpop.permute.xlu0 %3718
  %3722 = vset.pattern.permute.xlu0 5
  %3723 = vperm.xlu0 %3722, %v3541
  %v3724 = vpop.permute.xlu0 %3723
  %3727 = vset.pattern.permute.xlu0 5
  %3728 = vperm.xlu0 %3727, %v3542
  %v3729 = vpop.permute.xlu0 %3728
  %3732 = vset.pattern.permute.xlu0 5
  %3733 = vperm.xlu0 %3732, %v3543
  %v3734 = vpop.permute.xlu0 %3733
  %3737 = vset.pattern.permute.xlu0 5
  %3738 = vperm.xlu0 %3737, %v3544
  %v3739 = vpop.permute.xlu0 %3738
  %3742 = vset.pattern.permute.xlu0 5
  %3743 = vperm.xlu0 %3742, %v3545
  %v3744 = vpop.permute.xlu0 %3743
  %3747 = vset.pattern.permute.xlu0 5
  %3748 = vperm.xlu0 %3747, %v3546
  %v3749 = vpop.permute.xlu0 %3748
  %3752 = vset.pattern.permute.xlu0 5
  %3753 = vperm.xlu0 %3752, %v3547
  %v3754 = vpop.permute.xlu0 %3753
  %3757 = vset.pattern.permute.xlu0 5
  %3758 = vperm.xlu0 %3757, %v3548
  %v3759 = vpop.permute.xlu0 %3758
  %3762 = vset.pattern.permute.xlu0 5
  %3763 = vperm.xlu0 %3762, %v3549
  %v3764 = vpop.permute.xlu0 %3763
  %3767 = vset.pattern.permute.xlu0 5
  %3768 = vperm.xlu0 %3767, %v3550
  %v3769 = vpop.permute.xlu0 %3768
  %3772 = vset.pattern.permute.xlu0 5
  %3773 = vperm.xlu0 %3772, %v3551
  %v3774 = vpop.permute.xlu0 %3773
  %3777 = vset.pattern.permute.xlu0 5
  %3778 = vperm.xlu0 %3777, %v3552
  %v3779 = vpop.permute.xlu0 %3778
  %3782 = vset.pattern.permute.xlu0 5
  %3783 = vperm.xlu0 %3782, %v3553
  %v3784 = vpop.permute.xlu0 %3783
  %3787 = vset.pattern.permute.xlu0 5
  %3788 = vperm.xlu0 %3787, %v3554
  %v3789 = vpop.permute.xlu0 %3788
  %3792 = vset.pattern.permute.xlu0 5
  %3793 = vperm.xlu0 %3792, %v3555
  %v3794 = vpop.permute.xlu0 %3793
  %3797 = vset.pattern.permute.xlu0 5
  %3798 = vperm.xlu0 %3797, %v3556
  %v3799 = vpop.permute.xlu0 %3798
  %3802 = vset.pattern.permute.xlu0 5
  %3803 = vperm.xlu0 %3802, %v3557
  %v3804 = vpop.permute.xlu0 %3803
  %3807 = vset.pattern.permute.xlu0 5
  %3808 = vperm.xlu0 %3807, %v3558
  %v3809 = vpop.permute.xlu0 %3808
  %3812 = vset.pattern.permute.xlu0 5
  %3813 = vperm.xlu0 %3812, %v3559
  %v3814 = vpop.permute.xlu0 %3813
  %3817 = vset.pattern.permute.xlu0 5
  %3818 = vperm.xlu0 %3817, %v3560
  %v3819 = vpop.permute.xlu0 %3818
  %3822 = vset.pattern.permute.xlu0 5
  %3823 = vperm.xlu0 %3822, %v3561
  %v3824 = vpop.permute.xlu0 %3823
  %3827 = vset.pattern.permute.xlu0 5
  %3828 = vperm.xlu0 %3827, %v3562
  %v3829 = vpop.permute.xlu0 %3828
  %3832 = vset.pattern.permute.xlu0 5
  %3833 = vperm.xlu0 %3832, %v3563
  %v3834 = vpop.permute.xlu0 %3833
  %3837 = vset.pattern.permute.xlu0 5
  %3838 = vperm.xlu0 %3837, %v3564
  %v3839 = vpop.permute.xlu0 %3838
  %3842 = vset.pattern.permute.xlu0 5
  %3843 = vperm.xlu0 %3842, %v3565
  %v3844 = vpop.permute.xlu0 %3843
  %3847 = vset.pattern.permute.xlu0 5
  %3848 = vperm.xlu0 %3847, %v3566
  %v3849 = vpop.permute.xlu0 %3848
  %3852 = vset.pattern.permute.xlu0 5
  %3853 = vperm.xlu0 %3852, %v3567
  %v3854 = vpop.permute.xlu0 %3853
  %3857 = vset.pattern.permute.xlu0 5
  %3858 = vperm.xlu0 %3857, %v3568
  %v3859 = vpop.permute.xlu0 %3858
  %3862 = vset.pattern.permute.xlu0 5
  %3863 = vperm.xlu0 %3862, %v3569
  %v3864 = vpop.permute.xlu0 %3863
  %3867 = vset.pattern.permute.xlu0 5
  %3868 = vperm.xlu0 %3867, %v3570
  %v3869 = vpop.permute.xlu0 %3868
  %3872 = vset.pattern.permute.xlu0 5
  %3873 = vperm.xlu0 %3872, %v3571
  %v3874 = vpop.permute.xlu0 %3873
  %3877 = vset.pattern.permute.xlu0 5
  %3878 = vperm.xlu0 %3877, %v3572
  %v3879 = vpop.permute.xlu0 %3878
  %3882 = vset.pattern.permute.xlu0 5
  %3883 = vperm.xlu0 %3882, %v3573
  %v3884 = vpop.permute.xlu0 %3883
  %3887 = vset.pattern.permute.xlu0 5
  %3888 = vperm.xlu0 %3887, %v3574
  %v3889 = vpop.permute.xlu0 %3888
  %3892 = vset.pattern.permute.xlu0 5
  %3893 = vperm.xlu0 %3892, %v3575
  %v3894 = vpop.permute.xlu0 %3893
  %v3896 = vmul.f32 %v1651, %v3579
  %v3897 = vmul.f32 %v1650, %v3584
  %v3898 = vmul.f32 %v1649, %v3589
  %v3899 = vmul.f32 %v1648, %v3594
  %v3900 = vmul.f32 %v1647, %v3599
  %v3901 = vmul.f32 %v1646, %v3604
  %v3902 = vmul.f32 %v1645, %v3609
  %v3903 = vmul.f32 %v1644, %v3614
  %v3904 = vmul.f32 %v1643, %v3619
  %v3905 = vmul.f32 %v1642, %v3624
  %v3906 = vmul.f32 %v1641, %v3629
  %v3907 = vmul.f32 %v1640, %v3634
  %v3908 = vmul.f32 %v1639, %v3639
  %v3909 = vmul.f32 %v1638, %v3644
  %v3910 = vmul.f32 %v1637, %v3649
  %v3911 = vmul.f32 %v1636, %v3654
  %v3912 = vmul.f32 %v1635, %v3659
  %v3913 = vmul.f32 %v1634, %v3664
  %v3914 = vmul.f32 %v1633, %v3669
  %v3915 = vmul.f32 %v1632, %v3674
  %v3916 = vmul.f32 %v1631, %v3679
  %v3917 = vmul.f32 %v1630, %v3684
  %v3918 = vmul.f32 %v1629, %v3689
  %v3919 = vmul.f32 %v1628, %v3694
  %v3920 = vmul.f32 %v1627, %v3699
  %v3921 = vmul.f32 %v1626, %v3704
  %v3922 = vmul.f32 %v1625, %v3709
  %v3923 = vmul.f32 %v1624, %v3714
  %v3924 = vmul.f32 %v1623, %v3719
  %v3925 = vmul.f32 %v1622, %v3724
  %v3926 = vmul.f32 %v1621, %v3729
  %v3927 = vmul.f32 %v1620, %v3734
  %v3928 = vmul.f32 %v1619, %v3739
  %v3929 = vmul.f32 %v1618, %v3744
  %v3930 = vmul.f32 %v1617, %v3749
  %v3931 = vmul.f32 %v1616, %v3754
  %v3932 = vmul.f32 %v1615, %v3759
  %v3933 = vmul.f32 %v1614, %v3764
  %v3934 = vmul.f32 %v1613, %v3769
  %v3935 = vmul.f32 %v1612, %v3774
  %v3936 = vmul.f32 %v1611, %v3779
  %v3937 = vmul.f32 %v1610, %v3784
  %v3938 = vmul.f32 %v1609, %v3789
  %v3939 = vmul.f32 %v1608, %v3794
  %v3940 = vmul.f32 %v1607, %v3799
  %v3941 = vmul.f32 %v1606, %v3804
  %v3942 = vmul.f32 %v1605, %v3809
  %v3943 = vmul.f32 %v1604, %v3814
  %v3944 = vmul.f32 %v1603, %v3819
  %v3945 = vmul.f32 %v1602, %v3824
  %v3946 = vmul.f32 %v1601, %v3829
  %v3947 = vmul.f32 %v1600, %v3834
  %v3948 = vmul.f32 %v1599, %v3839
  %v3949 = vmul.f32 %v1598, %v3844
  %v3950 = vmul.f32 %v1597, %v3849
  %v3951 = vmul.f32 %v1596, %v3854
  %v3952 = vmul.f32 %v1595, %v3859
  %v3953 = vmul.f32 %v1594, %v3864
  %v3954 = vmul.f32 %v1593, %v3869
  %v3955 = vmul.f32 %v1592, %v3874
  %v3956 = vmul.f32 %v1591, %v3879
  %v3957 = vmul.f32 %v1590, %v3884
  %v3958 = vmul.f32 %v1589, %v3889
  %v3959 = vmul.f32 %v1652, %v3894
  %4024 = vrot.lane.b32.xlu0 %v3896, 20
  %v4025 = vpop.permute.xlu0 %4024
  %4026 = vrot.lane.b32.xlu0 %v3897, 20
  %v4027 = vpop.permute.xlu0 %4026
  %4028 = vrot.lane.b32.xlu0 %v3898, 20
  %v4029 = vpop.permute.xlu0 %4028
  %4030 = vrot.lane.b32.xlu0 %v3899, 20
  %v4031 = vpop.permute.xlu0 %4030
  %4032 = vrot.lane.b32.xlu0 %v3900, 20
  %v4033 = vpop.permute.xlu0 %4032
  %4034 = vrot.lane.b32.xlu0 %v3901, 20
  %v4035 = vpop.permute.xlu0 %4034
  %4036 = vrot.lane.b32.xlu0 %v3902, 20
  %v4037 = vpop.permute.xlu0 %4036
  %4038 = vrot.lane.b32.xlu0 %v3903, 20
  %v4039 = vpop.permute.xlu0 %4038
  %4040 = vrot.lane.b32.xlu0 %v3904, 20
  %v4041 = vpop.permute.xlu0 %4040
  %4042 = vrot.lane.b32.xlu0 %v3905, 20
  %v4043 = vpop.permute.xlu0 %4042
  %4044 = vrot.lane.b32.xlu0 %v3906, 20
  %v4045 = vpop.permute.xlu0 %4044
  %4046 = vrot.lane.b32.xlu0 %v3907, 20
  %v4047 = vpop.permute.xlu0 %4046
  %4048 = vrot.lane.b32.xlu0 %v3908, 20
  %v4049 = vpop.permute.xlu0 %4048
  %4050 = vrot.lane.b32.xlu0 %v3909, 20
  %v4051 = vpop.permute.xlu0 %4050
  %4052 = vrot.lane.b32.xlu0 %v3910, 20
  %v4053 = vpop.permute.xlu0 %4052
  %4054 = vrot.lane.b32.xlu0 %v3911, 20
  %v4055 = vpop.permute.xlu0 %4054
  %4056 = vrot.lane.b32.xlu0 %v3912, 20
  %v4057 = vpop.permute.xlu0 %4056
  %4058 = vrot.lane.b32.xlu0 %v3913, 20
  %v4059 = vpop.permute.xlu0 %4058
  %4060 = vrot.lane.b32.xlu0 %v3914, 20
  %v4061 = vpop.permute.xlu0 %4060
  %4062 = vrot.lane.b32.xlu0 %v3915, 20
  %v4063 = vpop.permute.xlu0 %4062
  %4064 = vrot.lane.b32.xlu0 %v3916, 20
  %v4065 = vpop.permute.xlu0 %4064
  %4066 = vrot.lane.b32.xlu0 %v3917, 20
  %v4067 = vpop.permute.xlu0 %4066
  %4068 = vrot.lane.b32.xlu0 %v3918, 20
  %v4069 = vpop.permute.xlu0 %4068
  %4070 = vrot.lane.b32.xlu0 %v3919, 20
  %v4071 = vpop.permute.xlu0 %4070
  %4072 = vrot.lane.b32.xlu0 %v3920, 20
  %v4073 = vpop.permute.xlu0 %4072
  %4074 = vrot.lane.b32.xlu0 %v3921, 20
  %v4075 = vpop.permute.xlu0 %4074
  %4076 = vrot.lane.b32.xlu0 %v3922, 20
  %v4077 = vpop.permute.xlu0 %4076
  %4078 = vrot.lane.b32.xlu0 %v3923, 20
  %v4079 = vpop.permute.xlu0 %4078
  %4080 = vrot.lane.b32.xlu0 %v3924, 20
  %v4081 = vpop.permute.xlu0 %4080
  %4082 = vrot.lane.b32.xlu0 %v3925, 20
  %v4083 = vpop.permute.xlu0 %4082
  %4084 = vrot.lane.b32.xlu0 %v3926, 20
  %v4085 = vpop.permute.xlu0 %4084
  %4086 = vrot.lane.b32.xlu0 %v3927, 20
  %v4087 = vpop.permute.xlu0 %4086
  %4088 = vrot.lane.b32.xlu0 %v3928, 20
  %v4089 = vpop.permute.xlu0 %4088
  %4090 = vrot.lane.b32.xlu0 %v3929, 20
  %v4091 = vpop.permute.xlu0 %4090
  %4092 = vrot.lane.b32.xlu0 %v3930, 20
  %v4093 = vpop.permute.xlu0 %4092
  %4094 = vrot.lane.b32.xlu0 %v3931, 20
  %v4095 = vpop.permute.xlu0 %4094
  %4096 = vrot.lane.b32.xlu0 %v3932, 20
  %v4097 = vpop.permute.xlu0 %4096
  %4098 = vrot.lane.b32.xlu0 %v3933, 20
  %v4099 = vpop.permute.xlu0 %4098
  %4100 = vrot.lane.b32.xlu0 %v3934, 20
  %v4101 = vpop.permute.xlu0 %4100
  %4102 = vrot.lane.b32.xlu0 %v3935, 20
  %v4103 = vpop.permute.xlu0 %4102
  %4104 = vrot.lane.b32.xlu0 %v3936, 20
  %v4105 = vpop.permute.xlu0 %4104
  %4106 = vrot.lane.b32.xlu0 %v3937, 20
  %v4107 = vpop.permute.xlu0 %4106
  %4108 = vrot.lane.b32.xlu0 %v3938, 20
  %v4109 = vpop.permute.xlu0 %4108
  %4110 = vrot.lane.b32.xlu0 %v3939, 20
  %v4111 = vpop.permute.xlu0 %4110
  %4112 = vrot.lane.b32.xlu0 %v3940, 20
  %v4113 = vpop.permute.xlu0 %4112
  %4114 = vrot.lane.b32.xlu0 %v3941, 20
  %v4115 = vpop.permute.xlu0 %4114
  %4116 = vrot.lane.b32.xlu0 %v3942, 20
  %v4117 = vpop.permute.xlu0 %4116
  %4118 = vrot.lane.b32.xlu0 %v3943, 20
  %v4119 = vpop.permute.xlu0 %4118
  %4120 = vrot.lane.b32.xlu0 %v3944, 20
  %v4121 = vpop.permute.xlu0 %4120
  %4122 = vrot.lane.b32.xlu0 %v3945, 20
  %v4123 = vpop.permute.xlu0 %4122
  %4124 = vrot.lane.b32.xlu0 %v3946, 20
  %v4125 = vpop.permute.xlu0 %4124
  %4126 = vrot.lane.b32.xlu0 %v3947, 20
  %v4127 = vpop.permute.xlu0 %4126
  %4128 = vrot.lane.b32.xlu0 %v3948, 20
  %v4129 = vpop.permute.xlu0 %4128
  %4130 = vrot.lane.b32.xlu0 %v3949, 20
  %v4131 = vpop.permute.xlu0 %4130
  %4132 = vrot.lane.b32.xlu0 %v3950, 20
  %v4133 = vpop.permute.xlu0 %4132
  %4134 = vrot.lane.b32.xlu0 %v3951, 20
  %v4135 = vpop.permute.xlu0 %4134
  %4136 = vrot.lane.b32.xlu0 %v3952, 20
  %v4137 = vpop.permute.xlu0 %4136
  %4138 = vrot.lane.b32.xlu0 %v3953, 20
  %v4139 = vpop.permute.xlu0 %4138
  %4140 = vrot.lane.b32.xlu0 %v3954, 20
  %v4141 = vpop.permute.xlu0 %4140
  %4142 = vrot.lane.b32.xlu0 %v3955, 20
  %v4143 = vpop.permute.xlu0 %4142
  %4144 = vrot.lane.b32.xlu0 %v3956, 20
  %v4145 = vpop.permute.xlu0 %4144
  %4146 = vrot.lane.b32.xlu0 %v3957, 20
  %v4147 = vpop.permute.xlu0 %4146
  %4148 = vrot.lane.b32.xlu0 %v3958, 20
  %v4149 = vpop.permute.xlu0 %4148
  %4150 = vrot.lane.b32.xlu0 %v3959, 20
  %v4151 = vpop.permute.xlu0 %4150
  %vm4216 = vcmask 195744
  %4217 = vst.msk [vmem:[#allocation2] sm:$0xff] %vm4216, %v4025
  %4218 = vst.msk [vmem:[#allocation2 + $0x8] sm:$0xff] %vm4216, %v4027
  %4219 = vst.msk [vmem:[#allocation2 + $0x10] sm:$0xff] %vm4216, %v4029
  %4220 = vst.msk [vmem:[#allocation2 + $0x18] sm:$0xff] %vm4216, %v4031
  %4221 = vst.msk [vmem:[#allocation2 + $0x20] sm:$0xff] %vm4216, %v4033
  %4222 = vst.msk [vmem:[#allocation2 + $0x28] sm:$0xff] %vm4216, %v4035
  %4223 = vst.msk [vmem:[#allocation2 + $0x30] sm:$0xff] %vm4216, %v4037
  %4224 = vst.msk [vmem:[#allocation2 + $0x38] sm:$0xff] %vm4216, %v4039
  %4225 = vst.msk [vmem:[#allocation2 + $0x40] sm:$0xff] %vm4216, %v4041
  %4226 = vst.msk [vmem:[#allocation2 + $0x48] sm:$0xff] %vm4216, %v4043
  %4227 = vst.msk [vmem:[#allocation2 + $0x50] sm:$0xff] %vm4216, %v4045
  %4228 = vst.msk [vmem:[#allocation2 + $0x58] sm:$0xff] %vm4216, %v4047
  %4229 = vst.msk [vmem:[#allocation2 + $0x60] sm:$0xff] %vm4216, %v4049
  %4230 = vst.msk [vmem:[#allocation2 + $0x68] sm:$0xff] %vm4216, %v4051
  %4231 = vst.msk [vmem:[#allocation2 + $0x70] sm:$0xff] %vm4216, %v4053
  %4232 = vst.msk [vmem:[#allocation2 + $0x78] sm:$0xff] %vm4216, %v4055
  %4233 = vst.msk [vmem:[#allocation2 + $0x80] sm:$0xff] %vm4216, %v4057
  %4234 = vst.msk [vmem:[#allocation2 + $0x88] sm:$0xff] %vm4216, %v4059
  %4235 = vst.msk [vmem:[#allocation2 + $0x90] sm:$0xff] %vm4216, %v4061
  %4236 = vst.msk [vmem:[#allocation2 + $0x98] sm:$0xff] %vm4216, %v4063
  %4237 = vst.msk [vmem:[#allocation2 + $0xa0] sm:$0xff] %vm4216, %v4065
  %4238 = vst.msk [vmem:[#allocation2 + $0xa8] sm:$0xff] %vm4216, %v4067
  %4239 = vst.msk [vmem:[#allocation2 + $0xb0] sm:$0xff] %vm4216, %v4069
  %4240 = vst.msk [vmem:[#allocation2 + $0xb8] sm:$0xff] %vm4216, %v4071
  %4241 = vst.msk [vmem:[#allocation2 + $0xc0] sm:$0xff] %vm4216, %v4073
  %4242 = vst.msk [vmem:[#allocation2 + $0xc8] sm:$0xff] %vm4216, %v4075
  %4243 = vst.msk [vmem:[#allocation2 + $0xd0] sm:$0xff] %vm4216, %v4077
  %4244 = vst.msk [vmem:[#allocation2 + $0xd8] sm:$0xff] %vm4216, %v4079
  %4245 = vst.msk [vmem:[#allocation2 + $0xe0] sm:$0xff] %vm4216, %v4081
  %4246 = vst.msk [vmem:[#allocation2 + $0xe8] sm:$0xff] %vm4216, %v4083
  %4247 = vst.msk [vmem:[#allocation2 + $0xf0] sm:$0xff] %vm4216, %v4085
  %4248 = vst.msk [vmem:[#allocation2 + $0xf8] sm:$0xff] %vm4216, %v4087
  %4249 = vst.msk [vmem:[#allocation2 + $0x100] sm:$0xff] %vm4216, %v4089
  %4250 = vst.msk [vmem:[#allocation2 + $0x108] sm:$0xff] %vm4216, %v4091
  %4251 = vst.msk [vmem:[#allocation2 + $0x110] sm:$0xff] %vm4216, %v4093
  %4252 = vst.msk [vmem:[#allocation2 + $0x118] sm:$0xff] %vm4216, %v4095
  %4253 = vst.msk [vmem:[#allocation2 + $0x120] sm:$0xff] %vm4216, %v4097
  %4254 = vst.msk [vmem:[#allocation2 + $0x128] sm:$0xff] %vm4216, %v4099
  %4255 = vst.msk [vmem:[#allocation2 + $0x130] sm:$0xff] %vm4216, %v4101
  %4256 = vst.msk [vmem:[#allocation2 + $0x138] sm:$0xff] %vm4216, %v4103
  %4257 = vst.msk [vmem:[#allocation2 + $0x140] sm:$0xff] %vm4216, %v4105
  %4258 = vst.msk [vmem:[#allocation2 + $0x148] sm:$0xff] %vm4216, %v4107
  %4259 = vst.msk [vmem:[#allocation2 + $0x150] sm:$0xff] %vm4216, %v4109
  %4260 = vst.msk [vmem:[#allocation2 + $0x158] sm:$0xff] %vm4216, %v4111
  %4261 = vst.msk [vmem:[#allocation2 + $0x160] sm:$0xff] %vm4216, %v4113
  %4262 = vst.msk [vmem:[#allocation2 + $0x168] sm:$0xff] %vm4216, %v4115
  %4263 = vst.msk [vmem:[#allocation2 + $0x170] sm:$0xff] %vm4216, %v4117
  %4264 = vst.msk [vmem:[#allocation2 + $0x178] sm:$0xff] %vm4216, %v4119
  %4265 = vst.msk [vmem:[#allocation2 + $0x180] sm:$0xff] %vm4216, %v4121
  %4266 = vst.msk [vmem:[#allocation2 + $0x188] sm:$0xff] %vm4216, %v4123
  %4267 = vst.msk [vmem:[#allocation2 + $0x190] sm:$0xff] %vm4216, %v4125
  %4268 = vst.msk [vmem:[#allocation2 + $0x198] sm:$0xff] %vm4216, %v4127
  %4269 = vst.msk [vmem:[#allocation2 + $0x1a0] sm:$0xff] %vm4216, %v4129
  %4270 = vst.msk [vmem:[#allocation2 + $0x1a8] sm:$0xff] %vm4216, %v4131
  %4271 = vst.msk [vmem:[#allocation2 + $0x1b0] sm:$0xff] %vm4216, %v4133
  %4272 = vst.msk [vmem:[#allocation2 + $0x1b8] sm:$0xff] %vm4216, %v4135
  %4273 = vst.msk [vmem:[#allocation2 + $0x1c0] sm:$0xff] %vm4216, %v4137
  %4274 = vst.msk [vmem:[#allocation2 + $0x1c8] sm:$0xff] %vm4216, %v4139
  %4275 = vst.msk [vmem:[#allocation2 + $0x1d0] sm:$0xff] %vm4216, %v4141
  %4276 = vst.msk [vmem:[#allocation2 + $0x1d8] sm:$0xff] %vm4216, %v4143
  %4277 = vst.msk [vmem:[#allocation2 + $0x1e0] sm:$0xff] %vm4216, %v4145
  %4278 = vst.msk [vmem:[#allocation2 + $0x1e8] sm:$0xff] %vm4216, %v4147
  %4279 = vst.msk [vmem:[#allocation2 + $0x1f0] sm:$0xff] %vm4216, %v4149
  %4280 = vst.msk [vmem:[#allocation2 + $0x1f8] sm:$0xff] %vm4216, %v4151
  %v4281 = vld [vmem:[%s1] sm:$0xff]
  %v4282 = vld [vmem:[%s1 + $0x8] sm:$0xff]
  %v4283 = vld [vmem:[%s1 + $0x10] sm:$0xff]
  %v4284 = vld [vmem:[%s1 + $0x18] sm:$0xff]
  %v4285 = vld [vmem:[%s1 + $0x20] sm:$0xff]
  %v4286 = vld [vmem:[%s1 + $0x28] sm:$0xff]
  %v4287 = vld [vmem:[%s1 + $0x30] sm:$0xff]
  %v4288 = vld [vmem:[%s1 + $0x38] sm:$0xff]
  %v4289 = vld [vmem:[%s1 + $0x40] sm:$0xff]
  %v4290 = vld [vmem:[%s1 + $0x48] sm:$0xff]
  %v4291 = vld [vmem:[%s1 + $0x50] sm:$0xff]
  %v4292 = vld [vmem:[%s1 + $0x58] sm:$0xff]
  %v4293 = vld [vmem:[%s1 + $0x60] sm:$0xff]
  %v4294 = vld [vmem:[%s1 + $0x68] sm:$0xff]
  %v4295 = vld [vmem:[%s1 + $0x70] sm:$0xff]
  %v4296 = vld [vmem:[%s1 + $0x78] sm:$0xff]
  %v4297 = vld [vmem:[%s1 + $0x80] sm:$0xff]
  %v4298 = vld [vmem:[%s1 + $0x88] sm:$0xff]
  %v4299 = vld [vmem:[%s1 + $0x90] sm:$0xff]
  %v4300 = vld [vmem:[%s1 + $0x98] sm:$0xff]
  %v4301 = vld [vmem:[%s1 + $0xa0] sm:$0xff]
  %v4302 = vld [vmem:[%s1 + $0xa8] sm:$0xff]
  %v4303 = vld [vmem:[%s1 + $0xb0] sm:$0xff]
  %v4304 = vld [vmem:[%s1 + $0xb8] sm:$0xff]
  %v4305 = vld [vmem:[%s1 + $0xc0] sm:$0xff]
  %v4306 = vld [vmem:[%s1 + $0xc8] sm:$0xff]
  %v4307 = vld [vmem:[%s1 + $0xd0] sm:$0xff]
  %v4308 = vld [vmem:[%s1 + $0xd8] sm:$0xff]
  %v4309 = vld [vmem:[%s1 + $0xe0] sm:$0xff]
  %v4310 = vld [vmem:[%s1 + $0xe8] sm:$0xff]
  %v4311 = vld [vmem:[%s1 + $0xf0] sm:$0xff]
  %v4312 = vld [vmem:[%s1 + $0xf8] sm:$0xff]
  %v4313 = vld [vmem:[%s1 + $0x100] sm:$0xff]
  %v4314 = vld [vmem:[%s1 + $0x108] sm:$0xff]
  %v4315 = vld [vmem:[%s1 + $0x110] sm:$0xff]
  %v4316 = vld [vmem:[%s1 + $0x118] sm:$0xff]
  %v4317 = vld [vmem:[%s1 + $0x120] sm:$0xff]
  %v4318 = vld [vmem:[%s1 + $0x128] sm:$0xff]
  %v4319 = vld [vmem:[%s1 + $0x130] sm:$0xff]
  %v4320 = vld [vmem:[%s1 + $0x138] sm:$0xff]
  %v4321 = vld [vmem:[%s1 + $0x140] sm:$0xff]
  %v4322 = vld [vmem:[%s1 + $0x148] sm:$0xff]
  %v4323 = vld [vmem:[%s1 + $0x150] sm:$0xff]
  %v4324 = vld [vmem:[%s1 + $0x158] sm:$0xff]
  %v4325 = vld [vmem:[%s1 + $0x160] sm:$0xff]
  %v4326 = vld [vmem:[%s1 + $0x168] sm:$0xff]
  %v4327 = vld [vmem:[%s1 + $0x170] sm:$0xff]
  %v4328 = vld [vmem:[%s1 + $0x178] sm:$0xff]
  %v4329 = vld [vmem:[%s1 + $0x180] sm:$0xff]
  %v4330 = vld [vmem:[%s1 + $0x188] sm:$0xff]
  %v4331 = vld [vmem:[%s1 + $0x190] sm:$0xff]
  %v4332 = vld [vmem:[%s1 + $0x198] sm:$0xff]
  %v4333 = vld [vmem:[%s1 + $0x1a0] sm:$0xff]
  %v4334 = vld [vmem:[%s1 + $0x1a8] sm:$0xff]
  %v4335 = vld [vmem:[%s1 + $0x1b0] sm:$0xff]
  %v4336 = vld [vmem:[%s1 + $0x1b8] sm:$0xff]
  %v4337 = vld [vmem:[%s1 + $0x1c0] sm:$0xff]
  %v4338 = vld [vmem:[%s1 + $0x1c8] sm:$0xff]
  %v4339 = vld [vmem:[%s1 + $0x1d0] sm:$0xff]
  %v4340 = vld [vmem:[%s1 + $0x1d8] sm:$0xff]
  %v4341 = vld [vmem:[%s1 + $0x1e0] sm:$0xff]
  %v4342 = vld [vmem:[%s1 + $0x1e8] sm:$0xff]
  %v4343 = vld [vmem:[%s1 + $0x1f0] sm:$0xff]
  %v4344 = vld [vmem:[%s1 + $0x1f8] sm:$0xff]
  %4346 = vset.pattern.permute.xlu0 6
  %4347 = vperm.xlu0 %4346, %v4281
  %v4348 = vpop.permute.xlu0 %4347
  %4351 = vset.pattern.permute.xlu0 6
  %4352 = vperm.xlu0 %4351, %v4282
  %v4353 = vpop.permute.xlu0 %4352
  %4356 = vset.pattern.permute.xlu0 6
  %4357 = vperm.xlu0 %4356, %v4283
  %v4358 = vpop.permute.xlu0 %4357
  %4361 = vset.pattern.permute.xlu0 6
  %4362 = vperm.xlu0 %4361, %v4284
  %v4363 = vpop.permute.xlu0 %4362
  %4366 = vset.pattern.permute.xlu0 6
  %4367 = vperm.xlu0 %4366, %v4285
  %v4368 = vpop.permute.xlu0 %4367
  %4371 = vset.pattern.permute.xlu0 6
  %4372 = vperm.xlu0 %4371, %v4286
  %v4373 = vpop.permute.xlu0 %4372
  %4376 = vset.pattern.permute.xlu0 6
  %4377 = vperm.xlu0 %4376, %v4287
  %v4378 = vpop.permute.xlu0 %4377
  %4381 = vset.pattern.permute.xlu0 6
  %4382 = vperm.xlu0 %4381, %v4288
  %v4383 = vpop.permute.xlu0 %4382
  %4386 = vset.pattern.permute.xlu0 6
  %4387 = vperm.xlu0 %4386, %v4289
  %v4388 = vpop.permute.xlu0 %4387
  %4391 = vset.pattern.permute.xlu0 6
  %4392 = vperm.xlu0 %4391, %v4290
  %v4393 = vpop.permute.xlu0 %4392
  %4396 = vset.pattern.permute.xlu0 6
  %4397 = vperm.xlu0 %4396, %v4291
  %v4398 = vpop.permute.xlu0 %4397
  %4401 = vset.pattern.permute.xlu0 6
  %4402 = vperm.xlu0 %4401, %v4292
  %v4403 = vpop.permute.xlu0 %4402
  %4406 = vset.pattern.permute.xlu0 6
  %4407 = vperm.xlu0 %4406, %v4293
  %v4408 = vpop.permute.xlu0 %4407
  %4411 = vset.pattern.permute.xlu0 6
  %4412 = vperm.xlu0 %4411, %v4294
  %v4413 = vpop.permute.xlu0 %4412
  %4416 = vset.pattern.permute.xlu0 6
  %4417 = vperm.xlu0 %4416, %v4295
  %v4418 = vpop.permute.xlu0 %4417
  %4421 = vset.pattern.permute.xlu0 6
  %4422 = vperm.xlu0 %4421, %v4296
  %v4423 = vpop.permute.xlu0 %4422
  %4426 = vset.pattern.permute.xlu0 6
  %4427 = vperm.xlu0 %4426, %v4297
  %v4428 = vpop.permute.xlu0 %4427
  %4431 = vset.pattern.permute.xlu0 6
  %4432 = vperm.xlu0 %4431, %v4298
  %v4433 = vpop.permute.xlu0 %4432
  %4436 = vset.pattern.permute.xlu0 6
  %4437 = vperm.xlu0 %4436, %v4299
  %v4438 = vpop.permute.xlu0 %4437
  %4441 = vset.pattern.permute.xlu0 6
  %4442 = vperm.xlu0 %4441, %v4300
  %v4443 = vpop.permute.xlu0 %4442
  %4446 = vset.pattern.permute.xlu0 6
  %4447 = vperm.xlu0 %4446, %v4301
  %v4448 = vpop.permute.xlu0 %4447
  %4451 = vset.pattern.permute.xlu0 6
  %4452 = vperm.xlu0 %4451, %v4302
  %v4453 = vpop.permute.xlu0 %4452
  %4456 = vset.pattern.permute.xlu0 6
  %4457 = vperm.xlu0 %4456, %v4303
  %v4458 = vpop.permute.xlu0 %4457
  %4461 = vset.pattern.permute.xlu0 6
  %4462 = vperm.xlu0 %4461, %v4304
  %v4463 = vpop.permute.xlu0 %4462
  %4466 = vset.pattern.permute.xlu0 6
  %4467 = vperm.xlu0 %4466, %v4305
  %v4468 = vpop.permute.xlu0 %4467
  %4471 = vset.pattern.permute.xlu0 6
  %4472 = vperm.xlu0 %4471, %v4306
  %v4473 = vpop.permute.xlu0 %4472
  %4476 = vset.pattern.permute.xlu0 6
  %4477 = vperm.xlu0 %4476, %v4307
  %v4478 = vpop.permute.xlu0 %4477
  %4481 = vset.pattern.permute.xlu0 6
  %4482 = vperm.xlu0 %4481, %v4308
  %v4483 = vpop.permute.xlu0 %4482
  %4486 = vset.pattern.permute.xlu0 6
  %4487 = vperm.xlu0 %4486, %v4309
  %v4488 = vpop.permute.xlu0 %4487
  %4491 = vset.pattern.permute.xlu0 6
  %4492 = vperm.xlu0 %4491, %v4310
  %v4493 = vpop.permute.xlu0 %4492
  %4496 = vset.pattern.permute.xlu0 6
  %4497 = vperm.xlu0 %4496, %v4311
  %v4498 = vpop.permute.xlu0 %4497
  %4501 = vset.pattern.permute.xlu0 6
  %4502 = vperm.xlu0 %4501, %v4312
  %v4503 = vpop.permute.xlu0 %4502
  %4506 = vset.pattern.permute.xlu0 6
  %4507 = vperm.xlu0 %4506, %v4313
  %v4508 = vpop.permute.xlu0 %4507
  %4511 = vset.pattern.permute.xlu0 6
  %4512 = vperm.xlu0 %4511, %v4314
  %v4513 = vpop.permute.xlu0 %4512
  %4516 = vset.pattern.permute.xlu0 6
  %4517 = vperm.xlu0 %4516, %v4315
  %v4518 = vpop.permute.xlu0 %4517
  %4521 = vset.pattern.permute.xlu0 6
  %4522 = vperm.xlu0 %4521, %v4316
  %v4523 = vpop.permute.xlu0 %4522
  %4526 = vset.pattern.permute.xlu0 6
  %4527 = vperm.xlu0 %4526, %v4317
  %v4528 = vpop.permute.xlu0 %4527
  %4531 = vset.pattern.permute.xlu0 6
  %4532 = vperm.xlu0 %4531, %v4318
  %v4533 = vpop.permute.xlu0 %4532
  %4536 = vset.pattern.permute.xlu0 6
  %4537 = vperm.xlu0 %4536, %v4319
  %v4538 = vpop.permute.xlu0 %4537
  %4541 = vset.pattern.permute.xlu0 6
  %4542 = vperm.xlu0 %4541, %v4320
  %v4543 = vpop.permute.xlu0 %4542
  %4546 = vset.pattern.permute.xlu0 6
  %4547 = vperm.xlu0 %4546, %v4321
  %v4548 = vpop.permute.xlu0 %4547
  %4551 = vset.pattern.permute.xlu0 6
  %4552 = vperm.xlu0 %4551, %v4322
  %v4553 = vpop.permute.xlu0 %4552
  %4556 = vset.pattern.permute.xlu0 6
  %4557 = vperm.xlu0 %4556, %v4323
  %v4558 = vpop.permute.xlu0 %4557
  %4561 = vset.pattern.permute.xlu0 6
  %4562 = vperm.xlu0 %4561, %v4324
  %v4563 = vpop.permute.xlu0 %4562
  %4566 = vset.pattern.permute.xlu0 6
  %4567 = vperm.xlu0 %4566, %v4325
  %v4568 = vpop.permute.xlu0 %4567
  %4571 = vset.pattern.permute.xlu0 6
  %4572 = vperm.xlu0 %4571, %v4326
  %v4573 = vpop.permute.xlu0 %4572
  %4576 = vset.pattern.permute.xlu0 6
  %4577 = vperm.xlu0 %4576, %v4327
  %v4578 = vpop.permute.xlu0 %4577
  %4581 = vset.pattern.permute.xlu0 6
  %4582 = vperm.xlu0 %4581, %v4328
  %v4583 = vpop.permute.xlu0 %4582
  %4586 = vset.pattern.permute.xlu0 6
  %4587 = vperm.xlu0 %4586, %v4329
  %v4588 = vpop.permute.xlu0 %4587
  %4591 = vset.pattern.permute.xlu0 6
  %4592 = vperm.xlu0 %4591, %v4330
  %v4593 = vpop.permute.xlu0 %4592
  %4596 = vset.pattern.permute.xlu0 6
  %4597 = vperm.xlu0 %4596, %v4331
  %v4598 = vpop.permute.xlu0 %4597
  %4601 = vset.pattern.permute.xlu0 6
  %4602 = vperm.xlu0 %4601, %v4332
  %v4603 = vpop.permute.xlu0 %4602
  %4606 = vset.pattern.permute.xlu0 6
  %4607 = vperm.xlu0 %4606, %v4333
  %v4608 = vpop.permute.xlu0 %4607
  %4611 = vset.pattern.permute.xlu0 6
  %4612 = vperm.xlu0 %4611, %v4334
  %v4613 = vpop.permute.xlu0 %4612
  %4616 = vset.pattern.permute.xlu0 6
  %4617 = vperm.xlu0 %4616, %v4335
  %v4618 = vpop.permute.xlu0 %4617
  %4621 = vset.pattern.permute.xlu0 6
  %4622 = vperm.xlu0 %4621, %v4336
  %v4623 = vpop.permute.xlu0 %4622
  %4626 = vset.pattern.permute.xlu0 6
  %4627 = vperm.xlu0 %4626, %v4337
  %v4628 = vpop.permute.xlu0 %4627
  %4631 = vset.pattern.permute.xlu0 6
  %4632 = vperm.xlu0 %4631, %v4338
  %v4633 = vpop.permute.xlu0 %4632
  %4636 = vset.pattern.permute.xlu0 6
  %4637 = vperm.xlu0 %4636, %v4339
  %v4638 = vpop.permute.xlu0 %4637
  %4641 = vset.pattern.permute.xlu0 6
  %4642 = vperm.xlu0 %4641, %v4340
  %v4643 = vpop.permute.xlu0 %4642
  %4646 = vset.pattern.permute.xlu0 6
  %4647 = vperm.xlu0 %4646, %v4341
  %v4648 = vpop.permute.xlu0 %4647
  %4651 = vset.pattern.permute.xlu0 6
  %4652 = vperm.xlu0 %4651, %v4342
  %v4653 = vpop.permute.xlu0 %4652
  %4656 = vset.pattern.permute.xlu0 6
  %4657 = vperm.xlu0 %4656, %v4343
  %v4658 = vpop.permute.xlu0 %4657
  %4661 = vset.pattern.permute.xlu0 6
  %4662 = vperm.xlu0 %4661, %v4344
  %v4663 = vpop.permute.xlu0 %4662
  %v4665 = vmul.f32 %v239, %v4348
  %v4666 = vmul.f32 %v238, %v4353
  %v4667 = vmul.f32 %v237, %v4358
  %v4668 = vmul.f32 %v236, %v4363
  %v4669 = vmul.f32 %v235, %v4368
  %v4670 = vmul.f32 %v234, %v4373
  %v4671 = vmul.f32 %v233, %v4378
  %v4672 = vmul.f32 %v232, %v4383
  %v4673 = vmul.f32 %v231, %v4388
  %v4674 = vmul.f32 %v230, %v4393
  %v4675 = vmul.f32 %v229, %v4398
  %v4676 = vmul.f32 %v228, %v4403
  %v4677 = vmul.f32 %v227, %v4408
  %v4678 = vmul.f32 %v226, %v4413
  %v4679 = vmul.f32 %v225, %v4418
  %v4680 = vmul.f32 %v224, %v4423
  %v4681 = vmul.f32 %v223, %v4428
  %v4682 = vmul.f32 %v222, %v4433
  %v4683 = vmul.f32 %v221, %v4438
  %v4684 = vmul.f32 %v220, %v4443
  %v4685 = vmul.f32 %v219, %v4448
  %v4686 = vmul.f32 %v218, %v4453
  %v4687 = vmul.f32 %v217, %v4458
  %v4688 = vmul.f32 %v216, %v4463
  %v4689 = vmul.f32 %v215, %v4468
  %v4690 = vmul.f32 %v214, %v4473
  %v4691 = vmul.f32 %v213, %v4478
  %v4692 = vmul.f32 %v212, %v4483
  %v4693 = vmul.f32 %v211, %v4488
  %v4694 = vmul.f32 %v210, %v4493
  %v4695 = vmul.f32 %v209, %v4498
  %v4696 = vmul.f32 %v208, %v4503
  %v4697 = vmul.f32 %v207, %v4508
  %v4698 = vmul.f32 %v206, %v4513
  %v4699 = vmul.f32 %v205, %v4518
  %v4700 = vmul.f32 %v204, %v4523
  %v4701 = vmul.f32 %v203, %v4528
  %v4702 = vmul.f32 %v202, %v4533
  %v4703 = vmul.f32 %v201, %v4538
  %v4704 = vmul.f32 %v200, %v4543
  %v4705 = vmul.f32 %v199, %v4548
  %v4706 = vmul.f32 %v198, %v4553
  %v4707 = vmul.f32 %v197, %v4558
  %v4708 = vmul.f32 %v196, %v4563
  %v4709 = vmul.f32 %v195, %v4568
  %v4710 = vmul.f32 %v194, %v4573
  %v4711 = vmul.f32 %v193, %v4578
  %v4712 = vmul.f32 %v192, %v4583
  %v4713 = vmul.f32 %v191, %v4588
  %v4714 = vmul.f32 %v190, %v4593
  %v4715 = vmul.f32 %v189, %v4598
  %v4716 = vmul.f32 %v188, %v4603
  %v4717 = vmul.f32 %v187, %v4608
  %v4718 = vmul.f32 %v186, %v4613
  %v4719 = vmul.f32 %v185, %v4618
  %v4720 = vmul.f32 %v184, %v4623
  %v4721 = vmul.f32 %v183, %v4628
  %v4722 = vmul.f32 %v182, %v4633
  %v4723 = vmul.f32 %v181, %v4638
  %v4724 = vmul.f32 %v180, %v4643
  %v4725 = vmul.f32 %v179, %v4648
  %v4726 = vmul.f32 %v178, %v4653
  %v4727 = vmul.f32 %v241, %v4658
  %v4728 = vmul.f32 %v240, %v4663
  %4793 = vrot.lane.b32.xlu0 %v4665, 24
  %v4794 = vpop.permute.xlu0 %4793
  %4795 = vrot.lane.b32.xlu0 %v4666, 24
  %v4796 = vpop.permute.xlu0 %4795
  %4797 = vrot.lane.b32.xlu0 %v4667, 24
  %v4798 = vpop.permute.xlu0 %4797
  %4799 = vrot.lane.b32.xlu0 %v4668, 24
  %v4800 = vpop.permute.xlu0 %4799
  %4801 = vrot.lane.b32.xlu0 %v4669, 24
  %v4802 = vpop.permute.xlu0 %4801
  %4803 = vrot.lane.b32.xlu0 %v4670, 24
  %v4804 = vpop.permute.xlu0 %4803
  %4805 = vrot.lane.b32.xlu0 %v4671, 24
  %v4806 = vpop.permute.xlu0 %4805
  %4807 = vrot.lane.b32.xlu0 %v4672, 24
  %v4808 = vpop.permute.xlu0 %4807
  %4809 = vrot.lane.b32.xlu0 %v4673, 24
  %v4810 = vpop.permute.xlu0 %4809
  %4811 = vrot.lane.b32.xlu0 %v4674, 24
  %v4812 = vpop.permute.xlu0 %4811
  %4813 = vrot.lane.b32.xlu0 %v4675, 24
  %v4814 = vpop.permute.xlu0 %4813
  %4815 = vrot.lane.b32.xlu0 %v4676, 24
  %v4816 = vpop.permute.xlu0 %4815
  %4817 = vrot.lane.b32.xlu0 %v4677, 24
  %v4818 = vpop.permute.xlu0 %4817
  %4819 = vrot.lane.b32.xlu0 %v4678, 24
  %v4820 = vpop.permute.xlu0 %4819
  %4821 = vrot.lane.b32.xlu0 %v4679, 24
  %v4822 = vpop.permute.xlu0 %4821
  %4823 = vrot.lane.b32.xlu0 %v4680, 24
  %v4824 = vpop.permute.xlu0 %4823
  %4825 = vrot.lane.b32.xlu0 %v4681, 24
  %v4826 = vpop.permute.xlu0 %4825
  %4827 = vrot.lane.b32.xlu0 %v4682, 24
  %v4828 = vpop.permute.xlu0 %4827
  %4829 = vrot.lane.b32.xlu0 %v4683, 24
  %v4830 = vpop.permute.xlu0 %4829
  %4831 = vrot.lane.b32.xlu0 %v4684, 24
  %v4832 = vpop.permute.xlu0 %4831
  %4833 = vrot.lane.b32.xlu0 %v4685, 24
  %v4834 = vpop.permute.xlu0 %4833
  %4835 = vrot.lane.b32.xlu0 %v4686, 24
  %v4836 = vpop.permute.xlu0 %4835
  %4837 = vrot.lane.b32.xlu0 %v4687, 24
  %v4838 = vpop.permute.xlu0 %4837
  %4839 = vrot.lane.b32.xlu0 %v4688, 24
  %v4840 = vpop.permute.xlu0 %4839
  %4841 = vrot.lane.b32.xlu0 %v4689, 24
  %v4842 = vpop.permute.xlu0 %4841
  %4843 = vrot.lane.b32.xlu0 %v4690, 24
  %v4844 = vpop.permute.xlu0 %4843
  %4845 = vrot.lane.b32.xlu0 %v4691, 24
  %v4846 = vpop.permute.xlu0 %4845
  %4847 = vrot.lane.b32.xlu0 %v4692, 24
  %v4848 = vpop.permute.xlu0 %4847
  %4849 = vrot.lane.b32.xlu0 %v4693, 24
  %v4850 = vpop.permute.xlu0 %4849
  %4851 = vrot.lane.b32.xlu0 %v4694, 24
  %v4852 = vpop.permute.xlu0 %4851
  %4853 = vrot.lane.b32.xlu0 %v4695, 24
  %v4854 = vpop.permute.xlu0 %4853
  %4855 = vrot.lane.b32.xlu0 %v4696, 24
  %v4856 = vpop.permute.xlu0 %4855
  %4857 = vrot.lane.b32.xlu0 %v4697, 24
  %v4858 = vpop.permute.xlu0 %4857
  %4859 = vrot.lane.b32.xlu0 %v4698, 24
  %v4860 = vpop.permute.xlu0 %4859
  %4861 = vrot.lane.b32.xlu0 %v4699, 24
  %v4862 = vpop.permute.xlu0 %4861
  %4863 = vrot.lane.b32.xlu0 %v4700, 24
  %v4864 = vpop.permute.xlu0 %4863
  %4865 = vrot.lane.b32.xlu0 %v4701, 24
  %v4866 = vpop.permute.xlu0 %4865
  %4867 = vrot.lane.b32.xlu0 %v4702, 24
  %v4868 = vpop.permute.xlu0 %4867
  %4869 = vrot.lane.b32.xlu0 %v4703, 24
  %v4870 = vpop.permute.xlu0 %4869
  %4871 = vrot.lane.b32.xlu0 %v4704, 24
  %v4872 = vpop.permute.xlu0 %4871
  %4873 = vrot.lane.b32.xlu0 %v4705, 24
  %v4874 = vpop.permute.xlu0 %4873
  %4875 = vrot.lane.b32.xlu0 %v4706, 24
  %v4876 = vpop.permute.xlu0 %4875
  %4877 = vrot.lane.b32.xlu0 %v4707, 24
  %v4878 = vpop.permute.xlu0 %4877
  %4879 = vrot.lane.b32.xlu0 %v4708, 24
  %v4880 = vpop.permute.xlu0 %4879
  %4881 = vrot.lane.b32.xlu0 %v4709, 24
  %v4882 = vpop.permute.xlu0 %4881
  %4883 = vrot.lane.b32.xlu0 %v4710, 24
  %v4884 = vpop.permute.xlu0 %4883
  %4885 = vrot.lane.b32.xlu0 %v4711, 24
  %v4886 = vpop.permute.xlu0 %4885
  %4887 = vrot.lane.b32.xlu0 %v4712, 24
  %v4888 = vpop.permute.xlu0 %4887
  %4889 = vrot.lane.b32.xlu0 %v4713, 24
  %v4890 = vpop.permute.xlu0 %4889
  %4891 = vrot.lane.b32.xlu0 %v4714, 24
  %v4892 = vpop.permute.xlu0 %4891
  %4893 = vrot.lane.b32.xlu0 %v4715, 24
  %v4894 = vpop.permute.xlu0 %4893
  %4895 = vrot.lane.b32.xlu0 %v4716, 24
  %v4896 = vpop.permute.xlu0 %4895
  %4897 = vrot.lane.b32.xlu0 %v4717, 24
  %v4898 = vpop.permute.xlu0 %4897
  %4899 = vrot.lane.b32.xlu0 %v4718, 24
  %v4900 = vpop.permute.xlu0 %4899
  %4901 = vrot.lane.b32.xlu0 %v4719, 24
  %v4902 = vpop.permute.xlu0 %4901
  %4903 = vrot.lane.b32.xlu0 %v4720, 24
  %v4904 = vpop.permute.xlu0 %4903
  %4905 = vrot.lane.b32.xlu0 %v4721, 24
  %v4906 = vpop.permute.xlu0 %4905
  %4907 = vrot.lane.b32.xlu0 %v4722, 24
  %v4908 = vpop.permute.xlu0 %4907
  %4909 = vrot.lane.b32.xlu0 %v4723, 24
  %v4910 = vpop.permute.xlu0 %4909
  %4911 = vrot.lane.b32.xlu0 %v4724, 24
  %v4912 = vpop.permute.xlu0 %4911
  %4913 = vrot.lane.b32.xlu0 %v4725, 24
  %v4914 = vpop.permute.xlu0 %4913
  %4915 = vrot.lane.b32.xlu0 %v4726, 24
  %v4916 = vpop.permute.xlu0 %4915
  %4917 = vrot.lane.b32.xlu0 %v4727, 24
  %v4918 = vpop.permute.xlu0 %4917
  %4919 = vrot.lane.b32.xlu0 %v4728, 24
  %v4920 = vpop.permute.xlu0 %4919
  %vm4985 = vcmask 228544
  %4986 = vst.msk [vmem:[#allocation2] sm:$0xff] %vm4985, %v4794
  %4987 = vst.msk [vmem:[#allocation2 + $0x8] sm:$0xff] %vm4985, %v4796
  %4988 = vst.msk [vmem:[#allocation2 + $0x10] sm:$0xff] %vm4985, %v4798
  %4989 = vst.msk [vmem:[#allocation2 + $0x18] sm:$0xff] %vm4985, %v4800
  %4990 = vst.msk [vmem:[#allocation2 + $0x20] sm:$0xff] %vm4985, %v4802
  %4991 = vst.msk [vmem:[#allocation2 + $0x28] sm:$0xff] %vm4985, %v4804
  %4992 = vst.msk [vmem:[#allocation2 + $0x30] sm:$0xff] %vm4985, %v4806
  %4993 = vst.msk [vmem:[#allocation2 + $0x38] sm:$0xff] %vm4985, %v4808
  %4994 = vst.msk [vmem:[#allocation2 + $0x40] sm:$0xff] %vm4985, %v4810
  %4995 = vst.msk [vmem:[#allocation2 + $0x48] sm:$0xff] %vm4985, %v4812
  %4996 = vst.msk [vmem:[#allocation2 + $0x50] sm:$0xff] %vm4985, %v4814
  %4997 = vst.msk [vmem:[#allocation2 + $0x58] sm:$0xff] %vm4985, %v4816
  %4998 = vst.msk [vmem:[#allocation2 + $0x60] sm:$0xff] %vm4985, %v4818
  %4999 = vst.msk [vmem:[#allocation2 + $0x68] sm:$0xff] %vm4985, %v4820
  %5000 = vst.msk [vmem:[#allocation2 + $0x70] sm:$0xff] %vm4985, %v4822
  %5001 = vst.msk [vmem:[#allocation2 + $0x78] sm:$0xff] %vm4985, %v4824
  %5002 = vst.msk [vmem:[#allocation2 + $0x80] sm:$0xff] %vm4985, %v4826
  %5003 = vst.msk [vmem:[#allocation2 + $0x88] sm:$0xff] %vm4985, %v4828
  %5004 = vst.msk [vmem:[#allocation2 + $0x90] sm:$0xff] %vm4985, %v4830
  %5005 = vst.msk [vmem:[#allocation2 + $0x98] sm:$0xff] %vm4985, %v4832
  %5006 = vst.msk [vmem:[#allocation2 + $0xa0] sm:$0xff] %vm4985, %v4834
  %5007 = vst.msk [vmem:[#allocation2 + $0xa8] sm:$0xff] %vm4985, %v4836
  %5008 = vst.msk [vmem:[#allocation2 + $0xb0] sm:$0xff] %vm4985, %v4838
  %5009 = vst.msk [vmem:[#allocation2 + $0xb8] sm:$0xff] %vm4985, %v4840
  %5010 = vst.msk [vmem:[#allocation2 + $0xc0] sm:$0xff] %vm4985, %v4842
  %5011 = vst.msk [vmem:[#allocation2 + $0xc8] sm:$0xff] %vm4985, %v4844
  %5012 = vst.msk [vmem:[#allocation2 + $0xd0] sm:$0xff] %vm4985, %v4846
  %5013 = vst.msk [vmem:[#allocation2 + $0xd8] sm:$0xff] %vm4985, %v4848
  %5014 = vst.msk [vmem:[#allocation2 + $0xe0] sm:$0xff] %vm4985, %v4850
  %5015 = vst.msk [vmem:[#allocation2 + $0xe8] sm:$0xff] %vm4985, %v4852
  %5016 = vst.msk [vmem:[#allocation2 + $0xf0] sm:$0xff] %vm4985, %v4854
  %5017 = vst.msk [vmem:[#allocation2 + $0xf8] sm:$0xff] %vm4985, %v4856
  %5018 = vst.msk [vmem:[#allocation2 + $0x100] sm:$0xff] %vm4985, %v4858
  %5019 = vst.msk [vmem:[#allocation2 + $0x108] sm:$0xff] %vm4985, %v4860
  %5020 = vst.msk [vmem:[#allocation2 + $0x110] sm:$0xff] %vm4985, %v4862
  %5021 = vst.msk [vmem:[#allocation2 + $0x118] sm:$0xff] %vm4985, %v4864
  %5022 = vst.msk [vmem:[#allocation2 + $0x120] sm:$0xff] %vm4985, %v4866
  %5023 = vst.msk [vmem:[#allocation2 + $0x128] sm:$0xff] %vm4985, %v4868
  %5024 = vst.msk [vmem:[#allocation2 + $0x130] sm:$0xff] %vm4985, %v4870
  %5025 = vst.msk [vmem:[#allocation2 + $0x138] sm:$0xff] %vm4985, %v4872
  %5026 = vst.msk [vmem:[#allocation2 + $0x140] sm:$0xff] %vm4985, %v4874
  %5027 = vst.msk [vmem:[#allocation2 + $0x148] sm:$0xff] %vm4985, %v4876
  %5028 = vst.msk [vmem:[#allocation2 + $0x150] sm:$0xff] %vm4985, %v4878
  %5029 = vst.msk [vmem:[#allocation2 + $0x158] sm:$0xff] %vm4985, %v4880
  %5030 = vst.msk [vmem:[#allocation2 + $0x160] sm:$0xff] %vm4985, %v4882
  %5031 = vst.msk [vmem:[#allocation2 + $0x168] sm:$0xff] %vm4985, %v4884
  %5032 = vst.msk [vmem:[#allocation2 + $0x170] sm:$0xff] %vm4985, %v4886
  %5033 = vst.msk [vmem:[#allocation2 + $0x178] sm:$0xff] %vm4985, %v4888
  %5034 = vst.msk [vmem:[#allocation2 + $0x180] sm:$0xff] %vm4985, %v4890
  %5035 = vst.msk [vmem:[#allocation2 + $0x188] sm:$0xff] %vm4985, %v4892
  %5036 = vst.msk [vmem:[#allocation2 + $0x190] sm:$0xff] %vm4985, %v4894
  %5037 = vst.msk [vmem:[#allocation2 + $0x198] sm:$0xff] %vm4985, %v4896
  %5038 = vst.msk [vmem:[#allocation2 + $0x1a0] sm:$0xff] %vm4985, %v4898
  %5039 = vst.msk [vmem:[#allocation2 + $0x1a8] sm:$0xff] %vm4985, %v4900
  %5040 = vst.msk [vmem:[#allocation2 + $0x1b0] sm:$0xff] %vm4985, %v4902
  %5041 = vst.msk [vmem:[#allocation2 + $0x1b8] sm:$0xff] %vm4985, %v4904
  %5042 = vst.msk [vmem:[#allocation2 + $0x1c0] sm:$0xff] %vm4985, %v4906
  %5043 = vst.msk [vmem:[#allocation2 + $0x1c8] sm:$0xff] %vm4985, %v4908
  %5044 = vst.msk [vmem:[#allocation2 + $0x1d0] sm:$0xff] %vm4985, %v4910
  %5045 = vst.msk [vmem:[#allocation2 + $0x1d8] sm:$0xff] %vm4985, %v4912
  %5046 = vst.msk [vmem:[#allocation2 + $0x1e0] sm:$0xff] %vm4985, %v4914
  %5047 = vst.msk [vmem:[#allocation2 + $0x1e8] sm:$0xff] %vm4985, %v4916
  %5048 = vst.msk [vmem:[#allocation2 + $0x1f0] sm:$0xff] %vm4985, %v4918
  %5049 = vst.msk [vmem:[#allocation2 + $0x1f8] sm:$0xff] %vm4985, %v4920
  %v5050 = vld [vmem:[%s1] sm:$0xff]
  %v5051 = vld [vmem:[%s1 + $0x8] sm:$0xff]
  %v5052 = vld [vmem:[%s1 + $0x10] sm:$0xff]
  %v5053 = vld [vmem:[%s1 + $0x18] sm:$0xff]
  %v5054 = vld [vmem:[%s1 + $0x20] sm:$0xff]
  %v5055 = vld [vmem:[%s1 + $0x28] sm:$0xff]
  %v5056 = vld [vmem:[%s1 + $0x30] sm:$0xff]
  %v5057 = vld [vmem:[%s1 + $0x38] sm:$0xff]
  %v5058 = vld [vmem:[%s1 + $0x40] sm:$0xff]
  %v5059 = vld [vmem:[%s1 + $0x48] sm:$0xff]
  %v5060 = vld [vmem:[%s1 + $0x50] sm:$0xff]
  %v5061 = vld [vmem:[%s1 + $0x58] sm:$0xff]
  %v5062 = vld [vmem:[%s1 + $0x60] sm:$0xff]
  %v5063 = vld [vmem:[%s1 + $0x68] sm:$0xff]
  %v5064 = vld [vmem:[%s1 + $0x70] sm:$0xff]
  %v5065 = vld [vmem:[%s1 + $0x78] sm:$0xff]
  %v5066 = vld [vmem:[%s1 + $0x80] sm:$0xff]
  %v5067 = vld [vmem:[%s1 + $0x88] sm:$0xff]
  %v5068 = vld [vmem:[%s1 + $0x90] sm:$0xff]
  %v5069 = vld [vmem:[%s1 + $0x98] sm:$0xff]
  %v5070 = vld [vmem:[%s1 + $0xa0] sm:$0xff]
  %v5071 = vld [vmem:[%s1 + $0xa8] sm:$0xff]
  %v5072 = vld [vmem:[%s1 + $0xb0] sm:$0xff]
  %v5073 = vld [vmem:[%s1 + $0xb8] sm:$0xff]
  %v5074 = vld [vmem:[%s1 + $0xc0] sm:$0xff]
  %v5075 = vld [vmem:[%s1 + $0xc8] sm:$0xff]
  %v5076 = vld [vmem:[%s1 + $0xd0] sm:$0xff]
  %v5077 = vld [vmem:[%s1 + $0xd8] sm:$0xff]
  %v5078 = vld [vmem:[%s1 + $0xe0] sm:$0xff]
  %v5079 = vld [vmem:[%s1 + $0xe8] sm:$0xff]
  %v5080 = vld [vmem:[%s1 + $0xf0] sm:$0xff]
  %v5081 = vld [vmem:[%s1 + $0xf8] sm:$0xff]
  %v5082 = vld [vmem:[%s1 + $0x100] sm:$0xff]
  %v5083 = vld [vmem:[%s1 + $0x108] sm:$0xff]
  %v5084 = vld [vmem:[%s1 + $0x110] sm:$0xff]
  %v5085 = vld [vmem:[%s1 + $0x118] sm:$0xff]
  %v5086 = vld [vmem:[%s1 + $0x120] sm:$0xff]
  %v5087 = vld [vmem:[%s1 + $0x128] sm:$0xff]
  %v5088 = vld [vmem:[%s1 + $0x130] sm:$0xff]
  %v5089 = vld [vmem:[%s1 + $0x138] sm:$0xff]
  %v5090 = vld [vmem:[%s1 + $0x140] sm:$0xff]
  %v5091 = vld [vmem:[%s1 + $0x148] sm:$0xff]
  %v5092 = vld [vmem:[%s1 + $0x150] sm:$0xff]
  %v5093 = vld [vmem:[%s1 + $0x158] sm:$0xff]
  %v5094 = vld [vmem:[%s1 + $0x160] sm:$0xff]
  %v5095 = vld [vmem:[%s1 + $0x168] sm:$0xff]
  %v5096 = vld [vmem:[%s1 + $0x170] sm:$0xff]
  %v5097 = vld [vmem:[%s1 + $0x178] sm:$0xff]
  %v5098 = vld [vmem:[%s1 + $0x180] sm:$0xff]
  %v5099 = vld [vmem:[%s1 + $0x188] sm:$0xff]
  %v5100 = vld [vmem:[%s1 + $0x190] sm:$0xff]
  %v5101 = vld [vmem:[%s1 + $0x198] sm:$0xff]
  %v5102 = vld [vmem:[%s1 + $0x1a0] sm:$0xff]
  %v5103 = vld [vmem:[%s1 + $0x1a8] sm:$0xff]
  %v5104 = vld [vmem:[%s1 + $0x1b0] sm:$0xff]
  %v5105 = vld [vmem:[%s1 + $0x1b8] sm:$0xff]
  %v5106 = vld [vmem:[%s1 + $0x1c0] sm:$0xff]
  %v5107 = vld [vmem:[%s1 + $0x1c8] sm:$0xff]
  %v5108 = vld [vmem:[%s1 + $0x1d0] sm:$0xff]
  %v5109 = vld [vmem:[%s1 + $0x1d8] sm:$0xff]
  %v5110 = vld [vmem:[%s1 + $0x1e0] sm:$0xff]
  %v5111 = vld [vmem:[%s1 + $0x1e8] sm:$0xff]
  %v5112 = vld [vmem:[%s1 + $0x1f0] sm:$0xff]
  %v5113 = vld [vmem:[%s1 + $0x1f8] sm:$0xff]
  %5115 = vset.pattern.permute.xlu0 7
  %5116 = vperm.xlu0 %5115, %v5050
  %v5117 = vpop.permute.xlu0 %5116
  %5120 = vset.pattern.permute.xlu0 7
  %5121 = vperm.xlu0 %5120, %v5051
  %v5122 = vpop.permute.xlu0 %5121
  %5125 = vset.pattern.permute.xlu0 7
  %5126 = vperm.xlu0 %5125, %v5052
  %v5127 = vpop.permute.xlu0 %5126
  %5130 = vset.pattern.permute.xlu0 7
  %5131 = vperm.xlu0 %5130, %v5053
  %v5132 = vpop.permute.xlu0 %5131
  %5135 = vset.pattern.permute.xlu0 7
  %5136 = vperm.xlu0 %5135, %v5054
  %v5137 = vpop.permute.xlu0 %5136
  %5140 = vset.pattern.permute.xlu0 7
  %5141 = vperm.xlu0 %5140, %v5055
  %v5142 = vpop.permute.xlu0 %5141
  %5145 = vset.pattern.permute.xlu0 7
  %5146 = vperm.xlu0 %5145, %v5056
  %v5147 = vpop.permute.xlu0 %5146
  %5150 = vset.pattern.permute.xlu0 7
  %5151 = vperm.xlu0 %5150, %v5057
  %v5152 = vpop.permute.xlu0 %5151
  %5155 = vset.pattern.permute.xlu0 7
  %5156 = vperm.xlu0 %5155, %v5058
  %v5157 = vpop.permute.xlu0 %5156
  %5160 = vset.pattern.permute.xlu0 7
  %5161 = vperm.xlu0 %5160, %v5059
  %v5162 = vpop.permute.xlu0 %5161
  %5165 = vset.pattern.permute.xlu0 7
  %5166 = vperm.xlu0 %5165, %v5060
  %v5167 = vpop.permute.xlu0 %5166
  %5170 = vset.pattern.permute.xlu0 7
  %5171 = vperm.xlu0 %5170, %v5061
  %v5172 = vpop.permute.xlu0 %5171
  %5175 = vset.pattern.permute.xlu0 7
  %5176 = vperm.xlu0 %5175, %v5062
  %v5177 = vpop.permute.xlu0 %5176
  %5180 = vset.pattern.permute.xlu0 7
  %5181 = vperm.xlu0 %5180, %v5063
  %v5182 = vpop.permute.xlu0 %5181
  %5185 = vset.pattern.permute.xlu0 7
  %5186 = vperm.xlu0 %5185, %v5064
  %v5187 = vpop.permute.xlu0 %5186
  %5190 = vset.pattern.permute.xlu0 7
  %5191 = vperm.xlu0 %5190, %v5065
  %v5192 = vpop.permute.xlu0 %5191
  %5195 = vset.pattern.permute.xlu0 7
  %5196 = vperm.xlu0 %5195, %v5066
  %v5197 = vpop.permute.xlu0 %5196
  %5200 = vset.pattern.permute.xlu0 7
  %5201 = vperm.xlu0 %5200, %v5067
  %v5202 = vpop.permute.xlu0 %5201
  %5205 = vset.pattern.permute.xlu0 7
  %5206 = vperm.xlu0 %5205, %v5068
  %v5207 = vpop.permute.xlu0 %5206
  %5210 = vset.pattern.permute.xlu0 7
  %5211 = vperm.xlu0 %5210, %v5069
  %v5212 = vpop.permute.xlu0 %5211
  %5215 = vset.pattern.permute.xlu0 7
  %5216 = vperm.xlu0 %5215, %v5070
  %v5217 = vpop.permute.xlu0 %5216
  %5220 = vset.pattern.permute.xlu0 7
  %5221 = vperm.xlu0 %5220, %v5071
  %v5222 = vpop.permute.xlu0 %5221
  %5225 = vset.pattern.permute.xlu0 7
  %5226 = vperm.xlu0 %5225, %v5072
  %v5227 = vpop.permute.xlu0 %5226
  %5230 = vset.pattern.permute.xlu0 7
  %5231 = vperm.xlu0 %5230, %v5073
  %v5232 = vpop.permute.xlu0 %5231
  %5235 = vset.pattern.permute.xlu0 7
  %5236 = vperm.xlu0 %5235, %v5074
  %v5237 = vpop.permute.xlu0 %5236
  %5240 = vset.pattern.permute.xlu0 7
  %5241 = vperm.xlu0 %5240, %v5075
  %v5242 = vpop.permute.xlu0 %5241
  %5245 = vset.pattern.permute.xlu0 7
  %5246 = vperm.xlu0 %5245, %v5076
  %v5247 = vpop.permute.xlu0 %5246
  %5250 = vset.pattern.permute.xlu0 7
  %5251 = vperm.xlu0 %5250, %v5077
  %v5252 = vpop.permute.xlu0 %5251
  %5255 = vset.pattern.permute.xlu0 7
  %5256 = vperm.xlu0 %5255, %v5078
  %v5257 = vpop.permute.xlu0 %5256
  %5260 = vset.pattern.permute.xlu0 7
  %5261 = vperm.xlu0 %5260, %v5079
  %v5262 = vpop.permute.xlu0 %5261
  %5265 = vset.pattern.permute.xlu0 7
  %5266 = vperm.xlu0 %5265, %v5080
  %v5267 = vpop.permute.xlu0 %5266
  %5270 = vset.pattern.permute.xlu0 7
  %5271 = vperm.xlu0 %5270, %v5081
  %v5272 = vpop.permute.xlu0 %5271
  %5275 = vset.pattern.permute.xlu0 7
  %5276 = vperm.xlu0 %5275, %v5082
  %v5277 = vpop.permute.xlu0 %5276
  %5280 = vset.pattern.permute.xlu0 7
  %5281 = vperm.xlu0 %5280, %v5083
  %v5282 = vpop.permute.xlu0 %5281
  %5285 = vset.pattern.permute.xlu0 7
  %5286 = vperm.xlu0 %5285, %v5084
  %v5287 = vpop.permute.xlu0 %5286
  %5290 = vset.pattern.permute.xlu0 7
  %5291 = vperm.xlu0 %5290, %v5085
  %v5292 = vpop.permute.xlu0 %5291
  %5295 = vset.pattern.permute.xlu0 7
  %5296 = vperm.xlu0 %5295, %v5086
  %v5297 = vpop.permute.xlu0 %5296
  %5300 = vset.pattern.permute.xlu0 7
  %5301 = vperm.xlu0 %5300, %v5087
  %v5302 = vpop.permute.xlu0 %5301
  %5305 = vset.pattern.permute.xlu0 7
  %5306 = vperm.xlu0 %5305, %v5088
  %v5307 = vpop.permute.xlu0 %5306
  %5310 = vset.pattern.permute.xlu0 7
  %5311 = vperm.xlu0 %5310, %v5089
  %v5312 = vpop.permute.xlu0 %5311
  %5315 = vset.pattern.permute.xlu0 7
  %5316 = vperm.xlu0 %5315, %v5090
  %v5317 = vpop.permute.xlu0 %5316
  %5320 = vset.pattern.permute.xlu0 7
  %5321 = vperm.xlu0 %5320, %v5091
  %v5322 = vpop.permute.xlu0 %5321
  %5325 = vset.pattern.permute.xlu0 7
  %5326 = vperm.xlu0 %5325, %v5092
  %v5327 = vpop.permute.xlu0 %5326
  %5330 = vset.pattern.permute.xlu0 7
  %5331 = vperm.xlu0 %5330, %v5093
  %v5332 = vpop.permute.xlu0 %5331
  %5335 = vset.pattern.permute.xlu0 7
  %5336 = vperm.xlu0 %5335, %v5094
  %v5337 = vpop.permute.xlu0 %5336
  %5340 = vset.pattern.permute.xlu0 7
  %5341 = vperm.xlu0 %5340, %v5095
  %v5342 = vpop.permute.xlu0 %5341
  %5345 = vset.pattern.permute.xlu0 7
  %5346 = vperm.xlu0 %5345, %v5096
  %v5347 = vpop.permute.xlu0 %5346
  %5350 = vset.pattern.permute.xlu0 7
  %5351 = vperm.xlu0 %5350, %v5097
  %v5352 = vpop.permute.xlu0 %5351
  %5355 = vset.pattern.permute.xlu0 7
  %5356 = vperm.xlu0 %5355, %v5098
  %v5357 = vpop.permute.xlu0 %5356
  %5360 = vset.pattern.permute.xlu0 7
  %5361 = vperm.xlu0 %5360, %v5099
  %v5362 = vpop.permute.xlu0 %5361
  %5365 = vset.pattern.permute.xlu0 7
  %5366 = vperm.xlu0 %5365, %v5100
  %v5367 = vpop.permute.xlu0 %5366
  %5370 = vset.pattern.permute.xlu0 7
  %5371 = vperm.xlu0 %5370, %v5101
  %v5372 = vpop.permute.xlu0 %5371
  %5375 = vset.pattern.permute.xlu0 7
  %5376 = vperm.xlu0 %5375, %v5102
  %v5377 = vpop.permute.xlu0 %5376
  %5380 = vset.pattern.permute.xlu0 7
  %5381 = vperm.xlu0 %5380, %v5103
  %v5382 = vpop.permute.xlu0 %5381
  %5385 = vset.pattern.permute.xlu0 7
  %5386 = vperm.xlu0 %5385, %v5104
  %v5387 = vpop.permute.xlu0 %5386
  %5390 = vset.pattern.permute.xlu0 7
  %5391 = vperm.xlu0 %5390, %v5105
  %v5392 = vpop.permute.xlu0 %5391
  %5395 = vset.pattern.permute.xlu0 7
  %5396 = vperm.xlu0 %5395, %v5106
  %v5397 = vpop.permute.xlu0 %5396
  %5400 = vset.pattern.permute.xlu0 7
  %5401 = vperm.xlu0 %5400, %v5107
  %v5402 = vpop.permute.xlu0 %5401
  %5405 = vset.pattern.permute.xlu0 7
  %5406 = vperm.xlu0 %5405, %v5108
  %v5407 = vpop.permute.xlu0 %5406
  %5410 = vset.pattern.permute.xlu0 7
  %5411 = vperm.xlu0 %5410, %v5109
  %v5412 = vpop.permute.xlu0 %5411
  %5415 = vset.pattern.permute.xlu0 7
  %5416 = vperm.xlu0 %5415, %v5110
  %v5417 = vpop.permute.xlu0 %5416
  %5420 = vset.pattern.permute.xlu0 7
  %5421 = vperm.xlu0 %5420, %v5111
  %v5422 = vpop.permute.xlu0 %5421
  %5425 = vset.pattern.permute.xlu0 7
  %5426 = vperm.xlu0 %5425, %v5112
  %v5427 = vpop.permute.xlu0 %5426
  %5430 = vset.pattern.permute.xlu0 7
  %5431 = vperm.xlu0 %5430, %v5113
  %v5432 = vpop.permute.xlu0 %5431
  %v5434 = vmul.f32 %v49, %v5117
  %v5435 = vmul.f32 %v50, %v5122
  %v5436 = vmul.f32 %v51, %v5127
  %v5437 = vmul.f32 %v52, %v5132
  %v5438 = vmul.f32 %v53, %v5137
  %v5439 = vmul.f32 %v54, %v5142
  %v5440 = vmul.f32 %v55, %v5147
  %v5441 = vmul.f32 %v56, %v5152
  %v5442 = vmul.f32 %v57, %v5157
  %v5443 = vmul.f32 %v58, %v5162
  %v5444 = vmul.f32 %v59, %v5167
  %v5445 = vmul.f32 %v60, %v5172
  %v5446 = vmul.f32 %v61, %v5177
  %v5447 = vmul.f32 %v62, %v5182
  %v5448 = vmul.f32 %v63, %v5187
  %v5449 = vmul.f32 %v64, %v5192
  %v5450 = vmul.f32 %v65, %v5197
  %v5451 = vmul.f32 %v66, %v5202
  %v5452 = vmul.f32 %v67, %v5207
  %v5453 = vmul.f32 %v68, %v5212
  %v5454 = vmul.f32 %v69, %v5217
  %v5455 = vmul.f32 %v70, %v5222
  %v5456 = vmul.f32 %v71, %v5227
  %v5457 = vmul.f32 %v72, %v5232
  %v5458 = vmul.f32 %v73, %v5237
  %v5459 = vmul.f32 %v74, %v5242
  %v5460 = vmul.f32 %v75, %v5247
  %v5461 = vmul.f32 %v76, %v5252
  %v5462 = vmul.f32 %v77, %v5257
  %v5463 = vmul.f32 %v78, %v5262
  %v5464 = vmul.f32 %v79, %v5267
  %v5465 = vmul.f32 %v80, %v5272
  %v5466 = vmul.f32 %v81, %v5277
  %v5467 = vmul.f32 %v82, %v5282
  %v5468 = vmul.f32 %v83, %v5287
  %v5469 = vmul.f32 %v84, %v5292
  %v5470 = vmul.f32 %v85, %v5297
  %v5471 = vmul.f32 %v86, %v5302
  %v5472 = vmul.f32 %v87, %v5307
  %v5473 = vmul.f32 %v88, %v5312
  %v5474 = vmul.f32 %v89, %v5317
  %v5475 = vmul.f32 %v90, %v5322
  %v5476 = vmul.f32 %v91, %v5327
  %v5477 = vmul.f32 %v92, %v5332
  %v5478 = vmul.f32 %v93, %v5337
  %v5479 = vmul.f32 %v94, %v5342
  %v5480 = vmul.f32 %v95, %v5347
  %v5481 = vmul.f32 %v96, %v5352
  %v5482 = vmul.f32 %v97, %v5357
  %v5483 = vmul.f32 %v98, %v5362
  %v5484 = vmul.f32 %v99, %v5367
  %v5485 = vmul.f32 %v100, %v5372
  %v5486 = vmul.f32 %v101, %v5377
  %v5487 = vmul.f32 %v102, %v5382
  %v5488 = vmul.f32 %v103, %v5387
  %v5489 = vmul.f32 %v104, %v5392
  %v5490 = vmul.f32 %v105, %v5397
  %v5491 = vmul.f32 %v106, %v5402
  %v5492 = vmul.f32 %v107, %v5407
  %v5493 = vmul.f32 %v108, %v5412
  %v5494 = vmul.f32 %v109, %v5417
  %v5495 = vmul.f32 %v110, %v5422
  %v5496 = vmul.f32 %v47, %v5427
  %v5497 = vmul.f32 %v48, %v5432
  %5562 = vrot.lane.b32.xlu0 %v5434, 28
  %v5563 = vpop.permute.xlu0 %5562
  %5564 = vrot.lane.b32.xlu0 %v5435, 28
  %v5565 = vpop.permute.xlu0 %5564
  %5566 = vrot.lane.b32.xlu0 %v5436, 28
  %v5567 = vpop.permute.xlu0 %5566
  %5568 = vrot.lane.b32.xlu0 %v5437, 28
  %v5569 = vpop.permute.xlu0 %5568
  %5570 = vrot.lane.b32.xlu0 %v5438, 28
  %v5571 = vpop.permute.xlu0 %5570
  %5572 = vrot.lane.b32.xlu0 %v5439, 28
  %v5573 = vpop.permute.xlu0 %5572
  %5574 = vrot.lane.b32.xlu0 %v5440, 28
  %v5575 = vpop.permute.xlu0 %5574
  %5576 = vrot.lane.b32.xlu0 %v5441, 28
  %v5577 = vpop.permute.xlu0 %5576
  %5578 = vrot.lane.b32.xlu0 %v5442, 28
  %v5579 = vpop.permute.xlu0 %5578
  %5580 = vrot.lane.b32.xlu0 %v5443, 28
  %v5581 = vpop.permute.xlu0 %5580
  %5582 = vrot.lane.b32.xlu0 %v5444, 28
  %v5583 = vpop.permute.xlu0 %5582
  %5584 = vrot.lane.b32.xlu0 %v5445, 28
  %v5585 = vpop.permute.xlu0 %5584
  %5586 = vrot.lane.b32.xlu0 %v5446, 28
  %v5587 = vpop.permute.xlu0 %5586
  %5588 = vrot.lane.b32.xlu0 %v5447, 28
  %v5589 = vpop.permute.xlu0 %5588
  %5590 = vrot.lane.b32.xlu0 %v5448, 28
  %v5591 = vpop.permute.xlu0 %5590
  %5592 = vrot.lane.b32.xlu0 %v5449, 28
  %v5593 = vpop.permute.xlu0 %5592
  %5594 = vrot.lane.b32.xlu0 %v5450, 28
  %v5595 = vpop.permute.xlu0 %5594
  %5596 = vrot.lane.b32.xlu0 %v5451, 28
  %v5597 = vpop.permute.xlu0 %5596
  %5598 = vrot.lane.b32.xlu0 %v5452, 28
  %v5599 = vpop.permute.xlu0 %5598
  %5600 = vrot.lane.b32.xlu0 %v5453, 28
  %v5601 = vpop.permute.xlu0 %5600
  %5602 = vrot.lane.b32.xlu0 %v5454, 28
  %v5603 = vpop.permute.xlu0 %5602
  %5604 = vrot.lane.b32.xlu0 %v5455, 28
  %v5605 = vpop.permute.xlu0 %5604
  %5606 = vrot.lane.b32.xlu0 %v5456, 28
  %v5607 = vpop.permute.xlu0 %5606
  %5608 = vrot.lane.b32.xlu0 %v5457, 28
  %v5609 = vpop.permute.xlu0 %5608
  %5610 = vrot.lane.b32.xlu0 %v5458, 28
  %v5611 = vpop.permute.xlu0 %5610
  %5612 = vrot.lane.b32.xlu0 %v5459, 28
  %v5613 = vpop.permute.xlu0 %5612
  %5614 = vrot.lane.b32.xlu0 %v5460, 28
  %v5615 = vpop.permute.xlu0 %5614
  %5616 = vrot.lane.b32.xlu0 %v5461, 28
  %v5617 = vpop.permute.xlu0 %5616
  %5618 = vrot.lane.b32.xlu0 %v5462, 28
  %v5619 = vpop.permute.xlu0 %5618
  %5620 = vrot.lane.b32.xlu0 %v5463, 28
  %v5621 = vpop.permute.xlu0 %5620
  %5622 = vrot.lane.b32.xlu0 %v5464, 28
  %v5623 = vpop.permute.xlu0 %5622
  %5624 = vrot.lane.b32.xlu0 %v5465, 28
  %v5625 = vpop.permute.xlu0 %5624
  %5626 = vrot.lane.b32.xlu0 %v5466, 28
  %v5627 = vpop.permute.xlu0 %5626
  %5628 = vrot.lane.b32.xlu0 %v5467, 28
  %v5629 = vpop.permute.xlu0 %5628
  %5630 = vrot.lane.b32.xlu0 %v5468, 28
  %v5631 = vpop.permute.xlu0 %5630
  %5632 = vrot.lane.b32.xlu0 %v5469, 28
  %v5633 = vpop.permute.xlu0 %5632
  %5634 = vrot.lane.b32.xlu0 %v5470, 28
  %v5635 = vpop.permute.xlu0 %5634
  %5636 = vrot.lane.b32.xlu0 %v5471, 28
  %v5637 = vpop.permute.xlu0 %5636
  %5638 = vrot.lane.b32.xlu0 %v5472, 28
  %v5639 = vpop.permute.xlu0 %5638
  %5640 = vrot.lane.b32.xlu0 %v5473, 28
  %v5641 = vpop.permute.xlu0 %5640
  %5642 = vrot.lane.b32.xlu0 %v5474, 28
  %v5643 = vpop.permute.xlu0 %5642
  %5644 = vrot.lane.b32.xlu0 %v5475, 28
  %v5645 = vpop.permute.xlu0 %5644
  %5646 = vrot.lane.b32.xlu0 %v5476, 28
  %v5647 = vpop.permute.xlu0 %5646
  %5648 = vrot.lane.b32.xlu0 %v5477, 28
  %v5649 = vpop.permute.xlu0 %5648
  %5650 = vrot.lane.b32.xlu0 %v5478, 28
  %v5651 = vpop.permute.xlu0 %5650
  %5652 = vrot.lane.b32.xlu0 %v5479, 28
  %v5653 = vpop.permute.xlu0 %5652
  %5654 = vrot.lane.b32.xlu0 %v5480, 28
  %v5655 = vpop.permute.xlu0 %5654
  %5656 = vrot.lane.b32.xlu0 %v5481, 28
  %v5657 = vpop.permute.xlu0 %5656
  %5658 = vrot.lane.b32.xlu0 %v5482, 28
  %v5659 = vpop.permute.xlu0 %5658
  %5660 = vrot.lane.b32.xlu0 %v5483, 28
  %v5661 = vpop.permute.xlu0 %5660
  %5662 = vrot.lane.b32.xlu0 %v5484, 28
  %v5663 = vpop.permute.xlu0 %5662
  %5664 = vrot.lane.b32.xlu0 %v5485, 28
  %v5665 = vpop.permute.xlu0 %5664
  %5666 = vrot.lane.b32.xlu0 %v5486, 28
  %v5667 = vpop.permute.xlu0 %5666
  %5668 = vrot.lane.b32.xlu0 %v5487, 28
  %v5669 = vpop.permute.xlu0 %5668
  %5670 = vrot.lane.b32.xlu0 %v5488, 28
  %v5671 = vpop.permute.xlu0 %5670
  %5672 = vrot.lane.b32.xlu0 %v5489, 28
  %v5673 = vpop.permute.xlu0 %5672
  %5674 = vrot.lane.b32.xlu0 %v5490, 28
  %v5675 = vpop.permute.xlu0 %5674
  %5676 = vrot.lane.b32.xlu0 %v5491, 28
  %v5677 = vpop.permute.xlu0 %5676
  %5678 = vrot.lane.b32.xlu0 %v5492, 28
  %v5679 = vpop.permute.xlu0 %5678
  %5680 = vrot.lane.b32.xlu0 %v5493, 28
  %v5681 = vpop.permute.xlu0 %5680
  %5682 = vrot.lane.b32.xlu0 %v5494, 28
  %v5683 = vpop.permute.xlu0 %5682
  %5684 = vrot.lane.b32.xlu0 %v5495, 28
  %v5685 = vpop.permute.xlu0 %5684
  %5686 = vrot.lane.b32.xlu0 %v5496, 28
  %v5687 = vpop.permute.xlu0 %5686
  %5688 = vrot.lane.b32.xlu0 %v5497, 28
  %v5689 = vpop.permute.xlu0 %5688
  %vm5754 = vcmask 261344
  %5755 = vst.msk [vmem:[#allocation2] sm:$0xff] %vm5754, %v5563
  %5756 = vst.msk [vmem:[#allocation2 + $0x8] sm:$0xff] %vm5754, %v5565
  %5757 = vst.msk [vmem:[#allocation2 + $0x10] sm:$0xff] %vm5754, %v5567
  %5758 = vst.msk [vmem:[#allocation2 + $0x18] sm:$0xff] %vm5754, %v5569
  %5759 = vst.msk [vmem:[#allocation2 + $0x20] sm:$0xff] %vm5754, %v5571
  %5760 = vst.msk [vmem:[#allocation2 + $0x28] sm:$0xff] %vm5754, %v5573
  %5761 = vst.msk [vmem:[#allocation2 + $0x30] sm:$0xff] %vm5754, %v5575
  %5762 = vst.msk [vmem:[#allocation2 + $0x38] sm:$0xff] %vm5754, %v5577
  %5763 = vst.msk [vmem:[#allocation2 + $0x40] sm:$0xff] %vm5754, %v5579
  %5764 = vst.msk [vmem:[#allocation2 + $0x48] sm:$0xff] %vm5754, %v5581
  %5765 = vst.msk [vmem:[#allocation2 + $0x50] sm:$0xff] %vm5754, %v5583
  %5766 = vst.msk [vmem:[#allocation2 + $0x58] sm:$0xff] %vm5754, %v5585
  %5767 = vst.msk [vmem:[#allocation2 + $0x60] sm:$0xff] %vm5754, %v5587
  %5768 = vst.msk [vmem:[#allocation2 + $0x68] sm:$0xff] %vm5754, %v5589
  %5769 = vst.msk [vmem:[#allocation2 + $0x70] sm:$0xff] %vm5754, %v5591
  %5770 = vst.msk [vmem:[#allocation2 + $0x78] sm:$0xff] %vm5754, %v5593
  %5771 = vst.msk [vmem:[#allocation2 + $0x80] sm:$0xff] %vm5754, %v5595
  %5772 = vst.msk [vmem:[#allocation2 + $0x88] sm:$0xff] %vm5754, %v5597
  %5773 = vst.msk [vmem:[#allocation2 + $0x90] sm:$0xff] %vm5754, %v5599
  %5774 = vst.msk [vmem:[#allocation2 + $0x98] sm:$0xff] %vm5754, %v5601
  %5775 = vst.msk [vmem:[#allocation2 + $0xa0] sm:$0xff] %vm5754, %v5603
  %5776 = vst.msk [vmem:[#allocation2 + $0xa8] sm:$0xff] %vm5754, %v5605
  %5777 = vst.msk [vmem:[#allocation2 + $0xb0] sm:$0xff] %vm5754, %v5607
  %5778 = vst.msk [vmem:[#allocation2 + $0xb8] sm:$0xff] %vm5754, %v5609
  %5779 = vst.msk [vmem:[#allocation2 + $0xc0] sm:$0xff] %vm5754, %v5611
  %5780 = vst.msk [vmem:[#allocation2 + $0xc8] sm:$0xff] %vm5754, %v5613
  %5781 = vst.msk [vmem:[#allocation2 + $0xd0] sm:$0xff] %vm5754, %v5615
  %5782 = vst.msk [vmem:[#allocation2 + $0xd8] sm:$0xff] %vm5754, %v5617
  %5783 = vst.msk [vmem:[#allocation2 + $0xe0] sm:$0xff] %vm5754, %v5619
  %5784 = vst.msk [vmem:[#allocation2 + $0xe8] sm:$0xff] %vm5754, %v5621
  %5785 = vst.msk [vmem:[#allocation2 + $0xf0] sm:$0xff] %vm5754, %v5623
  %5786 = vst.msk [vmem:[#allocation2 + $0xf8] sm:$0xff] %vm5754, %v5625
  %5787 = vst.msk [vmem:[#allocation2 + $0x100] sm:$0xff] %vm5754, %v5627
  %5788 = vst.msk [vmem:[#allocation2 + $0x108] sm:$0xff] %vm5754, %v5629
  %5789 = vst.msk [vmem:[#allocation2 + $0x110] sm:$0xff] %vm5754, %v5631
  %5790 = vst.msk [vmem:[#allocation2 + $0x118] sm:$0xff] %vm5754, %v5633
  %5791 = vst.msk [vmem:[#allocation2 + $0x120] sm:$0xff] %vm5754, %v5635
  %5792 = vst.msk [vmem:[#allocation2 + $0x128] sm:$0xff] %vm5754, %v5637
  %5793 = vst.msk [vmem:[#allocation2 + $0x130] sm:$0xff] %vm5754, %v5639
  %5794 = vst.msk [vmem:[#allocation2 + $0x138] sm:$0xff] %vm5754, %v5641
  %5795 = vst.msk [vmem:[#allocation2 + $0x140] sm:$0xff] %vm5754, %v5643
  %5796 = vst.msk [vmem:[#allocation2 + $0x148] sm:$0xff] %vm5754, %v5645
  %5797 = vst.msk [vmem:[#allocation2 + $0x150] sm:$0xff] %vm5754, %v5647
  %5798 = vst.msk [vmem:[#allocation2 + $0x158] sm:$0xff] %vm5754, %v5649
  %5799 = vst.msk [vmem:[#allocation2 + $0x160] sm:$0xff] %vm5754, %v5651
  %5800 = vst.msk [vmem:[#allocation2 + $0x168] sm:$0xff] %vm5754, %v5653
  %5801 = vst.msk [vmem:[#allocation2 + $0x170] sm:$0xff] %vm5754, %v5655
  %5802 = vst.msk [vmem:[#allocation2 + $0x178] sm:$0xff] %vm5754, %v5657
  %5803 = vst.msk [vmem:[#allocation2 + $0x180] sm:$0xff] %vm5754, %v5659
  %5804 = vst.msk [vmem:[#allocation2 + $0x188] sm:$0xff] %vm5754, %v5661
  %5805 = vst.msk [vmem:[#allocation2 + $0x190] sm:$0xff] %vm5754, %v5663
  %5806 = vst.msk [vmem:[#allocation2 + $0x198] sm:$0xff] %vm5754, %v5665
  %5807 = vst.msk [vmem:[#allocation2 + $0x1a0] sm:$0xff] %vm5754, %v5667
  %5808 = vst.msk [vmem:[#allocation2 + $0x1a8] sm:$0xff] %vm5754, %v5669
  %5809 = vst.msk [vmem:[#allocation2 + $0x1b0] sm:$0xff] %vm5754, %v5671
  %5810 = vst.msk [vmem:[#allocation2 + $0x1b8] sm:$0xff] %vm5754, %v5673
  %5811 = vst.msk [vmem:[#allocation2 + $0x1c0] sm:$0xff] %vm5754, %v5675
  %5812 = vst.msk [vmem:[#allocation2 + $0x1c8] sm:$0xff] %vm5754, %v5677
  %5813 = vst.msk [vmem:[#allocation2 + $0x1d0] sm:$0xff] %vm5754, %v5679
  %5814 = vst.msk [vmem:[#allocation2 + $0x1d8] sm:$0xff] %vm5754, %v5681
  %5815 = vst.msk [vmem:[#allocation2 + $0x1e0] sm:$0xff] %vm5754, %v5683
  %5816 = vst.msk [vmem:[#allocation2 + $0x1e8] sm:$0xff] %vm5754, %v5685
  %5817 = vst.msk [vmem:[#allocation2 + $0x1f0] sm:$0xff] %vm5754, %v5687
  %5818 = vst.msk [vmem:[#allocation2 + $0x1f8] sm:$0xff] %vm5754, %v5689
  %v5819 = vld [vmem:[%s1] sm:$0xff]
  %v5820 = vld [vmem:[%s1 + $0x8] sm:$0xff]
  %v5821 = vld [vmem:[%s1 + $0x10] sm:$0xff]
  %v5822 = vld [vmem:[%s1 + $0x18] sm:$0xff]
  %v5823 = vld [vmem:[%s1 + $0x20] sm:$0xff]
  %v5824 = vld [vmem:[%s1 + $0x28] sm:$0xff]
  %v5825 = vld [vmem:[%s1 + $0x30] sm:$0xff]
  %v5826 = vld [vmem:[%s1 + $0x38] sm:$0xff]
  %v5827 = vld [vmem:[%s1 + $0x40] sm:$0xff]
  %v5828 = vld [vmem:[%s1 + $0x48] sm:$0xff]
  %v5829 = vld [vmem:[%s1 + $0x50] sm:$0xff]
  %v5830 = vld [vmem:[%s1 + $0x58] sm:$0xff]
  %v5831 = vld [vmem:[%s1 + $0x60] sm:$0xff]
  %v5832 = vld [vmem:[%s1 + $0x68] sm:$0xff]
  %v5833 = vld [vmem:[%s1 + $0x70] sm:$0xff]
  %v5834 = vld [vmem:[%s1 + $0x78] sm:$0xff]
  %v5835 = vld [vmem:[%s1 + $0x80] sm:$0xff]
  %v5836 = vld [vmem:[%s1 + $0x88] sm:$0xff]
  %v5837 = vld [vmem:[%s1 + $0x90] sm:$0xff]
  %v5838 = vld [vmem:[%s1 + $0x98] sm:$0xff]
  %v5839 = vld [vmem:[%s1 + $0xa0] sm:$0xff]
  %v5840 = vld [vmem:[%s1 + $0xa8] sm:$0xff]
  %v5841 = vld [vmem:[%s1 + $0xb0] sm:$0xff]
  %v5842 = vld [vmem:[%s1 + $0xb8] sm:$0xff]
  %v5843 = vld [vmem:[%s1 + $0xc0] sm:$0xff]
  %v5844 = vld [vmem:[%s1 + $0xc8] sm:$0xff]
  %v5845 = vld [vmem:[%s1 + $0xd0] sm:$0xff]
  %v5846 = vld [vmem:[%s1 + $0xd8] sm:$0xff]
  %v5847 = vld [vmem:[%s1 + $0xe0] sm:$0xff]
  %v5848 = vld [vmem:[%s1 + $0xe8] sm:$0xff]
  %v5849 = vld [vmem:[%s1 + $0xf0] sm:$0xff]
  %v5850 = vld [vmem:[%s1 + $0xf8] sm:$0xff]
  %v5851 = vld [vmem:[%s1 + $0x100] sm:$0xff]
  %v5852 = vld [vmem:[%s1 + $0x108] sm:$0xff]
  %v5853 = vld [vmem:[%s1 + $0x110] sm:$0xff]
  %v5854 = vld [vmem:[%s1 + $0x118] sm:$0xff]
  %v5855 = vld [vmem:[%s1 + $0x120] sm:$0xff]
  %v5856 = vld [vmem:[%s1 + $0x128] sm:$0xff]
  %v5857 = vld [vmem:[%s1 + $0x130] sm:$0xff]
  %v5858 = vld [vmem:[%s1 + $0x138] sm:$0xff]
  %v5859 = vld [vmem:[%s1 + $0x140] sm:$0xff]
  %v5860 = vld [vmem:[%s1 + $0x148] sm:$0xff]
  %v5861 = vld [vmem:[%s1 + $0x150] sm:$0xff]
  %v5862 = vld [vmem:[%s1 + $0x158] sm:$0xff]
  %v5863 = vld [vmem:[%s1 + $0x160] sm:$0xff]
  %v5864 = vld [vmem:[%s1 + $0x168] sm:$0xff]
  %v5865 = vld [vmem:[%s1 + $0x170] sm:$0xff]
  %v5866 = vld [vmem:[%s1 + $0x178] sm:$0xff]
  %v5867 = vld [vmem:[%s1 + $0x180] sm:$0xff]
  %v5868 = vld [vmem:[%s1 + $0x188] sm:$0xff]
  %v5869 = vld [vmem:[%s1 + $0x190] sm:$0xff]
  %v5870 = vld [vmem:[%s1 + $0x198] sm:$0xff]
  %v5871 = vld [vmem:[%s1 + $0x1a0] sm:$0xff]
  %v5872 = vld [vmem:[%s1 + $0x1a8] sm:$0xff]
  %v5873 = vld [vmem:[%s1 + $0x1b0] sm:$0xff]
  %v5874 = vld [vmem:[%s1 + $0x1b8] sm:$0xff]
  %v5875 = vld [vmem:[%s1 + $0x1c0] sm:$0xff]
  %v5876 = vld [vmem:[%s1 + $0x1c8] sm:$0xff]
  %v5877 = vld [vmem:[%s1 + $0x1d0] sm:$0xff]
  %v5878 = vld [vmem:[%s1 + $0x1d8] sm:$0xff]
  %v5879 = vld [vmem:[%s1 + $0x1e0] sm:$0xff]
  %v5880 = vld [vmem:[%s1 + $0x1e8] sm:$0xff]
  %v5881 = vld [vmem:[%s1 + $0x1f0] sm:$0xff]
  %v5882 = vld [vmem:[%s1 + $0x1f8] sm:$0xff]
  %5884 = vset.pattern.permute.xlu0 8
  %5885 = vperm.xlu0 %5884, %v5819
  %v5886 = vpop.permute.xlu0 %5885
  %5889 = vset.pattern.permute.xlu0 8
  %5890 = vperm.xlu0 %5889, %v5820
  %v5891 = vpop.permute.xlu0 %5890
  %5894 = vset.pattern.permute.xlu0 8
  %5895 = vperm.xlu0 %5894, %v5821
  %v5896 = vpop.permute.xlu0 %5895
  %5899 = vset.pattern.permute.xlu0 8
  %5900 = vperm.xlu0 %5899, %v5822
  %v5901 = vpop.permute.xlu0 %5900
  %5904 = vset.pattern.permute.xlu0 8
  %5905 = vperm.xlu0 %5904, %v5823
  %v5906 = vpop.permute.xlu0 %5905
  %5909 = vset.pattern.permute.xlu0 8
  %5910 = vperm.xlu0 %5909, %v5824
  %v5911 = vpop.permute.xlu0 %5910
  %5914 = vset.pattern.permute.xlu0 8
  %5915 = vperm.xlu0 %5914, %v5825
  %v5916 = vpop.permute.xlu0 %5915
  %5919 = vset.pattern.permute.xlu0 8
  %5920 = vperm.xlu0 %5919, %v5826
  %v5921 = vpop.permute.xlu0 %5920
  %5924 = vset.pattern.permute.xlu0 8
  %5925 = vperm.xlu0 %5924, %v5827
  %v5926 = vpop.permute.xlu0 %5925
  %5929 = vset.pattern.permute.xlu0 8
  %5930 = vperm.xlu0 %5929, %v5828
  %v5931 = vpop.permute.xlu0 %5930
  %5934 = vset.pattern.permute.xlu0 8
  %5935 = vperm.xlu0 %5934, %v5829
  %v5936 = vpop.permute.xlu0 %5935
  %5939 = vset.pattern.permute.xlu0 8
  %5940 = vperm.xlu0 %5939, %v5830
  %v5941 = vpop.permute.xlu0 %5940
  %5944 = vset.pattern.permute.xlu0 8
  %5945 = vperm.xlu0 %5944, %v5831
  %v5946 = vpop.permute.xlu0 %5945
  %5949 = vset.pattern.permute.xlu0 8
  %5950 = vperm.xlu0 %5949, %v5832
  %v5951 = vpop.permute.xlu0 %5950
  %5954 = vset.pattern.permute.xlu0 8
  %5955 = vperm.xlu0 %5954, %v5833
  %v5956 = vpop.permute.xlu0 %5955
  %5959 = vset.pattern.permute.xlu0 8
  %5960 = vperm.xlu0 %5959, %v5834
  %v5961 = vpop.permute.xlu0 %5960
  %5964 = vset.pattern.permute.xlu0 8
  %5965 = vperm.xlu0 %5964, %v5835
  %v5966 = vpop.permute.xlu0 %5965
  %5969 = vset.pattern.permute.xlu0 8
  %5970 = vperm.xlu0 %5969, %v5836
  %v5971 = vpop.permute.xlu0 %5970
  %5974 = vset.pattern.permute.xlu0 8
  %5975 = vperm.xlu0 %5974, %v5837
  %v5976 = vpop.permute.xlu0 %5975
  %5979 = vset.pattern.permute.xlu0 8
  %5980 = vperm.xlu0 %5979, %v5838
  %v5981 = vpop.permute.xlu0 %5980
  %5984 = vset.pattern.permute.xlu0 8
  %5985 = vperm.xlu0 %5984, %v5839
  %v5986 = vpop.permute.xlu0 %5985
  %5989 = vset.pattern.permute.xlu0 8
  %5990 = vperm.xlu0 %5989, %v5840
  %v5991 = vpop.permute.xlu0 %5990
  %5994 = vset.pattern.permute.xlu0 8
  %5995 = vperm.xlu0 %5994, %v5841
  %v5996 = vpop.permute.xlu0 %5995
  %5999 = vset.pattern.permute.xlu0 8
  %6000 = vperm.xlu0 %5999, %v5842
  %v6001 = vpop.permute.xlu0 %6000
  %6004 = vset.pattern.permute.xlu0 8
  %6005 = vperm.xlu0 %6004, %v5843
  %v6006 = vpop.permute.xlu0 %6005
  %6009 = vset.pattern.permute.xlu0 8
  %6010 = vperm.xlu0 %6009, %v5844
  %v6011 = vpop.permute.xlu0 %6010
  %6014 = vset.pattern.permute.xlu0 8
  %6015 = vperm.xlu0 %6014, %v5845
  %v6016 = vpop.permute.xlu0 %6015
  %6019 = vset.pattern.permute.xlu0 8
  %6020 = vperm.xlu0 %6019, %v5846
  %v6021 = vpop.permute.xlu0 %6020
  %6024 = vset.pattern.permute.xlu0 8
  %6025 = vperm.xlu0 %6024, %v5847
  %v6026 = vpop.permute.xlu0 %6025
  %6029 = vset.pattern.permute.xlu0 8
  %6030 = vperm.xlu0 %6029, %v5848
  %v6031 = vpop.permute.xlu0 %6030
  %6034 = vset.pattern.permute.xlu0 8
  %6035 = vperm.xlu0 %6034, %v5849
  %v6036 = vpop.permute.xlu0 %6035
  %6039 = vset.pattern.permute.xlu0 8
  %6040 = vperm.xlu0 %6039, %v5850
  %v6041 = vpop.permute.xlu0 %6040
  %6044 = vset.pattern.permute.xlu0 8
  %6045 = vperm.xlu0 %6044, %v5851
  %v6046 = vpop.permute.xlu0 %6045
  %6049 = vset.pattern.permute.xlu0 8
  %6050 = vperm.xlu0 %6049, %v5852
  %v6051 = vpop.permute.xlu0 %6050
  %6054 = vset.pattern.permute.xlu0 8
  %6055 = vperm.xlu0 %6054, %v5853
  %v6056 = vpop.permute.xlu0 %6055
  %6059 = vset.pattern.permute.xlu0 8
  %6060 = vperm.xlu0 %6059, %v5854
  %v6061 = vpop.permute.xlu0 %6060
  %6064 = vset.pattern.permute.xlu0 8
  %6065 = vperm.xlu0 %6064, %v5855
  %v6066 = vpop.permute.xlu0 %6065
  %6069 = vset.pattern.permute.xlu0 8
  %6070 = vperm.xlu0 %6069, %v5856
  %v6071 = vpop.permute.xlu0 %6070
  %6074 = vset.pattern.permute.xlu0 8
  %6075 = vperm.xlu0 %6074, %v5857
  %v6076 = vpop.permute.xlu0 %6075
  %6079 = vset.pattern.permute.xlu0 8
  %6080 = vperm.xlu0 %6079, %v5858
  %v6081 = vpop.permute.xlu0 %6080
  %6084 = vset.pattern.permute.xlu0 8
  %6085 = vperm.xlu0 %6084, %v5859
  %v6086 = vpop.permute.xlu0 %6085
  %6089 = vset.pattern.permute.xlu0 8
  %6090 = vperm.xlu0 %6089, %v5860
  %v6091 = vpop.permute.xlu0 %6090
  %6094 = vset.pattern.permute.xlu0 8
  %6095 = vperm.xlu0 %6094, %v5861
  %v6096 = vpop.permute.xlu0 %6095
  %6099 = vset.pattern.permute.xlu0 8
  %6100 = vperm.xlu0 %6099, %v5862
  %v6101 = vpop.permute.xlu0 %6100
  %6104 = vset.pattern.permute.xlu0 8
  %6105 = vperm.xlu0 %6104, %v5863
  %v6106 = vpop.permute.xlu0 %6105
  %6109 = vset.pattern.permute.xlu0 8
  %6110 = vperm.xlu0 %6109, %v5864
  %v6111 = vpop.permute.xlu0 %6110
  %6114 = vset.pattern.permute.xlu0 8
  %6115 = vperm.xlu0 %6114, %v5865
  %v6116 = vpop.permute.xlu0 %6115
  %6119 = vset.pattern.permute.xlu0 8
  %6120 = vperm.xlu0 %6119, %v5866
  %v6121 = vpop.permute.xlu0 %6120
  %6124 = vset.pattern.permute.xlu0 8
  %6125 = vperm.xlu0 %6124, %v5867
  %v6126 = vpop.permute.xlu0 %6125
  %6129 = vset.pattern.permute.xlu0 8
  %6130 = vperm.xlu0 %6129, %v5868
  %v6131 = vpop.permute.xlu0 %6130
  %6134 = vset.pattern.permute.xlu0 8
  %6135 = vperm.xlu0 %6134, %v5869
  %v6136 = vpop.permute.xlu0 %6135
  %6139 = vset.pattern.permute.xlu0 8
  %6140 = vperm.xlu0 %6139, %v5870
  %v6141 = vpop.permute.xlu0 %6140
  %6144 = vset.pattern.permute.xlu0 8
  %6145 = vperm.xlu0 %6144, %v5871
  %v6146 = vpop.permute.xlu0 %6145
  %6149 = vset.pattern.permute.xlu0 8
  %6150 = vperm.xlu0 %6149, %v5872
  %v6151 = vpop.permute.xlu0 %6150
  %6154 = vset.pattern.permute.xlu0 8
  %6155 = vperm.xlu0 %6154, %v5873
  %v6156 = vpop.permute.xlu0 %6155
  %6159 = vset.pattern.permute.xlu0 8
  %6160 = vperm.xlu0 %6159, %v5874
  %v6161 = vpop.permute.xlu0 %6160
  %6164 = vset.pattern.permute.xlu0 8
  %6165 = vperm.xlu0 %6164, %v5875
  %v6166 = vpop.permute.xlu0 %6165
  %6169 = vset.pattern.permute.xlu0 8
  %6170 = vperm.xlu0 %6169, %v5876
  %v6171 = vpop.permute.xlu0 %6170
  %6174 = vset.pattern.permute.xlu0 8
  %6175 = vperm.xlu0 %6174, %v5877
  %v6176 = vpop.permute.xlu0 %6175
  %6179 = vset.pattern.permute.xlu0 8
  %6180 = vperm.xlu0 %6179, %v5878
  %v6181 = vpop.permute.xlu0 %6180
  %6184 = vset.pattern.permute.xlu0 8
  %6185 = vperm.xlu0 %6184, %v5879
  %v6186 = vpop.permute.xlu0 %6185
  %6189 = vset.pattern.permute.xlu0 8
  %6190 = vperm.xlu0 %6189, %v5880
  %v6191 = vpop.permute.xlu0 %6190
  %6194 = vset.pattern.permute.xlu0 8
  %6195 = vperm.xlu0 %6194, %v5881
  %v6196 = vpop.permute.xlu0 %6195
  %6199 = vset.pattern.permute.xlu0 8
  %6200 = vperm.xlu0 %6199, %v5882
  %v6201 = vpop.permute.xlu0 %6200
  %v6203 = vmul.f32 %v1649, %v5886
  %v6204 = vmul.f32 %v1648, %v5891
  %v6205 = vmul.f32 %v1647, %v5896
  %v6206 = vmul.f32 %v1646, %v5901
  %v6207 = vmul.f32 %v1645, %v5906
  %v6208 = vmul.f32 %v1644, %v5911
  %v6209 = vmul.f32 %v1643, %v5916
  %v6210 = vmul.f32 %v1642, %v5921
  %v6211 = vmul.f32 %v1641, %v5926
  %v6212 = vmul.f32 %v1640, %v5931
  %v6213 = vmul.f32 %v1639, %v5936
  %v6214 = vmul.f32 %v1638, %v5941
  %v6215 = vmul.f32 %v1637, %v5946
  %v6216 = vmul.f32 %v1636, %v5951
  %v6217 = vmul.f32 %v1635, %v5956
  %v6218 = vmul.f32 %v1634, %v5961
  %v6219 = vmul.f32 %v1633, %v5966
  %v6220 = vmul.f32 %v1632, %v5971
  %v6221 = vmul.f32 %v1631, %v5976
  %v6222 = vmul.f32 %v1630, %v5981
  %v6223 = vmul.f32 %v1629, %v5986
  %v6224 = vmul.f32 %v1628, %v5991
  %v6225 = vmul.f32 %v1627, %v5996
  %v6226 = vmul.f32 %v1626, %v6001
  %v6227 = vmul.f32 %v1625, %v6006
  %v6228 = vmul.f32 %v1624, %v6011
  %v6229 = vmul.f32 %v1623, %v6016
  %v6230 = vmul.f32 %v1622, %v6021
  %v6231 = vmul.f32 %v1621, %v6026
  %v6232 = vmul.f32 %v1620, %v6031
  %v6233 = vmul.f32 %v1619, %v6036
  %v6234 = vmul.f32 %v1618, %v6041
  %v6235 = vmul.f32 %v1617, %v6046
  %v6236 = vmul.f32 %v1616, %v6051
  %v6237 = vmul.f32 %v1615, %v6056
  %v6238 = vmul.f32 %v1614, %v6061
  %v6239 = vmul.f32 %v1613, %v6066
  %v6240 = vmul.f32 %v1612, %v6071
  %v6241 = vmul.f32 %v1611, %v6076
  %v6242 = vmul.f32 %v1610, %v6081
  %v6243 = vmul.f32 %v1609, %v6086
  %v6244 = vmul.f32 %v1608, %v6091
  %v6245 = vmul.f32 %v1607, %v6096
  %v6246 = vmul.f32 %v1606, %v6101
  %v6247 = vmul.f32 %v1605, %v6106
  %v6248 = vmul.f32 %v1604, %v6111
  %v6249 = vmul.f32 %v1603, %v6116
  %v6250 = vmul.f32 %v1602, %v6121
  %v6251 = vmul.f32 %v1601, %v6126
  %v6252 = vmul.f32 %v1600, %v6131
  %v6253 = vmul.f32 %v1599, %v6136
  %v6254 = vmul.f32 %v1598, %v6141
  %v6255 = vmul.f32 %v1597, %v6146
  %v6256 = vmul.f32 %v1596, %v6151
  %v6257 = vmul.f32 %v1595, %v6156
  %v6258 = vmul.f32 %v1594, %v6161
  %v6259 = vmul.f32 %v1593, %v6166
  %v6260 = vmul.f32 %v1592, %v6171
  %v6261 = vmul.f32 %v1591, %v6176
  %v6262 = vmul.f32 %v1590, %v6181
  %v6263 = vmul.f32 %v1589, %v6186
  %v6264 = vmul.f32 %v1652, %v6191
  %v6265 = vmul.f32 %v1651, %v6196
  %v6266 = vmul.f32 %v1650, %v6201
  %6331 = vrot.lane.b32.xlu0 %v6203, 32
  %v6332 = vpop.permute.xlu0 %6331
  %6333 = vrot.lane.b32.xlu0 %v6204, 32
  %v6334 = vpop.permute.xlu0 %6333
  %6335 = vrot.lane.b32.xlu0 %v6205, 32
  %v6336 = vpop.permute.xlu0 %6335
  %6337 = vrot.lane.b32.xlu0 %v6206, 32
  %v6338 = vpop.permute.xlu0 %6337
  %6339 = vrot.lane.b32.xlu0 %v6207, 32
  %v6340 = vpop.permute.xlu0 %6339
  %6341 = vrot.lane.b32.xlu0 %v6208, 32
  %v6342 = vpop.permute.xlu0 %6341
  %6343 = vrot.lane.b32.xlu0 %v6209, 32
  %v6344 = vpop.permute.xlu0 %6343
  %6345 = vrot.lane.b32.xlu0 %v6210, 32
  %v6346 = vpop.permute.xlu0 %6345
  %6347 = vrot.lane.b32.xlu0 %v6211, 32
  %v6348 = vpop.permute.xlu0 %6347
  %6349 = vrot.lane.b32.xlu0 %v6212, 32
  %v6350 = vpop.permute.xlu0 %6349
  %6351 = vrot.lane.b32.xlu0 %v6213, 32
  %v6352 = vpop.permute.xlu0 %6351
  %6353 = vrot.lane.b32.xlu0 %v6214, 32
  %v6354 = vpop.permute.xlu0 %6353
  %6355 = vrot.lane.b32.xlu0 %v6215, 32
  %v6356 = vpop.permute.xlu0 %6355
  %6357 = vrot.lane.b32.xlu0 %v6216, 32
  %v6358 = vpop.permute.xlu0 %6357
  %6359 = vrot.lane.b32.xlu0 %v6217, 32
  %v6360 = vpop.permute.xlu0 %6359
  %6361 = vrot.lane.b32.xlu0 %v6218, 32
  %v6362 = vpop.permute.xlu0 %6361
  %6363 = vrot.lane.b32.xlu0 %v6219, 32
  %v6364 = vpop.permute.xlu0 %6363
  %6365 = vrot.lane.b32.xlu0 %v6220, 32
  %v6366 = vpop.permute.xlu0 %6365
  %6367 = vrot.lane.b32.xlu0 %v6221, 32
  %v6368 = vpop.permute.xlu0 %6367
  %6369 = vrot.lane.b32.xlu0 %v6222, 32
  %v6370 = vpop.permute.xlu0 %6369
  %6371 = vrot.lane.b32.xlu0 %v6223, 32
  %v6372 = vpop.permute.xlu0 %6371
  %6373 = vrot.lane.b32.xlu0 %v6224, 32
  %v6374 = vpop.permute.xlu0 %6373
  %6375 = vrot.lane.b32.xlu0 %v6225, 32
  %v6376 = vpop.permute.xlu0 %6375
  %6377 = vrot.lane.b32.xlu0 %v6226, 32
  %v6378 = vpop.permute.xlu0 %6377
  %6379 = vrot.lane.b32.xlu0 %v6227, 32
  %v6380 = vpop.permute.xlu0 %6379
  %6381 = vrot.lane.b32.xlu0 %v6228, 32
  %v6382 = vpop.permute.xlu0 %6381
  %6383 = vrot.lane.b32.xlu0 %v6229, 32
  %v6384 = vpop.permute.xlu0 %6383
  %6385 = vrot.lane.b32.xlu0 %v6230, 32
  %v6386 = vpop.permute.xlu0 %6385
  %6387 = vrot.lane.b32.xlu0 %v6231, 32
  %v6388 = vpop.permute.xlu0 %6387
  %6389 = vrot.lane.b32.xlu0 %v6232, 32
  %v6390 = vpop.permute.xlu0 %6389
  %6391 = vrot.lane.b32.xlu0 %v6233, 32
  %v6392 = vpop.permute.xlu0 %6391
  %6393 = vrot.lane.b32.xlu0 %v6234, 32
  %v6394 = vpop.permute.xlu0 %6393
  %6395 = vrot.lane.b32.xlu0 %v6235, 32
  %v6396 = vpop.permute.xlu0 %6395
  %6397 = vrot.lane.b32.xlu0 %v6236, 32
  %v6398 = vpop.permute.xlu0 %6397
  %6399 = vrot.lane.b32.xlu0 %v6237, 32
  %v6400 = vpop.permute.xlu0 %6399
  %6401 = vrot.lane.b32.xlu0 %v6238, 32
  %v6402 = vpop.permute.xlu0 %6401
  %6403 = vrot.lane.b32.xlu0 %v6239, 32
  %v6404 = vpop.permute.xlu0 %6403
  %6405 = vrot.lane.b32.xlu0 %v6240, 32
  %v6406 = vpop.permute.xlu0 %6405
  %6407 = vrot.lane.b32.xlu0 %v6241, 32
  %v6408 = vpop.permute.xlu0 %6407
  %6409 = vrot.lane.b32.xlu0 %v6242, 32
  %v6410 = vpop.permute.xlu0 %6409
  %6411 = vrot.lane.b32.xlu0 %v6243, 32
  %v6412 = vpop.permute.xlu0 %6411
  %6413 = vrot.lane.b32.xlu0 %v6244, 32
  %v6414 = vpop.permute.xlu0 %6413
  %6415 = vrot.lane.b32.xlu0 %v6245, 32
  %v6416 = vpop.permute.xlu0 %6415
  %6417 = vrot.lane.b32.xlu0 %v6246, 32
  %v6418 = vpop.permute.xlu0 %6417
  %6419 = vrot.lane.b32.xlu0 %v6247, 32
  %v6420 = vpop.permute.xlu0 %6419
  %6421 = vrot.lane.b32.xlu0 %v6248, 32
  %v6422 = vpop.permute.xlu0 %6421
  %6423 = vrot.lane.b32.xlu0 %v6249, 32
  %v6424 = vpop.permute.xlu0 %6423
  %6425 = vrot.lane.b32.xlu0 %v6250, 32
  %v6426 = vpop.permute.xlu0 %6425
  %6427 = vrot.lane.b32.xlu0 %v6251, 32
  %v6428 = vpop.permute.xlu0 %6427
  %6429 = vrot.lane.b32.xlu0 %v6252, 32
  %v6430 = vpop.permute.xlu0 %6429
  %6431 = vrot.lane.b32.xlu0 %v6253, 32
  %v6432 = vpop.permute.xlu0 %6431
  %6433 = vrot.lane.b32.xlu0 %v6254, 32
  %v6434 = vpop.permute.xlu0 %6433
  %6435 = vrot.lane.b32.xlu0 %v6255, 32
  %v6436 = vpop.permute.xlu0 %6435
  %6437 = vrot.lane.b32.xlu0 %v6256, 32
  %v6438 = vpop.permute.xlu0 %6437
  %6439 = vrot.lane.b32.xlu0 %v6257, 32
  %v6440 = vpop.permute.xlu0 %6439
  %6441 = vrot.lane.b32.xlu0 %v6258, 32
  %v6442 = vpop.permute.xlu0 %6441
  %6443 = vrot.lane.b32.xlu0 %v6259, 32
  %v6444 = vpop.permute.xlu0 %6443
  %6445 = vrot.lane.b32.xlu0 %v6260, 32
  %v6446 = vpop.permute.xlu0 %6445
  %6447 = vrot.lane.b32.xlu0 %v6261, 32
  %v6448 = vpop.permute.xlu0 %6447
  %6449 = vrot.lane.b32.xlu0 %v6262, 32
  %v6450 = vpop.permute.xlu0 %6449
  %6451 = vrot.lane.b32.xlu0 %v6263, 32
  %v6452 = vpop.permute.xlu0 %6451
  %6453 = vrot.lane.b32.xlu0 %v6264, 32
  %v6454 = vpop.permute.xlu0 %6453
  %6455 = vrot.lane.b32.xlu0 %v6265, 32
  %v6456 = vpop.permute.xlu0 %6455
  %6457 = vrot.lane.b32.xlu0 %v6266, 32
  %v6458 = vpop.permute.xlu0 %6457
  %vm6523 = vcmask 294144
  %6524 = vst.msk [vmem:[#allocation2] sm:$0xff] %vm6523, %v6332
  %6525 = vst.msk [vmem:[#allocation2 + $0x8] sm:$0xff] %vm6523, %v6334
  %6526 = vst.msk [vmem:[#allocation2 + $0x10] sm:$0xff] %vm6523, %v6336
  %6527 = vst.msk [vmem:[#allocation2 + $0x18] sm:$0xff] %vm6523, %v6338
  %6528 = vst.msk [vmem:[#allocation2 + $0x20] sm:$0xff] %vm6523, %v6340
  %6529 = vst.msk [vmem:[#allocation2 + $0x28] sm:$0xff] %vm6523, %v6342
  %6530 = vst.msk [vmem:[#allocation2 + $0x30] sm:$0xff] %vm6523, %v6344
  %6531 = vst.msk [vmem:[#allocation2 + $0x38] sm:$0xff] %vm6523, %v6346
  %6532 = vst.msk [vmem:[#allocation2 + $0x40] sm:$0xff] %vm6523, %v6348
  %6533 = vst.msk [vmem:[#allocation2 + $0x48] sm:$0xff] %vm6523, %v6350
  %6534 = vst.msk [vmem:[#allocation2 + $0x50] sm:$0xff] %vm6523, %v6352
  %6535 = vst.msk [vmem:[#allocation2 + $0x58] sm:$0xff] %vm6523, %v6354
  %6536 = vst.msk [vmem:[#allocation2 + $0x60] sm:$0xff] %vm6523, %v6356
  %6537 = vst.msk [vmem:[#allocation2 + $0x68] sm:$0xff] %vm6523, %v6358
  %6538 = vst.msk [vmem:[#allocation2 + $0x70] sm:$0xff] %vm6523, %v6360
  %6539 = vst.msk [vmem:[#allocation2 + $0x78] sm:$0xff] %vm6523, %v6362
  %6540 = vst.msk [vmem:[#allocation2 + $0x80] sm:$0xff] %vm6523, %v6364
  %6541 = vst.msk [vmem:[#allocation2 + $0x88] sm:$0xff] %vm6523, %v6366
  %6542 = vst.msk [vmem:[#allocation2 + $0x90] sm:$0xff] %vm6523, %v6368
  %6543 = vst.msk [vmem:[#allocation2 + $0x98] sm:$0xff] %vm6523, %v6370
  %6544 = vst.msk [vmem:[#allocation2 + $0xa0] sm:$0xff] %vm6523, %v6372
  %6545 = vst.msk [vmem:[#allocation2 + $0xa8] sm:$0xff] %vm6523, %v6374
  %6546 = vst.msk [vmem:[#allocation2 + $0xb0] sm:$0xff] %vm6523, %v6376
  %6547 = vst.msk [vmem:[#allocation2 + $0xb8] sm:$0xff] %vm6523, %v6378
  %6548 = vst.msk [vmem:[#allocation2 + $0xc0] sm:$0xff] %vm6523, %v6380
  %6549 = vst.msk [vmem:[#allocation2 + $0xc8] sm:$0xff] %vm6523, %v6382
  %6550 = vst.msk [vmem:[#allocation2 + $0xd0] sm:$0xff] %vm6523, %v6384
  %6551 = vst.msk [vmem:[#allocation2 + $0xd8] sm:$0xff] %vm6523, %v6386
  %6552 = vst.msk [vmem:[#allocation2 + $0xe0] sm:$0xff] %vm6523, %v6388
  %6553 = vst.msk [vmem:[#allocation2 + $0xe8] sm:$0xff] %vm6523, %v6390
  %6554 = vst.msk [vmem:[#allocation2 + $0xf0] sm:$0xff] %vm6523, %v6392
  %6555 = vst.msk [vmem:[#allocation2 + $0xf8] sm:$0xff] %vm6523, %v6394
  %6556 = vst.msk [vmem:[#allocation2 + $0x100] sm:$0xff] %vm6523, %v6396
  %6557 = vst.msk [vmem:[#allocation2 + $0x108] sm:$0xff] %vm6523, %v6398
  %6558 = vst.msk [vmem:[#allocation2 + $0x110] sm:$0xff] %vm6523, %v6400
  %6559 = vst.msk [vmem:[#allocation2 + $0x118] sm:$0xff] %vm6523, %v6402
  %6560 = vst.msk [vmem:[#allocation2 + $0x120] sm:$0xff] %vm6523, %v6404
  %6561 = vst.msk [vmem:[#allocation2 + $0x128] sm:$0xff] %vm6523, %v6406
  %6562 = vst.msk [vmem:[#allocation2 + $0x130] sm:$0xff] %vm6523, %v6408
  %6563 = vst.msk [vmem:[#allocation2 + $0x138] sm:$0xff] %vm6523, %v6410
  %6564 = vst.msk [vmem:[#allocation2 + $0x140] sm:$0xff] %vm6523, %v6412
  %6565 = vst.msk [vmem:[#allocation2 + $0x148] sm:$0xff] %vm6523, %v6414
  %6566 = vst.msk [vmem:[#allocation2 + $0x150] sm:$0xff] %vm6523, %v6416
  %6567 = vst.msk [vmem:[#allocation2 + $0x158] sm:$0xff] %vm6523, %v6418
  %6568 = vst.msk [vmem:[#allocation2 + $0x160] sm:$0xff] %vm6523, %v6420
  %6569 = vst.msk [vmem:[#allocation2 + $0x168] sm:$0xff] %vm6523, %v6422
  %6570 = vst.msk [vmem:[#allocation2 + $0x170] sm:$0xff] %vm6523, %v6424
  %6571 = vst.msk [vmem:[#allocation2 + $0x178] sm:$0xff] %vm6523, %v6426
  %6572 = vst.msk [vmem:[#allocation2 + $0x180] sm:$0xff] %vm6523, %v6428
  %6573 = vst.msk [vmem:[#allocation2 + $0x188] sm:$0xff] %vm6523, %v6430
  %6574 = vst.msk [vmem:[#allocation2 + $0x190] sm:$0xff] %vm6523, %v6432
  %6575 = vst.msk [vmem:[#allocation2 + $0x198] sm:$0xff] %vm6523, %v6434
  %6576 = vst.msk [vmem:[#allocation2 + $0x1a0] sm:$0xff] %vm6523, %v6436
  %6577 = vst.msk [vmem:[#allocation2 + $0x1a8] sm:$0xff] %vm6523, %v6438
  %6578 = vst.msk [vmem:[#allocation2 + $0x1b0] sm:$0xff] %vm6523, %v6440
  %6579 = vst.msk [vmem:[#allocation2 + $0x1b8] sm:$0xff] %vm6523, %v6442
  %6580 = vst.msk [vmem:[#allocation2 + $0x1c0] sm:$0xff] %vm6523, %v6444
  %6581 = vst.msk [vmem:[#allocation2 + $0x1c8] sm:$0xff] %vm6523, %v6446
  %6582 = vst.msk [vmem:[#allocation2 + $0x1d0] sm:$0xff] %vm6523, %v6448
  %6583 = vst.msk [vmem:[#allocation2 + $0x1d8] sm:$0xff] %vm6523, %v6450
  %6584 = vst.msk [vmem:[#allocation2 + $0x1e0] sm:$0xff] %vm6523, %v6452
  %6585 = vst.msk [vmem:[#allocation2 + $0x1e8] sm:$0xff] %vm6523, %v6454
  %6586 = vst.msk [vmem:[#allocation2 + $0x1f0] sm:$0xff] %vm6523, %v6456
  %6587 = vst.msk [vmem:[#allocation2 + $0x1f8] sm:$0xff] %vm6523, %v6458
  %v6588 = vld [vmem:[#allocation2] sm:$0xff]
  %v6589 = vld [vmem:[#allocation2 + $0x8] sm:$0xff]
  %v6590 = vld [vmem:[#allocation2 + $0x10] sm:$0xff]
  %v6591 = vld [vmem:[#allocation2 + $0x18] sm:$0xff]
  %v6592 = vld [vmem:[#allocation2 + $0x20] sm:$0xff]
  %v6593 = vld [vmem:[#allocation2 + $0x28] sm:$0xff]
  %v6594 = vld [vmem:[#allocation2 + $0x30] sm:$0xff]
  %v6595 = vld [vmem:[#allocation2 + $0x38] sm:$0xff]
  %v6596 = vld [vmem:[#allocation2 + $0x40] sm:$0xff]
  %v6597 = vld [vmem:[#allocation2 + $0x48] sm:$0xff]
  %v6598 = vld [vmem:[#allocation2 + $0x50] sm:$0xff]
  %v6599 = vld [vmem:[#allocation2 + $0x58] sm:$0xff]
  %v6600 = vld [vmem:[#allocation2 + $0x60] sm:$0xff]
  %v6601 = vld [vmem:[#allocation2 + $0x68] sm:$0xff]
  %v6602 = vld [vmem:[#allocation2 + $0x70] sm:$0xff]
  %v6603 = vld [vmem:[#allocation2 + $0x78] sm:$0xff]
  %v6604 = vld [vmem:[#allocation2 + $0x80] sm:$0xff]
  %v6605 = vld [vmem:[#allocation2 + $0x88] sm:$0xff]
  %v6606 = vld [vmem:[#allocation2 + $0x90] sm:$0xff]
  %v6607 = vld [vmem:[#allocation2 + $0x98] sm:$0xff]
  %v6608 = vld [vmem:[#allocation2 + $0xa0] sm:$0xff]
  %v6609 = vld [vmem:[#allocation2 + $0xa8] sm:$0xff]
  %v6610 = vld [vmem:[#allocation2 + $0xb0] sm:$0xff]
  %v6611 = vld [vmem:[#allocation2 + $0xb8] sm:$0xff]
  %v6612 = vld [vmem:[#allocation2 + $0xc0] sm:$0xff]
  %v6613 = vld [vmem:[#allocation2 + $0xc8] sm:$0xff]
  %v6614 = vld [vmem:[#allocation2 + $0xd0] sm:$0xff]
  %v6615 = vld [vmem:[#allocation2 + $0xd8] sm:$0xff]
  %v6616 = vld [vmem:[#allocation2 + $0xe0] sm:$0xff]
  %v6617 = vld [vmem:[#allocation2 + $0xe8] sm:$0xff]
  %v6618 = vld [vmem:[#allocation2 + $0xf0] sm:$0xff]
  %v6619 = vld [vmem:[#allocation2 + $0xf8] sm:$0xff]
  %v6620 = vld [vmem:[#allocation2 + $0x100] sm:$0xff]
  %v6621 = vld [vmem:[#allocation2 + $0x108] sm:$0xff]
  %v6622 = vld [vmem:[#allocation2 + $0x110] sm:$0xff]
  %v6623 = vld [vmem:[#allocation2 + $0x118] sm:$0xff]
  %v6624 = vld [vmem:[#allocation2 + $0x120] sm:$0xff]
  %v6625 = vld [vmem:[#allocation2 + $0x128] sm:$0xff]
  %v6626 = vld [vmem:[#allocation2 + $0x130] sm:$0xff]
  %v6627 = vld [vmem:[#allocation2 + $0x138] sm:$0xff]
  %v6628 = vld [vmem:[#allocation2 + $0x140] sm:$0xff]
  %v6629 = vld [vmem:[#allocation2 + $0x148] sm:$0xff]
  %v6630 = vld [vmem:[#allocation2 + $0x150] sm:$0xff]
  %v6631 = vld [vmem:[#allocation2 + $0x158] sm:$0xff]
  %v6632 = vld [vmem:[#allocation2 + $0x160] sm:$0xff]
  %v6633 = vld [vmem:[#allocation2 + $0x168] sm:$0xff]
  %v6634 = vld [vmem:[#allocation2 + $0x170] sm:$0xff]
  %v6635 = vld [vmem:[#allocation2 + $0x178] sm:$0xff]
  %v6636 = vld [vmem:[#allocation2 + $0x180] sm:$0xff]
  %v6637 = vld [vmem:[#allocation2 + $0x188] sm:$0xff]
  %v6638 = vld [vmem:[#allocation2 + $0x190] sm:$0xff]
  %v6639 = vld [vmem:[#allocation2 + $0x198] sm:$0xff]
  %v6640 = vld [vmem:[#allocation2 + $0x1a0] sm:$0xff]
  %v6641 = vld [vmem:[#allocation2 + $0x1a8] sm:$0xff]
  %v6642 = vld [vmem:[#allocation2 + $0x1b0] sm:$0xff]
  %v6643 = vld [vmem:[#allocation2 + $0x1b8] sm:$0xff]
  %v6644 = vld [vmem:[#allocation2 + $0x1c0] sm:$0xff]
  %v6645 = vld [vmem:[#allocation2 + $0x1c8] sm:$0xff]
  %v6646 = vld [vmem:[#allocation2 + $0x1d0] sm:$0xff]
  %v6647 = vld [vmem:[#allocation2 + $0x1d8] sm:$0xff]
  %v6648 = vld [vmem:[#allocation2 + $0x1e0] sm:$0xff]
  %v6649 = vld [vmem:[#allocation2 + $0x1e8] sm:$0xff]
  %v6650 = vld [vmem:[#allocation2 + $0x1f0] sm:$0xff]
  %v6651 = vld [vmem:[#allocation2 + $0x1f8] sm:$0xff]
  %v6652 = vld [vmem:[%s4] sm:$0xff]
  %v6653 = vld [vmem:[%s4 + $0x8] sm:$0xff]
  %v6654 = vld [vmem:[%s4 + $0x10] sm:$0xff]
  %v6655 = vld [vmem:[%s4 + $0x18] sm:$0xff]
  %v6656 = vld [vmem:[%s4 + $0x20] sm:$0xf]
  %vm6657 = vcmask 293888
  %v6659 = vsel %vm6657, %v6588, 0
  %v6662 = vsel %vm6657, %v6589, 0
  %v6665 = vsel %vm6657, %v6590, 0
  %v6668 = vsel %vm6657, %v6591, 0
  %v6671 = vsel %vm6657, %v6592, 0
  %v6674 = vsel %vm6657, %v6593, 0
  %v6677 = vsel %vm6657, %v6594, 0
  %v6680 = vsel %vm6657, %v6595, 0
  %v6683 = vsel %vm6657, %v6596, 0
  %v6686 = vsel %vm6657, %v6597, 0
  %v6689 = vsel %vm6657, %v6598, 0
  %v6692 = vsel %vm6657, %v6599, 0
  %v6695 = vsel %vm6657, %v6600, 0
  %v6698 = vsel %vm6657, %v6601, 0
  %v6701 = vsel %vm6657, %v6602, 0
  %v6704 = vsel %vm6657, %v6603, 0
  %v6707 = vsel %vm6657, %v6604, 0
  %v6710 = vsel %vm6657, %v6605, 0
  %v6713 = vsel %vm6657, %v6606, 0
  %v6716 = vsel %vm6657, %v6607, 0
  %v6719 = vsel %vm6657, %v6608, 0
  %v6722 = vsel %vm6657, %v6609, 0
  %v6725 = vsel %vm6657, %v6610, 0
  %v6728 = vsel %vm6657, %v6611, 0
  %v6731 = vsel %vm6657, %v6612, 0
  %v6734 = vsel %vm6657, %v6613, 0
  %v6737 = vsel %vm6657, %v6614, 0
  %v6740 = vsel %vm6657, %v6615, 0
  %v6743 = vsel %vm6657, %v6616, 0
  %v6746 = vsel %vm6657, %v6617, 0
  %v6749 = vsel %vm6657, %v6618, 0
  %v6752 = vsel %vm6657, %v6619, 0
  %v6755 = vsel %vm6657, %v6620, 0
  %v6758 = vsel %vm6657, %v6621, 0
  %v6761 = vsel %vm6657, %v6622, 0
  %v6764 = vsel %vm6657, %v6623, 0
  %v6767 = vsel %vm6657, %v6624, 0
  %v6770 = vsel %vm6657, %v6625, 0
  %v6773 = vsel %vm6657, %v6626, 0
  %v6776 = vsel %vm6657, %v6627, 0
  %v6779 = vsel %vm6657, %v6628, 0
  %v6782 = vsel %vm6657, %v6629, 0
  %v6785 = vsel %vm6657, %v6630, 0
  %v6788 = vsel %vm6657, %v6631, 0
  %v6791 = vsel %vm6657, %v6632, 0
  %v6794 = vsel %vm6657, %v6633, 0
  %v6797 = vsel %vm6657, %v6634, 0
  %v6800 = vsel %vm6657, %v6635, 0
  %v6803 = vsel %vm6657, %v6636, 0
  %v6806 = vsel %vm6657, %v6637, 0
  %v6809 = vsel %vm6657, %v6638, 0
  %v6812 = vsel %vm6657, %v6639, 0
  %v6815 = vsel %vm6657, %v6640, 0
  %v6818 = vsel %vm6657, %v6641, 0
  %v6821 = vsel %vm6657, %v6642, 0
  %v6824 = vsel %vm6657, %v6643, 0
  %v6827 = vsel %vm6657, %v6644, 0
  %v6830 = vsel %vm6657, %v6645, 0
  %v6833 = vsel %vm6657, %v6646, 0
  %v6836 = vsel %vm6657, %v6647, 0
  %v6839 = vsel %vm6657, %v6648, 0
  %v6842 = vsel %vm6657, %v6649, 0
  %v6845 = vsel %vm6657, %v6650, 0
  %v6848 = vsel %vm6657, %v6651, 0
  %vm6850 = vcmask 1043456
  %v6852 = vsel %vm6850, %v6656, 0
  %6854 = vmatprep.subr.mxu0 0.0
  %6855 = vmatpush1.msra.mxu0 %v6652
  %6856 = vmatprep.subr.mxu0 0.0
  %6857 = vmatpush1.msra.mxu0 %v6653
  %6858 = vmatprep.subr.mxu0 0.0
  %6859 = vmatpush1.msra.mxu0 %v6654
  %6860 = vmatprep.subr.mxu0 0.0
  %6861 = vmatpush1.msra.mxu0 %v6655
  %6862 = vmatprep.subr.mxu0 0.0
  %6863 = vmatpush1.msra.mxu0 %v6852
  %6864 = vmatprep.subr.mxu0 0.0
  %6865 = vmatpush1.msra.mxu0 0.0
  %6866 = vmatprep.subr.mxu0 0.0
  %6867 = vmatpush1.msra.mxu0 0.0
  %6868 = vmatprep.subr.mxu0 0.0
  %6869 = vmatpush1.msra.mxu0 0.0
  %6870 = vmatprep.subr.mxu0 0.0
  %6871 = vmatpush1.msra.mxu0 0.0
  %6872 = vmatprep.subr.mxu0 0.0
  %6873 = vmatpush1.msra.mxu0 0.0
  %6874 = vmatprep.subr.mxu0 0.0
  %6875 = vmatpush1.msra.mxu0 0.0
  %6876 = vmatprep.subr.mxu0 0.0
  %6877 = vmatpush1.msra.mxu0 0.0
  %6878 = vmatprep.subr.mxu0 0.0
  %6879 = vmatpush1.msra.mxu0 0.0
  %6880 = vmatprep.subr.mxu0 0.0
  %6881 = vmatpush1.msra.mxu0 0.0
  %6882 = vmatprep.subr.mxu0 0.0
  %6883 = vmatpush1.msra.mxu0 0.0
  %6884 = vmatprep.subr.mxu0 0.0
  %6885 = vmatpush1.msra.mxu0 0.0
  %6886 = vmatprep.subr.mxu0 0.0
  %6887 = vmatpush1.msra.mxu0 0.0
  %6888 = vmatprep.subr.mxu0 0.0
  %6889 = vmatpush1.msra.mxu0 0.0
  %6890 = vmatprep.subr.mxu0 0.0
  %6891 = vmatpush1.msra.mxu0 0.0
  %6892 = vmatprep.subr.mxu0 0.0
  %6893 = vmatpush1.msra.mxu0 0.0
  %6894 = vmatprep.subr.mxu0 0.0
  %6895 = vmatpush1.msra.mxu0 0.0
  %6896 = vmatprep.subr.mxu0 0.0
  %6897 = vmatpush1.msra.mxu0 0.0
  %6898 = vmatprep.subr.mxu0 0.0
  %6899 = vmatpush1.msra.mxu0 0.0
  %6900 = vmatprep.subr.mxu0 0.0
  %6901 = vmatpush1.msra.mxu0 0.0
  %6902 = vmatprep.subr.mxu0 0.0
  %6903 = vmatpush1.msra.mxu0 0.0
  %6904 = vmatprep.subr.mxu0 0.0
  %6905 = vmatpush1.msra.mxu0 0.0
  %6906 = vmatprep.subr.mxu0 0.0
  %6907 = vmatpush1.msra.mxu0 0.0
  %6908 = vmatprep.subr.mxu0 0.0
  %6909 = vmatpush1.msra.mxu0 0.0
  %6910 = vmatprep.subr.mxu0 0.0
  %6911 = vmatpush1.msra.mxu0 0.0
  %6912 = vmatprep.subr.mxu0 0.0
  %6913 = vmatpush1.msra.mxu0 0.0
  %6914 = vmatprep.subr.mxu0 0.0
  %6915 = vmatpush1.msra.mxu0 0.0
  %6916 = vmatprep.subr.mxu0 0.0
  %6917 = vmatpush1.msra.mxu0 0.0
  %6918 = vmatprep.mubr.f32.mxu0 0.0
  %6919 = vmatmul.mubr.f32.gmra.mrb[0].mxu0 %v6659
  %v6920 = vpop.f32.mrb[0].mxu0
  %v6921 = vadd.f32 0.0, %v6920
  %v6922 = vpop.f32.mrb[0].mxu0
  %6923 = vmatprep.mubr.f32.mxu0 0.0
  %6924 = vmatmul.mubr.f32.gmra.mrb[0].mxu0 %v6662
  %v6925 = vpop.f32.mrb[0].mxu0
  %v6926 = vadd.f32 0.0, %v6925
  %v6927 = vpop.f32.mrb[0].mxu0
  %6928 = vmatprep.mubr.f32.mxu0 0.0
  %6929 = vmatmul.mubr.f32.gmra.mrb[0].mxu0 %v6665
  %v6930 = vpop.f32.mrb[0].mxu0
  %v6931 = vadd.f32 0.0, %v6930
  %v6932 = vpop.f32.mrb[0].mxu0
  %6933 = vmatprep.mubr.f32.mxu0 0.0
  %6934 = vmatmul.mubr.f32.gmra.mrb[0].mxu0 %v6668
  %v6935 = vpop.f32.mrb[0].mxu0
  %v6936 = vadd.f32 0.0, %v6935
  %v6937 = vpop.f32.mrb[0].mxu0
  %6938 = vmatprep.mubr.f32.mxu0 0.0
  %6939 = vmatmul.mubr.f32.gmra.mrb[0].mxu0 %v6671
  %v6940 = vpop.f32.mrb[0].mxu0
  %v6941 = vadd.f32 0.0, %v6940
  %v6942 = vpop.f32.mrb[0].mxu0
  %6943 = vmatprep.mubr.f32.mxu0 0.0
  %6944 = vmatmul.mubr.f32.gmra.mrb[0].mxu0 %v6674
  %v6945 = vpop.f32.mrb[0].mxu0
  %v6946 = vadd.f32 0.0, %v6945
  %v6947 = vpop.f32.mrb[0].mxu0
  %6948 = vmatprep.mubr.f32.mxu0 0.0
  %6949 = vmatmul.mubr.f32.gmra.mrb[0].mxu0 %v6677
  %v6950 = vpop.f32.mrb[0].mxu0
  %v6951 = vadd.f32 0.0, %v6950
  %v6952 = vpop.f32.mrb[0].mxu0
  %6953 = vmatprep.mubr.f32.mxu0 0.0
  %6954 = vmatmul.mubr.f32.gmra.mrb[0].mxu0 %v6680
  %v6955 = vpop.f32.mrb[0].mxu0
  %v6956 = vadd.f32 0.0, %v6955
  %v6957 = vpop.f32.mrb[0].mxu0
  %6958 = vmatprep.mubr.f32.mxu0 0.0
  %6959 = vmatmul.mubr.f32.gmra.mrb[0].mxu0 %v6683
  %v6960 = vpop.f32.mrb[0].mxu0
  %v6961 = vadd.f32 0.0, %v6960
  %v6962 = vpop.f32.mrb[0].mxu0
  %6963 = vmatprep.mubr.f32.mxu0 0.0
  %6964 = vmatmul.mubr.f32.gmra.mrb[0].mxu0 %v6686
  %v6965 = vpop.f32.mrb[0].mxu0
  %v6966 = vadd.f32 0.0, %v6965
  %v6967 = vpop.f32.mrb[0].mxu0
  %6968 = vmatprep.mubr.f32.mxu0 0.0
  %6969 = vmatmul.mubr.f32.gmra.mrb[0].mxu0 %v6689
  %v6970 = vpop.f32.mrb[0].mxu0
  %v6971 = vadd.f32 0.0, %v6970
  %v6972 = vpop.f32.mrb[0].mxu0
  %6973 = vmatprep.mubr.f32.mxu0 0.0
  %6974 = vmatmul.mubr.f32.gmra.mrb[0].mxu0 %v6692
  %v6975 = vpop.f32.mrb[0].mxu0
  %v6976 = vadd.f32 0.0, %v6975
  %v6977 = vpop.f32.mrb[0].mxu0
  %6978 = vmatprep.mubr.f32.mxu0 0.0
  %6979 = vmatmul.mubr.f32.gmra.mrb[0].mxu0 %v6695
  %v6980 = vpop.f32.mrb[0].mxu0
  %v6981 = vadd.f32 0.0, %v6980
  %v6982 = vpop.f32.mrb[0].mxu0
  %6983 = vmatprep.mubr.f32.mxu0 0.0
  %6984 = vmatmul.mubr.f32.gmra.mrb[0].mxu0 %v6698
  %v6985 = vpop.f32.mrb[0].mxu0
  %v6986 = vadd.f32 0.0, %v6985
  %v6987 = vpop.f32.mrb[0].mxu0
  %6988 = vmatprep.mubr.f32.mxu0 0.0
  %6989 = vmatmul.mubr.f32.gmra.mrb[0].mxu0 %v6701
  %v6990 = vpop.f32.mrb[0].mxu0
  %v6991 = vadd.f32 0.0, %v6990
  %v6992 = vpop.f32.mrb[0].mxu0
  %6993 = vmatprep.mubr.f32.mxu0 0.0
  %6994 = vmatmul.mubr.f32.gmra.mrb[0].mxu0 %v6704
  %v6995 = vpop.f32.mrb[0].mxu0
  %v6996 = vadd.f32 0.0, %v6995
  %v6997 = vpop.f32.mrb[0].mxu0
  %6998 = vmatprep.mubr.f32.mxu0 0.0
  %6999 = vmatmul.mubr.f32.gmra.mrb[0].mxu0 %v6707
  %v7000 = vpop.f32.mrb[0].mxu0
  %v7001 = vadd.f32 0.0, %v7000
  %v7002 = vpop.f32.mrb[0].mxu0
  %7003 = vmatprep.mubr.f32.mxu0 0.0
  %7004 = vmatmul.mubr.f32.gmra.mrb[0].mxu0 %v6710
  %v7005 = vpop.f32.mrb[0].mxu0
  %v7006 = vadd.f32 0.0, %v7005
  %v7007 = vpop.f32.mrb[0].mxu0
  %7008 = vmatprep.mubr.f32.mxu0 0.0
  %7009 = vmatmul.mubr.f32.gmra.mrb[0].mxu0 %v6713
  %v7010 = vpop.f32.mrb[0].mxu0
  %v7011 = vadd.f32 0.0, %v7010
  %v7012 = vpop.f32.mrb[0].mxu0
  %7013 = vmatprep.mubr.f32.mxu0 0.0
  %7014 = vmatmul.mubr.f32.gmra.mrb[0].mxu0 %v6716
  %v7015 = vpop.f32.mrb[0].mxu0
  %v7016 = vadd.f32 0.0, %v7015
  %v7017 = vpop.f32.mrb[0].mxu0
  %7018 = vmatprep.mubr.f32.mxu0 0.0
  %7019 = vmatmul.mubr.f32.gmra.mrb[0].mxu0 %v6719
  %v7020 = vpop.f32.mrb[0].mxu0
  %v7021 = vadd.f32 0.0, %v7020
  %v7022 = vpop.f32.mrb[0].mxu0
  %7023 = vmatprep.mubr.f32.mxu0 0.0
  %7024 = vmatmul.mubr.f32.gmra.mrb[0].mxu0 %v6722
  %v7025 = vpop.f32.mrb[0].mxu0
  %v7026 = vadd.f32 0.0, %v7025
  %v7027 = vpop.f32.mrb[0].mxu0
  %7028 = vmatprep.mubr.f32.mxu0 0.0
  %7029 = vmatmul.mubr.f32.gmra.mrb[0].mxu0 %v6725
  %v7030 = vpop.f32.mrb[0].mxu0
  %v7031 = vadd.f32 0.0, %v7030
  %v7032 = vpop.f32.mrb[0].mxu0
  %7033 = vmatprep.mubr.f32.mxu0 0.0
  %7034 = vmatmul.mubr.f32.gmra.mrb[0].mxu0 %v6728
  %v7035 = vpop.f32.mrb[0].mxu0
  %v7036 = vadd.f32 0.0, %v7035
  %v7037 = vpop.f32.mrb[0].mxu0
  %7038 = vmatprep.mubr.f32.mxu0 0.0
  %7039 = vmatmul.mubr.f32.gmra.mrb[0].mxu0 %v6731
  %v7040 = vpop.f32.mrb[0].mxu0
  %v7041 = vadd.f32 0.0, %v7040
  %v7042 = vpop.f32.mrb[0].mxu0
  %7043 = vmatprep.mubr.f32.mxu0 0.0
  %7044 = vmatmul.mubr.f32.gmra.mrb[0].mxu0 %v6734
  %v7045 = vpop.f32.mrb[0].mxu0
  %v7046 = vadd.f32 0.0, %v7045
  %v7047 = vpop.f32.mrb[0].mxu0
  %7048 = vmatprep.mubr.f32.mxu0 0.0
  %7049 = vmatmul.mubr.f32.gmra.mrb[0].mxu0 %v6737
  %v7050 = vpop.f32.mrb[0].mxu0
  %v7051 = vadd.f32 0.0, %v7050
  %v7052 = vpop.f32.mrb[0].mxu0
  %7053 = vmatprep.mubr.f32.mxu0 0.0
  %7054 = vmatmul.mubr.f32.gmra.mrb[0].mxu0 %v6740
  %v7055 = vpop.f32.mrb[0].mxu0
  %v7056 = vadd.f32 0.0, %v7055
  %v7057 = vpop.f32.mrb[0].mxu0
  %7058 = vmatprep.mubr.f32.mxu0 0.0
  %7059 = vmatmul.mubr.f32.gmra.mrb[0].mxu0 %v6743
  %v7060 = vpop.f32.mrb[0].mxu0
  %v7061 = vadd.f32 0.0, %v7060
  %v7062 = vpop.f32.mrb[0].mxu0
  %7063 = vmatprep.mubr.f32.mxu0 0.0
  %7064 = vmatmul.mubr.f32.gmra.mrb[0].mxu0 %v6746
  %v7065 = vpop.f32.mrb[0].mxu0
  %v7066 = vadd.f32 0.0, %v7065
  %v7067 = vpop.f32.mrb[0].mxu0
  %7068 = vmatprep.mubr.f32.mxu0 0.0
  %7069 = vmatmul.mubr.f32.gmra.mrb[0].mxu0 %v6749
  %v7070 = vpop.f32.mrb[0].mxu0
  %v7071 = vadd.f32 0.0, %v7070
  %v7072 = vpop.f32.mrb[0].mxu0
  %7073 = vmatprep.mubr.f32.mxu0 0.0
  %7074 = vmatmul.mubr.f32.gmra.mrb[0].mxu0 %v6752
  %v7075 = vpop.f32.mrb[0].mxu0
  %v7076 = vadd.f32 0.0, %v7075
  %v7077 = vpop.f32.mrb[0].mxu0
  %7078 = vmatprep.mubr.f32.mxu0 0.0
  %7079 = vmatmul.mubr.f32.gmra.mrb[0].mxu0 %v6755
  %v7080 = vpop.f32.mrb[0].mxu0
  %v7081 = vadd.f32 0.0, %v7080
  %v7082 = vpop.f32.mrb[0].mxu0
  %7083 = vmatprep.mubr.f32.mxu0 0.0
  %7084 = vmatmul.mubr.f32.gmra.mrb[0].mxu0 %v6758
  %v7085 = vpop.f32.mrb[0].mxu0
  %v7086 = vadd.f32 0.0, %v7085
  %v7087 = vpop.f32.mrb[0].mxu0
  %7088 = vmatprep.mubr.f32.mxu0 0.0
  %7089 = vmatmul.mubr.f32.gmra.mrb[0].mxu0 %v6761
  %v7090 = vpop.f32.mrb[0].mxu0
  %v7091 = vadd.f32 0.0, %v7090
  %v7092 = vpop.f32.mrb[0].mxu0
  %7093 = vmatprep.mubr.f32.mxu0 0.0
  %7094 = vmatmul.mubr.f32.gmra.mrb[0].mxu0 %v6764
  %v7095 = vpop.f32.mrb[0].mxu0
  %v7096 = vadd.f32 0.0, %v7095
  %v7097 = vpop.f32.mrb[0].mxu0
  %7098 = vmatprep.mubr.f32.mxu0 0.0
  %7099 = vmatmul.mubr.f32.gmra.mrb[0].mxu0 %v6767
  %v7100 = vpop.f32.mrb[0].mxu0
  %v7101 = vadd.f32 0.0, %v7100
  %v7102 = vpop.f32.mrb[0].mxu0
  %7103 = vmatprep.mubr.f32.mxu0 0.0
  %7104 = vmatmul.mubr.f32.gmra.mrb[0].mxu0 %v6770
  %v7105 = vpop.f32.mrb[0].mxu0
  %v7106 = vadd.f32 0.0, %v7105
  %v7107 = vpop.f32.mrb[0].mxu0
  %7108 = vmatprep.mubr.f32.mxu0 0.0
  %7109 = vmatmul.mubr.f32.gmra.mrb[0].mxu0 %v6773
  %v7110 = vpop.f32.mrb[0].mxu0
  %v7111 = vadd.f32 0.0, %v7110
  %v7112 = vpop.f32.mrb[0].mxu0
  %7113 = vmatprep.mubr.f32.mxu0 0.0
  %7114 = vmatmul.mubr.f32.gmra.mrb[0].mxu0 %v6776
  %v7115 = vpop.f32.mrb[0].mxu0
  %v7116 = vadd.f32 0.0, %v7115
  %v7117 = vpop.f32.mrb[0].mxu0
  %7118 = vmatprep.mubr.f32.mxu0 0.0
  %7119 = vmatmul.mubr.f32.gmra.mrb[0].mxu0 %v6779
  %v7120 = vpop.f32.mrb[0].mxu0
  %v7121 = vadd.f32 0.0, %v7120
  %v7122 = vpop.f32.mrb[0].mxu0
  %7123 = vmatprep.mubr.f32.mxu0 0.0
  %7124 = vmatmul.mubr.f32.gmra.mrb[0].mxu0 %v6782
  %v7125 = vpop.f32.mrb[0].mxu0
  %v7126 = vadd.f32 0.0, %v7125
  %v7127 = vpop.f32.mrb[0].mxu0
  %7128 = vmatprep.mubr.f32.mxu0 0.0
  %7129 = vmatmul.mubr.f32.gmra.mrb[0].mxu0 %v6785
  %v7130 = vpop.f32.mrb[0].mxu0
  %v7131 = vadd.f32 0.0, %v7130
  %v7132 = vpop.f32.mrb[0].mxu0
  %7133 = vmatprep.mubr.f32.mxu0 0.0
  %7134 = vmatmul.mubr.f32.gmra.mrb[0].mxu0 %v6788
  %v7135 = vpop.f32.mrb[0].mxu0
  %v7136 = vadd.f32 0.0, %v7135
  %v7137 = vpop.f32.mrb[0].mxu0
  %7138 = vmatprep.mubr.f32.mxu0 0.0
  %7139 = vmatmul.mubr.f32.gmra.mrb[0].mxu0 %v6791
  %v7140 = vpop.f32.mrb[0].mxu0
  %v7141 = vadd.f32 0.0, %v7140
  %v7142 = vpop.f32.mrb[0].mxu0
  %7143 = vmatprep.mubr.f32.mxu0 0.0
  %7144 = vmatmul.mubr.f32.gmra.mrb[0].mxu0 %v6794
  %v7145 = vpop.f32.mrb[0].mxu0
  %v7146 = vadd.f32 0.0, %v7145
  %v7147 = vpop.f32.mrb[0].mxu0
  %7148 = vmatprep.mubr.f32.mxu0 0.0
  %7149 = vmatmul.mubr.f32.gmra.mrb[0].mxu0 %v6797
  %v7150 = vpop.f32.mrb[0].mxu0
  %v7151 = vadd.f32 0.0, %v7150
  %v7152 = vpop.f32.mrb[0].mxu0
  %7153 = vmatprep.mubr.f32.mxu0 0.0
  %7154 = vmatmul.mubr.f32.gmra.mrb[0].mxu0 %v6800
  %v7155 = vpop.f32.mrb[0].mxu0
  %v7156 = vadd.f32 0.0, %v7155
  %v7157 = vpop.f32.mrb[0].mxu0
  %7158 = vmatprep.mubr.f32.mxu0 0.0
  %7159 = vmatmul.mubr.f32.gmra.mrb[0].mxu0 %v6803
  %v7160 = vpop.f32.mrb[0].mxu0
  %v7161 = vadd.f32 0.0, %v7160
  %v7162 = vpop.f32.mrb[0].mxu0
  %7163 = vmatprep.mubr.f32.mxu0 0.0
  %7164 = vmatmul.mubr.f32.gmra.mrb[0].mxu0 %v6806
  %v7165 = vpop.f32.mrb[0].mxu0
  %v7166 = vadd.f32 0.0, %v7165
  %v7167 = vpop.f32.mrb[0].mxu0
  %7168 = vmatprep.mubr.f32.mxu0 0.0
  %7169 = vmatmul.mubr.f32.gmra.mrb[0].mxu0 %v6809
  %v7170 = vpop.f32.mrb[0].mxu0
  %v7171 = vadd.f32 0.0, %v7170
  %v7172 = vpop.f32.mrb[0].mxu0
  %7173 = vmatprep.mubr.f32.mxu0 0.0
  %7174 = vmatmul.mubr.f32.gmra.mrb[0].mxu0 %v6812
  %v7175 = vpop.f32.mrb[0].mxu0
  %v7176 = vadd.f32 0.0, %v7175
  %v7177 = vpop.f32.mrb[0].mxu0
  %7178 = vmatprep.mubr.f32.mxu0 0.0
  %7179 = vmatmul.mubr.f32.gmra.mrb[0].mxu0 %v6815
  %v7180 = vpop.f32.mrb[0].mxu0
  %v7181 = vadd.f32 0.0, %v7180
  %v7182 = vpop.f32.mrb[0].mxu0
  %7183 = vmatprep.mubr.f32.mxu0 0.0
  %7184 = vmatmul.mubr.f32.gmra.mrb[0].mxu0 %v6818
  %v7185 = vpop.f32.mrb[0].mxu0
  %v7186 = vadd.f32 0.0, %v7185
  %v7187 = vpop.f32.mrb[0].mxu0
  %7188 = vmatprep.mubr.f32.mxu0 0.0
  %7189 = vmatmul.mubr.f32.gmra.mrb[0].mxu0 %v6821
  %v7190 = vpop.f32.mrb[0].mxu0
  %v7191 = vadd.f32 0.0, %v7190
  %v7192 = vpop.f32.mrb[0].mxu0
  %7193 = vmatprep.mubr.f32.mxu0 0.0
  %7194 = vmatmul.mubr.f32.gmra.mrb[0].mxu0 %v6824
  %v7195 = vpop.f32.mrb[0].mxu0
  %v7196 = vadd.f32 0.0, %v7195
  %v7197 = vpop.f32.mrb[0].mxu0
  %7198 = vmatprep.mubr.f32.mxu0 0.0
  %7199 = vmatmul.mubr.f32.gmra.mrb[0].mxu0 %v6827
  %v7200 = vpop.f32.mrb[0].mxu0
  %v7201 = vadd.f32 0.0, %v7200
  %v7202 = vpop.f32.mrb[0].mxu0
  %7203 = vmatprep.mubr.f32.mxu0 0.0
  %7204 = vmatmul.mubr.f32.gmra.mrb[0].mxu0 %v6830
  %v7205 = vpop.f32.mrb[0].mxu0
  %v7206 = vadd.f32 0.0, %v7205
  %v7207 = vpop.f32.mrb[0].mxu0
  %7208 = vmatprep.mubr.f32.mxu0 0.0
  %7209 = vmatmul.mubr.f32.gmra.mrb[0].mxu0 %v6833
  %v7210 = vpop.f32.mrb[0].mxu0
  %v7211 = vadd.f32 0.0, %v7210
  %v7212 = vpop.f32.mrb[0].mxu0
  %7213 = vmatprep.mubr.f32.mxu0 0.0
  %7214 = vmatmul.mubr.f32.gmra.mrb[0].mxu0 %v6836
  %v7215 = vpop.f32.mrb[0].mxu0
  %v7216 = vadd.f32 0.0, %v7215
  %v7217 = vpop.f32.mrb[0].mxu0
  %7218 = vmatprep.mubr.f32.mxu0 0.0
  %7219 = vmatmul.mubr.f32.gmra.mrb[0].mxu0 %v6839
  %v7220 = vpop.f32.mrb[0].mxu0
  %v7221 = vadd.f32 0.0, %v7220
  %v7222 = vpop.f32.mrb[0].mxu0
  %7223 = vmatprep.mubr.f32.mxu0 0.0
  %7224 = vmatmul.mubr.f32.gmra.mrb[0].mxu0 %v6842
  %v7225 = vpop.f32.mrb[0].mxu0
  %v7226 = vadd.f32 0.0, %v7225
  %v7227 = vpop.f32.mrb[0].mxu0
  %7228 = vmatprep.mubr.f32.mxu0 0.0
  %7229 = vmatmul.mubr.f32.gmra.mrb[0].mxu0 %v6845
  %v7230 = vpop.f32.mrb[0].mxu0
  %v7231 = vadd.f32 0.0, %v7230
  %v7232 = vpop.f32.mrb[0].mxu0
  %7233 = vmatprep.mubr.f32.mxu0 0.0
  %7234 = vmatmul.mubr.f32.gmra.mrb[0].mxu0 %v6848
  %v7235 = vpop.f32.mrb[0].mxu0
  %v7236 = vadd.f32 0.0, %v7235
  %v7237 = vpop.f32.mrb[0].mxu0
  %7238 = vdwg.mxu0
  %v7239 = vrot.slane %v6921, 1
  %v7240 = vrot.slane %v6926, 1
  %v7241 = vrot.slane %v6931, 1
  %v7242 = vrot.slane %v6936, 1
  %v7243 = vrot.slane %v6941, 1
  %v7244 = vrot.slane %v6946, 1
  %v7245 = vrot.slane %v6951, 1
  %v7246 = vrot.slane %v6956, 1
  %v7247 = vrot.slane %v6961, 1
  %v7248 = vrot.slane %v6966, 1
  %v7249 = vrot.slane %v6971, 1
  %v7250 = vrot.slane %v6976, 1
  %v7251 = vrot.slane %v6981, 1
  %v7252 = vrot.slane %v6986, 1
  %v7253 = vrot.slane %v6991, 1
  %v7254 = vrot.slane %v6996, 1
  %v7255 = vrot.slane %v7001, 1
  %v7256 = vrot.slane %v7006, 1
  %v7257 = vrot.slane %v7011, 1
  %v7258 = vrot.slane %v7016, 1
  %v7259 = vrot.slane %v7021, 1
  %v7260 = vrot.slane %v7026, 1
  %v7261 = vrot.slane %v7031, 1
  %v7262 = vrot.slane %v7036, 1
  %v7263 = vrot.slane %v7041, 1
  %v7264 = vrot.slane %v7046, 1
  %v7265 = vrot.slane %v7051, 1
  %v7266 = vrot.slane %v7056, 1
  %v7267 = vrot.slane %v7061, 1
  %v7268 = vrot.slane %v7066, 1
  %v7269 = vrot.slane %v7071, 1
  %v7270 = vrot.slane %v7076, 1
  %v7271 = vrot.slane %v7081, 1
  %v7272 = vrot.slane %v7086, 1
  %v7273 = vrot.slane %v7091, 1
  %v7274 = vrot.slane %v7096, 1
  %v7275 = vrot.slane %v7101, 1
  %v7276 = vrot.slane %v7106, 1
  %v7277 = vrot.slane %v7111, 1
  %v7278 = vrot.slane %v7116, 1
  %v7279 = vrot.slane %v7121, 1
  %v7280 = vrot.slane %v7126, 1
  %v7281 = vrot.slane %v7131, 1
  %v7282 = vrot.slane %v7136, 1
  %v7283 = vrot.slane %v7141, 1
  %v7284 = vrot.slane %v7146, 1
  %v7285 = vrot.slane %v7151, 1
  %v7286 = vrot.slane %v7156, 1
  %v7287 = vrot.slane %v7161, 1
  %v7288 = vrot.slane %v7166, 1
  %v7289 = vrot.slane %v7171, 1
  %v7290 = vrot.slane %v7176, 1
  %v7291 = vrot.slane %v7181, 1
  %v7292 = vrot.slane %v7186, 1
  %v7293 = vrot.slane %v7191, 1
  %v7294 = vrot.slane %v7196, 1
  %v7295 = vrot.slane %v7201, 1
  %v7296 = vrot.slane %v7206, 1
  %v7297 = vrot.slane %v7211, 1
  %v7298 = vrot.slane %v7216, 1
  %v7299 = vrot.slane %v7221, 1
  %v7300 = vrot.slane %v7226, 1
  %v7301 = vrot.slane %v7231, 1
  %v7302 = vrot.slane %v7236, 1
  %v7303 = vsel %vm1588, %v7301, %v7302
  %v7304 = vsel %vm1588, %v7300, %v7301
  %v7305 = vsel %vm1588, %v7299, %v7300
  %v7306 = vsel %vm1588, %v7298, %v7299
  %v7307 = vsel %vm1588, %v7297, %v7298
  %v7308 = vsel %vm1588, %v7296, %v7297
  %v7309 = vsel %vm1588, %v7295, %v7296
  %v7310 = vsel %vm1588, %v7294, %v7295
  %v7311 = vsel %vm1588, %v7293, %v7294
  %v7312 = vsel %vm1588, %v7292, %v7293
  %v7313 = vsel %vm1588, %v7291, %v7292
  %v7314 = vsel %vm1588, %v7290, %v7291
  %v7315 = vsel %vm1588, %v7289, %v7290
  %v7316 = vsel %vm1588, %v7288, %v7289
  %v7317 = vsel %vm1588, %v7287, %v7288
  %v7318 = vsel %vm1588, %v7286, %v7287
  %v7319 = vsel %vm1588, %v7285, %v7286
  %v7320 = vsel %vm1588, %v7284, %v7285
  %v7321 = vsel %vm1588, %v7283, %v7284
  %v7322 = vsel %vm1588, %v7282, %v7283
  %v7323 = vsel %vm1588, %v7281, %v7282
  %v7324 = vsel %vm1588, %v7280, %v7281
  %v7325 = vsel %vm1588, %v7279, %v7280
  %v7326 = vsel %vm1588, %v7278, %v7279
  %v7327 = vsel %vm1588, %v7277, %v7278
  %v7328 = vsel %vm1588, %v7276, %v7277
  %v7329 = vsel %vm1588, %v7275, %v7276
  %v7330 = vsel %vm1588, %v7274, %v7275
  %v7331 = vsel %vm1588, %v7273, %v7274
  %v7332 = vsel %vm1588, %v7272, %v7273
  %v7333 = vsel %vm1588, %v7271, %v7272
  %v7334 = vsel %vm1588, %v7270, %v7271
  %v7335 = vsel %vm1588, %v7269, %v7270
  %v7336 = vsel %vm1588, %v7268, %v7269
  %v7337 = vsel %vm1588, %v7267, %v7268
  %v7338 = vsel %vm1588, %v7266, %v7267
  %v7339 = vsel %vm1588, %v7265, %v7266
  %v7340 = vsel %vm1588, %v7264, %v7265
  %v7341 = vsel %vm1588, %v7263, %v7264
  %v7342 = vsel %vm1588, %v7262, %v7263
  %v7343 = vsel %vm1588, %v7261, %v7262
  %v7344 = vsel %vm1588, %v7260, %v7261
  %v7345 = vsel %vm1588, %v7259, %v7260
  %v7346 = vsel %vm1588, %v7258, %v7259
  %v7347 = vsel %vm1588, %v7257, %v7258
  %v7348 = vsel %vm1588, %v7256, %v7257
  %v7349 = vsel %vm1588, %v7255, %v7256
  %v7350 = vsel %vm1588, %v7254, %v7255
  %v7351 = vsel %vm1588, %v7253, %v7254
  %v7352 = vsel %vm1588, %v7252, %v7253
  %v7353 = vsel %vm1588, %v7251, %v7252
  %v7354 = vsel %vm1588, %v7250, %v7251
  %v7355 = vsel %vm1588, %v7249, %v7250
  %v7356 = vsel %vm1588, %v7248, %v7249
  %v7357 = vsel %vm1588, %v7247, %v7248
  %v7358 = vsel %vm1588, %v7246, %v7247
  %v7359 = vsel %vm1588, %v7245, %v7246
  %v7360 = vsel %vm1588, %v7244, %v7245
  %v7361 = vsel %vm1588, %v7243, %v7244
  %v7362 = vsel %vm1588, %v7242, %v7243
  %v7363 = vsel %vm1588, %v7241, %v7242
  %v7364 = vsel %vm1588, %v7240, %v7241
  %v7365 = vsel %vm1588, %v7239, %v7240
  %v7366 = vsel %vm1588, %v7302, %v7239
  %v7367 = vmax.f32 %v6921, %v7365
  %v7368 = vmax.f32 %v6926, %v7364
  %v7369 = vmax.f32 %v6931, %v7363
  %v7370 = vmax.f32 %v6936, %v7362
  %v7371 = vmax.f32 %v6941, %v7361
  %v7372 = vmax.f32 %v6946, %v7360
  %v7373 = vmax.f32 %v6951, %v7359
  %v7374 = vmax.f32 %v6956, %v7358
  %v7375 = vmax.f32 %v6961, %v7357
  %v7376 = vmax.f32 %v6966, %v7356
  %v7377 = vmax.f32 %v6971, %v7355
  %v7378 = vmax.f32 %v6976, %v7354
  %v7379 = vmax.f32 %v6981, %v7353
  %v7380 = vmax.f32 %v6986, %v7352
  %v7381 = vmax.f32 %v6991, %v7351
  %v7382 = vmax.f32 %v6996, %v7350
  %v7383 = vmax.f32 %v7001, %v7349
  %v7384 = vmax.f32 %v7006, %v7348
  %v7385 = vmax.f32 %v7011, %v7347
  %v7386 = vmax.f32 %v7016, %v7346
  %v7387 = vmax.f32 %v7021, %v7345
  %v7388 = vmax.f32 %v7026, %v7344
  %v7389 = vmax.f32 %v7031, %v7343
  %v7390 = vmax.f32 %v7036, %v7342
  %v7391 = vmax.f32 %v7041, %v7341
  %v7392 = vmax.f32 %v7046, %v7340
  %v7393 = vmax.f32 %v7051, %v7339
  %v7394 = vmax.f32 %v7056, %v7338
  %v7395 = vmax.f32 %v7061, %v7337
  %v7396 = vmax.f32 %v7066, %v7336
  %v7397 = vmax.f32 %v7071, %v7335
  %v7398 = vmax.f32 %v7076, %v7334
  %v7399 = vmax.f32 %v7081, %v7333
  %v7400 = vmax.f32 %v7086, %v7332
  %v7401 = vmax.f32 %v7091, %v7331
  %v7402 = vmax.f32 %v7096, %v7330
  %v7403 = vmax.f32 %v7101, %v7329
  %v7404 = vmax.f32 %v7106, %v7328
  %v7405 = vmax.f32 %v7111, %v7327
  %v7406 = vmax.f32 %v7116, %v7326
  %v7407 = vmax.f32 %v7121, %v7325
  %v7408 = vmax.f32 %v7126, %v7324
  %v7409 = vmax.f32 %v7131, %v7323
  %v7410 = vmax.f32 %v7136, %v7322
  %v7411 = vmax.f32 %v7141, %v7321
  %v7412 = vmax.f32 %v7146, %v7320
  %v7413 = vmax.f32 %v7151, %v7319
  %v7414 = vmax.f32 %v7156, %v7318
  %v7415 = vmax.f32 %v7161, %v7317
  %v7416 = vmax.f32 %v7166, %v7316
  %v7417 = vmax.f32 %v7171, %v7315
  %v7418 = vmax.f32 %v7176, %v7314
  %v7419 = vmax.f32 %v7181, %v7313
  %v7420 = vmax.f32 %v7186, %v7312
  %v7421 = vmax.f32 %v7191, %v7311
  %v7422 = vmax.f32 %v7196, %v7310
  %v7423 = vmax.f32 %v7201, %v7309
  %v7424 = vmax.f32 %v7206, %v7308
  %v7425 = vmax.f32 %v7211, %v7307
  %v7426 = vmax.f32 %v7216, %v7306
  %v7427 = vmax.f32 %v7221, %v7305
  %v7428 = vmax.f32 %v7226, %v7304
  %v7429 = vmax.f32 %v7231, %v7303
  %v7430 = vmax.f32 %v7236, %v7366
  %v7431 = vmax.f32 %v7367, %v7369
  %v7432 = vmax.f32 %v7368, %v7370
  %v7433 = vmax.f32 %v7369, %v7371
  %v7434 = vmax.f32 %v7370, %v7372
  %v7435 = vmax.f32 %v7371, %v7373
  %v7436 = vmax.f32 %v7372, %v7374
  %v7437 = vmax.f32 %v7373, %v7375
  %v7438 = vmax.f32 %v7374, %v7376
  %v7439 = vmax.f32 %v7375, %v7377
  %v7440 = vmax.f32 %v7376, %v7378
  %v7441 = vmax.f32 %v7377, %v7379
  %v7442 = vmax.f32 %v7378, %v7380
  %v7443 = vmax.f32 %v7379, %v7381
  %v7444 = vmax.f32 %v7380, %v7382
  %v7445 = vmax.f32 %v7381, %v7383
  %v7446 = vmax.f32 %v7382, %v7384
  %v7447 = vmax.f32 %v7383, %v7385
  %v7448 = vmax.f32 %v7384, %v7386
  %v7449 = vmax.f32 %v7385, %v7387
  %v7450 = vmax.f32 %v7386, %v7388
  %v7451 = vmax.f32 %v7387, %v7389
  %v7452 = vmax.f32 %v7388, %v7390
  %v7453 = vmax.f32 %v7389, %v7391
  %v7454 = vmax.f32 %v7390, %v7392
  %v7455 = vmax.f32 %v7391, %v7393
  %v7456 = vmax.f32 %v7392, %v7394
  %v7457 = vmax.f32 %v7393, %v7395
  %v7458 = vmax.f32 %v7394, %v7396
  %v7459 = vmax.f32 %v7395, %v7397
  %v7460 = vmax.f32 %v7396, %v7398
  %v7461 = vmax.f32 %v7397, %v7399
  %v7462 = vmax.f32 %v7398, %v7400
  %v7463 = vmax.f32 %v7399, %v7401
  %v7464 = vmax.f32 %v7400, %v7402
  %v7465 = vmax.f32 %v7401, %v7403
  %v7466 = vmax.f32 %v7402, %v7404
  %v7467 = vmax.f32 %v7403, %v7405
  %v7468 = vmax.f32 %v7404, %v7406
  %v7469 = vmax.f32 %v7405, %v7407
  %v7470 = vmax.f32 %v7406, %v7408
  %v7471 = vmax.f32 %v7407, %v7409
  %v7472 = vmax.f32 %v7408, %v7410
  %v7473 = vmax.f32 %v7409, %v7411
  %v7474 = vmax.f32 %v7410, %v7412
  %v7475 = vmax.f32 %v7411, %v7413
  %v7476 = vmax.f32 %v7412, %v7414
  %v7477 = vmax.f32 %v7413, %v7415
  %v7478 = vmax.f32 %v7414, %v7416
  %v7479 = vmax.f32 %v7415, %v7417
  %v7480 = vmax.f32 %v7416, %v7418
  %v7481 = vmax.f32 %v7417, %v7419
  %v7482 = vmax.f32 %v7418, %v7420
  %v7483 = vmax.f32 %v7419, %v7421
  %v7484 = vmax.f32 %v7420, %v7422
  %v7485 = vmax.f32 %v7421, %v7423
  %v7486 = vmax.f32 %v7422, %v7424
  %v7487 = vmax.f32 %v7423, %v7425
  %v7488 = vmax.f32 %v7424, %v7426
  %v7489 = vmax.f32 %v7425, %v7427
  %v7490 = vmax.f32 %v7426, %v7428
  %v7491 = vmax.f32 %v7427, %v7429
  %v7492 = vmax.f32 %v7428, %v7430
  %v7493 = vmax.f32 %v7429, %v7367
  %v7494 = vmax.f32 %v7430, %v7368
  %vm7495 = vcmask 261120
  %7496 = vst.msk [vmem:[#allocation3] sm:$0xff] %vm7495, %v7431
  %7497 = vst.msk [vmem:[#allocation3 + $0x8] sm:$0xff] %vm7495, %v7432
  %7498 = vst.msk [vmem:[#allocation3 + $0x10] sm:$0xff] %vm7495, %v7433
  %7499 = vst.msk [vmem:[#allocation3 + $0x18] sm:$0xff] %vm7495, %v7434
  %7500 = vst.msk [vmem:[#allocation3 + $0x20] sm:$0xff] %vm7495, %v7435
  %7501 = vst.msk [vmem:[#allocation3 + $0x28] sm:$0xff] %vm7495, %v7436
  %7502 = vst.msk [vmem:[#allocation3 + $0x30] sm:$0xff] %vm7495, %v7437
  %7503 = vst.msk [vmem:[#allocation3 + $0x38] sm:$0xff] %vm7495, %v7438
  %7504 = vst.msk [vmem:[#allocation3 + $0x40] sm:$0xff] %vm7495, %v7439
  %7505 = vst.msk [vmem:[#allocation3 + $0x48] sm:$0xff] %vm7495, %v7440
  %7506 = vst.msk [vmem:[#allocation3 + $0x50] sm:$0xff] %vm7495, %v7441
  %7507 = vst.msk [vmem:[#allocation3 + $0x58] sm:$0xff] %vm7495, %v7442
  %7508 = vst.msk [vmem:[#allocation3 + $0x60] sm:$0xff] %vm7495, %v7443
  %7509 = vst.msk [vmem:[#allocation3 + $0x68] sm:$0xff] %vm7495, %v7444
  %7510 = vst.msk [vmem:[#allocation3 + $0x70] sm:$0xff] %vm7495, %v7445
  %7511 = vst.msk [vmem:[#allocation3 + $0x78] sm:$0xff] %vm7495, %v7446
  %7512 = vst.msk [vmem:[#allocation3 + $0x80] sm:$0xff] %vm7495, %v7447
  %7513 = vst.msk [vmem:[#allocation3 + $0x88] sm:$0xff] %vm7495, %v7448
  %7514 = vst.msk [vmem:[#allocation3 + $0x90] sm:$0xff] %vm7495, %v7449
  %7515 = vst.msk [vmem:[#allocation3 + $0x98] sm:$0xff] %vm7495, %v7450
  %7516 = vst.msk [vmem:[#allocation3 + $0xa0] sm:$0xff] %vm7495, %v7451
  %7517 = vst.msk [vmem:[#allocation3 + $0xa8] sm:$0xff] %vm7495, %v7452
  %7518 = vst.msk [vmem:[#allocation3 + $0xb0] sm:$0xff] %vm7495, %v7453
  %7519 = vst.msk [vmem:[#allocation3 + $0xb8] sm:$0xff] %vm7495, %v7454
  %7520 = vst.msk [vmem:[#allocation3 + $0xc0] sm:$0xff] %vm7495, %v7455
  %7521 = vst.msk [vmem:[#allocation3 + $0xc8] sm:$0xff] %vm7495, %v7456
  %7522 = vst.msk [vmem:[#allocation3 + $0xd0] sm:$0xff] %vm7495, %v7457
  %7523 = vst.msk [vmem:[#allocation3 + $0xd8] sm:$0xff] %vm7495, %v7458
  %7524 = vst.msk [vmem:[#allocation3 + $0xe0] sm:$0xff] %vm7495, %v7459
  %7525 = vst.msk [vmem:[#allocation3 + $0xe8] sm:$0xff] %vm7495, %v7460
  %7526 = vst.msk [vmem:[#allocation3 + $0xf0] sm:$0xff] %vm7495, %v7461
  %7527 = vst.msk [vmem:[#allocation3 + $0xf8] sm:$0xff] %vm7495, %v7462
  %7528 = vst.msk [vmem:[#allocation3 + $0x100] sm:$0xff] %vm7495, %v7463
  %7529 = vst.msk [vmem:[#allocation3 + $0x108] sm:$0xff] %vm7495, %v7464
  %7530 = vst.msk [vmem:[#allocation3 + $0x110] sm:$0xff] %vm7495, %v7465
  %7531 = vst.msk [vmem:[#allocation3 + $0x118] sm:$0xff] %vm7495, %v7466
  %7532 = vst.msk [vmem:[#allocation3 + $0x120] sm:$0xff] %vm7495, %v7467
  %7533 = vst.msk [vmem:[#allocation3 + $0x128] sm:$0xff] %vm7495, %v7468
  %7534 = vst.msk [vmem:[#allocation3 + $0x130] sm:$0xff] %vm7495, %v7469
  %7535 = vst.msk [vmem:[#allocation3 + $0x138] sm:$0xff] %vm7495, %v7470
  %7536 = vst.msk [vmem:[#allocation3 + $0x140] sm:$0xff] %vm7495, %v7471
  %7537 = vst.msk [vmem:[#allocation3 + $0x148] sm:$0xff] %vm7495, %v7472
  %7538 = vst.msk [vmem:[#allocation3 + $0x150] sm:$0xff] %vm7495, %v7473
  %7539 = vst.msk [vmem:[#allocation3 + $0x158] sm:$0xff] %vm7495, %v7474
  %7540 = vst.msk [vmem:[#allocation3 + $0x160] sm:$0xff] %vm7495, %v7475
  %7541 = vst.msk [vmem:[#allocation3 + $0x168] sm:$0xff] %vm7495, %v7476
  %7542 = vst.msk [vmem:[#allocation3 + $0x170] sm:$0xff] %vm7495, %v7477
  %7543 = vst.msk [vmem:[#allocation3 + $0x178] sm:$0xff] %vm7495, %v7478
  %7544 = vst.msk [vmem:[#allocation3 + $0x180] sm:$0xff] %vm7495, %v7479
  %7545 = vst.msk [vmem:[#allocation3 + $0x188] sm:$0xff] %vm7495, %v7480
  %7546 = vst.msk [vmem:[#allocation3 + $0x190] sm:$0xff] %vm7495, %v7481
  %7547 = vst.msk [vmem:[#allocation3 + $0x198] sm:$0xff] %vm7495, %v7482
  %7548 = vst.msk [vmem:[#allocation3 + $0x1a0] sm:$0xff] %vm7495, %v7483
  %7549 = vst.msk [vmem:[#allocation3 + $0x1a8] sm:$0xff] %vm7495, %v7484
  %7550 = vst.msk [vmem:[#allocation3 + $0x1b0] sm:$0xff] %vm7495, %v7485
  %7551 = vst.msk [vmem:[#allocation3 + $0x1b8] sm:$0xff] %vm7495, %v7486
  %7552 = vst.msk [vmem:[#allocation3 + $0x1c0] sm:$0xff] %vm7495, %v7487
  %7553 = vst.msk [vmem:[#allocation3 + $0x1c8] sm:$0xff] %vm7495, %v7488
  %7554 = vst.msk [vmem:[#allocation3 + $0x1d0] sm:$0xff] %vm7495, %v7489
  %7555 = vst.msk [vmem:[#allocation3 + $0x1d8] sm:$0xff] %vm7495, %v7490
  %7556 = vst.msk [vmem:[#allocation3 + $0x1e0] sm:$0xff] %vm7495, %v7491
  %7557 = vst.msk [vmem:[#allocation3 + $0x1e8] sm:$0xff] %vm7495, %v7492
  %7558 = vst.msk [vmem:[#allocation3 + $0x1f0] sm:$0xff] %vm7495, %v7493
  %7559 = vst.msk [vmem:[#allocation3 + $0x1f8] sm:$0xff] %vm7495, %v7494
  %v7560 = vld [vmem:[#allocation3] ss:$2 sm:$0xff]
  %7561 = vst.msk [vmem:[#allocation4] sm:$0xff] %vm7495, %v7560
  %s7562 = scalar_lea.vmem [#allocation3], 32
  %v7563 = vld [vmem:[%s7562] ss:$2 sm:$0xff]
  %7564 = vst.msk [vmem:[#allocation4 + $0x8] sm:$0xff] %vm7495, %v7563
  %s7565 = scalar_lea.vmem [#allocation3], 64
  %v7566 = vld [vmem:[%s7565] ss:$2 sm:$0xff]
  %7567 = vst.msk [vmem:[#allocation4 + $0x10] sm:$0xff] %vm7495, %v7566
  %s7568 = scalar_lea.vmem [#allocation3], 96
  %v7569 = vld [vmem:[%s7568] ss:$2 sm:$0xff]
  %7570 = vst.msk [vmem:[#allocation4 + $0x18] sm:$0xff] %vm7495, %v7569
  %s7571 = scalar_lea.vmem [#allocation3], 128
  %v7572 = vld [vmem:[%s7571] ss:$2 sm:$0xff]
  %7573 = vst.msk [vmem:[#allocation4 + $0x20] sm:$0xff] %vm7495, %v7572
  %s7574 = scalar_lea.vmem [#allocation3], 160
  %v7575 = vld [vmem:[%s7574] ss:$2 sm:$0xff]
  %7576 = vst.msk [vmem:[#allocation4 + $0x28] sm:$0xff] %vm7495, %v7575
  %s7577 = scalar_lea.vmem [#allocation3], 192
  %v7578 = vld [vmem:[%s7577] ss:$2 sm:$0xff]
  %7579 = vst.msk [vmem:[#allocation4 + $0x30] sm:$0xff] %vm7495, %v7578
  %s7580 = scalar_lea.vmem [#allocation3], 224
  %v7581 = vld [vmem:[%s7580] ss:$2 sm:$0xff]
  %7582 = vst.msk [vmem:[#allocation4 + $0x38] sm:$0xff] %vm7495, %v7581
  %s7583 = scalar_lea.vmem [#allocation3], 256
  %v7584 = vld [vmem:[%s7583] ss:$2 sm:$0xff]
  %7585 = vst.msk [vmem:[#allocation4 + $0x40] sm:$0xff] %vm7495, %v7584
  %s7586 = scalar_lea.vmem [#allocation3], 288
  %v7587 = vld [vmem:[%s7586] ss:$2 sm:$0xff]
  %7588 = vst.msk [vmem:[#allocation4 + $0x48] sm:$0xff] %vm7495, %v7587
  %s7589 = scalar_lea.vmem [#allocation3], 320
  %v7590 = vld [vmem:[%s7589] ss:$2 sm:$0xff]
  %7591 = vst.msk [vmem:[#allocation4 + $0x50] sm:$0xff] %vm7495, %v7590
  %s7592 = scalar_lea.vmem [#allocation3], 352
  %v7593 = vld [vmem:[%s7592] ss:$2 sm:$0xff]
  %7594 = vst.msk [vmem:[#allocation4 + $0x58] sm:$0xff] %vm7495, %v7593
  %s7595 = scalar_lea.vmem [#allocation3], 384
  %v7596 = vld [vmem:[%s7595] ss:$2 sm:$0xff]
  %7597 = vst.msk [vmem:[#allocation4 + $0x60] sm:$0xff] %vm7495, %v7596
  %s7598 = scalar_lea.vmem [#allocation3], 416
  %v7599 = vld [vmem:[%s7598] ss:$2 sm:$0xff]
  %7600 = vst.msk [vmem:[#allocation4 + $0x68] sm:$0xff] %vm7495, %v7599
  %s7601 = scalar_lea.vmem [#allocation3], 448
  %v7602 = vld [vmem:[%s7601] ss:$2 sm:$0xff]
  %7603 = vst.msk [vmem:[#allocation4 + $0x70] sm:$0xff] %vm7495, %v7602
  %s7604 = scalar_lea.vmem [#allocation3], 480
  %v7605 = vld [vmem:[%s7604] ss:$2 sm:$0xff]
  %7606 = vst.msk [vmem:[#allocation4 + $0x78] sm:$0xff] %vm7495, %v7605
  %v7607 = vld [vmem:[#allocation4] sm:$0xff]
  %v7608 = vld [vmem:[#allocation4 + $0x8] sm:$0xff]
  %v7609 = vld [vmem:[#allocation4 + $0x10] sm:$0xff]
  %v7610 = vld [vmem:[#allocation4 + $0x18] sm:$0xff]
  %v7611 = vld [vmem:[#allocation4 + $0x20] sm:$0xff]
  %v7612 = vld [vmem:[#allocation4 + $0x28] sm:$0xff]
  %v7613 = vld [vmem:[#allocation4 + $0x30] sm:$0xff]
  %v7614 = vld [vmem:[#allocation4 + $0x38] sm:$0xff]
  %v7615 = vld [vmem:[#allocation4 + $0x40] sm:$0xff]
  %v7616 = vld [vmem:[#allocation4 + $0x48] sm:$0xff]
  %v7617 = vld [vmem:[#allocation4 + $0x50] sm:$0xff]
  %v7618 = vld [vmem:[#allocation4 + $0x58] sm:$0xff]
  %v7619 = vld [vmem:[#allocation4 + $0x60] sm:$0xff]
  %v7620 = vld [vmem:[#allocation4 + $0x68] sm:$0xff]
  %v7621 = vld [vmem:[#allocation4 + $0x70] sm:$0xff]
  %v7622 = vld [vmem:[#allocation4 + $0x78] sm:$0xff]
  %v7623 = vld [vmem:[%s5] sm:$0x1]
  %v7625 = vlaneseq
  %v7626 = vshrl.u32 %v7625, 7
  %v7627 = vsub.s32 0, %v7626
  %v7628 = vrot.slane %v7623, %v7627
  %v7630 = vadd.f32 %v7607, %v7628
  %v7631 = vadd.f32 %v7608, %v7628
  %v7632 = vadd.f32 %v7609, %v7628
  %v7633 = vadd.f32 %v7610, %v7628
  %v7634 = vadd.f32 %v7611, %v7628
  %v7635 = vadd.f32 %v7612, %v7628
  %v7636 = vadd.f32 %v7613, %v7628
  %v7637 = vadd.f32 %v7614, %v7628
  %v7638 = vadd.f32 %v7615, %v7628
  %v7639 = vadd.f32 %v7616, %v7628
  %v7640 = vadd.f32 %v7617, %v7628
  %v7641 = vadd.f32 %v7618, %v7628
  %v7642 = vadd.f32 %v7619, %v7628
  %v7643 = vadd.f32 %v7620, %v7628
  %v7644 = vadd.f32 %v7621, %v7628
  %v7645 = vadd.f32 %v7622, %v7628
  %v7646 = vmax.f32 %v7630, 0.0
  %v7647 = vmax.f32 %v7631, 0.0
  %v7648 = vmax.f32 %v7632, 0.0
  %v7649 = vmax.f32 %v7633, 0.0
  %v7650 = vmax.f32 %v7634, 0.0
  %v7651 = vmax.f32 %v7635, 0.0
  %v7652 = vmax.f32 %v7636, 0.0
  %v7653 = vmax.f32 %v7637, 0.0
  %v7654 = vmax.f32 %v7638, 0.0
  %v7655 = vmax.f32 %v7639, 0.0
  %v7656 = vmax.f32 %v7640, 0.0
  %v7657 = vmax.f32 %v7641, 0.0
  %v7658 = vmax.f32 %v7642, 0.0
  %v7659 = vmax.f32 %v7643, 0.0
  %v7660 = vmax.f32 %v7644, 0.0
  %v7661 = vmax.f32 %v7645, 0.0
  %v7662 = vrot.slane %v7646, 7
  %v7663 = vrot.slane %v7647, 7
  %v7664 = vrot.slane %v7648, 7
  %v7665 = vrot.slane %v7649, 7
  %v7666 = vrot.slane %v7650, 7
  %v7667 = vrot.slane %v7651, 7
  %v7668 = vrot.slane %v7652, 7
  %v7669 = vrot.slane %v7653, 7
  %v7670 = vrot.slane %v7654, 7
  %v7671 = vrot.slane %v7655, 7
  %v7672 = vrot.slane %v7656, 7
  %v7673 = vrot.slane %v7657, 7
  %v7674 = vrot.slane %v7658, 7
  %v7675 = vrot.slane %v7659, 7
  %v7676 = vrot.slane %v7660, 7
  %v7677 = vrot.slane %v7661, 7
  %v7678 = vsel %vm177, %v7676, %v7677
  %v7679 = vsel %vm177, %v7675, %v7676
  %v7680 = vsel %vm177, %v7674, %v7675
  %v7681 = vsel %vm177, %v7673, %v7674
  %v7682 = vsel %vm177, %v7672, %v7673
  %v7683 = vsel %vm177, %v7671, %v7672
  %v7684 = vsel %vm177, %v7670, %v7671
  %v7685 = vsel %vm177, %v7669, %v7670
  %v7686 = vsel %vm177, %v7668, %v7669
  %v7687 = vsel %vm177, %v7667, %v7668
  %v7688 = vsel %vm177, %v7666, %v7667
  %v7689 = vsel %vm177, %v7665, %v7666
  %v7690 = vsel %vm177, %v7664, %v7665
  %v7691 = vsel %vm177, %v7663, %v7664
  %v7692 = vsel %vm177, %v7662, %v7663
  %v7693 = vsel %vm177, %v7677, %v7662
  %v7694 = vld [vmem:[%s2] sm:$0xff]
  %v7695 = vld [vmem:[%s2 + $0x8] sm:$0xff]
  %v7696 = vld [vmem:[%s2 + $0x10] sm:$0xff]
  %v7697 = vld [vmem:[%s2 + $0x18] sm:$0xff]
  %v7698 = vld [vmem:[%s2 + $0x20] sm:$0xff]
  %v7699 = vld [vmem:[%s2 + $0x28] sm:$0xff]
  %v7700 = vld [vmem:[%s2 + $0x30] sm:$0xff]
  %v7701 = vld [vmem:[%s2 + $0x38] sm:$0xff]
  %v7702 = vld [vmem:[%s2 + $0x40] sm:$0xff]
  %v7703 = vld [vmem:[%s2 + $0x48] sm:$0xff]
  %v7704 = vld [vmem:[%s2 + $0x50] sm:$0xff]
  %v7705 = vld [vmem:[%s2 + $0x58] sm:$0xff]
  %v7706 = vld [vmem:[%s2 + $0x60] sm:$0xff]
  %v7707 = vld [vmem:[%s2 + $0x68] sm:$0xff]
  %v7708 = vld [vmem:[%s2 + $0x70] sm:$0xff]
  %v7709 = vld [vmem:[%s2 + $0x78] sm:$0xff]
  %7711 = vset.pattern.permute.xlu0 0
  %7712 = vperm.xlu0 %7711, %v7694
  %v7713 = vpop.permute.xlu0 %7712
  %7716 = vset.pattern.permute.xlu0 0
  %7717 = vperm.xlu0 %7716, %v7695
  %v7718 = vpop.permute.xlu0 %7717
  %7721 = vset.pattern.permute.xlu0 0
  %7722 = vperm.xlu0 %7721, %v7696
  %v7723 = vpop.permute.xlu0 %7722
  %7726 = vset.pattern.permute.xlu0 0
  %7727 = vperm.xlu0 %7726, %v7697
  %v7728 = vpop.permute.xlu0 %7727
  %7731 = vset.pattern.permute.xlu0 0
  %7732 = vperm.xlu0 %7731, %v7698
  %v7733 = vpop.permute.xlu0 %7732
  %7736 = vset.pattern.permute.xlu0 0
  %7737 = vperm.xlu0 %7736, %v7699
  %v7738 = vpop.permute.xlu0 %7737
  %7741 = vset.pattern.permute.xlu0 0
  %7742 = vperm.xlu0 %7741, %v7700
  %v7743 = vpop.permute.xlu0 %7742
  %7746 = vset.pattern.permute.xlu0 0
  %7747 = vperm.xlu0 %7746, %v7701
  %v7748 = vpop.permute.xlu0 %7747
  %7751 = vset.pattern.permute.xlu0 0
  %7752 = vperm.xlu0 %7751, %v7702
  %v7753 = vpop.permute.xlu0 %7752
  %7756 = vset.pattern.permute.xlu0 0
  %7757 = vperm.xlu0 %7756, %v7703
  %v7758 = vpop.permute.xlu0 %7757
  %7761 = vset.pattern.permute.xlu0 0
  %7762 = vperm.xlu0 %7761, %v7704
  %v7763 = vpop.permute.xlu0 %7762
  %7766 = vset.pattern.permute.xlu0 0
  %7767 = vperm.xlu0 %7766, %v7705
  %v7768 = vpop.permute.xlu0 %7767
  %7771 = vset.pattern.permute.xlu0 0
  %7772 = vperm.xlu0 %7771, %v7706
  %v7773 = vpop.permute.xlu0 %7772
  %7776 = vset.pattern.permute.xlu0 0
  %7777 = vperm.xlu0 %7776, %v7707
  %v7778 = vpop.permute.xlu0 %7777
  %7781 = vset.pattern.permute.xlu0 0
  %7782 = vperm.xlu0 %7781, %v7708
  %v7783 = vpop.permute.xlu0 %7782
  %7786 = vset.pattern.permute.xlu0 0
  %7787 = vperm.xlu0 %7786, %v7709
  %v7788 = vpop.permute.xlu0 %7787
  %v7790 = vmul.f32 %v7678, %v7713
  %v7791 = vmul.f32 %v7693, %v7718
  %v7792 = vmul.f32 %v7692, %v7723
  %v7793 = vmul.f32 %v7691, %v7728
  %v7794 = vmul.f32 %v7690, %v7733
  %v7795 = vmul.f32 %v7689, %v7738
  %v7796 = vmul.f32 %v7688, %v7743
  %v7797 = vmul.f32 %v7687, %v7748
  %v7798 = vmul.f32 %v7686, %v7753
  %v7799 = vmul.f32 %v7685, %v7758
  %v7800 = vmul.f32 %v7684, %v7763
  %v7801 = vmul.f32 %v7683, %v7768
  %v7802 = vmul.f32 %v7682, %v7773
  %v7803 = vmul.f32 %v7681, %v7778
  %v7804 = vmul.f32 %v7680, %v7783
  %v7805 = vmul.f32 %v7679, %v7788
  %7806 = vst.msk [vmem:[#allocation5] sm:$0xff] %vm7495, %v7790
  %7807 = vst.msk [vmem:[#allocation5 + $0x18] sm:$0xff] %vm7495, %v7791
  %7808 = vst.msk [vmem:[#allocation5 + $0x30] sm:$0xff] %vm7495, %v7792
  %7809 = vst.msk [vmem:[#allocation5 + $0x48] sm:$0xff] %vm7495, %v7793
  %7810 = vst.msk [vmem:[#allocation5 + $0x60] sm:$0xff] %vm7495, %v7794
  %7811 = vst.msk [vmem:[#allocation5 + $0x78] sm:$0xff] %vm7495, %v7795
  %7812 = vst.msk [vmem:[#allocation5 + $0x90] sm:$0xff] %vm7495, %v7796
  %7813 = vst.msk [vmem:[#allocation5 + $0xa8] sm:$0xff] %vm7495, %v7797
  %7814 = vst.msk [vmem:[#allocation5 + $0xc0] sm:$0xff] %vm7495, %v7798
  %7815 = vst.msk [vmem:[#allocation5 + $0xd8] sm:$0xff] %vm7495, %v7799
  %7816 = vst.msk [vmem:[#allocation5 + $0xf0] sm:$0xff] %vm7495, %v7800
  %7817 = vst.msk [vmem:[#allocation5 + $0x108] sm:$0xff] %vm7495, %v7801
  %7818 = vst.msk [vmem:[#allocation5 + $0x120] sm:$0xff] %vm7495, %v7802
  %7819 = vst.msk [vmem:[#allocation5 + $0x138] sm:$0xff] %vm7495, %v7803
  %7820 = vst.msk [vmem:[#allocation5 + $0x150] sm:$0xff] %vm7495, %v7804
  %7821 = vst.msk [vmem:[#allocation5 + $0x168] sm:$0xff] %vm7495, %v7805
  %v7822 = vld [vmem:[%s2] sm:$0xff]
  %v7823 = vld [vmem:[%s2 + $0x8] sm:$0xff]
  %v7824 = vld [vmem:[%s2 + $0x10] sm:$0xff]
  %v7825 = vld [vmem:[%s2 + $0x18] sm:$0xff]
  %v7826 = vld [vmem:[%s2 + $0x20] sm:$0xff]
  %v7827 = vld [vmem:[%s2 + $0x28] sm:$0xff]
  %v7828 = vld [vmem:[%s2 + $0x30] sm:$0xff]
  %v7829 = vld [vmem:[%s2 + $0x38] sm:$0xff]
  %v7830 = vld [vmem:[%s2 + $0x40] sm:$0xff]
  %v7831 = vld [vmem:[%s2 + $0x48] sm:$0xff]
  %v7832 = vld [vmem:[%s2 + $0x50] sm:$0xff]
  %v7833 = vld [vmem:[%s2 + $0x58] sm:$0xff]
  %v7834 = vld [vmem:[%s2 + $0x60] sm:$0xff]
  %v7835 = vld [vmem:[%s2 + $0x68] sm:$0xff]
  %v7836 = vld [vmem:[%s2 + $0x70] sm:$0xff]
  %v7837 = vld [vmem:[%s2 + $0x78] sm:$0xff]
  %7839 = vset.pattern.permute.xlu0 1
  %7840 = vperm.xlu0 %7839, %v7822
  %v7841 = vpop.permute.xlu0 %7840
  %7844 = vset.pattern.permute.xlu0 1
  %7845 = vperm.xlu0 %7844, %v7823
  %v7846 = vpop.permute.xlu0 %7845
  %7849 = vset.pattern.permute.xlu0 1
  %7850 = vperm.xlu0 %7849, %v7824
  %v7851 = vpop.permute.xlu0 %7850
  %7854 = vset.pattern.permute.xlu0 1
  %7855 = vperm.xlu0 %7854, %v7825
  %v7856 = vpop.permute.xlu0 %7855
  %7859 = vset.pattern.permute.xlu0 1
  %7860 = vperm.xlu0 %7859, %v7826
  %v7861 = vpop.permute.xlu0 %7860
  %7864 = vset.pattern.permute.xlu0 1
  %7865 = vperm.xlu0 %7864, %v7827
  %v7866 = vpop.permute.xlu0 %7865
  %7869 = vset.pattern.permute.xlu0 1
  %7870 = vperm.xlu0 %7869, %v7828
  %v7871 = vpop.permute.xlu0 %7870
  %7874 = vset.pattern.permute.xlu0 1
  %7875 = vperm.xlu0 %7874, %v7829
  %v7876 = vpop.permute.xlu0 %7875
  %7879 = vset.pattern.permute.xlu0 1
  %7880 = vperm.xlu0 %7879, %v7830
  %v7881 = vpop.permute.xlu0 %7880
  %7884 = vset.pattern.permute.xlu0 1
  %7885 = vperm.xlu0 %7884, %v7831
  %v7886 = vpop.permute.xlu0 %7885
  %7889 = vset.pattern.permute.xlu0 1
  %7890 = vperm.xlu0 %7889, %v7832
  %v7891 = vpop.permute.xlu0 %7890
  %7894 = vset.pattern.permute.xlu0 1
  %7895 = vperm.xlu0 %7894, %v7833
  %v7896 = vpop.permute.xlu0 %7895
  %7899 = vset.pattern.permute.xlu0 1
  %7900 = vperm.xlu0 %7899, %v7834
  %v7901 = vpop.permute.xlu0 %7900
  %7904 = vset.pattern.permute.xlu0 1
  %7905 = vperm.xlu0 %7904, %v7835
  %v7906 = vpop.permute.xlu0 %7905
  %7909 = vset.pattern.permute.xlu0 1
  %7910 = vperm.xlu0 %7909, %v7836
  %v7911 = vpop.permute.xlu0 %7910
  %7914 = vset.pattern.permute.xlu0 1
  %7915 = vperm.xlu0 %7914, %v7837
  %v7916 = vpop.permute.xlu0 %7915
  %v7918 = vmul.f32 %v7661, %v7841
  %v7919 = vmul.f32 %v7646, %v7846
  %v7920 = vmul.f32 %v7647, %v7851
  %v7921 = vmul.f32 %v7648, %v7856
  %v7922 = vmul.f32 %v7649, %v7861
  %v7923 = vmul.f32 %v7650, %v7866
  %v7924 = vmul.f32 %v7651, %v7871
  %v7925 = vmul.f32 %v7652, %v7876
  %v7926 = vmul.f32 %v7653, %v7881
  %v7927 = vmul.f32 %v7654, %v7886
  %v7928 = vmul.f32 %v7655, %v7891
  %v7929 = vmul.f32 %v7656, %v7896
  %v7930 = vmul.f32 %v7657, %v7901
  %v7931 = vmul.f32 %v7658, %v7906
  %v7932 = vmul.f32 %v7659, %v7911
  %v7933 = vmul.f32 %v7660, %v7916
  %7950 = vrot.lane.b32.xlu0 %v7918, 32
  %v7951 = vpop.permute.xlu0 %7950
  %7952 = vrot.lane.b32.xlu0 %v7919, 32
  %v7953 = vpop.permute.xlu0 %7952
  %7954 = vrot.lane.b32.xlu0 %v7920, 32
  %v7955 = vpop.permute.xlu0 %7954
  %7956 = vrot.lane.b32.xlu0 %v7921, 32
  %v7957 = vpop.permute.xlu0 %7956
  %7958 = vrot.lane.b32.xlu0 %v7922, 32
  %v7959 = vpop.permute.xlu0 %7958
  %7960 = vrot.lane.b32.xlu0 %v7923, 32
  %v7961 = vpop.permute.xlu0 %7960
  %7962 = vrot.lane.b32.xlu0 %v7924, 32
  %v7963 = vpop.permute.xlu0 %7962
  %7964 = vrot.lane.b32.xlu0 %v7925, 32
  %v7965 = vpop.permute.xlu0 %7964
  %7966 = vrot.lane.b32.xlu0 %v7926, 32
  %v7967 = vpop.permute.xlu0 %7966
  %7968 = vrot.lane.b32.xlu0 %v7927, 32
  %v7969 = vpop.permute.xlu0 %7968
  %7970 = vrot.lane.b32.xlu0 %v7928, 32
  %v7971 = vpop.permute.xlu0 %7970
  %7972 = vrot.lane.b32.xlu0 %v7929, 32
  %v7973 = vpop.permute.xlu0 %7972
  %7974 = vrot.lane.b32.xlu0 %v7930, 32
  %v7975 = vpop.permute.xlu0 %7974
  %7976 = vrot.lane.b32.xlu0 %v7931, 32
  %v7977 = vpop.permute.xlu0 %7976
  %7978 = vrot.lane.b32.xlu0 %v7932, 32
  %v7979 = vpop.permute.xlu0 %7978
  %7980 = vrot.lane.b32.xlu0 %v7933, 32
  %v7981 = vpop.permute.xlu0 %7980
  %vm7998 = vcmask 523520
  %7999 = vst.msk [vmem:[#allocation5] sm:$0xff] %vm7998, %v7951
  %8000 = vst.msk [vmem:[#allocation5 + $0x18] sm:$0xff] %vm7998, %v7953
  %8001 = vst.msk [vmem:[#allocation5 + $0x30] sm:$0xff] %vm7998, %v7955
  %8002 = vst.msk [vmem:[#allocation5 + $0x48] sm:$0xff] %vm7998, %v7957
  %8003 = vst.msk [vmem:[#allocation5 + $0x60] sm:$0xff] %vm7998, %v7959
  %8004 = vst.msk [vmem:[#allocation5 + $0x78] sm:$0xff] %vm7998, %v7961
  %8005 = vst.msk [vmem:[#allocation5 + $0x90] sm:$0xff] %vm7998, %v7963
  %8006 = vst.msk [vmem:[#allocation5 + $0xa8] sm:$0xff] %vm7998, %v7965
  %8007 = vst.msk [vmem:[#allocation5 + $0xc0] sm:$0xff] %vm7998, %v7967
  %8008 = vst.msk [vmem:[#allocation5 + $0xd8] sm:$0xff] %vm7998, %v7969
  %8009 = vst.msk [vmem:[#allocation5 + $0xf0] sm:$0xff] %vm7998, %v7971
  %8010 = vst.msk [vmem:[#allocation5 + $0x108] sm:$0xff] %vm7998, %v7973
  %8011 = vst.msk [vmem:[#allocation5 + $0x120] sm:$0xff] %vm7998, %v7975
  %8012 = vst.msk [vmem:[#allocation5 + $0x138] sm:$0xff] %vm7998, %v7977
  %8013 = vst.msk [vmem:[#allocation5 + $0x150] sm:$0xff] %vm7998, %v7979
  %8014 = vst.msk [vmem:[#allocation5 + $0x168] sm:$0xff] %vm7998, %v7981
  %v8015 = vrot.slane %v7646, 1
  %v8016 = vrot.slane %v7647, 1
  %v8017 = vrot.slane %v7648, 1
  %v8018 = vrot.slane %v7649, 1
  %v8019 = vrot.slane %v7650, 1
  %v8020 = vrot.slane %v7651, 1
  %v8021 = vrot.slane %v7652, 1
  %v8022 = vrot.slane %v7653, 1
  %v8023 = vrot.slane %v7654, 1
  %v8024 = vrot.slane %v7655, 1
  %v8025 = vrot.slane %v7656, 1
  %v8026 = vrot.slane %v7657, 1
  %v8027 = vrot.slane %v7658, 1
  %v8028 = vrot.slane %v7659, 1
  %v8029 = vrot.slane %v7660, 1
  %v8030 = vrot.slane %v7661, 1
  %v8031 = vsel %vm1588, %v8029, %v8030
  %v8032 = vsel %vm1588, %v8028, %v8029
  %v8033 = vsel %vm1588, %v8027, %v8028
  %v8034 = vsel %vm1588, %v8026, %v8027
  %v8035 = vsel %vm1588, %v8025, %v8026
  %v8036 = vsel %vm1588, %v8024, %v8025
  %v8037 = vsel %vm1588, %v8023, %v8024
  %v8038 = vsel %vm1588, %v8022, %v8023
  %v8039 = vsel %vm1588, %v8021, %v8022
  %v8040 = vsel %vm1588, %v8020, %v8021
  %v8041 = vsel %vm1588, %v8019, %v8020
  %v8042 = vsel %vm1588, %v8018, %v8019
  %v8043 = vsel %vm1588, %v8017, %v8018
  %v8044 = vsel %vm1588, %v8016, %v8017
  %v8045 = vsel %vm1588, %v8015, %v8016
  %v8046 = vsel %vm1588, %v8030, %v8015
  %v8047 = vld [vmem:[%s2] sm:$0xff]
  %v8048 = vld [vmem:[%s2 + $0x8] sm:$0xff]
  %v8049 = vld [vmem:[%s2 + $0x10] sm:$0xff]
  %v8050 = vld [vmem:[%s2 + $0x18] sm:$0xff]
  %v8051 = vld [vmem:[%s2 + $0x20] sm:$0xff]
  %v8052 = vld [vmem:[%s2 + $0x28] sm:$0xff]
  %v8053 = vld [vmem:[%s2 + $0x30] sm:$0xff]
  %v8054 = vld [vmem:[%s2 + $0x38] sm:$0xff]
  %v8055 = vld [vmem:[%s2 + $0x40] sm:$0xff]
  %v8056 = vld [vmem:[%s2 + $0x48] sm:$0xff]
  %v8057 = vld [vmem:[%s2 + $0x50] sm:$0xff]
  %v8058 = vld [vmem:[%s2 + $0x58] sm:$0xff]
  %v8059 = vld [vmem:[%s2 + $0x60] sm:$0xff]
  %v8060 = vld [vmem:[%s2 + $0x68] sm:$0xff]
  %v8061 = vld [vmem:[%s2 + $0x70] sm:$0xff]
  %v8062 = vld [vmem:[%s2 + $0x78] sm:$0xff]
  %8064 = vset.pattern.permute.xlu0 2
  %8065 = vperm.xlu0 %8064, %v8047
  %v8066 = vpop.permute.xlu0 %8065
  %8069 = vset.pattern.permute.xlu0 2
  %8070 = vperm.xlu0 %8069, %v8048
  %v8071 = vpop.permute.xlu0 %8070
  %8074 = vset.pattern.permute.xlu0 2
  %8075 = vperm.xlu0 %8074, %v8049
  %v8076 = vpop.permute.xlu0 %8075
  %8079 = vset.pattern.permute.xlu0 2
  %8080 = vperm.xlu0 %8079, %v8050
  %v8081 = vpop.permute.xlu0 %8080
  %8084 = vset.pattern.permute.xlu0 2
  %8085 = vperm.xlu0 %8084, %v8051
  %v8086 = vpop.permute.xlu0 %8085
  %8089 = vset.pattern.permute.xlu0 2
  %8090 = vperm.xlu0 %8089, %v8052
  %v8091 = vpop.permute.xlu0 %8090
  %8094 = vset.pattern.permute.xlu0 2
  %8095 = vperm.xlu0 %8094, %v8053
  %v8096 = vpop.permute.xlu0 %8095
  %8099 = vset.pattern.permute.xlu0 2
  %8100 = vperm.xlu0 %8099, %v8054
  %v8101 = vpop.permute.xlu0 %8100
  %8104 = vset.pattern.permute.xlu0 2
  %8105 = vperm.xlu0 %8104, %v8055
  %v8106 = vpop.permute.xlu0 %8105
  %8109 = vset.pattern.permute.xlu0 2
  %8110 = vperm.xlu0 %8109, %v8056
  %v8111 = vpop.permute.xlu0 %8110
  %8114 = vset.pattern.permute.xlu0 2
  %8115 = vperm.xlu0 %8114, %v8057
  %v8116 = vpop.permute.xlu0 %8115
  %8119 = vset.pattern.permute.xlu0 2
  %8120 = vperm.xlu0 %8119, %v8058
  %v8121 = vpop.permute.xlu0 %8120
  %8124 = vset.pattern.permute.xlu0 2
  %8125 = vperm.xlu0 %8124, %v8059
  %v8126 = vpop.permute.xlu0 %8125
  %8129 = vset.pattern.permute.xlu0 2
  %8130 = vperm.xlu0 %8129, %v8060
  %v8131 = vpop.permute.xlu0 %8130
  %8134 = vset.pattern.permute.xlu0 2
  %8135 = vperm.xlu0 %8134, %v8061
  %v8136 = vpop.permute.xlu0 %8135
  %8139 = vset.pattern.permute.xlu0 2
  %8140 = vperm.xlu0 %8139, %v8062
  %v8141 = vpop.permute.xlu0 %8140
  %v8143 = vmul.f32 %v8046, %v8066
  %v8144 = vmul.f32 %v8045, %v8071
  %v8145 = vmul.f32 %v8044, %v8076
  %v8146 = vmul.f32 %v8043, %v8081
  %v8147 = vmul.f32 %v8042, %v8086
  %v8148 = vmul.f32 %v8041, %v8091
  %v8149 = vmul.f32 %v8040, %v8096
  %v8150 = vmul.f32 %v8039, %v8101
  %v8151 = vmul.f32 %v8038, %v8106
  %v8152 = vmul.f32 %v8037, %v8111
  %v8153 = vmul.f32 %v8036, %v8116
  %v8154 = vmul.f32 %v8035, %v8121
  %v8155 = vmul.f32 %v8034, %v8126
  %v8156 = vmul.f32 %v8033, %v8131
  %v8157 = vmul.f32 %v8032, %v8136
  %v8158 = vmul.f32 %v8031, %v8141
  %8175 = vrot.lane.b32.xlu0 %v8143, 64
  %v8176 = vpop.permute.xlu0 %8175
  %8177 = vrot.lane.b32.xlu0 %v8144, 64
  %v8178 = vpop.permute.xlu0 %8177
  %8179 = vrot.lane.b32.xlu0 %v8145, 64
  %v8180 = vpop.permute.xlu0 %8179
  %8181 = vrot.lane.b32.xlu0 %v8146, 64
  %v8182 = vpop.permute.xlu0 %8181
  %8183 = vrot.lane.b32.xlu0 %v8147, 64
  %v8184 = vpop.permute.xlu0 %8183
  %8185 = vrot.lane.b32.xlu0 %v8148, 64
  %v8186 = vpop.permute.xlu0 %8185
  %8187 = vrot.lane.b32.xlu0 %v8149, 64
  %v8188 = vpop.permute.xlu0 %8187
  %8189 = vrot.lane.b32.xlu0 %v8150, 64
  %v8190 = vpop.permute.xlu0 %8189
  %8191 = vrot.lane.b32.xlu0 %v8151, 64
  %v8192 = vpop.permute.xlu0 %8191
  %8193 = vrot.lane.b32.xlu0 %v8152, 64
  %v8194 = vpop.permute.xlu0 %8193
  %8195 = vrot.lane.b32.xlu0 %v8153, 64
  %v8196 = vpop.permute.xlu0 %8195
  %8197 = vrot.lane.b32.xlu0 %v8154, 64
  %v8198 = vpop.permute.xlu0 %8197
  %8199 = vrot.lane.b32.xlu0 %v8155, 64
  %v8200 = vpop.permute.xlu0 %8199
  %8201 = vrot.lane.b32.xlu0 %v8156, 64
  %v8202 = vpop.permute.xlu0 %8201
  %8203 = vrot.lane.b32.xlu0 %v8157, 64
  %v8204 = vpop.permute.xlu0 %8203
  %8205 = vrot.lane.b32.xlu0 %v8158, 64
  %v8206 = vpop.permute.xlu0 %8205
  %vm8223 = vcmask 785920
  %8224 = vst.msk [vmem:[#allocation5] sm:$0xff] %vm8223, %v8176
  %8225 = vst.msk [vmem:[#allocation5 + $0x18] sm:$0xff] %vm8223, %v8178
  %8226 = vst.msk [vmem:[#allocation5 + $0x30] sm:$0xff] %vm8223, %v8180
  %8227 = vst.msk [vmem:[#allocation5 + $0x48] sm:$0xff] %vm8223, %v8182
  %8228 = vst.msk [vmem:[#allocation5 + $0x60] sm:$0xff] %vm8223, %v8184
  %8229 = vst.msk [vmem:[#allocation5 + $0x78] sm:$0xff] %vm8223, %v8186
  %8230 = vst.msk [vmem:[#allocation5 + $0x90] sm:$0xff] %vm8223, %v8188
  %8231 = vst.msk [vmem:[#allocation5 + $0xa8] sm:$0xff] %vm8223, %v8190
  %8232 = vst.msk [vmem:[#allocation5 + $0xc0] sm:$0xff] %vm8223, %v8192
  %8233 = vst.msk [vmem:[#allocation5 + $0xd8] sm:$0xff] %vm8223, %v8194
  %8234 = vst.msk [vmem:[#allocation5 + $0xf0] sm:$0xff] %vm8223, %v8196
  %8235 = vst.msk [vmem:[#allocation5 + $0x108] sm:$0xff] %vm8223, %v8198
  %8236 = vst.msk [vmem:[#allocation5 + $0x120] sm:$0xff] %vm8223, %v8200
  %8237 = vst.msk [vmem:[#allocation5 + $0x138] sm:$0xff] %vm8223, %v8202
  %8238 = vst.msk [vmem:[#allocation5 + $0x150] sm:$0xff] %vm8223, %v8204
  %8239 = vst.msk [vmem:[#allocation5 + $0x168] sm:$0xff] %vm8223, %v8206
  %v8240 = vld [vmem:[%s2] sm:$0xff]
  %v8241 = vld [vmem:[%s2 + $0x8] sm:$0xff]
  %v8242 = vld [vmem:[%s2 + $0x10] sm:$0xff]
  %v8243 = vld [vmem:[%s2 + $0x18] sm:$0xff]
  %v8244 = vld [vmem:[%s2 + $0x20] sm:$0xff]
  %v8245 = vld [vmem:[%s2 + $0x28] sm:$0xff]
  %v8246 = vld [vmem:[%s2 + $0x30] sm:$0xff]
  %v8247 = vld [vmem:[%s2 + $0x38] sm:$0xff]
  %v8248 = vld [vmem:[%s2 + $0x40] sm:$0xff]
  %v8249 = vld [vmem:[%s2 + $0x48] sm:$0xff]
  %v8250 = vld [vmem:[%s2 + $0x50] sm:$0xff]
  %v8251 = vld [vmem:[%s2 + $0x58] sm:$0xff]
  %v8252 = vld [vmem:[%s2 + $0x60] sm:$0xff]
  %v8253 = vld [vmem:[%s2 + $0x68] sm:$0xff]
  %v8254 = vld [vmem:[%s2 + $0x70] sm:$0xff]
  %v8255 = vld [vmem:[%s2 + $0x78] sm:$0xff]
  %8257 = vset.pattern.permute.xlu0 3
  %8258 = vperm.xlu0 %8257, %v8240
  %v8259 = vpop.permute.xlu0 %8258
  %8262 = vset.pattern.permute.xlu0 3
  %8263 = vperm.xlu0 %8262, %v8241
  %v8264 = vpop.permute.xlu0 %8263
  %8267 = vset.pattern.permute.xlu0 3
  %8268 = vperm.xlu0 %8267, %v8242
  %v8269 = vpop.permute.xlu0 %8268
  %8272 = vset.pattern.permute.xlu0 3
  %8273 = vperm.xlu0 %8272, %v8243
  %v8274 = vpop.permute.xlu0 %8273
  %8277 = vset.pattern.permute.xlu0 3
  %8278 = vperm.xlu0 %8277, %v8244
  %v8279 = vpop.permute.xlu0 %8278
  %8282 = vset.pattern.permute.xlu0 3
  %8283 = vperm.xlu0 %8282, %v8245
  %v8284 = vpop.permute.xlu0 %8283
  %8287 = vset.pattern.permute.xlu0 3
  %8288 = vperm.xlu0 %8287, %v8246
  %v8289 = vpop.permute.xlu0 %8288
  %8292 = vset.pattern.permute.xlu0 3
  %8293 = vperm.xlu0 %8292, %v8247
  %v8294 = vpop.permute.xlu0 %8293
  %8297 = vset.pattern.permute.xlu0 3
  %8298 = vperm.xlu0 %8297, %v8248
  %v8299 = vpop.permute.xlu0 %8298
  %8302 = vset.pattern.permute.xlu0 3
  %8303 = vperm.xlu0 %8302, %v8249
  %v8304 = vpop.permute.xlu0 %8303
  %8307 = vset.pattern.permute.xlu0 3
  %8308 = vperm.xlu0 %8307, %v8250
  %v8309 = vpop.permute.xlu0 %8308
  %8312 = vset.pattern.permute.xlu0 3
  %8313 = vperm.xlu0 %8312, %v8251
  %v8314 = vpop.permute.xlu0 %8313
  %8317 = vset.pattern.permute.xlu0 3
  %8318 = vperm.xlu0 %8317, %v8252
  %v8319 = vpop.permute.xlu0 %8318
  %8322 = vset.pattern.permute.xlu0 3
  %8323 = vperm.xlu0 %8322, %v8253
  %v8324 = vpop.permute.xlu0 %8323
  %8327 = vset.pattern.permute.xlu0 3
  %8328 = vperm.xlu0 %8327, %v8254
  %v8329 = vpop.permute.xlu0 %8328
  %8332 = vset.pattern.permute.xlu0 3
  %8333 = vperm.xlu0 %8332, %v8255
  %v8334 = vpop.permute.xlu0 %8333
  %v8336 = vmul.f32 %v7693, %v8259
  %v8337 = vmul.f32 %v7692, %v8264
  %v8338 = vmul.f32 %v7691, %v8269
  %v8339 = vmul.f32 %v7690, %v8274
  %v8340 = vmul.f32 %v7689, %v8279
  %v8341 = vmul.f32 %v7688, %v8284
  %v8342 = vmul.f32 %v7687, %v8289
  %v8343 = vmul.f32 %v7686, %v8294
  %v8344 = vmul.f32 %v7685, %v8299
  %v8345 = vmul.f32 %v7684, %v8304
  %v8346 = vmul.f32 %v7683, %v8309
  %v8347 = vmul.f32 %v7682, %v8314
  %v8348 = vmul.f32 %v7681, %v8319
  %v8349 = vmul.f32 %v7680, %v8324
  %v8350 = vmul.f32 %v7679, %v8329
  %v8351 = vmul.f32 %v7678, %v8334
  %8368 = vrot.lane.b32.xlu0 %v8336, 96
  %v8369 = vpop.permute.xlu0 %8368
  %8370 = vrot.lane.b32.xlu0 %v8337, 96
  %v8371 = vpop.permute.xlu0 %8370
  %8372 = vrot.lane.b32.xlu0 %v8338, 96
  %v8373 = vpop.permute.xlu0 %8372
  %8374 = vrot.lane.b32.xlu0 %v8339, 96
  %v8375 = vpop.permute.xlu0 %8374
  %8376 = vrot.lane.b32.xlu0 %v8340, 96
  %v8377 = vpop.permute.xlu0 %8376
  %8378 = vrot.lane.b32.xlu0 %v8341, 96
  %v8379 = vpop.permute.xlu0 %8378
  %8380 = vrot.lane.b32.xlu0 %v8342, 96
  %v8381 = vpop.permute.xlu0 %8380
  %8382 = vrot.lane.b32.xlu0 %v8343, 96
  %v8383 = vpop.permute.xlu0 %8382
  %8384 = vrot.lane.b32.xlu0 %v8344, 96
  %v8385 = vpop.permute.xlu0 %8384
  %8386 = vrot.lane.b32.xlu0 %v8345, 96
  %v8387 = vpop.permute.xlu0 %8386
  %8388 = vrot.lane.b32.xlu0 %v8346, 96
  %v8389 = vpop.permute.xlu0 %8388
  %8390 = vrot.lane.b32.xlu0 %v8347, 96
  %v8391 = vpop.permute.xlu0 %8390
  %8392 = vrot.lane.b32.xlu0 %v8348, 96
  %v8393 = vpop.permute.xlu0 %8392
  %8394 = vrot.lane.b32.xlu0 %v8349, 96
  %v8395 = vpop.permute.xlu0 %8394
  %8396 = vrot.lane.b32.xlu0 %v8350, 96
  %v8397 = vpop.permute.xlu0 %8396
  %8398 = vrot.lane.b32.xlu0 %v8351, 96
  %v8399 = vpop.permute.xlu0 %8398
  %vm8416 = vcmask 1048320
  %8417 = vst.msk [vmem:[#allocation5] sm:$0xff] %vm8416, %v8369
  %8418 = vst.msk [vmem:[#allocation5 + $0x18] sm:$0xff] %vm8416, %v8371
  %8419 = vst.msk [vmem:[#allocation5 + $0x30] sm:$0xff] %vm8416, %v8373
  %8420 = vst.msk [vmem:[#allocation5 + $0x48] sm:$0xff] %vm8416, %v8375
  %8421 = vst.msk [vmem:[#allocation5 + $0x60] sm:$0xff] %vm8416, %v8377
  %8422 = vst.msk [vmem:[#allocation5 + $0x78] sm:$0xff] %vm8416, %v8379
  %8423 = vst.msk [vmem:[#allocation5 + $0x90] sm:$0xff] %vm8416, %v8381
  %8424 = vst.msk [vmem:[#allocation5 + $0xa8] sm:$0xff] %vm8416, %v8383
  %8425 = vst.msk [vmem:[#allocation5 + $0xc0] sm:$0xff] %vm8416, %v8385
  %8426 = vst.msk [vmem:[#allocation5 + $0xd8] sm:$0xff] %vm8416, %v8387
  %8427 = vst.msk [vmem:[#allocation5 + $0xf0] sm:$0xff] %vm8416, %v8389
  %8428 = vst.msk [vmem:[#allocation5 + $0x108] sm:$0xff] %vm8416, %v8391
  %8429 = vst.msk [vmem:[#allocation5 + $0x120] sm:$0xff] %vm8416, %v8393
  %8430 = vst.msk [vmem:[#allocation5 + $0x138] sm:$0xff] %vm8416, %v8395
  %8431 = vst.msk [vmem:[#allocation5 + $0x150] sm:$0xff] %vm8416, %v8397
  %8432 = vst.msk [vmem:[#allocation5 + $0x168] sm:$0xff] %vm8416, %v8399
  %8433 = vst.msk [vmem:[#allocation5 + $0x8] sm:$0xff] %vm7495, %v7646
  %8434 = vst.msk [vmem:[#allocation5 + $0x20] sm:$0xff] %vm7495, %v7647
  %8435 = vst.msk [vmem:[#allocation5 + $0x38] sm:$0xff] %vm7495, %v7648
  %8436 = vst.msk [vmem:[#allocation5 + $0x50] sm:$0xff] %vm7495, %v7649
  %8437 = vst.msk [vmem:[#allocation5 + $0x68] sm:$0xff] %vm7495, %v7650
  %8438 = vst.msk [vmem:[#allocation5 + $0x80] sm:$0xff] %vm7495, %v7651
  %8439 = vst.msk [vmem:[#allocation5 + $0x98] sm:$0xff] %vm7495, %v7652
  %8440 = vst.msk [vmem:[#allocation5 + $0xb0] sm:$0xff] %vm7495, %v7653
  %8441 = vst.msk [vmem:[#allocation5 + $0xc8] sm:$0xff] %vm7495, %v7654
  %8442 = vst.msk [vmem:[#allocation5 + $0xe0] sm:$0xff] %vm7495, %v7655
  %8443 = vst.msk [vmem:[#allocation5 + $0xf8] sm:$0xff] %vm7495, %v7656
  %8444 = vst.msk [vmem:[#allocation5 + $0x110] sm:$0xff] %vm7495, %v7657
  %8445 = vst.msk [vmem:[#allocation5 + $0x128] sm:$0xff] %vm7495, %v7658
  %8446 = vst.msk [vmem:[#allocation5 + $0x140] sm:$0xff] %vm7495, %v7659
  %8447 = vst.msk [vmem:[#allocation5 + $0x158] sm:$0xff] %vm7495, %v7660
  %8448 = vst.msk [vmem:[#allocation5 + $0x170] sm:$0xff] %vm7495, %v7661
  %v8449 = vld [vmem:[%s2] sm:$0xff]
  %v8450 = vld [vmem:[%s2 + $0x8] sm:$0xff]
  %v8451 = vld [vmem:[%s2 + $0x10] sm:$0xff]
  %v8452 = vld [vmem:[%s2 + $0x18] sm:$0xff]
  %v8453 = vld [vmem:[%s2 + $0x20] sm:$0xff]
  %v8454 = vld [vmem:[%s2 + $0x28] sm:$0xff]
  %v8455 = vld [vmem:[%s2 + $0x30] sm:$0xff]
  %v8456 = vld [vmem:[%s2 + $0x38] sm:$0xff]
  %v8457 = vld [vmem:[%s2 + $0x40] sm:$0xff]
  %v8458 = vld [vmem:[%s2 + $0x48] sm:$0xff]
  %v8459 = vld [vmem:[%s2 + $0x50] sm:$0xff]
  %v8460 = vld [vmem:[%s2 + $0x58] sm:$0xff]
  %v8461 = vld [vmem:[%s2 + $0x60] sm:$0xff]
  %v8462 = vld [vmem:[%s2 + $0x68] sm:$0xff]
  %v8463 = vld [vmem:[%s2 + $0x70] sm:$0xff]
  %v8464 = vld [vmem:[%s2 + $0x78] sm:$0xff]
  %8466 = vset.pattern.permute.xlu0 5
  %8467 = vperm.xlu0 %8466, %v8449
  %v8468 = vpop.permute.xlu0 %8467
  %8471 = vset.pattern.permute.xlu0 5
  %8472 = vperm.xlu0 %8471, %v8450
  %v8473 = vpop.permute.xlu0 %8472
  %8476 = vset.pattern.permute.xlu0 5
  %8477 = vperm.xlu0 %8476, %v8451
  %v8478 = vpop.permute.xlu0 %8477
  %8481 = vset.pattern.permute.xlu0 5
  %8482 = vperm.xlu0 %8481, %v8452
  %v8483 = vpop.permute.xlu0 %8482
  %8486 = vset.pattern.permute.xlu0 5
  %8487 = vperm.xlu0 %8486, %v8453
  %v8488 = vpop.permute.xlu0 %8487
  %8491 = vset.pattern.permute.xlu0 5
  %8492 = vperm.xlu0 %8491, %v8454
  %v8493 = vpop.permute.xlu0 %8492
  %8496 = vset.pattern.permute.xlu0 5
  %8497 = vperm.xlu0 %8496, %v8455
  %v8498 = vpop.permute.xlu0 %8497
  %8501 = vset.pattern.permute.xlu0 5
  %8502 = vperm.xlu0 %8501, %v8456
  %v8503 = vpop.permute.xlu0 %8502
  %8506 = vset.pattern.permute.xlu0 5
  %8507 = vperm.xlu0 %8506, %v8457
  %v8508 = vpop.permute.xlu0 %8507
  %8511 = vset.pattern.permute.xlu0 5
  %8512 = vperm.xlu0 %8511, %v8458
  %v8513 = vpop.permute.xlu0 %8512
  %8516 = vset.pattern.permute.xlu0 5
  %8517 = vperm.xlu0 %8516, %v8459
  %v8518 = vpop.permute.xlu0 %8517
  %8521 = vset.pattern.permute.xlu0 5
  %8522 = vperm.xlu0 %8521, %v8460
  %v8523 = vpop.permute.xlu0 %8522
  %8526 = vset.pattern.permute.xlu0 5
  %8527 = vperm.xlu0 %8526, %v8461
  %v8528 = vpop.permute.xlu0 %8527
  %8531 = vset.pattern.permute.xlu0 5
  %8532 = vperm.xlu0 %8531, %v8462
  %v8533 = vpop.permute.xlu0 %8532
  %8536 = vset.pattern.permute.xlu0 5
  %8537 = vperm.xlu0 %8536, %v8463
  %v8538 = vpop.permute.xlu0 %8537
  %8541 = vset.pattern.permute.xlu0 5
  %8542 = vperm.xlu0 %8541, %v8464
  %v8543 = vpop.permute.xlu0 %8542
  %v8545 = vmul.f32 %v8045, %v8468
  %v8546 = vmul.f32 %v8044, %v8473
  %v8547 = vmul.f32 %v8043, %v8478
  %v8548 = vmul.f32 %v8042, %v8483
  %v8549 = vmul.f32 %v8041, %v8488
  %v8550 = vmul.f32 %v8040, %v8493
  %v8551 = vmul.f32 %v8039, %v8498
  %v8552 = vmul.f32 %v8038, %v8503
  %v8553 = vmul.f32 %v8037, %v8508
  %v8554 = vmul.f32 %v8036, %v8513
  %v8555 = vmul.f32 %v8035, %v8518
  %v8556 = vmul.f32 %v8034, %v8523
  %v8557 = vmul.f32 %v8033, %v8528
  %v8558 = vmul.f32 %v8032, %v8533
  %v8559 = vmul.f32 %v8031, %v8538
  %v8560 = vmul.f32 %v8046, %v8543
  %8577 = vrot.lane.b32.xlu0 %v8545, 32
  %v8578 = vpop.permute.xlu0 %8577
  %8579 = vrot.lane.b32.xlu0 %v8546, 32
  %v8580 = vpop.permute.xlu0 %8579
  %8581 = vrot.lane.b32.xlu0 %v8547, 32
  %v8582 = vpop.permute.xlu0 %8581
  %8583 = vrot.lane.b32.xlu0 %v8548, 32
  %v8584 = vpop.permute.xlu0 %8583
  %8585 = vrot.lane.b32.xlu0 %v8549, 32
  %v8586 = vpop.permute.xlu0 %8585
  %8587 = vrot.lane.b32.xlu0 %v8550, 32
  %v8588 = vpop.permute.xlu0 %8587
  %8589 = vrot.lane.b32.xlu0 %v8551, 32
  %v8590 = vpop.permute.xlu0 %8589
  %8591 = vrot.lane.b32.xlu0 %v8552, 32
  %v8592 = vpop.permute.xlu0 %8591
  %8593 = vrot.lane.b32.xlu0 %v8553, 32
  %v8594 = vpop.permute.xlu0 %8593
  %8595 = vrot.lane.b32.xlu0 %v8554, 32
  %v8596 = vpop.permute.xlu0 %8595
  %8597 = vrot.lane.b32.xlu0 %v8555, 32
  %v8598 = vpop.permute.xlu0 %8597
  %8599 = vrot.lane.b32.xlu0 %v8556, 32
  %v8600 = vpop.permute.xlu0 %8599
  %8601 = vrot.lane.b32.xlu0 %v8557, 32
  %v8602 = vpop.permute.xlu0 %8601
  %8603 = vrot.lane.b32.xlu0 %v8558, 32
  %v8604 = vpop.permute.xlu0 %8603
  %8605 = vrot.lane.b32.xlu0 %v8559, 32
  %v8606 = vpop.permute.xlu0 %8605
  %8607 = vrot.lane.b32.xlu0 %v8560, 32
  %v8608 = vpop.permute.xlu0 %8607
  %8625 = vst.msk [vmem:[#allocation5 + $0x8] sm:$0xff] %vm7998, %v8578
  %8626 = vst.msk [vmem:[#allocation5 + $0x20] sm:$0xff] %vm7998, %v8580
  %8627 = vst.msk [vmem:[#allocation5 + $0x38] sm:$0xff] %vm7998, %v8582
  %8628 = vst.msk [vmem:[#allocation5 + $0x50] sm:$0xff] %vm7998, %v8584
  %8629 = vst.msk [vmem:[#allocation5 + $0x68] sm:$0xff] %vm7998, %v8586
  %8630 = vst.msk [vmem:[#allocation5 + $0x80] sm:$0xff] %vm7998, %v8588
  %8631 = vst.msk [vmem:[#allocation5 + $0x98] sm:$0xff] %vm7998, %v8590
  %8632 = vst.msk [vmem:[#allocation5 + $0xb0] sm:$0xff] %vm7998, %v8592
  %8633 = vst.msk [vmem:[#allocation5 + $0xc8] sm:$0xff] %vm7998, %v8594
  %8634 = vst.msk [vmem:[#allocation5 + $0xe0] sm:$0xff] %vm7998, %v8596
  %8635 = vst.msk [vmem:[#allocation5 + $0xf8] sm:$0xff] %vm7998, %v8598
  %8636 = vst.msk [vmem:[#allocation5 + $0x110] sm:$0xff] %vm7998, %v8600
  %8637 = vst.msk [vmem:[#allocation5 + $0x128] sm:$0xff] %vm7998, %v8602
  %8638 = vst.msk [vmem:[#allocation5 + $0x140] sm:$0xff] %vm7998, %v8604
  %8639 = vst.msk [vmem:[#allocation5 + $0x158] sm:$0xff] %vm7998, %v8606
  %8640 = vst.msk [vmem:[#allocation5 + $0x170] sm:$0xff] %vm7998, %v8608
  %v8641 = vld [vmem:[%s2] sm:$0xff]
  %v8642 = vld [vmem:[%s2 + $0x8] sm:$0xff]
  %v8643 = vld [vmem:[%s2 + $0x10] sm:$0xff]
  %v8644 = vld [vmem:[%s2 + $0x18] sm:$0xff]
  %v8645 = vld [vmem:[%s2 + $0x20] sm:$0xff]
  %v8646 = vld [vmem:[%s2 + $0x28] sm:$0xff]
  %v8647 = vld [vmem:[%s2 + $0x30] sm:$0xff]
  %v8648 = vld [vmem:[%s2 + $0x38] sm:$0xff]
  %v8649 = vld [vmem:[%s2 + $0x40] sm:$0xff]
  %v8650 = vld [vmem:[%s2 + $0x48] sm:$0xff]
  %v8651 = vld [vmem:[%s2 + $0x50] sm:$0xff]
  %v8652 = vld [vmem:[%s2 + $0x58] sm:$0xff]
  %v8653 = vld [vmem:[%s2 + $0x60] sm:$0xff]
  %v8654 = vld [vmem:[%s2 + $0x68] sm:$0xff]
  %v8655 = vld [vmem:[%s2 + $0x70] sm:$0xff]
  %v8656 = vld [vmem:[%s2 + $0x78] sm:$0xff]
  %8658 = vset.pattern.permute.xlu0 6
  %8659 = vperm.xlu0 %8658, %v8641
  %v8660 = vpop.permute.xlu0 %8659
  %8663 = vset.pattern.permute.xlu0 6
  %8664 = vperm.xlu0 %8663, %v8642
  %v8665 = vpop.permute.xlu0 %8664
  %8668 = vset.pattern.permute.xlu0 6
  %8669 = vperm.xlu0 %8668, %v8643
  %v8670 = vpop.permute.xlu0 %8669
  %8673 = vset.pattern.permute.xlu0 6
  %8674 = vperm.xlu0 %8673, %v8644
  %v8675 = vpop.permute.xlu0 %8674
  %8678 = vset.pattern.permute.xlu0 6
  %8679 = vperm.xlu0 %8678, %v8645
  %v8680 = vpop.permute.xlu0 %8679
  %8683 = vset.pattern.permute.xlu0 6
  %8684 = vperm.xlu0 %8683, %v8646
  %v8685 = vpop.permute.xlu0 %8684
  %8688 = vset.pattern.permute.xlu0 6
  %8689 = vperm.xlu0 %8688, %v8647
  %v8690 = vpop.permute.xlu0 %8689
  %8693 = vset.pattern.permute.xlu0 6
  %8694 = vperm.xlu0 %8693, %v8648
  %v8695 = vpop.permute.xlu0 %8694
  %8698 = vset.pattern.permute.xlu0 6
  %8699 = vperm.xlu0 %8698, %v8649
  %v8700 = vpop.permute.xlu0 %8699
  %8703 = vset.pattern.permute.xlu0 6
  %8704 = vperm.xlu0 %8703, %v8650
  %v8705 = vpop.permute.xlu0 %8704
  %8708 = vset.pattern.permute.xlu0 6
  %8709 = vperm.xlu0 %8708, %v8651
  %v8710 = vpop.permute.xlu0 %8709
  %8713 = vset.pattern.permute.xlu0 6
  %8714 = vperm.xlu0 %8713, %v8652
  %v8715 = vpop.permute.xlu0 %8714
  %8718 = vset.pattern.permute.xlu0 6
  %8719 = vperm.xlu0 %8718, %v8653
  %v8720 = vpop.permute.xlu0 %8719
  %8723 = vset.pattern.permute.xlu0 6
  %8724 = vperm.xlu0 %8723, %v8654
  %v8725 = vpop.permute.xlu0 %8724
  %8728 = vset.pattern.permute.xlu0 6
  %8729 = vperm.xlu0 %8728, %v8655
  %v8730 = vpop.permute.xlu0 %8729
  %8733 = vset.pattern.permute.xlu0 6
  %8734 = vperm.xlu0 %8733, %v8656
  %v8735 = vpop.permute.xlu0 %8734
  %v8737 = vmul.f32 %v7692, %v8660
  %v8738 = vmul.f32 %v7691, %v8665
  %v8739 = vmul.f32 %v7690, %v8670
  %v8740 = vmul.f32 %v7689, %v8675
  %v8741 = vmul.f32 %v7688, %v8680
  %v8742 = vmul.f32 %v7687, %v8685
  %v8743 = vmul.f32 %v7686, %v8690
  %v8744 = vmul.f32 %v7685, %v8695
  %v8745 = vmul.f32 %v7684, %v8700
  %v8746 = vmul.f32 %v7683, %v8705
  %v8747 = vmul.f32 %v7682, %v8710
  %v8748 = vmul.f32 %v7681, %v8715
  %v8749 = vmul.f32 %v7680, %v8720
  %v8750 = vmul.f32 %v7679, %v8725
  %v8751 = vmul.f32 %v7678, %v8730
  %v8752 = vmul.f32 %v7693, %v8735
  %8769 = vrot.lane.b32.xlu0 %v8737, 64
  %v8770 = vpop.permute.xlu0 %8769
  %8771 = vrot.lane.b32.xlu0 %v8738, 64
  %v8772 = vpop.permute.xlu0 %8771
  %8773 = vrot.lane.b32.xlu0 %v8739, 64
  %v8774 = vpop.permute.xlu0 %8773
  %8775 = vrot.lane.b32.xlu0 %v8740, 64
  %v8776 = vpop.permute.xlu0 %8775
  %8777 = vrot.lane.b32.xlu0 %v8741, 64
  %v8778 = vpop.permute.xlu0 %8777
  %8779 = vrot.lane.b32.xlu0 %v8742, 64
  %v8780 = vpop.permute.xlu0 %8779
  %8781 = vrot.lane.b32.xlu0 %v8743, 64
  %v8782 = vpop.permute.xlu0 %8781
  %8783 = vrot.lane.b32.xlu0 %v8744, 64
  %v8784 = vpop.permute.xlu0 %8783
  %8785 = vrot.lane.b32.xlu0 %v8745, 64
  %v8786 = vpop.permute.xlu0 %8785
  %8787 = vrot.lane.b32.xlu0 %v8746, 64
  %v8788 = vpop.permute.xlu0 %8787
  %8789 = vrot.lane.b32.xlu0 %v8747, 64
  %v8790 = vpop.permute.xlu0 %8789
  %8791 = vrot.lane.b32.xlu0 %v8748, 64
  %v8792 = vpop.permute.xlu0 %8791
  %8793 = vrot.lane.b32.xlu0 %v8749, 64
  %v8794 = vpop.permute.xlu0 %8793
  %8795 = vrot.lane.b32.xlu0 %v8750, 64
  %v8796 = vpop.permute.xlu0 %8795
  %8797 = vrot.lane.b32.xlu0 %v8751, 64
  %v8798 = vpop.permute.xlu0 %8797
  %8799 = vrot.lane.b32.xlu0 %v8752, 64
  %v8800 = vpop.permute.xlu0 %8799
  %8817 = vst.msk [vmem:[#allocation5 + $0x8] sm:$0xff] %vm8223, %v8770
  %8818 = vst.msk [vmem:[#allocation5 + $0x20] sm:$0xff] %vm8223, %v8772
  %8819 = vst.msk [vmem:[#allocation5 + $0x38] sm:$0xff] %vm8223, %v8774
  %8820 = vst.msk [vmem:[#allocation5 + $0x50] sm:$0xff] %vm8223, %v8776
  %8821 = vst.msk [vmem:[#allocation5 + $0x68] sm:$0xff] %vm8223, %v8778
  %8822 = vst.msk [vmem:[#allocation5 + $0x80] sm:$0xff] %vm8223, %v8780
  %8823 = vst.msk [vmem:[#allocation5 + $0x98] sm:$0xff] %vm8223, %v8782
  %8824 = vst.msk [vmem:[#allocation5 + $0xb0] sm:$0xff] %vm8223, %v8784
  %8825 = vst.msk [vmem:[#allocation5 + $0xc8] sm:$0xff] %vm8223, %v8786
  %8826 = vst.msk [vmem:[#allocation5 + $0xe0] sm:$0xff] %vm8223, %v8788
  %8827 = vst.msk [vmem:[#allocation5 + $0xf8] sm:$0xff] %vm8223, %v8790
  %8828 = vst.msk [vmem:[#allocation5 + $0x110] sm:$0xff] %vm8223, %v8792
  %8829 = vst.msk [vmem:[#allocation5 + $0x128] sm:$0xff] %vm8223, %v8794
  %8830 = vst.msk [vmem:[#allocation5 + $0x140] sm:$0xff] %vm8223, %v8796
  %8831 = vst.msk [vmem:[#allocation5 + $0x158] sm:$0xff] %vm8223, %v8798
  %8832 = vst.msk [vmem:[#allocation5 + $0x170] sm:$0xff] %vm8223, %v8800
  %v8833 = vld [vmem:[%s2] sm:$0xff]
  %v8834 = vld [vmem:[%s2 + $0x8] sm:$0xff]
  %v8835 = vld [vmem:[%s2 + $0x10] sm:$0xff]
  %v8836 = vld [vmem:[%s2 + $0x18] sm:$0xff]
  %v8837 = vld [vmem:[%s2 + $0x20] sm:$0xff]
  %v8838 = vld [vmem:[%s2 + $0x28] sm:$0xff]
  %v8839 = vld [vmem:[%s2 + $0x30] sm:$0xff]
  %v8840 = vld [vmem:[%s2 + $0x38] sm:$0xff]
  %v8841 = vld [vmem:[%s2 + $0x40] sm:$0xff]
  %v8842 = vld [vmem:[%s2 + $0x48] sm:$0xff]
  %v8843 = vld [vmem:[%s2 + $0x50] sm:$0xff]
  %v8844 = vld [vmem:[%s2 + $0x58] sm:$0xff]
  %v8845 = vld [vmem:[%s2 + $0x60] sm:$0xff]
  %v8846 = vld [vmem:[%s2 + $0x68] sm:$0xff]
  %v8847 = vld [vmem:[%s2 + $0x70] sm:$0xff]
  %v8848 = vld [vmem:[%s2 + $0x78] sm:$0xff]
  %8850 = vset.pattern.permute.xlu0 7
  %8851 = vperm.xlu0 %8850, %v8833
  %v8852 = vpop.permute.xlu0 %8851
  %8855 = vset.pattern.permute.xlu0 7
  %8856 = vperm.xlu0 %8855, %v8834
  %v8857 = vpop.permute.xlu0 %8856
  %8860 = vset.pattern.permute.xlu0 7
  %8861 = vperm.xlu0 %8860, %v8835
  %v8862 = vpop.permute.xlu0 %8861
  %8865 = vset.pattern.permute.xlu0 7
  %8866 = vperm.xlu0 %8865, %v8836
  %v8867 = vpop.permute.xlu0 %8866
  %8870 = vset.pattern.permute.xlu0 7
  %8871 = vperm.xlu0 %8870, %v8837
  %v8872 = vpop.permute.xlu0 %8871
  %8875 = vset.pattern.permute.xlu0 7
  %8876 = vperm.xlu0 %8875, %v8838
  %v8877 = vpop.permute.xlu0 %8876
  %8880 = vset.pattern.permute.xlu0 7
  %8881 = vperm.xlu0 %8880, %v8839
  %v8882 = vpop.permute.xlu0 %8881
  %8885 = vset.pattern.permute.xlu0 7
  %8886 = vperm.xlu0 %8885, %v8840
  %v8887 = vpop.permute.xlu0 %8886
  %8890 = vset.pattern.permute.xlu0 7
  %8891 = vperm.xlu0 %8890, %v8841
  %v8892 = vpop.permute.xlu0 %8891
  %8895 = vset.pattern.permute.xlu0 7
  %8896 = vperm.xlu0 %8895, %v8842
  %v8897 = vpop.permute.xlu0 %8896
  %8900 = vset.pattern.permute.xlu0 7
  %8901 = vperm.xlu0 %8900, %v8843
  %v8902 = vpop.permute.xlu0 %8901
  %8905 = vset.pattern.permute.xlu0 7
  %8906 = vperm.xlu0 %8905, %v8844
  %v8907 = vpop.permute.xlu0 %8906
  %8910 = vset.pattern.permute.xlu0 7
  %8911 = vperm.xlu0 %8910, %v8845
  %v8912 = vpop.permute.xlu0 %8911
  %8915 = vset.pattern.permute.xlu0 7
  %8916 = vperm.xlu0 %8915, %v8846
  %v8917 = vpop.permute.xlu0 %8916
  %8920 = vset.pattern.permute.xlu0 7
  %8921 = vperm.xlu0 %8920, %v8847
  %v8922 = vpop.permute.xlu0 %8921
  %8925 = vset.pattern.permute.xlu0 7
  %8926 = vperm.xlu0 %8925, %v8848
  %v8927 = vpop.permute.xlu0 %8926
  %v8929 = vmul.f32 %v7647, %v8852
  %v8930 = vmul.f32 %v7648, %v8857
  %v8931 = vmul.f32 %v7649, %v8862
  %v8932 = vmul.f32 %v7650, %v8867
  %v8933 = vmul.f32 %v7651, %v8872
  %v8934 = vmul.f32 %v7652, %v8877
  %v8935 = vmul.f32 %v7653, %v8882
  %v8936 = vmul.f32 %v7654, %v8887
  %v8937 = vmul.f32 %v7655, %v8892
  %v8938 = vmul.f32 %v7656, %v8897
  %v8939 = vmul.f32 %v7657, %v8902
  %v8940 = vmul.f32 %v7658, %v8907
  %v8941 = vmul.f32 %v7659, %v8912
  %v8942 = vmul.f32 %v7660, %v8917
  %v8943 = vmul.f32 %v7661, %v8922
  %v8944 = vmul.f32 %v7646, %v8927
  %8961 = vrot.lane.b32.xlu0 %v8929, 96
  %v8962 = vpop.permute.xlu0 %8961
  %8963 = vrot.lane.b32.xlu0 %v8930, 96
  %v8964 = vpop.permute.xlu0 %8963
  %8965 = vrot.lane.b32.xlu0 %v8931, 96
  %v8966 = vpop.permute.xlu0 %8965
  %8967 = vrot.lane.b32.xlu0 %v8932, 96
  %v8968 = vpop.permute.xlu0 %8967
  %8969 = vrot.lane.b32.xlu0 %v8933, 96
  %v8970 = vpop.permute.xlu0 %8969
  %8971 = vrot.lane.b32.xlu0 %v8934, 96
  %v8972 = vpop.permute.xlu0 %8971
  %8973 = vrot.lane.b32.xlu0 %v8935, 96
  %v8974 = vpop.permute.xlu0 %8973
  %8975 = vrot.lane.b32.xlu0 %v8936, 96
  %v8976 = vpop.permute.xlu0 %8975
  %8977 = vrot.lane.b32.xlu0 %v8937, 96
  %v8978 = vpop.permute.xlu0 %8977
  %8979 = vrot.lane.b32.xlu0 %v8938, 96
  %v8980 = vpop.permute.xlu0 %8979
  %8981 = vrot.lane.b32.xlu0 %v8939, 96
  %v8982 = vpop.permute.xlu0 %8981
  %8983 = vrot.lane.b32.xlu0 %v8940, 96
  %v8984 = vpop.permute.xlu0 %8983
  %8985 = vrot.lane.b32.xlu0 %v8941, 96
  %v8986 = vpop.permute.xlu0 %8985
  %8987 = vrot.lane.b32.xlu0 %v8942, 96
  %v8988 = vpop.permute.xlu0 %8987
  %8989 = vrot.lane.b32.xlu0 %v8943, 96
  %v8990 = vpop.permute.xlu0 %8989
  %8991 = vrot.lane.b32.xlu0 %v8944, 96
  %v8992 = vpop.permute.xlu0 %8991
  %9009 = vst.msk [vmem:[#allocation5 + $0x8] sm:$0xff] %vm8416, %v8962
  %9010 = vst.msk [vmem:[#allocation5 + $0x20] sm:$0xff] %vm8416, %v8964
  %9011 = vst.msk [vmem:[#allocation5 + $0x38] sm:$0xff] %vm8416, %v8966
  %9012 = vst.msk [vmem:[#allocation5 + $0x50] sm:$0xff] %vm8416, %v8968
  %9013 = vst.msk [vmem:[#allocation5 + $0x68] sm:$0xff] %vm8416, %v8970
  %9014 = vst.msk [vmem:[#allocation5 + $0x80] sm:$0xff] %vm8416, %v8972
  %9015 = vst.msk [vmem:[#allocation5 + $0x98] sm:$0xff] %vm8416, %v8974
  %9016 = vst.msk [vmem:[#allocation5 + $0xb0] sm:$0xff] %vm8416, %v8976
  %9017 = vst.msk [vmem:[#allocation5 + $0xc8] sm:$0xff] %vm8416, %v8978
  %9018 = vst.msk [vmem:[#allocation5 + $0xe0] sm:$0xff] %vm8416, %v8980
  %9019 = vst.msk [vmem:[#allocation5 + $0xf8] sm:$0xff] %vm8416, %v8982
  %9020 = vst.msk [vmem:[#allocation5 + $0x110] sm:$0xff] %vm8416, %v8984
  %9021 = vst.msk [vmem:[#allocation5 + $0x128] sm:$0xff] %vm8416, %v8986
  %9022 = vst.msk [vmem:[#allocation5 + $0x140] sm:$0xff] %vm8416, %v8988
  %9023 = vst.msk [vmem:[#allocation5 + $0x158] sm:$0xff] %vm8416, %v8990
  %9024 = vst.msk [vmem:[#allocation5 + $0x170] sm:$0xff] %vm8416, %v8992
  %v9025 = vld [vmem:[%s2] sm:$0xff]
  %v9026 = vld [vmem:[%s2 + $0x8] sm:$0xff]
  %v9027 = vld [vmem:[%s2 + $0x10] sm:$0xff]
  %v9028 = vld [vmem:[%s2 + $0x18] sm:$0xff]
  %v9029 = vld [vmem:[%s2 + $0x20] sm:$0xff]
  %v9030 = vld [vmem:[%s2 + $0x28] sm:$0xff]
  %v9031 = vld [vmem:[%s2 + $0x30] sm:$0xff]
  %v9032 = vld [vmem:[%s2 + $0x38] sm:$0xff]
  %v9033 = vld [vmem:[%s2 + $0x40] sm:$0xff]
  %v9034 = vld [vmem:[%s2 + $0x48] sm:$0xff]
  %v9035 = vld [vmem:[%s2 + $0x50] sm:$0xff]
  %v9036 = vld [vmem:[%s2 + $0x58] sm:$0xff]
  %v9037 = vld [vmem:[%s2 + $0x60] sm:$0xff]
  %v9038 = vld [vmem:[%s2 + $0x68] sm:$0xff]
  %v9039 = vld [vmem:[%s2 + $0x70] sm:$0xff]
  %v9040 = vld [vmem:[%s2 + $0x78] sm:$0xff]
  %9042 = vset.pattern.permute.xlu0 8
  %9043 = vperm.xlu0 %9042, %v9025
  %v9044 = vpop.permute.xlu0 %9043
  %9047 = vset.pattern.permute.xlu0 8
  %9048 = vperm.xlu0 %9047, %v9026
  %v9049 = vpop.permute.xlu0 %9048
  %9052 = vset.pattern.permute.xlu0 8
  %9053 = vperm.xlu0 %9052, %v9027
  %v9054 = vpop.permute.xlu0 %9053
  %9057 = vset.pattern.permute.xlu0 8
  %9058 = vperm.xlu0 %9057, %v9028
  %v9059 = vpop.permute.xlu0 %9058
  %9062 = vset.pattern.permute.xlu0 8
  %9063 = vperm.xlu0 %9062, %v9029
  %v9064 = vpop.permute.xlu0 %9063
  %9067 = vset.pattern.permute.xlu0 8
  %9068 = vperm.xlu0 %9067, %v9030
  %v9069 = vpop.permute.xlu0 %9068
  %9072 = vset.pattern.permute.xlu0 8
  %9073 = vperm.xlu0 %9072, %v9031
  %v9074 = vpop.permute.xlu0 %9073
  %9077 = vset.pattern.permute.xlu0 8
  %9078 = vperm.xlu0 %9077, %v9032
  %v9079 = vpop.permute.xlu0 %9078
  %9082 = vset.pattern.permute.xlu0 8
  %9083 = vperm.xlu0 %9082, %v9033
  %v9084 = vpop.permute.xlu0 %9083
  %9087 = vset.pattern.permute.xlu0 8
  %9088 = vperm.xlu0 %9087, %v9034
  %v9089 = vpop.permute.xlu0 %9088
  %9092 = vset.pattern.permute.xlu0 8
  %9093 = vperm.xlu0 %9092, %v9035
  %v9094 = vpop.permute.xlu0 %9093
  %9097 = vset.pattern.permute.xlu0 8
  %9098 = vperm.xlu0 %9097, %v9036
  %v9099 = vpop.permute.xlu0 %9098
  %9102 = vset.pattern.permute.xlu0 8
  %9103 = vperm.xlu0 %9102, %v9037
  %v9104 = vpop.permute.xlu0 %9103
  %9107 = vset.pattern.permute.xlu0 8
  %9108 = vperm.xlu0 %9107, %v9038
  %v9109 = vpop.permute.xlu0 %9108
  %9112 = vset.pattern.permute.xlu0 8
  %9113 = vperm.xlu0 %9112, %v9039
  %v9114 = vpop.permute.xlu0 %9113
  %9117 = vset.pattern.permute.xlu0 8
  %9118 = vperm.xlu0 %9117, %v9040
  %v9119 = vpop.permute.xlu0 %9118
  %v9121 = vmul.f32 %v8044, %v9044
  %v9122 = vmul.f32 %v8043, %v9049
  %v9123 = vmul.f32 %v8042, %v9054
  %v9124 = vmul.f32 %v8041, %v9059
  %v9125 = vmul.f32 %v8040, %v9064
  %v9126 = vmul.f32 %v8039, %v9069
  %v9127 = vmul.f32 %v8038, %v9074
  %v9128 = vmul.f32 %v8037, %v9079
  %v9129 = vmul.f32 %v8036, %v9084
  %v9130 = vmul.f32 %v8035, %v9089
  %v9131 = vmul.f32 %v8034, %v9094
  %v9132 = vmul.f32 %v8033, %v9099
  %v9133 = vmul.f32 %v8032, %v9104
  %v9134 = vmul.f32 %v8031, %v9109
  %v9135 = vmul.f32 %v8046, %v9114
  %v9136 = vmul.f32 %v8045, %v9119
  %9137 = vst.msk [vmem:[#allocation5 + $0x10] sm:$0xff] %vm7495, %v9121
  %9138 = vst.msk [vmem:[#allocation5 + $0x28] sm:$0xff] %vm7495, %v9122
  %9139 = vst.msk [vmem:[#allocation5 + $0x40] sm:$0xff] %vm7495, %v9123
  %9140 = vst.msk [vmem:[#allocation5 + $0x58] sm:$0xff] %vm7495, %v9124
  %9141 = vst.msk [vmem:[#allocation5 + $0x70] sm:$0xff] %vm7495, %v9125
  %9142 = vst.msk [vmem:[#allocation5 + $0x88] sm:$0xff] %vm7495, %v9126
  %9143 = vst.msk [vmem:[#allocation5 + $0xa0] sm:$0xff] %vm7495, %v9127
  %9144 = vst.msk [vmem:[#allocation5 + $0xb8] sm:$0xff] %vm7495, %v9128
  %9145 = vst.msk [vmem:[#allocation5 + $0xd0] sm:$0xff] %vm7495, %v9129
  %9146 = vst.msk [vmem:[#allocation5 + $0xe8] sm:$0xff] %vm7495, %v9130
  %9147 = vst.msk [vmem:[#allocation5 + $0x100] sm:$0xff] %vm7495, %v9131
  %9148 = vst.msk [vmem:[#allocation5 + $0x118] sm:$0xff] %vm7495, %v9132
  %9149 = vst.msk [vmem:[#allocation5 + $0x130] sm:$0xff] %vm7495, %v9133
  %9150 = vst.msk [vmem:[#allocation5 + $0x148] sm:$0xff] %vm7495, %v9134
  %9151 = vst.msk [vmem:[#allocation5 + $0x160] sm:$0xff] %vm7495, %v9135
  %9152 = vst.msk [vmem:[#allocation5 + $0x178] sm:$0xff] %vm7495, %v9136
  %v9153 = vld [vmem:[#allocation5] sm:$0xff]
  %v9154 = vld [vmem:[#allocation5 + $0x8] sm:$0xff]
  %v9155 = vld [vmem:[#allocation5 + $0x10] sm:$0xff]
  %v9156 = vld [vmem:[#allocation5 + $0x18] sm:$0xff]
  %v9157 = vld [vmem:[#allocation5 + $0x20] sm:$0xff]
  %v9158 = vld [vmem:[#allocation5 + $0x28] sm:$0xff]
  %v9159 = vld [vmem:[#allocation5 + $0x30] sm:$0xff]
  %v9160 = vld [vmem:[#allocation5 + $0x38] sm:$0xff]
  %v9161 = vld [vmem:[#allocation5 + $0x40] sm:$0xff]
  %v9162 = vld [vmem:[#allocation5 + $0x48] sm:$0xff]
  %v9163 = vld [vmem:[#allocation5 + $0x50] sm:$0xff]
  %v9164 = vld [vmem:[#allocation5 + $0x58] sm:$0xff]
  %v9165 = vld [vmem:[#allocation5 + $0x60] sm:$0xff]
  %v9166 = vld [vmem:[#allocation5 + $0x68] sm:$0xff]
  %v9167 = vld [vmem:[#allocation5 + $0x70] sm:$0xff]
  %v9168 = vld [vmem:[#allocation5 + $0x78] sm:$0xff]
  %v9169 = vld [vmem:[#allocation5 + $0x80] sm:$0xff]
  %v9170 = vld [vmem:[#allocation5 + $0x88] sm:$0xff]
  %v9171 = vld [vmem:[#allocation5 + $0x90] sm:$0xff]
  %v9172 = vld [vmem:[#allocation5 + $0x98] sm:$0xff]
  %v9173 = vld [vmem:[#allocation5 + $0xa0] sm:$0xff]
  %v9174 = vld [vmem:[#allocation5 + $0xa8] sm:$0xff]
  %v9175 = vld [vmem:[#allocation5 + $0xb0] sm:$0xff]
  %v9176 = vld [vmem:[#allocation5 + $0xb8] sm:$0xff]
  %v9177 = vld [vmem:[#allocation5 + $0xc0] sm:$0xff]
  %v9178 = vld [vmem:[#allocation5 + $0xc8] sm:$0xff]
  %v9179 = vld [vmem:[#allocation5 + $0xd0] sm:$0xff]
  %v9180 = vld [vmem:[#allocation5 + $0xd8] sm:$0xff]
  %v9181 = vld [vmem:[#allocation5 + $0xe0] sm:$0xff]
  %v9182 = vld [vmem:[#allocation5 + $0xe8] sm:$0xff]
  %v9183 = vld [vmem:[#allocation5 + $0xf0] sm:$0xff]
  %v9184 = vld [vmem:[#allocation5 + $0xf8] sm:$0xff]
  %v9185 = vld [vmem:[#allocation5 + $0x100] sm:$0xff]
  %v9186 = vld [vmem:[#allocation5 + $0x108] sm:$0xff]
  %v9187 = vld [vmem:[#allocation5 + $0x110] sm:$0xff]
  %v9188 = vld [vmem:[#allocation5 + $0x118] sm:$0xff]
  %v9189 = vld [vmem:[#allocation5 + $0x120] sm:$0xff]
  %v9190 = vld [vmem:[#allocation5 + $0x128] sm:$0xff]
  %v9191 = vld [vmem:[#allocation5 + $0x130] sm:$0xff]
  %v9192 = vld [vmem:[#allocation5 + $0x138] sm:$0xff]
  %v9193 = vld [vmem:[#allocation5 + $0x140] sm:$0xff]
  %v9194 = vld [vmem:[#allocation5 + $0x148] sm:$0xff]
  %v9195 = vld [vmem:[#allocation5 + $0x150] sm:$0xff]
  %v9196 = vld [vmem:[#allocation5 + $0x158] sm:$0xff]
  %v9197 = vld [vmem:[#allocation5 + $0x160] sm:$0xff]
  %v9198 = vld [vmem:[#allocation5 + $0x168] sm:$0xff]
  %v9199 = vld [vmem:[#allocation5 + $0x170] sm:$0xff]
  %v9200 = vld [vmem:[#allocation5 + $0x178] sm:$0xff]
  %v9201 = vld [vmem:[%s6] sm:$0xff]
  %v9202 = vld [vmem:[%s6 + $0x8] sm:$0xff]
  %v9203 = vld [vmem:[%s6 + $0x10] sm:$0xff]
  %v9204 = vld [vmem:[%s6 + $0x18] sm:$0xff]
  %v9205 = vld [vmem:[%s6 + $0x20] sm:$0xff]
  %v9206 = vld [vmem:[%s6 + $0x28] sm:$0xff]
  %v9207 = vld [vmem:[%s6 + $0x30] sm:$0xff]
  %v9208 = vld [vmem:[%s6 + $0x38] sm:$0xff]
  %v9209 = vld [vmem:[%s6 + $0x40] sm:$0xff]
  %v9210 = vld [vmem:[%s6 + $0x48] sm:$0xff]
  %v9211 = vld [vmem:[%s6 + $0x50] sm:$0xff]
  %v9212 = vld [vmem:[%s6 + $0x58] sm:$0xff]
  %v9213 = vld [vmem:[%s6 + $0x60] sm:$0xff]
  %v9214 = vld [vmem:[%s6 + $0x68] sm:$0xff]
  %v9215 = vld [vmem:[%s6 + $0x70] sm:$0xff]
  %v9216 = vld [vmem:[%s6 + $0x78] sm:$0xff]
  %v9217 = vld [vmem:[%s6 + $0x80] sm:$0xff]
  %v9218 = vld [vmem:[%s6 + $0x88] sm:$0xff]
  %v9219 = vld [vmem:[%s6 + $0x90] sm:$0xff]
  %v9220 = vld [vmem:[%s6 + $0x98] sm:$0xff]
  %v9221 = vld [vmem:[%s6 + $0xa0] sm:$0xff]
  %v9222 = vld [vmem:[%s6 + $0xa8] sm:$0xff]
  %v9223 = vld [vmem:[%s6 + $0xb0] sm:$0xff]
  %v9224 = vld [vmem:[%s6 + $0xb8] sm:$0xff]
  %v9225 = vld [vmem:[%s6 + $0xc0] sm:$0xff]
  %v9226 = vld [vmem:[%s6 + $0xc8] sm:$0xff]
  %v9227 = vld [vmem:[%s6 + $0xd0] sm:$0xff]
  %v9228 = vld [vmem:[%s6 + $0xd8] sm:$0xff]
  %v9229 = vld [vmem:[%s6 + $0xe0] sm:$0xff]
  %v9230 = vld [vmem:[%s6 + $0xe8] sm:$0xff]
  %v9231 = vld [vmem:[%s6 + $0xf0] sm:$0xff]
  %v9232 = vld [vmem:[%s6 + $0xf8] sm:$0xff]
  %v9233 = vld [vmem:[%s6 + $0x100] sm:$0xff]
  %v9234 = vld [vmem:[%s6 + $0x108] sm:$0xff]
  %v9235 = vld [vmem:[%s6 + $0x110] sm:$0xff]
  %v9236 = vld [vmem:[%s6 + $0x118] sm:$0xff]
  %v9238 = vsel %vm7495, %v9155, 0
  %v9241 = vsel %vm7495, %v9158, 0
  %v9244 = vsel %vm7495, %v9161, 0
  %v9247 = vsel %vm7495, %v9164, 0
  %v9250 = vsel %vm7495, %v9167, 0
  %v9253 = vsel %vm7495, %v9170, 0
  %v9256 = vsel %vm7495, %v9173, 0
  %v9259 = vsel %vm7495, %v9176, 0
  %v9262 = vsel %vm7495, %v9179, 0
  %v9265 = vsel %vm7495, %v9182, 0
  %v9268 = vsel %vm7495, %v9185, 0
  %v9271 = vsel %vm7495, %v9188, 0
  %v9274 = vsel %vm7495, %v9191, 0
  %v9277 = vsel %vm7495, %v9194, 0
  %v9280 = vsel %vm7495, %v9197, 0
  %v9283 = vsel %vm7495, %v9200, 0
  %9285 = vmatprep.subr.mxu0 0.0
  %9286 = vmatpush1.msra.mxu0 %v9201
  %9287 = vmatprep.subr.mxu0 0.0
  %9288 = vmatpush1.msra.mxu0 %v9202
  %9289 = vmatprep.subr.mxu0 0.0
  %9290 = vmatpush1.msra.mxu0 %v9203
  %9291 = vmatprep.subr.mxu0 0.0
  %9292 = vmatpush1.msra.mxu0 %v9204
  %9293 = vmatprep.subr.mxu0 0.0
  %9294 = vmatpush1.msra.mxu0 %v9205
  %9295 = vmatprep.subr.mxu0 0.0
  %9296 = vmatpush1.msra.mxu0 %v9206
  %9297 = vmatprep.subr.mxu0 0.0
  %9298 = vmatpush1.msra.mxu0 %v9207
  %9299 = vmatprep.subr.mxu0 0.0
  %9300 = vmatpush1.msra.mxu0 %v9208
  %9301 = vmatprep.subr.mxu0 0.0
  %9302 = vmatpush1.msra.mxu0 %v9209
  %9303 = vmatprep.subr.mxu0 0.0
  %9304 = vmatpush1.msra.mxu0 %v9210
  %9305 = vmatprep.subr.mxu0 0.0
  %9306 = vmatpush1.msra.mxu0 %v9211
  %9307 = vmatprep.subr.mxu0 0.0
  %9308 = vmatpush1.msra.mxu0 %v9212
  %9309 = vmatprep.subr.mxu0 0.0
  %9310 = vmatpush1.msra.mxu0 %v9213
  %9311 = vmatprep.subr.mxu0 0.0
  %9312 = vmatpush1.msra.mxu0 %v9214
  %9313 = vmatprep.subr.mxu0 0.0
  %9314 = vmatpush1.msra.mxu0 %v9215
  %9315 = vmatprep.subr.mxu0 0.0
  %9316 = vmatpush1.msra.mxu0 %v9216
  %9317 = vmatprep.subr.mxu0 0.0
  %9318 = vmatpush1.msra.mxu0 %v9217
  %9319 = vmatprep.subr.mxu0 0.0
  %9320 = vmatpush1.msra.mxu0 %v9218
  %9321 = vmatprep.subr.mxu0 0.0
  %9322 = vmatpush1.msra.mxu0 %v9219
  %9323 = vmatprep.subr.mxu0 0.0
  %9324 = vmatpush1.msra.mxu0 %v9220
  %9325 = vmatprep.subr.mxu0 0.0
  %9326 = vmatpush1.msra.mxu0 %v9221
  %9327 = vmatprep.subr.mxu0 0.0
  %9328 = vmatpush1.msra.mxu0 %v9222
  %9329 = vmatprep.subr.mxu0 0.0
  %9330 = vmatpush1.msra.mxu0 %v9223
  %9331 = vmatprep.subr.mxu0 0.0
  %9332 = vmatpush1.msra.mxu0 %v9224
  %9333 = vmatprep.subr.mxu0 0.0
  %9334 = vmatpush1.msra.mxu0 %v9225
  %9335 = vmatprep.subr.mxu0 0.0
  %9336 = vmatpush1.msra.mxu0 %v9226
  %9337 = vmatprep.subr.mxu0 0.0
  %9338 = vmatpush1.msra.mxu0 %v9227
  %9339 = vmatprep.subr.mxu0 0.0
  %9340 = vmatpush1.msra.mxu0 %v9228
  %9341 = vmatprep.subr.mxu0 0.0
  %9342 = vmatpush1.msra.mxu0 %v9229
  %9343 = vmatprep.subr.mxu0 0.0
  %9344 = vmatpush1.msra.mxu0 %v9230
  %9345 = vmatprep.subr.mxu0 0.0
  %9346 = vmatpush1.msra.mxu0 %v9231
  %9347 = vmatprep.subr.mxu0 0.0
  %9348 = vmatpush1.msra.mxu0 %v9232
  %9349 = vmatprep.mubr.f32.mxu0 %v9154
  %9350 = vmatmul.mubr.f32.gmra.mrb[0].mxu0 %v9153
  %v9351 = vpop.f32.mrb[0].mxu0
  %v9352 = vadd.f32 0.0, %v9351
  %v9353 = vpop.f32.mrb[0].mxu0
  %9354 = vmatprep.mubr.f32.mxu0 %v9157
  %9355 = vmatmul.mubr.f32.gmra.mrb[0].mxu0 %v9156
  %v9356 = vpop.f32.mrb[0].mxu0
  %v9357 = vadd.f32 0.0, %v9356
  %v9358 = vpop.f32.mrb[0].mxu0
  %9359 = vmatprep.mubr.f32.mxu0 %v9160
  %9360 = vmatmul.mubr.f32.gmra.mrb[0].mxu0 %v9159
  %v9361 = vpop.f32.mrb[0].mxu0
  %v9362 = vadd.f32 0.0, %v9361
  %v9363 = vpop.f32.mrb[0].mxu0
  %9364 = vmatprep.mubr.f32.mxu0 %v9163
  %9365 = vmatmul.mubr.f32.gmra.mrb[0].mxu0 %v9162
  %v9366 = vpop.f32.mrb[0].mxu0
  %v9367 = vadd.f32 0.0, %v9366
  %v9368 = vpop.f32.mrb[0].mxu0
  %9369 = vmatprep.mubr.f32.mxu0 %v9166
  %9370 = vmatmul.mubr.f32.gmra.mrb[0].mxu0 %v9165
  %v9371 = vpop.f32.mrb[0].mxu0
  %v9372 = vadd.f32 0.0, %v9371
  %v9373 = vpop.f32.mrb[0].mxu0
  %9374 = vmatprep.mubr.f32.mxu0 %v9169
  %9375 = vmatmul.mubr.f32.gmra.mrb[0].mxu0 %v9168
  %v9376 = vpop.f32.mrb[0].mxu0
  %v9377 = vadd.f32 0.0, %v9376
  %v9378 = vpop.f32.mrb[0].mxu0
  %9379 = vmatprep.mubr.f32.mxu0 %v9172
  %9380 = vmatmul.mubr.f32.gmra.mrb[0].mxu0 %v9171
  %v9381 = vpop.f32.mrb[0].mxu0
  %v9382 = vadd.f32 0.0, %v9381
  %v9383 = vpop.f32.mrb[0].mxu0
  %9384 = vmatprep.mubr.f32.mxu0 %v9175
  %9385 = vmatmul.mubr.f32.gmra.mrb[0].mxu0 %v9174
  %v9386 = vpop.f32.mrb[0].mxu0
  %v9387 = vadd.f32 0.0, %v9386
  %v9388 = vpop.f32.mrb[0].mxu0
  %9389 = vmatprep.mubr.f32.mxu0 %v9178
  %9390 = vmatmul.mubr.f32.gmra.mrb[0].mxu0 %v9177
  %v9391 = vpop.f32.mrb[0].mxu0
  %v9392 = vadd.f32 0.0, %v9391
  %v9393 = vpop.f32.mrb[0].mxu0
  %9394 = vmatprep.mubr.f32.mxu0 %v9181
  %9395 = vmatmul.mubr.f32.gmra.mrb[0].mxu0 %v9180
  %v9396 = vpop.f32.mrb[0].mxu0
  %v9397 = vadd.f32 0.0, %v9396
  %v9398 = vpop.f32.mrb[0].mxu0
  %9399 = vmatprep.mubr.f32.mxu0 %v9184
  %9400 = vmatmul.mubr.f32.gmra.mrb[0].mxu0 %v9183
  %v9401 = vpop.f32.mrb[0].mxu0
  %v9402 = vadd.f32 0.0, %v9401
  %v9403 = vpop.f32.mrb[0].mxu0
  %9404 = vmatprep.mubr.f32.mxu0 %v9187
  %9405 = vmatmul.mubr.f32.gmra.mrb[0].mxu0 %v9186
  %v9406 = vpop.f32.mrb[0].mxu0
  %v9407 = vadd.f32 0.0, %v9406
  %v9408 = vpop.f32.mrb[0].mxu0
  %9409 = vmatprep.mubr.f32.mxu0 %v9190
  %9410 = vmatmul.mubr.f32.gmra.mrb[0].mxu0 %v9189
  %v9411 = vpop.f32.mrb[0].mxu0
  %v9412 = vadd.f32 0.0, %v9411
  %v9413 = vpop.f32.mrb[0].mxu0
  %9414 = vmatprep.mubr.f32.mxu0 %v9193
  %9415 = vmatmul.mubr.f32.gmra.mrb[0].mxu0 %v9192
  %v9416 = vpop.f32.mrb[0].mxu0
  %v9417 = vadd.f32 0.0, %v9416
  %v9418 = vpop.f32.mrb[0].mxu0
  %9419 = vmatprep.mubr.f32.mxu0 %v9196
  %9420 = vmatmul.mubr.f32.gmra.mrb[0].mxu0 %v9195
  %v9421 = vpop.f32.mrb[0].mxu0
  %v9422 = vadd.f32 0.0, %v9421
  %v9423 = vpop.f32.mrb[0].mxu0
  %9424 = vmatprep.mubr.f32.mxu0 %v9199
  %9425 = vmatmul.mubr.f32.gmra.mrb[0].mxu0 %v9198
  %v9426 = vpop.f32.mrb[0].mxu0
  %v9427 = vadd.f32 0.0, %v9426
  %v9428 = vpop.f32.mrb[0].mxu0
  %9429 = vdwg.mxu0
  %9430 = vmatprep.subr.mxu0 0.0
  %9431 = vmatpush1.msra.mxu0 %v9233
  %9432 = vmatprep.subr.mxu0 0.0
  %9433 = vmatpush1.msra.mxu0 %v9234
  %9434 = vmatprep.subr.mxu0 0.0
  %9435 = vmatpush1.msra.mxu0 %v9235
  %9436 = vmatprep.subr.mxu0 0.0
  %9437 = vmatpush1.msra.mxu0 %v9236
  %9438 = vmatprep.subr.mxu0 0.0
  %9439 = vmatpush1.msra.mxu0 0.0
  %9440 = vmatprep.subr.mxu0 0.0
  %9441 = vmatpush1.msra.mxu0 0.0
  %9442 = vmatprep.subr.mxu0 0.0
  %9443 = vmatpush1.msra.mxu0 0.0
  %9444 = vmatprep.subr.mxu0 0.0
  %9445 = vmatpush1.msra.mxu0 0.0
  %9446 = vmatprep.subr.mxu0 0.0
  %9447 = vmatpush1.msra.mxu0 0.0
  %9448 = vmatprep.subr.mxu0 0.0
  %9449 = vmatpush1.msra.mxu0 0.0
  %9450 = vmatprep.subr.mxu0 0.0
  %9451 = vmatpush1.msra.mxu0 0.0
  %9452 = vmatprep.subr.mxu0 0.0
  %9453 = vmatpush1.msra.mxu0 0.0
  %9454 = vmatprep.subr.mxu0 0.0
  %9455 = vmatpush1.msra.mxu0 0.0
  %9456 = vmatprep.subr.mxu0 0.0
  %9457 = vmatpush1.msra.mxu0 0.0
  %9458 = vmatprep.subr.mxu0 0.0
  %9459 = vmatpush1.msra.mxu0 0.0
  %9460 = vmatprep.subr.mxu0 0.0
  %9461 = vmatpush1.msra.mxu0 0.0
  %9462 = vmatprep.subr.mxu0 0.0
  %9463 = vmatpush1.msra.mxu0 0.0
  %9464 = vmatprep.subr.mxu0 0.0
  %9465 = vmatpush1.msra.mxu0 0.0
  %9466 = vmatprep.subr.mxu0 0.0
  %9467 = vmatpush1.msra.mxu0 0.0
  %9468 = vmatprep.subr.mxu0 0.0
  %9469 = vmatpush1.msra.mxu0 0.0
  %9470 = vmatprep.subr.mxu0 0.0
  %9471 = vmatpush1.msra.mxu0 0.0
  %9472 = vmatprep.subr.mxu0 0.0
  %9473 = vmatpush1.msra.mxu0 0.0
  %9474 = vmatprep.subr.mxu0 0.0
  %9475 = vmatpush1.msra.mxu0 0.0
  %9476 = vmatprep.subr.mxu0 0.0
  %9477 = vmatpush1.msra.mxu0 0.0
  %9478 = vmatprep.subr.mxu0 0.0
  %9479 = vmatpush1.msra.mxu0 0.0
  %9480 = vmatprep.subr.mxu0 0.0
  %9481 = vmatpush1.msra.mxu0 0.0
  %9482 = vmatprep.subr.mxu0 0.0
  %9483 = vmatpush1.msra.mxu0 0.0
  %9484 = vmatprep.subr.mxu0 0.0
  %9485 = vmatpush1.msra.mxu0 0.0
  %9486 = vmatprep.subr.mxu0 0.0
  %9487 = vmatpush1.msra.mxu0 0.0
  %9488 = vmatprep.subr.mxu0 0.0
  %9489 = vmatpush1.msra.mxu0 0.0
  %9490 = vmatprep.subr.mxu0 0.0
  %9491 = vmatpush1.msra.mxu0 0.0
  %9492 = vmatprep.subr.mxu0 0.0
  %9493 = vmatpush1.msra.mxu0 0.0
  %9494 = vmatprep.mubr.f32.mxu0 0.0
  %9495 = vmatmul.mubr.f32.gmra.mrb[0].mxu0 %v9238
  %v9496 = vpop.f32.mrb[0].mxu0
  %v9497 = vadd.f32 %v9352, %v9496
  %v9498 = vpop.f32.mrb[0].mxu0
  %9499 = vmatprep.mubr.f32.mxu0 0.0
  %9500 = vmatmul.mubr.f32.gmra.mrb[0].mxu0 %v9241
  %v9501 = vpop.f32.mrb[0].mxu0
  %v9502 = vadd.f32 %v9357, %v9501
  %v9503 = vpop.f32.mrb[0].mxu0
  %9504 = vmatprep.mubr.f32.mxu0 0.0
  %9505 = vmatmul.mubr.f32.gmra.mrb[0].mxu0 %v9244
  %v9506 = vpop.f32.mrb[0].mxu0
  %v9507 = vadd.f32 %v9362, %v9506
  %v9508 = vpop.f32.mrb[0].mxu0
  %9509 = vmatprep.mubr.f32.mxu0 0.0
  %9510 = vmatmul.mubr.f32.gmra.mrb[0].mxu0 %v9247
  %v9511 = vpop.f32.mrb[0].mxu0
  %v9512 = vadd.f32 %v9367, %v9511
  %v9513 = vpop.f32.mrb[0].mxu0
  %9514 = vmatprep.mubr.f32.mxu0 0.0
  %9515 = vmatmul.mubr.f32.gmra.mrb[0].mxu0 %v9250
  %v9516 = vpop.f32.mrb[0].mxu0
  %v9517 = vadd.f32 %v9372, %v9516
  %v9518 = vpop.f32.mrb[0].mxu0
  %9519 = vmatprep.mubr.f32.mxu0 0.0
  %9520 = vmatmul.mubr.f32.gmra.mrb[0].mxu0 %v9253
  %v9521 = vpop.f32.mrb[0].mxu0
  %v9522 = vadd.f32 %v9377, %v9521
  %v9523 = vpop.f32.mrb[0].mxu0
  %9524 = vmatprep.mubr.f32.mxu0 0.0
  %9525 = vmatmul.mubr.f32.gmra.mrb[0].mxu0 %v9256
  %v9526 = vpop.f32.mrb[0].mxu0
  %v9527 = vadd.f32 %v9382, %v9526
  %v9528 = vpop.f32.mrb[0].mxu0
  %9529 = vmatprep.mubr.f32.mxu0 0.0
  %9530 = vmatmul.mubr.f32.gmra.mrb[0].mxu0 %v9259
  %v9531 = vpop.f32.mrb[0].mxu0
  %v9532 = vadd.f32 %v9387, %v9531
  %v9533 = vpop.f32.mrb[0].mxu0
  %9534 = vmatprep.mubr.f32.mxu0 0.0
  %9535 = vmatmul.mubr.f32.gmra.mrb[0].mxu0 %v9262
  %v9536 = vpop.f32.mrb[0].mxu0
  %v9537 = vadd.f32 %v9392, %v9536
  %v9538 = vpop.f32.mrb[0].mxu0
  %9539 = vmatprep.mubr.f32.mxu0 0.0
  %9540 = vmatmul.mubr.f32.gmra.mrb[0].mxu0 %v9265
  %v9541 = vpop.f32.mrb[0].mxu0
  %v9542 = vadd.f32 %v9397, %v9541
  %v9543 = vpop.f32.mrb[0].mxu0
  %9544 = vmatprep.mubr.f32.mxu0 0.0
  %9545 = vmatmul.mubr.f32.gmra.mrb[0].mxu0 %v9268
  %v9546 = vpop.f32.mrb[0].mxu0
  %v9547 = vadd.f32 %v9402, %v9546
  %v9548 = vpop.f32.mrb[0].mxu0
  %9549 = vmatprep.mubr.f32.mxu0 0.0
  %9550 = vmatmul.mubr.f32.gmra.mrb[0].mxu0 %v9271
  %v9551 = vpop.f32.mrb[0].mxu0
  %v9552 = vadd.f32 %v9407, %v9551
  %v9553 = vpop.f32.mrb[0].mxu0
  %9554 = vmatprep.mubr.f32.mxu0 0.0
  %9555 = vmatmul.mubr.f32.gmra.mrb[0].mxu0 %v9274
  %v9556 = vpop.f32.mrb[0].mxu0
  %v9557 = vadd.f32 %v9412, %v9556
  %v9558 = vpop.f32.mrb[0].mxu0
  %9559 = vmatprep.mubr.f32.mxu0 0.0
  %9560 = vmatmul.mubr.f32.gmra.mrb[0].mxu0 %v9277
  %v9561 = vpop.f32.mrb[0].mxu0
  %v9562 = vadd.f32 %v9417, %v9561
  %v9563 = vpop.f32.mrb[0].mxu0
  %9564 = vmatprep.mubr.f32.mxu0 0.0
  %9565 = vmatmul.mubr.f32.gmra.mrb[0].mxu0 %v9280
  %v9566 = vpop.f32.mrb[0].mxu0
  %v9567 = vadd.f32 %v9422, %v9566
  %v9568 = vpop.f32.mrb[0].mxu0
  %9569 = vmatprep.mubr.f32.mxu0 0.0
  %9570 = vmatmul.mubr.f32.gmra.mrb[0].mxu0 %v9283
  %v9571 = vpop.f32.mrb[0].mxu0
  %v9572 = vadd.f32 %v9427, %v9571
  %v9573 = vpop.f32.mrb[0].mxu0
  %9574 = vdwg.mxu0
  %v9575 = vrot.slane %v9497, 1
  %v9576 = vrot.slane %v9502, 1
  %v9577 = vrot.slane %v9507, 1
  %v9578 = vrot.slane %v9512, 1
  %v9579 = vrot.slane %v9517, 1
  %v9580 = vrot.slane %v9522, 1
  %v9581 = vrot.slane %v9527, 1
  %v9582 = vrot.slane %v9532, 1
  %v9583 = vrot.slane %v9537, 1
  %v9584 = vrot.slane %v9542, 1
  %v9585 = vrot.slane %v9547, 1
  %v9586 = vrot.slane %v9552, 1
  %v9587 = vrot.slane %v9557, 1
  %v9588 = vrot.slane %v9562, 1
  %v9589 = vrot.slane %v9567, 1
  %v9590 = vrot.slane %v9572, 1
  %v9591 = vsel %vm1588, %v9589, %v9590
  %v9592 = vsel %vm1588, %v9588, %v9589
  %v9593 = vsel %vm1588, %v9587, %v9588
  %v9594 = vsel %vm1588, %v9586, %v9587
  %v9595 = vsel %vm1588, %v9585, %v9586
  %v9596 = vsel %vm1588, %v9584, %v9585
  %v9597 = vsel %vm1588, %v9583, %v9584
  %v9598 = vsel %vm1588, %v9582, %v9583
  %v9599 = vsel %vm1588, %v9581, %v9582
  %v9600 = vsel %vm1588, %v9580, %v9581
  %v9601 = vsel %vm1588, %v9579, %v9580
  %v9602 = vsel %vm1588, %v9578, %v9579
  %v9603 = vsel %vm1588, %v9577, %v9578
  %v9604 = vsel %vm1588, %v9576, %v9577
  %v9605 = vsel %vm1588, %v9575, %v9576
  %v9606 = vsel %vm1588, %v9590, %v9575
  %v9607 = vmax.f32 %v9497, %v9605
  %v9608 = vmax.f32 %v9502, %v9604
  %v9609 = vmax.f32 %v9507, %v9603
  %v9610 = vmax.f32 %v9512, %v9602
  %v9611 = vmax.f32 %v9517, %v9601
  %v9612 = vmax.f32 %v9522, %v9600
  %v9613 = vmax.f32 %v9527, %v9599
  %v9614 = vmax.f32 %v9532, %v9598
  %v9615 = vmax.f32 %v9537, %v9597
  %v9616 = vmax.f32 %v9542, %v9596
  %v9617 = vmax.f32 %v9547, %v9595
  %v9618 = vmax.f32 %v9552, %v9594
  %v9619 = vmax.f32 %v9557, %v9593
  %v9620 = vmax.f32 %v9562, %v9592
  %v9621 = vmax.f32 %v9567, %v9591
  %v9622 = vmax.f32 %v9572, %v9606
  %v9623 = vmax.f32 %v9607, %v9608
  %v9624 = vmax.f32 %v9608, %v9609
  %v9625 = vmax.f32 %v9609, %v9610
  %v9626 = vmax.f32 %v9610, %v9611
  %v9627 = vmax.f32 %v9611, %v9612
  %v9628 = vmax.f32 %v9612, %v9613
  %v9629 = vmax.f32 %v9613, %v9614
  %v9630 = vmax.f32 %v9614, %v9615
  %v9631 = vmax.f32 %v9615, %v9616
  %v9632 = vmax.f32 %v9616, %v9617
  %v9633 = vmax.f32 %v9617, %v9618
  %v9634 = vmax.f32 %v9618, %v9619
  %v9635 = vmax.f32 %v9619, %v9620
  %v9636 = vmax.f32 %v9620, %v9621
  %v9637 = vmax.f32 %v9621, %v9622
  %v9638 = vmax.f32 %v9622, %v9607
  %vm9639 = vcmask 523264
  %9640 = vst.msk [vmem:[#allocation6] sm:$0xff] %vm9639, %v9623
  %9641 = vst.msk [vmem:[#allocation6 + $0x8] sm:$0xff] %vm9639, %v9624
  %9642 = vst.msk [vmem:[#allocation6 + $0x10] sm:$0xff] %vm9639, %v9625
  %9643 = vst.msk [vmem:[#allocation6 + $0x18] sm:$0xff] %vm9639, %v9626
  %9644 = vst.msk [vmem:[#allocation6 + $0x20] sm:$0xff] %vm9639, %v9627
  %9645 = vst.msk [vmem:[#allocation6 + $0x28] sm:$0xff] %vm9639, %v9628
  %9646 = vst.msk [vmem:[#allocation6 + $0x30] sm:$0xff] %vm9639, %v9629
  %9647 = vst.msk [vmem:[#allocation6 + $0x38] sm:$0xff] %vm9639, %v9630
  %9648 = vst.msk [vmem:[#allocation6 + $0x40] sm:$0xff] %vm9639, %v9631
  %9649 = vst.msk [vmem:[#allocation6 + $0x48] sm:$0xff] %vm9639, %v9632
  %9650 = vst.msk [vmem:[#allocation6 + $0x50] sm:$0xff] %vm9639, %v9633
  %9651 = vst.msk [vmem:[#allocation6 + $0x58] sm:$0xff] %vm9639, %v9634
  %9652 = vst.msk [vmem:[#allocation6 + $0x60] sm:$0xff] %vm9639, %v9635
  %9653 = vst.msk [vmem:[#allocation6 + $0x68] sm:$0xff] %vm9639, %v9636
  %9654 = vst.msk [vmem:[#allocation6 + $0x70] sm:$0xff] %vm9639, %v9637
  %9655 = vst.msk [vmem:[#allocation6 + $0x78] sm:$0xff] %vm9639, %v9638
  %v9656 = vld [vmem:[#allocation6] ss:$2 sm:$0xf]
  %vm9657 = vcmask 519168
  %9658 = vst.msk [vmem:[#allocation7] sm:$0xf] %vm9657, %v9656
  %s9659 = scalar_lea.vmem [#allocation6], 16
  %v9660 = vld [vmem:[%s9659] ss:$2 sm:$0xf]
  %9661 = vst.msk [vmem:[#allocation7 + $0x4] sm:$0xf] %vm9657, %v9660
  %s9662 = scalar_lea.vmem [#allocation6], 32
  %v9663 = vld [vmem:[%s9662] ss:$2 sm:$0xf]
  %9664 = vst.msk [vmem:[#allocation7 + $0x8] sm:$0xf] %vm9657, %v9663
  %s9665 = scalar_lea.vmem [#allocation6], 48
  %v9666 = vld [vmem:[%s9665] ss:$2 sm:$0xf]
  %9667 = vst.msk [vmem:[#allocation7 + $0xc] sm:$0xf] %vm9657, %v9666
  %s9668 = scalar_lea.vmem [#allocation6], 64
  %v9669 = vld [vmem:[%s9668] ss:$2 sm:$0xf]
  %9670 = vst.msk [vmem:[#allocation7 + $0x10] sm:$0xf] %vm9657, %v9669
  %s9671 = scalar_lea.vmem [#allocation6], 80
  %v9672 = vld [vmem:[%s9671] ss:$2 sm:$0xf]
  %9673 = vst.msk [vmem:[#allocation7 + $0x14] sm:$0xf] %vm9657, %v9672
  %s9674 = scalar_lea.vmem [#allocation6], 96
  %v9675 = vld [vmem:[%s9674] ss:$2 sm:$0xf]
  %9676 = vst.msk [vmem:[#allocation7 + $0x18] sm:$0xf] %vm9657, %v9675
  %s9677 = scalar_lea.vmem [#allocation6], 112
  %v9678 = vld [vmem:[%s9677] ss:$2 sm:$0xf]
  %9679 = vst.msk [vmem:[#allocation7 + $0x1c] sm:$0xf] %vm9657, %v9678
  %v9680 = vld [vmem:[#allocation7] sm:$0xff]
  %v9681 = vld [vmem:[#allocation7 + $0x8] sm:$0xff]
  %v9682 = vld [vmem:[#allocation7 + $0x10] sm:$0xff]
  %v9683 = vld [vmem:[#allocation7 + $0x18] sm:$0xff]
  %v9684 = vld [vmem:[%s7] sm:$0x1]
  %v9686 = vlaneseq
  %v9687 = vshrl.u32 %v9686, 7
  %v9688 = vsub.s32 0, %v9687
  %v9689 = vrot.slane %v9684, %v9688
  %v9691 = vadd.f32 %v9680, %v9689
  %v9692 = vadd.f32 %v9681, %v9689
  %v9693 = vadd.f32 %v9682, %v9689
  %v9694 = vadd.f32 %v9683, %v9689
  %v9695 = vmax.f32 %v9691, 0.0
  %v9696 = vmax.f32 %v9692, 0.0
  %v9697 = vmax.f32 %v9693, 0.0
  %v9698 = vmax.f32 %v9694, 0.0
  %v9699 = vrot.slane %v9695, 3
  %v9700 = vrot.slane %v9696, 3
  %v9701 = vrot.slane %v9697, 3
  %v9702 = vrot.slane %v9698, 3
  %vm9703 = vcmp.lt.s32.totalorder %v176, 5
  %v9704 = vsel %vm9703, %v9701, %v9702
  %v9705 = vsel %vm9703, %v9700, %v9701
  %v9706 = vsel %vm9703, %v9699, %v9700
  %v9707 = vsel %vm9703, %v9702, %v9699
  %v9708 = vld [vmem:[%s3] sm:$0xff]
  %v9709 = vld [vmem:[%s3 + $0x8] sm:$0xff]
  %v9710 = vld [vmem:[%s3 + $0x10] sm:$0xff]
  %v9711 = vld [vmem:[%s3 + $0x18] sm:$0xff]
  %9713 = vset.pattern.permute.xlu0 0
  %9714 = vperm.xlu0 %9713, %v9708
  %v9715 = vpop.permute.xlu0 %9714
  %9718 = vset.pattern.permute.xlu0 0
  %9719 = vperm.xlu0 %9718, %v9709
  %v9720 = vpop.permute.xlu0 %9719
  %9723 = vset.pattern.permute.xlu0 0
  %9724 = vperm.xlu0 %9723, %v9710
  %v9725 = vpop.permute.xlu0 %9724
  %9728 = vset.pattern.permute.xlu0 0
  %9729 = vperm.xlu0 %9728, %v9711
  %v9730 = vpop.permute.xlu0 %9729
  %v9732 = vmul.f32 %v9707, %v9715
  %v9733 = vmul.f32 %v9706, %v9720
  %v9734 = vmul.f32 %v9705, %v9725
  %v9735 = vmul.f32 %v9704, %v9730
  %9736 = vst.msk [vmem:[#allocation8] sm:$0xff] %vm9639, %v9732
  %9737 = vst.msk [vmem:[#allocation8 + $0x28] sm:$0xff] %vm9639, %v9733
  %9738 = vst.msk [vmem:[#allocation8 + $0x50] sm:$0xff] %vm9639, %v9734
  %9739 = vst.msk [vmem:[#allocation8 + $0x78] sm:$0xff] %vm9639, %v9735
  %v9740 = vrot.slane %v9695, 4
  %v9741 = vrot.slane %v9696, 4
  %v9742 = vrot.slane %v9697, 4
  %v9743 = vrot.slane %v9698, 4
  %vm9744 = vcmp.lt.s32.totalorder %v176, 4
  %v9745 = vsel %vm9744, %v9742, %v9743
  %v9746 = vsel %vm9744, %v9741, %v9742
  %v9747 = vsel %vm9744, %v9740, %v9741
  %v9748 = vsel %vm9744, %v9743, %v9740
  %v9749 = vld [vmem:[%s3] sm:$0xff]
  %v9750 = vld [vmem:[%s3 + $0x8] sm:$0xff]
  %v9751 = vld [vmem:[%s3 + $0x10] sm:$0xff]
  %v9752 = vld [vmem:[%s3 + $0x18] sm:$0xff]
  %9754 = vset.pattern.permute.xlu0 1
  %9755 = vperm.xlu0 %9754, %v9749
  %v9756 = vpop.permute.xlu0 %9755
  %9759 = vset.pattern.permute.xlu0 1
  %9760 = vperm.xlu0 %9759, %v9750
  %v9761 = vpop.permute.xlu0 %9760
  %9764 = vset.pattern.permute.xlu0 1
  %9765 = vperm.xlu0 %9764, %v9751
  %v9766 = vpop.permute.xlu0 %9765
  %9769 = vset.pattern.permute.xlu0 1
  %9770 = vperm.xlu0 %9769, %v9752
  %v9771 = vpop.permute.xlu0 %9770
  %v9773 = vmul.f32 %v9748, %v9756
  %v9774 = vmul.f32 %v9747, %v9761
  %v9775 = vmul.f32 %v9746, %v9766
  %v9776 = vmul.f32 %v9745, %v9771
  %9781 = vrot.lane.b32.xlu0 %v9773, 64
  %v9782 = vpop.permute.xlu0 %9781
  %9783 = vrot.lane.b32.xlu0 %v9774, 64
  %v9784 = vpop.permute.xlu0 %9783
  %9785 = vrot.lane.b32.xlu0 %v9775, 64
  %v9786 = vpop.permute.xlu0 %9785
  %9787 = vrot.lane.b32.xlu0 %v9776, 64
  %v9788 = vpop.permute.xlu0 %9787
  %vm9793 = vcmask 1048064
  %9794 = vst.msk [vmem:[#allocation8] sm:$0xff] %vm9793, %v9782
  %9795 = vst.msk [vmem:[#allocation8 + $0x28] sm:$0xff] %vm9793, %v9784
  %9796 = vst.msk [vmem:[#allocation8 + $0x50] sm:$0xff] %vm9793, %v9786
  %9797 = vst.msk [vmem:[#allocation8 + $0x78] sm:$0xff] %vm9793, %v9788
  %v9798 = vrot.slane %v9695, 5
  %v9799 = vrot.slane %v9696, 5
  %v9800 = vrot.slane %v9697, 5
  %v9801 = vrot.slane %v9698, 5
  %vm9802 = vcmp.lt.s32.totalorder %v176, 3
  %v9803 = vsel %vm9802, %v9800, %v9801
  %v9804 = vsel %vm9802, %v9799, %v9800
  %v9805 = vsel %vm9802, %v9798, %v9799
  %v9806 = vsel %vm9802, %v9801, %v9798
  %v9807 = vld [vmem:[%s3] sm:$0xff]
  %v9808 = vld [vmem:[%s3 + $0x8] sm:$0xff]
  %v9809 = vld [vmem:[%s3 + $0x10] sm:$0xff]
  %v9810 = vld [vmem:[%s3 + $0x18] sm:$0xff]
  %9812 = vset.pattern.permute.xlu0 2
  %9813 = vperm.xlu0 %9812, %v9807
  %v9814 = vpop.permute.xlu0 %9813
  %9817 = vset.pattern.permute.xlu0 2
  %9818 = vperm.xlu0 %9817, %v9808
  %v9819 = vpop.permute.xlu0 %9818
  %9822 = vset.pattern.permute.xlu0 2
  %9823 = vperm.xlu0 %9822, %v9809
  %v9824 = vpop.permute.xlu0 %9823
  %9827 = vset.pattern.permute.xlu0 2
  %9828 = vperm.xlu0 %9827, %v9810
  %v9829 = vpop.permute.xlu0 %9828
  %v9831 = vmul.f32 %v9806, %v9814
  %v9832 = vmul.f32 %v9805, %v9819
  %v9833 = vmul.f32 %v9804, %v9824
  %v9834 = vmul.f32 %v9803, %v9829
  %9835 = vst.msk [vmem:[#allocation8 + $0x8] sm:$0xff] %vm9639, %v9831
  %9836 = vst.msk [vmem:[#allocation8 + $0x30] sm:$0xff] %vm9639, %v9832
  %9837 = vst.msk [vmem:[#allocation8 + $0x58] sm:$0xff] %vm9639, %v9833
  %9838 = vst.msk [vmem:[#allocation8 + $0x80] sm:$0xff] %vm9639, %v9834
  %v9839 = vrot.slane %v9695, 7
  %v9840 = vrot.slane %v9696, 7
  %v9841 = vrot.slane %v9697, 7
  %v9842 = vrot.slane %v9698, 7
  %v9843 = vsel %vm177, %v9841, %v9842
  %v9844 = vsel %vm177, %v9840, %v9841
  %v9845 = vsel %vm177, %v9839, %v9840
  %v9846 = vsel %vm177, %v9842, %v9839
  %v9847 = vld [vmem:[%s3] sm:$0xff]
  %v9848 = vld [vmem:[%s3 + $0x8] sm:$0xff]
  %v9849 = vld [vmem:[%s3 + $0x10] sm:$0xff]
  %v9850 = vld [vmem:[%s3 + $0x18] sm:$0xff]
  %9852 = vset.pattern.permute.xlu0 3
  %9853 = vperm.xlu0 %9852, %v9847
  %v9854 = vpop.permute.xlu0 %9853
  %9857 = vset.pattern.permute.xlu0 3
  %9858 = vperm.xlu0 %9857, %v9848
  %v9859 = vpop.permute.xlu0 %9858
  %9862 = vset.pattern.permute.xlu0 3
  %9863 = vperm.xlu0 %9862, %v9849
  %v9864 = vpop.permute.xlu0 %9863
  %9867 = vset.pattern.permute.xlu0 3
  %9868 = vperm.xlu0 %9867, %v9850
  %v9869 = vpop.permute.xlu0 %9868
  %v9871 = vmul.f32 %v9846, %v9854
  %v9872 = vmul.f32 %v9845, %v9859
  %v9873 = vmul.f32 %v9844, %v9864
  %v9874 = vmul.f32 %v9843, %v9869
  %9879 = vrot.lane.b32.xlu0 %v9871, 64
  %v9880 = vpop.permute.xlu0 %9879
  %9881 = vrot.lane.b32.xlu0 %v9872, 64
  %v9882 = vpop.permute.xlu0 %9881
  %9883 = vrot.lane.b32.xlu0 %v9873, 64
  %v9884 = vpop.permute.xlu0 %9883
  %9885 = vrot.lane.b32.xlu0 %v9874, 64
  %v9886 = vpop.permute.xlu0 %9885
  %9891 = vst.msk [vmem:[#allocation8 + $0x8] sm:$0xff] %vm9793, %v9880
  %9892 = vst.msk [vmem:[#allocation8 + $0x30] sm:$0xff] %vm9793, %v9882
  %9893 = vst.msk [vmem:[#allocation8 + $0x58] sm:$0xff] %vm9793, %v9884
  %9894 = vst.msk [vmem:[#allocation8 + $0x80] sm:$0xff] %vm9793, %v9886
  %9895 = vst.msk [vmem:[#allocation8 + $0x10] sm:$0xff] %vm9639, %v9695
  %9896 = vst.msk [vmem:[#allocation8 + $0x38] sm:$0xff] %vm9639, %v9696
  %9897 = vst.msk [vmem:[#allocation8 + $0x60] sm:$0xff] %vm9639, %v9697
  %9898 = vst.msk [vmem:[#allocation8 + $0x88] sm:$0xff] %vm9639, %v9698
  %v9899 = vrot.slane %v9695, 1
  %v9900 = vrot.slane %v9696, 1
  %v9901 = vrot.slane %v9697, 1
  %v9902 = vrot.slane %v9698, 1
  %v9903 = vsel %vm1588, %v9901, %v9902
  %v9904 = vsel %vm1588, %v9900, %v9901
  %v9905 = vsel %vm1588, %v9899, %v9900
  %v9906 = vsel %vm1588, %v9902, %v9899
  %v9907 = vld [vmem:[%s3] sm:$0xff]
  %v9908 = vld [vmem:[%s3 + $0x8] sm:$0xff]
  %v9909 = vld [vmem:[%s3 + $0x10] sm:$0xff]
  %v9910 = vld [vmem:[%s3 + $0x18] sm:$0xff]
  %9912 = vset.pattern.permute.xlu0 5
  %9913 = vperm.xlu0 %9912, %v9907
  %v9914 = vpop.permute.xlu0 %9913
  %9917 = vset.pattern.permute.xlu0 5
  %9918 = vperm.xlu0 %9917, %v9908
  %v9919 = vpop.permute.xlu0 %9918
  %9922 = vset.pattern.permute.xlu0 5
  %9923 = vperm.xlu0 %9922, %v9909
  %v9924 = vpop.permute.xlu0 %9923
  %9927 = vset.pattern.permute.xlu0 5
  %9928 = vperm.xlu0 %9927, %v9910
  %v9929 = vpop.permute.xlu0 %9928
  %v9931 = vmul.f32 %v9905, %v9914
  %v9932 = vmul.f32 %v9904, %v9919
  %v9933 = vmul.f32 %v9903, %v9924
  %v9934 = vmul.f32 %v9906, %v9929
  %9939 = vrot.lane.b32.xlu0 %v9931, 64
  %v9940 = vpop.permute.xlu0 %9939
  %9941 = vrot.lane.b32.xlu0 %v9932, 64
  %v9942 = vpop.permute.xlu0 %9941
  %9943 = vrot.lane.b32.xlu0 %v9933, 64
  %v9944 = vpop.permute.xlu0 %9943
  %9945 = vrot.lane.b32.xlu0 %v9934, 64
  %v9946 = vpop.permute.xlu0 %9945
  %9951 = vst.msk [vmem:[#allocation8 + $0x10] sm:$0xff] %vm9793, %v9940
  %9952 = vst.msk [vmem:[#allocation8 + $0x38] sm:$0xff] %vm9793, %v9942
  %9953 = vst.msk [vmem:[#allocation8 + $0x60] sm:$0xff] %vm9793, %v9944
  %9954 = vst.msk [vmem:[#allocation8 + $0x88] sm:$0xff] %vm9793, %v9946
  %v9955 = vld [vmem:[%s3] sm:$0xff]
  %v9956 = vld [vmem:[%s3 + $0x8] sm:$0xff]
  %v9957 = vld [vmem:[%s3 + $0x10] sm:$0xff]
  %v9958 = vld [vmem:[%s3 + $0x18] sm:$0xff]
  %9960 = vset.pattern.permute.xlu0 6
  %9961 = vperm.xlu0 %9960, %v9955
  %v9962 = vpop.permute.xlu0 %9961
  %9965 = vset.pattern.permute.xlu0 6
  %9966 = vperm.xlu0 %9965, %v9956
  %v9967 = vpop.permute.xlu0 %9966
  %9970 = vset.pattern.permute.xlu0 6
  %9971 = vperm.xlu0 %9970, %v9957
  %v9972 = vpop.permute.xlu0 %9971
  %9975 = vset.pattern.permute.xlu0 6
  %9976 = vperm.xlu0 %9975, %v9958
  %v9977 = vpop.permute.xlu0 %9976
  %v9979 = vmul.f32 %v9706, %v9962
  %v9980 = vmul.f32 %v9705, %v9967
  %v9981 = vmul.f32 %v9704, %v9972
  %v9982 = vmul.f32 %v9707, %v9977
  %9983 = vst.msk [vmem:[#allocation8 + $0x18] sm:$0xff] %vm9639, %v9979
  %9984 = vst.msk [vmem:[#allocation8 + $0x40] sm:$0xff] %vm9639, %v9980
  %9985 = vst.msk [vmem:[#allocation8 + $0x68] sm:$0xff] %vm9639, %v9981
  %9986 = vst.msk [vmem:[#allocation8 + $0x90] sm:$0xff] %vm9639, %v9982
  %v9987 = vld [vmem:[%s3] sm:$0xff]
  %v9988 = vld [vmem:[%s3 + $0x8] sm:$0xff]
  %v9989 = vld [vmem:[%s3 + $0x10] sm:$0xff]
  %v9990 = vld [vmem:[%s3 + $0x18] sm:$0xff]
  %9992 = vset.pattern.permute.xlu0 7
  %9993 = vperm.xlu0 %9992, %v9987
  %v9994 = vpop.permute.xlu0 %9993
  %9997 = vset.pattern.permute.xlu0 7
  %9998 = vperm.xlu0 %9997, %v9988
  %v9999 = vpop.permute.xlu0 %9998
  %10002 = vset.pattern.permute.xlu0 7
  %10003 = vperm.xlu0 %10002, %v9989
  %v10004 = vpop.permute.xlu0 %10003
  %10007 = vset.pattern.permute.xlu0 7
  %10008 = vperm.xlu0 %10007, %v9990
  %v10009 = vpop.permute.xlu0 %10008
  %v10011 = vmul.f32 %v9747, %v9994
  %v10012 = vmul.f32 %v9746, %v9999
  %v10013 = vmul.f32 %v9745, %v10004
  %v10014 = vmul.f32 %v9748, %v10009
  %10019 = vrot.lane.b32.xlu0 %v10011, 64
  %v10020 = vpop.permute.xlu0 %10019
  %10021 = vrot.lane.b32.xlu0 %v10012, 64
  %v10022 = vpop.permute.xlu0 %10021
  %10023 = vrot.lane.b32.xlu0 %v10013, 64
  %v10024 = vpop.permute.xlu0 %10023
  %10025 = vrot.lane.b32.xlu0 %v10014, 64
  %v10026 = vpop.permute.xlu0 %10025
  %10031 = vst.msk [vmem:[#allocation8 + $0x18] sm:$0xff] %vm9793, %v10020
  %10032 = vst.msk [vmem:[#allocation8 + $0x40] sm:$0xff] %vm9793, %v10022
  %10033 = vst.msk [vmem:[#allocation8 + $0x68] sm:$0xff] %vm9793, %v10024
  %10034 = vst.msk [vmem:[#allocation8 + $0x90] sm:$0xff] %vm9793, %v10026
  %v10035 = vld [vmem:[%s3] sm:$0xff]
  %v10036 = vld [vmem:[%s3 + $0x8] sm:$0xff]
  %v10037 = vld [vmem:[%s3 + $0x10] sm:$0xff]
  %v10038 = vld [vmem:[%s3 + $0x18] sm:$0xff]
  %10040 = vset.pattern.permute.xlu0 8
  %10041 = vperm.xlu0 %10040, %v10035
  %v10042 = vpop.permute.xlu0 %10041
  %10045 = vset.pattern.permute.xlu0 8
  %10046 = vperm.xlu0 %10045, %v10036
  %v10047 = vpop.permute.xlu0 %10046
  %10050 = vset.pattern.permute.xlu0 8
  %10051 = vperm.xlu0 %10050, %v10037
  %v10052 = vpop.permute.xlu0 %10051
  %10055 = vset.pattern.permute.xlu0 8
  %10056 = vperm.xlu0 %10055, %v10038
  %v10057 = vpop.permute.xlu0 %10056
  %v10059 = vmul.f32 %v9805, %v10042
  %v10060 = vmul.f32 %v9804, %v10047
  %v10061 = vmul.f32 %v9803, %v10052
  %v10062 = vmul.f32 %v9806, %v10057
  %10063 = vst.msk [vmem:[#allocation8 + $0x20] sm:$0xff] %vm9639, %v10059
  %10064 = vst.msk [vmem:[#allocation8 + $0x48] sm:$0xff] %vm9639, %v10060
  %10065 = vst.msk [vmem:[#allocation8 + $0x70] sm:$0xff] %vm9639, %v10061
  %10066 = vst.msk [vmem:[#allocation8 + $0x98] sm:$0xff] %vm9639, %v10062
  %v10067 = vld [vmem:[#allocation8] sm:$0xff]
  %v10068 = vld [vmem:[#allocation8 + $0x8] sm:$0xff]
  %v10069 = vld [vmem:[#allocation8 + $0x10] sm:$0xff]
  %v10070 = vld [vmem:[#allocation8 + $0x18] sm:$0xff]
  %v10071 = vld [vmem:[#allocation8 + $0x20] sm:$0xff]
  %v10072 = vld [vmem:[#allocation8 + $0x28] sm:$0xff]
  %v10073 = vld [vmem:[#allocation8 + $0x30] sm:$0xff]
  %v10074 = vld [vmem:[#allocation8 + $0x38] sm:$0xff]
  %v10075 = vld [vmem:[#allocation8 + $0x40] sm:$0xff]
  %v10076 = vld [vmem:[#allocation8 + $0x48] sm:$0xff]
  %v10077 = vld [vmem:[#allocation8 + $0x50] sm:$0xff]
  %v10078 = vld [vmem:[#allocation8 + $0x58] sm:$0xff]
  %v10079 = vld [vmem:[#allocation8 + $0x60] sm:$0xff]
  %v10080 = vld [vmem:[#allocation8 + $0x68] sm:$0xff]
  %v10081 = vld [vmem:[#allocation8 + $0x70] sm:$0xff]
  %v10082 = vld [vmem:[#allocation8 + $0x78] sm:$0xff]
  %v10083 = vld [vmem:[#allocation8 + $0x80] sm:$0xff]
  %v10084 = vld [vmem:[#allocation8 + $0x88] sm:$0xff]
  %v10085 = vld [vmem:[#allocation8 + $0x90] sm:$0xff]
  %v10086 = vld [vmem:[#allocation8 + $0x98] sm:$0xff]
  %v10087 = vld [vmem:[%s8] sm:$0xff]
  %v10088 = vld [vmem:[%s8 + $0x8] sm:$0xff]
  %v10089 = vld [vmem:[%s8 + $0x10] sm:$0xff]
  %v10090 = vld [vmem:[%s8 + $0x18] sm:$0xff]
  %v10091 = vld [vmem:[%s8 + $0x20] sm:$0xff]
  %v10092 = vld [vmem:[%s8 + $0x28] sm:$0xff]
  %v10093 = vld [vmem:[%s8 + $0x30] sm:$0xff]
  %v10094 = vld [vmem:[%s8 + $0x38] sm:$0xff]
  %v10095 = vld [vmem:[%s8 + $0x40] sm:$0xff]
  %v10096 = vld [vmem:[%s8 + $0x48] sm:$0xff]
  %v10097 = vld [vmem:[%s8 + $0x50] sm:$0xff]
  %v10098 = vld [vmem:[%s8 + $0x58] sm:$0xff]
  %v10099 = vld [vmem:[%s8 + $0x60] sm:$0xff]
  %v10100 = vld [vmem:[%s8 + $0x68] sm:$0xff]
  %v10101 = vld [vmem:[%s8 + $0x70] sm:$0xff]
  %v10102 = vld [vmem:[%s8 + $0x78] sm:$0xff]
  %v10103 = vld [vmem:[%s8 + $0x80] sm:$0xff]
  %v10104 = vld [vmem:[%s8 + $0x88] sm:$0xff]
  %v10105 = vld [vmem:[%s8 + $0x90] sm:$0xff]
  %v10106 = vld [vmem:[%s8 + $0x98] sm:$0xff]
  %v10107 = vld [vmem:[%s8 + $0xa0] sm:$0xff]
  %v10108 = vld [vmem:[%s8 + $0xa8] sm:$0xff]
  %v10109 = vld [vmem:[%s8 + $0xb0] sm:$0xff]
  %v10110 = vld [vmem:[%s8 + $0xb8] sm:$0xff]
  %v10111 = vld [vmem:[%s8 + $0xc0] sm:$0xff]
  %v10112 = vld [vmem:[%s8 + $0xc8] sm:$0xff]
  %v10113 = vld [vmem:[%s8 + $0xd0] sm:$0xff]
  %v10114 = vld [vmem:[%s8 + $0xd8] sm:$0xff]
  %v10115 = vld [vmem:[%s8 + $0xe0] sm:$0xff]
  %v10116 = vld [vmem:[%s8 + $0xe8] sm:$0xff]
  %v10117 = vld [vmem:[%s8 + $0xf0] sm:$0xff]
  %v10118 = vld [vmem:[%s8 + $0xf8] sm:$0xff]
  %v10119 = vld [vmem:[%s8 + $0x100] sm:$0xff]
  %v10120 = vld [vmem:[%s8 + $0x108] sm:$0xff]
  %v10121 = vld [vmem:[%s8 + $0x110] sm:$0xff]
  %v10122 = vld [vmem:[%s8 + $0x118] sm:$0xff]
  %v10123 = vld [vmem:[%s8 + $0x120] sm:$0xff]
  %v10124 = vld [vmem:[%s8 + $0x128] sm:$0xff]
  %v10125 = vld [vmem:[%s8 + $0x130] sm:$0xff]
  %v10126 = vld [vmem:[%s8 + $0x138] sm:$0xff]
  %v10127 = vld [vmem:[%s8 + $0x140] sm:$0xff]
  %v10128 = vld [vmem:[%s8 + $0x148] sm:$0xff]
  %v10129 = vld [vmem:[%s8 + $0x150] sm:$0xff]
  %v10130 = vld [vmem:[%s8 + $0x158] sm:$0xff]
  %v10131 = vld [vmem:[%s8 + $0x160] sm:$0xff]
  %v10132 = vld [vmem:[%s8 + $0x168] sm:$0xff]
  %v10133 = vld [vmem:[%s8 + $0x170] sm:$0xff]
  %v10134 = vld [vmem:[%s8 + $0x178] sm:$0xff]
  %v10135 = vld [vmem:[%s8 + $0x180] sm:$0xff]
  %v10136 = vld [vmem:[%s8 + $0x188] sm:$0xff]
  %v10137 = vld [vmem:[%s8 + $0x190] sm:$0xff]
  %v10138 = vld [vmem:[%s8 + $0x198] sm:$0xff]
  %v10139 = vld [vmem:[%s8 + $0x1a0] sm:$0xff]
  %v10140 = vld [vmem:[%s8 + $0x1a8] sm:$0xff]
  %v10141 = vld [vmem:[%s8 + $0x1b0] sm:$0xff]
  %v10142 = vld [vmem:[%s8 + $0x1b8] sm:$0xff]
  %v10143 = vld [vmem:[%s8 + $0x1c0] sm:$0xff]
  %v10144 = vld [vmem:[%s8 + $0x1c8] sm:$0xff]
  %v10145 = vld [vmem:[%s8 + $0x1d0] sm:$0xff]
  %v10146 = vld [vmem:[%s8 + $0x1d8] sm:$0xff]
  %v10147 = vld [vmem:[%s8 + $0x1e0] sm:$0xff]
  %v10148 = vld [vmem:[%s8 + $0x1e8] sm:$0xff]
  %v10149 = vld [vmem:[%s8 + $0x1f0] sm:$0xff]
  %v10150 = vld [vmem:[%s8 + $0x1f8] sm:$0xff]
  %v10151 = vld [vmem:[%s8 + $0x200] sm:$0xff]
  %v10152 = vld [vmem:[%s8 + $0x208] sm:$0xff]
  %v10153 = vld [vmem:[%s8 + $0x210] sm:$0xff]
  %v10154 = vld [vmem:[%s8 + $0x218] sm:$0xff]
  %v10155 = vld [vmem:[%s8 + $0x220] sm:$0xff]
  %v10156 = vld [vmem:[%s8 + $0x228] sm:$0xff]
  %v10157 = vld [vmem:[%s8 + $0x230] sm:$0xff]
  %v10158 = vld [vmem:[%s8 + $0x238] sm:$0xff]
  %v10160 = vsel %vm9639, %v10071, 0
  %v10163 = vsel %vm9639, %v10076, 0
  %v10166 = vsel %vm9639, %v10081, 0
  %v10169 = vsel %vm9639, %v10086, 0
  %10171 = vmatprep.subr.mxu0 0.0
  %10172 = vmatpush1.msra.mxu0 %v10087
  %10173 = vmatprep.subr.mxu0 0.0
  %10174 = vmatpush1.msra.mxu0 %v10088
  %10175 = vmatprep.subr.mxu0 0.0
  %10176 = vmatpush1.msra.mxu0 %v10089
  %10177 = vmatprep.subr.mxu0 0.0
  %10178 = vmatpush1.msra.mxu0 %v10090
  %10179 = vmatprep.subr.mxu0 0.0
  %10180 = vmatpush1.msra.mxu0 %v10091
  %10181 = vmatprep.subr.mxu0 0.0
  %10182 = vmatpush1.msra.mxu0 %v10092
  %10183 = vmatprep.subr.mxu0 0.0
  %10184 = vmatpush1.msra.mxu0 %v10093
  %10185 = vmatprep.subr.mxu0 0.0
  %10186 = vmatpush1.msra.mxu0 %v10094
  %10187 = vmatprep.subr.mxu0 0.0
  %10188 = vmatpush1.msra.mxu0 %v10095
  %10189 = vmatprep.subr.mxu0 0.0
  %10190 = vmatpush1.msra.mxu0 %v10096
  %10191 = vmatprep.subr.mxu0 0.0
  %10192 = vmatpush1.msra.mxu0 %v10097
  %10193 = vmatprep.subr.mxu0 0.0
  %10194 = vmatpush1.msra.mxu0 %v10098
  %10195 = vmatprep.subr.mxu0 0.0
  %10196 = vmatpush1.msra.mxu0 %v10099
  %10197 = vmatprep.subr.mxu0 0.0
  %10198 = vmatpush1.msra.mxu0 %v10100
  %10199 = vmatprep.subr.mxu0 0.0
  %10200 = vmatpush1.msra.mxu0 %v10101
  %10201 = vmatprep.subr.mxu0 0.0
  %10202 = vmatpush1.msra.mxu0 %v10102
  %10203 = vmatprep.subr.mxu0 0.0
  %10204 = vmatpush1.msra.mxu0 %v10103
  %10205 = vmatprep.subr.mxu0 0.0
  %10206 = vmatpush1.msra.mxu0 %v10104
  %10207 = vmatprep.subr.mxu0 0.0
  %10208 = vmatpush1.msra.mxu0 %v10105
  %10209 = vmatprep.subr.mxu0 0.0
  %10210 = vmatpush1.msra.mxu0 %v10106
  %10211 = vmatprep.subr.mxu0 0.0
  %10212 = vmatpush1.msra.mxu0 %v10107
  %10213 = vmatprep.subr.mxu0 0.0
  %10214 = vmatpush1.msra.mxu0 %v10108
  %10215 = vmatprep.subr.mxu0 0.0
  %10216 = vmatpush1.msra.mxu0 %v10109
  %10217 = vmatprep.subr.mxu0 0.0
  %10218 = vmatpush1.msra.mxu0 %v10110
  %10219 = vmatprep.subr.mxu0 0.0
  %10220 = vmatpush1.msra.mxu0 %v10111
  %10221 = vmatprep.subr.mxu0 0.0
  %10222 = vmatpush1.msra.mxu0 %v10112
  %10223 = vmatprep.subr.mxu0 0.0
  %10224 = vmatpush1.msra.mxu0 %v10113
  %10225 = vmatprep.subr.mxu0 0.0
  %10226 = vmatpush1.msra.mxu0 %v10114
  %10227 = vmatprep.subr.mxu0 0.0
  %10228 = vmatpush1.msra.mxu0 %v10115
  %10229 = vmatprep.subr.mxu0 0.0
  %10230 = vmatpush1.msra.mxu0 %v10116
  %10231 = vmatprep.subr.mxu0 0.0
  %10232 = vmatpush1.msra.mxu0 %v10117
  %10233 = vmatprep.subr.mxu0 0.0
  %10234 = vmatpush1.msra.mxu0 %v10118
  %10235 = vmatprep.mubr.f32.mxu0 %v10068
  %10236 = vmatmul.mubr.f32.gmra.mrb[0].mxu0 %v10067
  %v10237 = vpop.f32.mrb[0].mxu0
  %v10238 = vadd.f32 0.0, %v10237
  %v10239 = vpop.f32.mrb[0].mxu0
  %10240 = vmatprep.mubr.f32.mxu0 %v10073
  %10241 = vmatmul.mubr.f32.gmra.mrb[0].mxu0 %v10072
  %v10242 = vpop.f32.mrb[0].mxu0
  %v10243 = vadd.f32 0.0, %v10242
  %v10244 = vpop.f32.mrb[0].mxu0
  %10245 = vmatprep.mubr.f32.mxu0 %v10078
  %10246 = vmatmul.mubr.f32.gmra.mrb[0].mxu0 %v10077
  %v10247 = vpop.f32.mrb[0].mxu0
  %v10248 = vadd.f32 0.0, %v10247
  %v10249 = vpop.f32.mrb[0].mxu0
  %10250 = vmatprep.mubr.f32.mxu0 %v10083
  %10251 = vmatmul.mubr.f32.gmra.mrb[0].mxu0 %v10082
  %v10252 = vpop.f32.mrb[0].mxu0
  %v10253 = vadd.f32 0.0, %v10252
  %v10254 = vpop.f32.mrb[0].mxu0
  %10255 = vdwg.mxu0
  %10256 = vmatprep.subr.mxu0 0.0
  %10257 = vmatpush1.msra.mxu0 %v10119
  %10258 = vmatprep.subr.mxu0 0.0
  %10259 = vmatpush1.msra.mxu0 %v10120
  %10260 = vmatprep.subr.mxu0 0.0
  %10261 = vmatpush1.msra.mxu0 %v10121
  %10262 = vmatprep.subr.mxu0 0.0
  %10263 = vmatpush1.msra.mxu0 %v10122
  %10264 = vmatprep.subr.mxu0 0.0
  %10265 = vmatpush1.msra.mxu0 %v10123
  %10266 = vmatprep.subr.mxu0 0.0
  %10267 = vmatpush1.msra.mxu0 %v10124
  %10268 = vmatprep.subr.mxu0 0.0
  %10269 = vmatpush1.msra.mxu0 %v10125
  %10270 = vmatprep.subr.mxu0 0.0
  %10271 = vmatpush1.msra.mxu0 %v10126
  %10272 = vmatprep.subr.mxu0 0.0
  %10273 = vmatpush1.msra.mxu0 %v10127
  %10274 = vmatprep.subr.mxu0 0.0
  %10275 = vmatpush1.msra.mxu0 %v10128
  %10276 = vmatprep.subr.mxu0 0.0
  %10277 = vmatpush1.msra.mxu0 %v10129
  %10278 = vmatprep.subr.mxu0 0.0
  %10279 = vmatpush1.msra.mxu0 %v10130
  %10280 = vmatprep.subr.mxu0 0.0
  %10281 = vmatpush1.msra.mxu0 %v10131
  %10282 = vmatprep.subr.mxu0 0.0
  %10283 = vmatpush1.msra.mxu0 %v10132
  %10284 = vmatprep.subr.mxu0 0.0
  %10285 = vmatpush1.msra.mxu0 %v10133
  %10286 = vmatprep.subr.mxu0 0.0
  %10287 = vmatpush1.msra.mxu0 %v10134
  %10288 = vmatprep.subr.mxu0 0.0
  %10289 = vmatpush1.msra.mxu0 %v10135
  %10290 = vmatprep.subr.mxu0 0.0
  %10291 = vmatpush1.msra.mxu0 %v10136
  %10292 = vmatprep.subr.mxu0 0.0
  %10293 = vmatpush1.msra.mxu0 %v10137
  %10294 = vmatprep.subr.mxu0 0.0
  %10295 = vmatpush1.msra.mxu0 %v10138
  %10296 = vmatprep.subr.mxu0 0.0
  %10297 = vmatpush1.msra.mxu0 %v10139
  %10298 = vmatprep.subr.mxu0 0.0
  %10299 = vmatpush1.msra.mxu0 %v10140
  %10300 = vmatprep.subr.mxu0 0.0
  %10301 = vmatpush1.msra.mxu0 %v10141
  %10302 = vmatprep.subr.mxu0 0.0
  %10303 = vmatpush1.msra.mxu0 %v10142
  %10304 = vmatprep.subr.mxu0 0.0
  %10305 = vmatpush1.msra.mxu0 %v10143
  %10306 = vmatprep.subr.mxu0 0.0
  %10307 = vmatpush1.msra.mxu0 %v10144
  %10308 = vmatprep.subr.mxu0 0.0
  %10309 = vmatpush1.msra.mxu0 %v10145
  %10310 = vmatprep.subr.mxu0 0.0
  %10311 = vmatpush1.msra.mxu0 %v10146
  %10312 = vmatprep.subr.mxu0 0.0
  %10313 = vmatpush1.msra.mxu0 %v10147
  %10314 = vmatprep.subr.mxu0 0.0
  %10315 = vmatpush1.msra.mxu0 %v10148
  %10316 = vmatprep.subr.mxu0 0.0
  %10317 = vmatpush1.msra.mxu0 %v10149
  %10318 = vmatprep.subr.mxu0 0.0
  %10319 = vmatpush1.msra.mxu0 %v10150
  %10320 = vmatprep.mubr.f32.mxu0 %v10070
  %10321 = vmatmul.mubr.f32.gmra.mrb[0].mxu0 %v10069
  %v10322 = vpop.f32.mrb[0].mxu0
  %v10323 = vadd.f32 %v10238, %v10322
  %v10324 = vpop.f32.mrb[0].mxu0
  %10325 = vmatprep.mubr.f32.mxu0 %v10075
  %10326 = vmatmul.mubr.f32.gmra.mrb[0].mxu0 %v10074
  %v10327 = vpop.f32.mrb[0].mxu0
  %v10328 = vadd.f32 %v10243, %v10327
  %v10329 = vpop.f32.mrb[0].mxu0
  %10330 = vmatprep.mubr.f32.mxu0 %v10080
  %10331 = vmatmul.mubr.f32.gmra.mrb[0].mxu0 %v10079
  %v10332 = vpop.f32.mrb[0].mxu0
  %v10333 = vadd.f32 %v10248, %v10332
  %v10334 = vpop.f32.mrb[0].mxu0
  %10335 = vmatprep.mubr.f32.mxu0 %v10085
  %10336 = vmatmul.mubr.f32.gmra.mrb[0].mxu0 %v10084
  %v10337 = vpop.f32.mrb[0].mxu0
  %v10338 = vadd.f32 %v10253, %v10337
  %v10339 = vpop.f32.mrb[0].mxu0
  %10340 = vdwg.mxu0
  %10341 = vmatprep.subr.mxu0 0.0
  %10342 = vmatpush1.msra.mxu0 %v10151
  %10343 = vmatprep.subr.mxu0 0.0
  %10344 = vmatpush1.msra.mxu0 %v10152
  %10345 = vmatprep.subr.mxu0 0.0
  %10346 = vmatpush1.msra.mxu0 %v10153
  %10347 = vmatprep.subr.mxu0 0.0
  %10348 = vmatpush1.msra.mxu0 %v10154
  %10349 = vmatprep.subr.mxu0 0.0
  %10350 = vmatpush1.msra.mxu0 %v10155
  %10351 = vmatprep.subr.mxu0 0.0
  %10352 = vmatpush1.msra.mxu0 %v10156
  %10353 = vmatprep.subr.mxu0 0.0
  %10354 = vmatpush1.msra.mxu0 %v10157
  %10355 = vmatprep.subr.mxu0 0.0
  %10356 = vmatpush1.msra.mxu0 %v10158
  %10357 = vmatprep.subr.mxu0 0.0
  %10358 = vmatpush1.msra.mxu0 0.0
  %10359 = vmatprep.subr.mxu0 0.0
  %10360 = vmatpush1.msra.mxu0 0.0
  %10361 = vmatprep.subr.mxu0 0.0
  %10362 = vmatpush1.msra.mxu0 0.0
  %10363 = vmatprep.subr.mxu0 0.0
  %10364 = vmatpush1.msra.mxu0 0.0
  %10365 = vmatprep.subr.mxu0 0.0
  %10366 = vmatpush1.msra.mxu0 0.0
  %10367 = vmatprep.subr.mxu0 0.0
  %10368 = vmatpush1.msra.mxu0 0.0
  %10369 = vmatprep.subr.mxu0 0.0
  %10370 = vmatpush1.msra.mxu0 0.0
  %10371 = vmatprep.subr.mxu0 0.0
  %10372 = vmatpush1.msra.mxu0 0.0
  %10373 = vmatprep.subr.mxu0 0.0
  %10374 = vmatpush1.msra.mxu0 0.0
  %10375 = vmatprep.subr.mxu0 0.0
  %10376 = vmatpush1.msra.mxu0 0.0
  %10377 = vmatprep.subr.mxu0 0.0
  %10378 = vmatpush1.msra.mxu0 0.0
  %10379 = vmatprep.subr.mxu0 0.0
  %10380 = vmatpush1.msra.mxu0 0.0
  %10381 = vmatprep.subr.mxu0 0.0
  %10382 = vmatpush1.msra.mxu0 0.0
  %10383 = vmatprep.subr.mxu0 0.0
  %10384 = vmatpush1.msra.mxu0 0.0
  %10385 = vmatprep.subr.mxu0 0.0
  %10386 = vmatpush1.msra.mxu0 0.0
  %10387 = vmatprep.subr.mxu0 0.0
  %10388 = vmatpush1.msra.mxu0 0.0
  %10389 = vmatprep.subr.mxu0 0.0
  %10390 = vmatpush1.msra.mxu0 0.0
  %10391 = vmatprep.subr.mxu0 0.0
  %10392 = vmatpush1.msra.mxu0 0.0
  %10393 = vmatprep.subr.mxu0 0.0
  %10394 = vmatpush1.msra.mxu0 0.0
  %10395 = vmatprep.subr.mxu0 0.0
  %10396 = vmatpush1.msra.mxu0 0.0
  %10397 = vmatprep.subr.mxu0 0.0
  %10398 = vmatpush1.msra.mxu0 0.0
  %10399 = vmatprep.subr.mxu0 0.0
  %10400 = vmatpush1.msra.mxu0 0.0
  %10401 = vmatprep.subr.mxu0 0.0
  %10402 = vmatpush1.msra.mxu0 0.0
  %10403 = vmatprep.subr.mxu0 0.0
  %10404 = vmatpush1.msra.mxu0 0.0
  %10405 = vmatprep.mubr.f32.mxu0 0.0
  %10406 = vmatmul.mubr.f32.gmra.mrb[0].mxu0 %v10160
  %v10407 = vpop.f32.mrb[0].mxu0
  %v10408 = vadd.f32 %v10323, %v10407
  %v10409 = vpop.f32.mrb[0].mxu0
  %10410 = vmatprep.mubr.f32.mxu0 0.0
  %10411 = vmatmul.mubr.f32.gmra.mrb[0].mxu0 %v10163
  %v10412 = vpop.f32.mrb[0].mxu0
  %v10413 = vadd.f32 %v10328, %v10412
  %v10414 = vpop.f32.mrb[0].mxu0
  %10415 = vmatprep.mubr.f32.mxu0 0.0
  %10416 = vmatmul.mubr.f32.gmra.mrb[0].mxu0 %v10166
  %v10417 = vpop.f32.mrb[0].mxu0
  %v10418 = vadd.f32 %v10333, %v10417
  %v10419 = vpop.f32.mrb[0].mxu0
  %10420 = vmatprep.mubr.f32.mxu0 0.0
  %10421 = vmatmul.mubr.f32.gmra.mrb[0].mxu0 %v10169
  %v10422 = vpop.f32.mrb[0].mxu0
  %v10423 = vadd.f32 %v10338, %v10422
  %v10424 = vpop.f32.mrb[0].mxu0
  %10425 = vdwg.mxu0
  %v10426 = vrot.slane %v10408, 1
  %v10427 = vrot.slane %v10413, 1
  %v10428 = vrot.slane %v10418, 1
  %v10429 = vrot.slane %v10423, 1
  %v10430 = vsel %vm1588, %v10428, %v10429
  %v10431 = vsel %vm1588, %v10427, %v10428
  %v10432 = vsel %vm1588, %v10426, %v10427
  %v10433 = vsel %vm1588, %v10429, %v10426
  %v10434 = vmax.f32 %v10408, %v10432
  %v10435 = vmax.f32 %v10413, %v10431
  %v10436 = vmax.f32 %v10418, %v10430
  %v10437 = vmax.f32 %v10423, %v10433
  %v10438 = vrot.slane %v10408, 4
  %v10439 = vrot.slane %v10413, 4
  %v10440 = vrot.slane %v10418, 4
  %v10441 = vrot.slane %v10423, 4
  %v10442 = vsel %vm9744, %v10440, %v10441
  %v10443 = vsel %vm9744, %v10439, %v10440
  %v10444 = vsel %vm9744, %v10438, %v10439
  %v10445 = vsel %vm9744, %v10441, %v10438
  %v10446 = vrot.slane %v10408, 5
  %v10447 = vrot.slane %v10413, 5
  %v10448 = vrot.slane %v10418, 5
  %v10449 = vrot.slane %v10423, 5
  %v10450 = vsel %vm9802, %v10448, %v10449
  %v10451 = vsel %vm9802, %v10447, %v10448
  %v10452 = vsel %vm9802, %v10446, %v10447
  %v10453 = vsel %vm9802, %v10449, %v10446
  %v10454 = vmax.f32 %v10444, %v10452
  %v10455 = vmax.f32 %v10443, %v10451
  %v10456 = vmax.f32 %v10442, %v10450
  %v10457 = vmax.f32 %v10445, %v10453
  %v10458 = vmax.f32 %v10434, %v10454
  %v10459 = vmax.f32 %v10435, %v10455
  %v10460 = vmax.f32 %v10436, %v10456
  %v10461 = vmax.f32 %v10437, %v10457
  %10462 = vst.msk [vmem:[#allocation9] sm:$0xff] %vm9639, %v10458
  %10463 = vst.msk [vmem:[#allocation9 + $0x8] sm:$0xff] %vm9639, %v10459
  %10464 = vst.msk [vmem:[#allocation9 + $0x10] sm:$0xff] %vm9639, %v10460
  %10465 = vst.msk [vmem:[#allocation9 + $0x18] sm:$0xff] %vm9639, %v10461
  %v10466 = vld [vmem:[#allocation9] ss:$16 sm:$0x3]
  %vm10467 = vcmask 517120
  %10468 = vst.msk [vmem:[#allocation10] sm:$0x3] %vm10467, %v10466
  %s10469 = scalar_lea.vmem [#allocation9], 2
  %v10470 = vld [vmem:[%s10469] ss:$16 sm:$0x3]
  %v10473 = vunpack.c.l.s4 1983009808
  %v10474 = vunpack.c.0.s8 %v10473
  %v10475 = vlaneseq
  %v10476 = vshrl.u32 %v10475, 7
  %v10477 = vsub.s32 %v10474, %v10476
  %v10478 = vrot.slane %v10470, %v10477
  %10479 = vrot.lane.b32.xlu0 %v10478, 64
  %v10480 = vpop.permute.xlu0 %10479
  %vm10482 = vcmask 1041920
  %10483 = vst.msk [vmem:[#allocation10] sm:$0x3] %vm10482, %v10480
  %s10484 = scalar_lea.vmem [#allocation9], 8
  %v10485 = vld [vmem:[%s10484] ss:$16 sm:$0x3]
  %10486 = vst.msk [vmem:[#allocation10 + $0x2] sm:$0x3] %vm10467, %v10485
  %s10487 = scalar_lea.vmem [#allocation9], 10
  %v10488 = vld [vmem:[%s10487] ss:$16 sm:$0x3]
  %v10491 = vunpack.c.l.s4 1983009808
  %v10492 = vunpack.c.0.s8 %v10491
  %v10493 = vlaneseq
  %v10494 = vshrl.u32 %v10493, 7
  %v10495 = vsub.s32 %v10492, %v10494
  %v10496 = vrot.slane %v10488, %v10495
  %10497 = vrot.lane.b32.xlu0 %v10496, 64
  %v10498 = vpop.permute.xlu0 %10497
  %10500 = vst.msk [vmem:[#allocation10 + $0x2] sm:$0x3] %vm10482, %v10498
  %v10501 = vld [vmem:[#allocation10] sm:$0xf]
  %v10502 = vld [vmem:[%s9] sm:$0x3]
  %v10504 = vlaneseq
  %v10505 = vshrl.u32 %v10504, 7
  %v10506 = vsub.s32 0, %v10505
  %v10507 = vrot.slane %v10502, %v10506
  %v10508 = vlaneseq
  %v10509 = vshrl.u32 %v10508, 7
  %v10510 = vsub.s32 1, %v10509
  %v10511 = vrot.slane %v10502, %v10510
  %v10512 = vcombine.low %v10507, %v10511
  %v10514 = vunpack.c.l.s4 1983009808
  %v10515 = vunpack.c.0.s8 %v10514
  %v10516 = vlaneseq
  %v10517 = vshrl.u32 %v10516, 7
  %v10518 = vsub.s32 %v10515, %v10517
  %v10519 = vrot.slane %v10512, %v10518
  %v10521 = vadd.f32 %v10501, %v10519
  %v10522 = vmax.f32 %v10521, 0.0
  %v10523 = vld [vmem:[%s10] sm:$0xff]
  %v10524 = vld [vmem:[%s10 + $0x8] sm:$0xff]
  %v10525 = vld [vmem:[%s10 + $0x10] sm:$0xff]
  %v10526 = vld [vmem:[%s10 + $0x18] sm:$0xff]
  %v10527 = vld [vmem:[%s10 + $0x20] sm:$0xff]
  %v10528 = vld [vmem:[%s10 + $0x28] sm:$0xff]
  %v10529 = vld [vmem:[%s10 + $0x30] sm:$0xff]
  %v10530 = vld [vmem:[%s10 + $0x38] sm:$0xff]
  %v10531 = vld [vmem:[%s10 + $0x40] sm:$0xff]
  %v10532 = vld [vmem:[%s10 + $0x48] sm:$0xff]
  %v10533 = vld [vmem:[%s10 + $0x50] sm:$0xff]
  %v10534 = vld [vmem:[%s10 + $0x58] sm:$0xff]
  %v10535 = vld [vmem:[%s10 + $0x60] sm:$0xff]
  %v10536 = vld [vmem:[%s10 + $0x68] sm:$0xff]
  %v10537 = vld [vmem:[%s10 + $0x70] sm:$0xff]
  %v10538 = vld [vmem:[%s10 + $0x78] sm:$0xff]
  %v10539 = vld [vmem:[%s10 + $0x80] sm:$0xff]
  %v10540 = vld [vmem:[%s10 + $0x88] sm:$0xff]
  %v10541 = vld [vmem:[%s10 + $0x90] sm:$0xff]
  %v10542 = vld [vmem:[%s10 + $0x98] sm:$0xff]
  %v10543 = vld [vmem:[%s10 + $0xa0] sm:$0xff]
  %v10544 = vld [vmem:[%s10 + $0xa8] sm:$0xff]
  %v10545 = vld [vmem:[%s10 + $0xb0] sm:$0xff]
  %v10546 = vld [vmem:[%s10 + $0xb8] sm:$0xff]
  %v10547 = vld [vmem:[%s10 + $0xc0] sm:$0xff]
  %v10548 = vld [vmem:[%s10 + $0xc8] sm:$0xff]
  %v10549 = vld [vmem:[%s10 + $0xd0] sm:$0xff]
  %v10550 = vld [vmem:[%s10 + $0xd8] sm:$0xff]
  %v10551 = vld [vmem:[%s10 + $0xe0] sm:$0xff]
  %v10552 = vld [vmem:[%s10 + $0xe8] sm:$0xff]
  %v10553 = vld [vmem:[%s10 + $0xf0] sm:$0xff]
  %v10554 = vld [vmem:[%s10 + $0xf8] sm:$0xff]
  %v10555 = vld [vmem:[%s10 + $0x100] sm:$0xff]
  %v10556 = vld [vmem:[%s10 + $0x108] sm:$0xff]
  %v10557 = vld [vmem:[%s10 + $0x110] sm:$0xff]
  %v10558 = vld [vmem:[%s10 + $0x118] sm:$0xff]
  %v10559 = vld [vmem:[%s10 + $0x120] sm:$0xff]
  %v10560 = vld [vmem:[%s10 + $0x128] sm:$0xff]
  %v10561 = vld [vmem:[%s10 + $0x130] sm:$0xff]
  %v10562 = vld [vmem:[%s10 + $0x138] sm:$0xff]
  %v10563 = vld [vmem:[%s10 + $0x140] sm:$0xff]
  %v10564 = vld [vmem:[%s10 + $0x148] sm:$0xff]
  %v10565 = vld [vmem:[%s10 + $0x150] sm:$0xff]
  %v10566 = vld [vmem:[%s10 + $0x158] sm:$0xff]
  %v10567 = vld [vmem:[%s10 + $0x160] sm:$0xff]
  %v10568 = vld [vmem:[%s10 + $0x168] sm:$0xff]
  %v10569 = vld [vmem:[%s10 + $0x170] sm:$0xff]
  %v10570 = vld [vmem:[%s10 + $0x178] sm:$0xff]
  %v10571 = vld [vmem:[%s10 + $0x180] sm:$0xff]
  %v10572 = vld [vmem:[%s10 + $0x188] sm:$0xff]
  %v10573 = vld [vmem:[%s10 + $0x190] sm:$0xff]
  %v10574 = vld [vmem:[%s10 + $0x198] sm:$0xff]
  %v10575 = vld [vmem:[%s10 + $0x1a0] sm:$0xff]
  %v10576 = vld [vmem:[%s10 + $0x1a8] sm:$0xff]
  %v10577 = vld [vmem:[%s10 + $0x1b0] sm:$0xff]
  %v10578 = vld [vmem:[%s10 + $0x1b8] sm:$0xff]
  %v10579 = vld [vmem:[%s10 + $0x1c0] sm:$0xff]
  %v10580 = vld [vmem:[%s10 + $0x1c8] sm:$0xff]
  %v10581 = vld [vmem:[%s10 + $0x1d0] sm:$0xff]
  %v10582 = vld [vmem:[%s10 + $0x1d8] sm:$0xff]
  %v10583 = vld [vmem:[%s10 + $0x1e0] sm:$0xff]
  %v10584 = vld [vmem:[%s10 + $0x1e8] sm:$0xff]
  %v10585 = vld [vmem:[%s10 + $0x1f0] sm:$0xff]
  %v10586 = vld [vmem:[%s10 + $0x1f8] sm:$0xff]
  %v10587 = vld [vmem:[%s11] sm:$0x3]
  %v10589 = vlaneseq
  %v10590 = vshrl.u32 %v10589, 7
  %v10591 = vsub.s32 0, %v10590
  %v10592 = vrot.slane %v10587, %v10591
  %v10593 = vlaneseq
  %v10594 = vshrl.u32 %v10593, 7
  %v10595 = vsub.s32 1, %v10594
  %v10596 = vrot.slane %v10587, %v10595
  %v10601 = vunpack.c.l.s4 1983009808
  %v10602 = vunpack.c.0.s8 %v10601
  %v10603 = vlaneseq
  %v10604 = vshrl.u32 %v10603, 7
  %v10605 = vsub.s32 %v10602, %v10604
  %v10606 = vrot.slane %v10522, %v10605
  %v10607 = vcombine.high %v10606, %v10606
  %10610 = vmatprep.subr.mxu0 %v10524
  %10611 = vmatpush1.msra.mxu0 %v10523
  %10612 = vmatprep.subr.mxu0 %v10526
  %10613 = vmatpush1.msra.mxu0 %v10525
  %10614 = vmatprep.subr.mxu0 %v10528
  %10615 = vmatpush1.msra.mxu0 %v10527
  %10616 = vmatprep.subr.mxu0 %v10530
  %10617 = vmatpush1.msra.mxu0 %v10529
  %10618 = vmatprep.subr.mxu0 %v10532
  %10619 = vmatpush1.msra.mxu0 %v10531
  %10620 = vmatprep.subr.mxu0 %v10534
  %10621 = vmatpush1.msra.mxu0 %v10533
  %10622 = vmatprep.subr.mxu0 %v10536
  %10623 = vmatpush1.msra.mxu0 %v10535
  %10624 = vmatprep.subr.mxu0 %v10538
  %10625 = vmatpush1.msra.mxu0 %v10537
  %10626 = vmatprep.subr.mxu0 %v10540
  %10627 = vmatpush1.msra.mxu0 %v10539
  %10628 = vmatprep.subr.mxu0 %v10542
  %10629 = vmatpush1.msra.mxu0 %v10541
  %10630 = vmatprep.subr.mxu0 %v10544
  %10631 = vmatpush1.msra.mxu0 %v10543
  %10632 = vmatprep.subr.mxu0 %v10546
  %10633 = vmatpush1.msra.mxu0 %v10545
  %10634 = vmatprep.subr.mxu0 %v10548
  %10635 = vmatpush1.msra.mxu0 %v10547
  %10636 = vmatprep.subr.mxu0 %v10550
  %10637 = vmatpush1.msra.mxu0 %v10549
  %10638 = vmatprep.subr.mxu0 %v10552
  %10639 = vmatpush1.msra.mxu0 %v10551
  %10640 = vmatprep.subr.mxu0 %v10554
  %10641 = vmatpush1.msra.mxu0 %v10553
  %10642 = vmatprep.subr.mxu0 %v10556
  %10643 = vmatpush1.msra.mxu0 %v10555
  %10644 = vmatprep.subr.mxu0 %v10558
  %10645 = vmatpush1.msra.mxu0 %v10557
  %10646 = vmatprep.subr.mxu0 %v10560
  %10647 = vmatpush1.msra.mxu0 %v10559
  %10648 = vmatprep.subr.mxu0 %v10562
  %10649 = vmatpush1.msra.mxu0 %v10561
  %10650 = vmatprep.subr.mxu0 %v10564
  %10651 = vmatpush1.msra.mxu0 %v10563
  %10652 = vmatprep.subr.mxu0 %v10566
  %10653 = vmatpush1.msra.mxu0 %v10565
  %10654 = vmatprep.subr.mxu0 %v10568
  %10655 = vmatpush1.msra.mxu0 %v10567
  %10656 = vmatprep.subr.mxu0 %v10570
  %10657 = vmatpush1.msra.mxu0 %v10569
  %10658 = vmatprep.subr.mxu0 %v10572
  %10659 = vmatpush1.msra.mxu0 %v10571
  %10660 = vmatprep.subr.mxu0 %v10574
  %10661 = vmatpush1.msra.mxu0 %v10573
  %10662 = vmatprep.subr.mxu0 %v10576
  %10663 = vmatpush1.msra.mxu0 %v10575
  %10664 = vmatprep.subr.mxu0 %v10578
  %10665 = vmatpush1.msra.mxu0 %v10577
  %10666 = vmatprep.subr.mxu0 %v10580
  %10667 = vmatpush1.msra.mxu0 %v10579
  %10668 = vmatprep.subr.mxu0 %v10582
  %10669 = vmatpush1.msra.mxu0 %v10581
  %10670 = vmatprep.subr.mxu0 %v10584
  %10671 = vmatpush1.msra.mxu0 %v10583
  %10672 = vmatprep.subr.mxu0 %v10586
  %10673 = vmatpush1.msra.mxu0 %v10585
  %10674 = vmatprep.mubr.f32.mxu0 %v10607
  %10675 = vmatmul.mubr.f32.gmra.mrb[0].mxu0 %v10606
  %v10676 = vpop.f32.mrb[0].mxu0
  %v10677 = vadd.f32 %v10592, %v10676
  %v10678 = vpop.f32.mrb[0].mxu0
  %v10679 = vadd.f32 %v10596, %v10678
  %10680 = vdwg.mxu0
  %v10681 = vmax.f32 %v10677, 0.0
  %v10682 = vmax.f32 %v10679, 0.0
  %v10683 = vld [vmem:[%s12] sm:$0xff]
  %v10684 = vld [vmem:[%s12 + $0x8] sm:$0xff]
  %v10685 = vld [vmem:[%s12 + $0x10] sm:$0xff]
  %v10686 = vld [vmem:[%s12 + $0x18] sm:$0xff]
  %v10687 = vld [vmem:[%s12 + $0x20] sm:$0xff]
  %v10688 = vld [vmem:[%s12 + $0x28] sm:$0xff]
  %v10689 = vld [vmem:[%s12 + $0x30] sm:$0xff]
  %v10690 = vld [vmem:[%s12 + $0x38] sm:$0xff]
  %v10691 = vld [vmem:[%s12 + $0x40] sm:$0xff]
  %v10692 = vld [vmem:[%s12 + $0x48] sm:$0xff]
  %v10693 = vld [vmem:[%s12 + $0x50] sm:$0xff]
  %v10694 = vld [vmem:[%s12 + $0x58] sm:$0xff]
  %v10695 = vld [vmem:[%s12 + $0x60] sm:$0xff]
  %v10696 = vld [vmem:[%s12 + $0x68] sm:$0xff]
  %v10697 = vld [vmem:[%s12 + $0x70] sm:$0xff]
  %v10698 = vld [vmem:[%s12 + $0x78] sm:$0xff]
  %v10699 = vld [vmem:[%s12 + $0x80] sm:$0xff]
  %v10700 = vld [vmem:[%s12 + $0x88] sm:$0xff]
  %v10701 = vld [vmem:[%s12 + $0x90] sm:$0xff]
  %v10702 = vld [vmem:[%s12 + $0x98] sm:$0xff]
  %v10703 = vld [vmem:[%s12 + $0xa0] sm:$0xff]
  %v10704 = vld [vmem:[%s12 + $0xa8] sm:$0xff]
  %v10705 = vld [vmem:[%s12 + $0xb0] sm:$0xff]
  %v10706 = vld [vmem:[%s12 + $0xb8] sm:$0xff]
  %v10707 = vld [vmem:[%s12 + $0xc0] sm:$0xff]
  %v10708 = vld [vmem:[%s12 + $0xc8] sm:$0xff]
  %v10709 = vld [vmem:[%s12 + $0xd0] sm:$0xff]
  %v10710 = vld [vmem:[%s12 + $0xd8] sm:$0xff]
  %v10711 = vld [vmem:[%s12 + $0xe0] sm:$0xff]
  %v10712 = vld [vmem:[%s12 + $0xe8] sm:$0xff]
  %v10713 = vld [vmem:[%s12 + $0xf0] sm:$0xff]
  %v10714 = vld [vmem:[%s12 + $0xf8] sm:$0xff]
  %v10715 = vld [vmem:[%s13] sm:$0x1]
  %v10717 = vlaneseq
  %v10718 = vshrl.u32 %v10717, 7
  %v10719 = vsub.s32 0, %v10718
  %v10720 = vrot.slane %v10715, %v10719
  %10722 = vmatprep.subr.mxu0 0.0
  %10723 = vmatpush1.msra.mxu0 %v10683
  %10724 = vmatprep.subr.mxu0 0.0
  %10725 = vmatpush1.msra.mxu0 %v10684
  %10726 = vmatprep.subr.mxu0 0.0
  %10727 = vmatpush1.msra.mxu0 %v10685
  %10728 = vmatprep.subr.mxu0 0.0
  %10729 = vmatpush1.msra.mxu0 %v10686
  %10730 = vmatprep.subr.mxu0 0.0
  %10731 = vmatpush1.msra.mxu0 %v10687
  %10732 = vmatprep.subr.mxu0 0.0
  %10733 = vmatpush1.msra.mxu0 %v10688
  %10734 = vmatprep.subr.mxu0 0.0
  %10735 = vmatpush1.msra.mxu0 %v10689
  %10736 = vmatprep.subr.mxu0 0.0
  %10737 = vmatpush1.msra.mxu0 %v10690
  %10738 = vmatprep.subr.mxu0 0.0
  %10739 = vmatpush1.msra.mxu0 %v10691
  %10740 = vmatprep.subr.mxu0 0.0
  %10741 = vmatpush1.msra.mxu0 %v10692
  %10742 = vmatprep.subr.mxu0 0.0
  %10743 = vmatpush1.msra.mxu0 %v10693
  %10744 = vmatprep.subr.mxu0 0.0
  %10745 = vmatpush1.msra.mxu0 %v10694
  %10746 = vmatprep.subr.mxu0 0.0
  %10747 = vmatpush1.msra.mxu0 %v10695
  %10748 = vmatprep.subr.mxu0 0.0
  %10749 = vmatpush1.msra.mxu0 %v10696
  %10750 = vmatprep.subr.mxu0 0.0
  %10751 = vmatpush1.msra.mxu0 %v10697
  %10752 = vmatprep.subr.mxu0 0.0
  %10753 = vmatpush1.msra.mxu0 %v10698
  %10754 = vmatprep.subr.mxu0 0.0
  %10755 = vmatpush1.msra.mxu0 %v10699
  %10756 = vmatprep.subr.mxu0 0.0
  %10757 = vmatpush1.msra.mxu0 %v10700
  %10758 = vmatprep.subr.mxu0 0.0
  %10759 = vmatpush1.msra.mxu0 %v10701
  %10760 = vmatprep.subr.mxu0 0.0
  %10761 = vmatpush1.msra.mxu0 %v10702
  %10762 = vmatprep.subr.mxu0 0.0
  %10763 = vmatpush1.msra.mxu0 %v10703
  %10764 = vmatprep.subr.mxu0 0.0
  %10765 = vmatpush1.msra.mxu0 %v10704
  %10766 = vmatprep.subr.mxu0 0.0
  %10767 = vmatpush1.msra.mxu0 %v10705
  %10768 = vmatprep.subr.mxu0 0.0
  %10769 = vmatpush1.msra.mxu0 %v10706
  %10770 = vmatprep.subr.mxu0 0.0
  %10771 = vmatpush1.msra.mxu0 %v10707
  %10772 = vmatprep.subr.mxu0 0.0
  %10773 = vmatpush1.msra.mxu0 %v10708
  %10774 = vmatprep.subr.mxu0 0.0
  %10775 = vmatpush1.msra.mxu0 %v10709
  %10776 = vmatprep.subr.mxu0 0.0
  %10777 = vmatpush1.msra.mxu0 %v10710
  %10778 = vmatprep.subr.mxu0 0.0
  %10779 = vmatpush1.msra.mxu0 %v10711
  %10780 = vmatprep.subr.mxu0 0.0
  %10781 = vmatpush1.msra.mxu0 %v10712
  %10782 = vmatprep.subr.mxu0 0.0
  %10783 = vmatpush1.msra.mxu0 %v10713
  %10784 = vmatprep.subr.mxu0 0.0
  %10785 = vmatpush1.msra.mxu0 %v10714
  %10786 = vmatprep.mubr.f32.mxu0 %v10682
  %10787 = vmatmul.mubr.f32.gmra.mrb[0].mxu0 %v10681
  %v10788 = vpop.f32.mrb[0].mxu0
  %v10789 = vadd.f32 %v10720, %v10788
  %v10790 = vpop.f32.mrb[0].mxu0
  %10791 = vdwg.mxu0
  %10792 = vst [vmem:[%s14] sm:$0x3] %v10789
  // Predicated region
  $region58: #{dueling_dqn_forward.1} parent=0 // pred_check
    _
  $region59: #{dueling_dqn_forward.1} parent=0 // pred_check_branch
    %10794 = sbr.rel (0) target = $region61
  $region60: #{dueling_dqn_forward.1} parent=0 // pred_region
    _
  $region61: #{dueling_dqn_forward.1} parent=0 // pred_fallthru
    _
  // Predicated region
  $region62: #{dueling_dqn_forward.1} parent=0 // pred_check
    _
  $region63: #{dueling_dqn_forward.1} parent=0 // pred_check_branch
    %10796 = sbr.rel (0) target = $region65
  $region64: #{dueling_dqn_forward.1} parent=0 // pred_region
    _
  $region65: #{dueling_dqn_forward.1} parent=0 // pred_fallthru
    _

</llo_original>
